<compile_context>
chip_gen: v7x
topology: tpu7x:2x2x1
jax: 0.10.0
libtpu: 0.0.40
codegen_flags: <defaults>
</compile_context>

<pallas_src>
import functools

import jax
import jax.numpy as jnp
from jax import lax
from jax.experimental import pallas as pl
from jax.experimental.pallas import tpu as pltpu

KH = KW = 3          # kernel_size = 3
NEG_SLOPE = 0.2      # LeakyReLU slope
LANE = 128           # TPU lane width


def _round_up(x, m):
    return (x + m - 1) // m * m


def _pick_tile_h(H, W, cin_p, cout_p, itemsize):
    """Largest row-tile dividing H that keeps per-step VMEM small (~6 MiB)."""
    budget = 6 * 1024 * 1024
    for th in range(min(H, 128), 0, -1):
        if H % th:
            continue
        blk_in = 2 * (th + 2) * (W + 2) * cin_p * itemsize   # double-buffered input tile
        blk_out = 2 * th * W * cout_p * itemsize             # double-buffered output tile
        col = th * W * KH * KW * cin_p * itemsize            # im2col scratch
        acc = th * W * cout_p * 4                            # f32 accumulator value
        if blk_in + blk_out + col + acc <= budget:
            return th
    return 1


def _conv3x3_kernel(x_ref, w_ref, b_ref, o_ref, col_ref, *, use_act, tile_h, out_w):
    # x_ref:   (1, 1, tile_h+2, out_w+2, cin_p)  input row-tile incl. 1-px halo
    # w_ref:   (9*cin_p, cout_p)                 weights, tap-major along K
    # b_ref:   (1, cout_p)                       f32 bias (zero-padded lanes)
    # o_ref:   (1, tile_h, out_w, cout_p)        lane-dense output tile
    # col_ref: (tile_h*out_w, 9*cin_p)           im2col scratch (compute dtype)
    cin_p = x_ref.shape[-1]

    # im2col: copy the 9 shifted windows into one contiguous (pixels, 9*cin_p)
    # matrix (lane-aligned column blocks since cin_p % 128 == 0).
    for kh in range(KH):
        for kw in range(KW):
            t = kh * KW + kw
            patch = x_ref[0, 0, kh:kh + tile_h, kw:kw + out_w, :]
            col_ref[:, t * cin_p:(t + 1) * cin_p] = patch.reshape(tile_h * out_w, cin_p)

    # Single MXU matmul with f32 accumulation; fused bias + LeakyReLU.
    acc = jnp.dot(col_ref[...], w_ref[...], preferred_element_type=jnp.float32)
    acc = acc + b_ref[...]
    if use_act:
        acc = jnp.where(acc >= 0, acc, NEG_SLOPE * acc)      # LeakyReLU(0.2)
    # else: Identity
    o_ref[...] = acc.reshape(1, tile_h, out_w, acc.shape[-1]).astype(o_ref.dtype)


def conv_block_nhwc(x, w_oihw, b, *, use_act, compute_dtype=jnp.float32):
    """ConvBlock forward on an NHWC tensor: Conv2d(k=3,s=1,p=1) [+ LeakyReLU(0.2)].

    x:      (N, H, W, Cin)
    w_oihw: (Cout, Cin, 3, 3)   -- PyTorch Conv2d weight layout
    b:      (Cout,)
    returns (N, H, W, Cout)
    """
    N, H, W, Cin = x.shape
    Cout = w_oihw.shape[0]
    cin_p = _round_up(Cin, LANE)
    cout_p = _round_up(Cout, LANE)
    itemsize = jnp.dtype(compute_dtype).itemsize

    # Parameters: zero-pad channels to lane multiples; lay out weights tap-major
    # along K so they match the im2col column order (kh, kw, cin).
    w_hwio = jnp.transpose(w_oihw, (2, 3, 1, 0)).astype(compute_dtype)   # (3,3,Cin,Cout)
    w_p = jnp.zeros((KH, KW, cin_p, cout_p), compute_dtype)
    w_p = w_p.at[:, :, :Cin, :Cout].set(w_hwio)
    w2d = w_p.reshape(KH * KW * cin_p, cout_p)
    b_p = jnp.zeros((1, cout_p), jnp.float32).at[0, :Cout].set(b.astype(jnp.float32))

    tile_h = _pick_tile_h(H, W, cin_p, cout_p, itemsize)
    n_h = H // tile_h
    wp = W + 2

    # Spatial halo pad + channel pad in one XLA pass, then gather overlapping
    # row tiles so each grid step's input block is a plain Blocked window.
    # TODO(synk): fold halo/pad handling into the kernel (masked boundary taps)
    # to save this extra HBM pass over the input.
    x_pad = jnp.pad(x.astype(compute_dtype),
                    ((0, 0), (1, 1), (1, 1), (0, cin_p - Cin)))
    row_idx = (jnp.arange(n_h) * tile_h)[:, None] + jnp.arange(tile_h + 2)[None, :]
    x_tiles = x_pad[:, row_idx]                  # (N, n_h, tile_h+2, W+2, cin_p)

    kernel = functools.partial(_conv3x3_kernel, use_act=use_act,
                               tile_h=tile_h, out_w=W)

    out = pl.pallas_call(
        kernel,
        out_shape=jax.ShapeDtypeStruct((N, H, W, cout_p), compute_dtype),
        grid_spec=pltpu.PrefetchScalarGridSpec(
            num_scalar_prefetch=0,
            grid=(N, n_h),
            in_specs=[
                pl.BlockSpec((1, 1, tile_h + 2, wp, cin_p),
                             lambda n, h: (n, h, 0, 0, 0)),
                pl.BlockSpec((KH * KW * cin_p, cout_p), lambda n, h: (0, 0)),
                pl.BlockSpec((1, cout_p), lambda n, h: (0, 0)),
            ],
            out_specs=pl.BlockSpec((1, tile_h, W, cout_p),
                                   lambda n, h: (n, h, 0, 0)),
            scratch_shapes=[
                pltpu.VMEM((tile_h * W, KH * KW * cin_p), compute_dtype)],
        ),
        compiler_params=pltpu.CompilerParams(
            dimension_semantics=("parallel", "parallel")),
    )(x_tiles, w2d, b_p)

    return out[..., :Cout]                       # drop padded output channels


def rrdb_forward(x_nchw, params, residual_beta=0.2, compute_dtype=jnp.float32):
    """RRDB forward (3 DenseResidualBlocks); NCHW in/out to match PyTorch."""
    # TODO(synk): fuse each DenseResidualBlock's 5 convs into one pallas_call so
    # dense-block intermediates stay in VMEM instead of round-tripping HBM.
    x_nhwc = jnp.transpose(x_nchw, (0, 2, 3, 1)).astype(compute_dtype)
    out_all = x_nhwc
    for drb in params:                           # 3 DenseResidualBlocks
        drb_in = out_all
        feats = drb_in
        out = None
        for i, (w, b) in enumerate(drb):         # 5 ConvBlocks, dense connections
            out = conv_block_nhwc(feats, w, b, use_act=(i <= 3),
                                  compute_dtype=compute_dtype)
            if i < 4:
                feats = jnp.concatenate([feats, out], axis=-1)
        out_all = residual_beta * out + drb_in
    y = out_all * residual_beta + x_nhwc
    return jnp.transpose(y, (0, 3, 1, 2)).astype(x_nchw.dtype)


# ----------------------------- reference & demo ------------------------------

def _conv_block_ref(x, w, b, use_act):
    y = lax.conv_general_dilated(
        x, w, window_strides=(1, 1), padding=((1, 1), (1, 1)),
        dimension_numbers=("NCHW", "OIHW", "NCHW"),
        precision=lax.Precision.HIGHEST)
    y = y + b[None, :, None, None]
    if use_act:
        y = jnp.where(y >= 0, y, NEG_SLOPE * y)
    return y


def rrdb_reference(x, params, residual_beta=0.2):
    out_all = x
    for drb in params:
        drb_in = out_all
        feats = drb_in
        out = None
        for i, (w, b) in enumerate(drb):
            out = _conv_block_ref(feats, w, b, i <= 3)
            if i < 4:
                feats = jnp.concatenate([feats, out], axis=1)
        out_all = residual_beta * out + drb_in
    return out_all * residual_beta + x


def init_rrdb_params(key, in_channels, channels=32):
    params = []
    for _ in range(3):
        blocks = []
        for i in range(5):
            cin = in_channels + channels * i
            cout = channels if i <= 3 else in_channels
            key, kw_, kb_ = jax.random.split(key, 3)
            w = 0.1 * jax.random.normal(kw_, (cout, cin, KH, KW), jnp.float32)
            b = 0.1 * jax.random.normal(kb_, (cout,), jnp.float32)
            blocks.append((w, b))
        params.append(blocks)
    return params


if __name__ == "__main__":
    key = jax.random.PRNGKey(0)
    kx, kp = jax.random.split(key)

    N, C, H, W = 2, 4, 16, 16                    # small shapes; RRDB(in_channels=4)
    x = jax.random.normal(kx, (N, C, H, W), dtype=jnp.float32)
    params = init_rrdb_params(kp, in_channels=C)

    # f32 compute path: strict check vs pure-JAX reference.
    fwd_f32 = jax.jit(functools.partial(rrdb_forward, compute_dtype=jnp.float32))
    out = jax.block_until_ready(fwd_f32(x, params))

    ref = rrdb_reference(x, params)
    assert out.shape == (N, C, H, W) and out.dtype == x.dtype
    max_err = float(jnp.max(jnp.abs(out - ref)))
    assert jnp.allclose(out, ref, atol=2e-3, rtol=2e-3), f"mismatch vs reference: {max_err}"

    print("KERNEL_OK")
</pallas_src>

<mosaic_0001>
module attributes {stable_mosaic.version = 11 : i64} {
  func.func @_conv3x3_kernel(%arg0: i32, %arg1: i32, %arg2: memref<1x1x18x18x128xf32, #tpu.memory_space<vmem>>, %arg3: memref<1152x128xf32, #tpu.memory_space<vmem>>, %arg4: memref<1x128xf32, #tpu.memory_space<vmem>>, %arg5: memref<1x16x16x128xf32, #tpu.memory_space<vmem>>, %arg6: memref<256x1152xf32, #tpu.memory_space<vmem>>) attributes {dimension_semantics = [#tpu.dimension_semantics<parallel>, #tpu.dimension_semantics<parallel>], iteration_bounds = array<i64: 2, 1>, scalar_prefetch = 0 : i64, scratch_operands = 1 : i64, tpu.core_type = #tpu.core_type<tc>, window_params = [{transform_indices = @transform_0, window_bounds = array<i64: 1, 1, 18, 18, 128>}, {pipeline_mode = #tpu.pipeline_mode<synchronous>, transform_indices = @transform_1, window_bounds = array<i64: 1152, 128>}, {pipeline_mode = #tpu.pipeline_mode<synchronous>, transform_indices = @transform_2, window_bounds = array<i64: 1, 128>}, {transform_indices = @transform_3, window_bounds = array<i64: 1, 16, 16, 128>}]} {
    %c0 = arith.constant 0 : index
    %c0_0 = arith.constant 0 : index
    %c0_1 = arith.constant 0 : index
    %c0_2 = arith.constant 0 : index
    %c0_3 = arith.constant 0 : index
    %0 = vector.load %arg2[%c0, %c0_0, %c0_1, %c0_2, %c0_3] : memref<1x1x18x18x128xf32, #tpu.memory_space<vmem>>, vector<1x1x16x16x128xf32>
    %1 = vector.shape_cast %0 : vector<1x1x16x16x128xf32> to vector<16x16x128xf32>
    %2 = vector.shape_cast %1 : vector<16x16x128xf32> to vector<256x128xf32>
    %c0_4 = arith.constant 0 : index
    %c0_5 = arith.constant 0 : index
    %3 = vector.load %arg6[%c0_4, %c0_5] : memref<256x1152xf32, #tpu.memory_space<vmem>>, vector<256x128xf32>
    tpu.vector_store %arg6[%c0_4, %c0_5], %2 {strides = array<i32>} : memref<256x1152xf32, #tpu.memory_space<vmem>>, vector<256x128xf32>,
    %c0_6 = arith.constant 0 : index
    %c0_7 = arith.constant 0 : index
    %c0_8 = arith.constant 0 : index
    %c1 = arith.constant 1 : index
    %c0_9 = arith.constant 0 : index
    %4 = vector.load %arg2[%c0_6, %c0_7, %c0_8, %c1, %c0_9] : memref<1x1x18x18x128xf32, #tpu.memory_space<vmem>>, vector<1x1x16x16x128xf32>
    %5 = vector.shape_cast %4 : vector<1x1x16x16x128xf32> to vector<16x16x128xf32>
    %6 = vector.shape_cast %5 : vector<16x16x128xf32> to vector<256x128xf32>
    %c0_10 = arith.constant 0 : index
    %c128 = arith.constant 128 : index
    %7 = vector.load %arg6[%c0_10, %c128] : memref<256x1152xf32, #tpu.memory_space<vmem>>, vector<256x128xf32>
    tpu.vector_store %arg6[%c0_10, %c128], %6 {strides = array<i32>} : memref<256x1152xf32, #tpu.memory_space<vmem>>, vector<256x128xf32>,
    %c0_11 = arith.constant 0 : index
    %c0_12 = arith.constant 0 : index
    %c0_13 = arith.constant 0 : index
    %c2 = arith.constant 2 : index
    %c0_14 = arith.constant 0 : index
    %8 = vector.load %arg2[%c0_11, %c0_12, %c0_13, %c2, %c0_14] : memref<1x1x18x18x128xf32, #tpu.memory_space<vmem>>, vector<1x1x16x16x128xf32>
    %9 = vector.shape_cast %8 : vector<1x1x16x16x128xf32> to vector<16x16x128xf32>
    %10 = vector.shape_cast %9 : vector<16x16x128xf32> to vector<256x128xf32>
    %c0_15 = arith.constant 0 : index
    %c256 = arith.constant 256 : index
    %11 = vector.load %arg6[%c0_15, %c256] : memref<256x1152xf32, #tpu.memory_space<vmem>>, vector<256x128xf32>
    tpu.vector_store %arg6[%c0_15, %c256], %10 {strides = array<i32>} : memref<256x1152xf32, #tpu.memory_space<vmem>>, vector<256x128xf32>,
    %c0_16 = arith.constant 0 : index
    %c0_17 = arith.constant 0 : index
    %c1_18 = arith.constant 1 : index
    %c0_19 = arith.constant 0 : index
    %c0_20 = arith.constant 0 : index
    %12 = vector.load %arg2[%c0_16, %c0_17, %c1_18, %c0_19, %c0_20] : memref<1x1x18x18x128xf32, #tpu.memory_space<vmem>>, vector<1x1x16x16x128xf32>
    %13 = vector.shape_cast %12 : vector<1x1x16x16x128xf32> to vector<16x16x128xf32>
    %14 = vector.shape_cast %13 : vector<16x16x128xf32> to vector<256x128xf32>
    %c0_21 = arith.constant 0 : index
    %c384 = arith.constant 384 : index
    %15 = vector.load %arg6[%c0_21, %c384] : memref<256x1152xf32, #tpu.memory_space<vmem>>, vector<256x128xf32>
    tpu.vector_store %arg6[%c0_21, %c384], %14 {strides = array<i32>} : memref<256x1152xf32, #tpu.memory_space<vmem>>, vector<256x128xf32>,
    %c0_22 = arith.constant 0 : index
    %c0_23 = arith.constant 0 : index
    %c1_24 = arith.constant 1 : index
    %c1_25 = arith.constant 1 : index
    %c0_26 = arith.constant 0 : index
    %16 = vector.load %arg2[%c0_22, %c0_23, %c1_24, %c1_25, %c0_26] : memref<1x1x18x18x128xf32, #tpu.memory_space<vmem>>, vector<1x1x16x16x128xf32>
    %17 = vector.shape_cast %16 : vector<1x1x16x16x128xf32> to vector<16x16x128xf32>
    %18 = vector.shape_cast %17 : vector<16x16x128xf32> to vector<256x128xf32>
    %c0_27 = arith.constant 0 : index
    %c512 = arith.constant 512 : index
    %19 = vector.load %arg6[%c0_27, %c512] : memref<256x1152xf32, #tpu.memory_space<vmem>>, vector<256x128xf32>
    tpu.vector_store %arg6[%c0_27, %c512], %18 {strides = array<i32>} : memref<256x1152xf32, #tpu.memory_space<vmem>>, vector<256x128xf32>,
    %c0_28 = arith.constant 0 : index
    %c0_29 = arith.constant 0 : index
    %c1_30 = arith.constant 1 : index
    %c2_31 = arith.constant 2 : index
    %c0_32 = arith.constant 0 : index
    %20 = vector.load %arg2[%c0_28, %c0_29, %c1_30, %c2_31, %c0_32] : memref<1x1x18x18x128xf32, #tpu.memory_space<vmem>>, vector<1x1x16x16x128xf32>
    %21 = vector.shape_cast %20 : vector<1x1x16x16x128xf32> to vector<16x16x128xf32>
    %22 = vector.shape_cast %21 : vector<16x16x128xf32> to vector<256x128xf32>
    %c0_33 = arith.constant 0 : index
    %c640 = arith.constant 640 : index
    %23 = vector.load %arg6[%c0_33, %c640] : memref<256x1152xf32, #tpu.memory_space<vmem>>, vector<256x128xf32>
    tpu.vector_store %arg6[%c0_33, %c640], %22 {strides = array<i32>} : memref<256x1152xf32, #tpu.memory_space<vmem>>, vector<256x128xf32>,
    %c0_34 = arith.constant 0 : index
    %c0_35 = arith.constant 0 : index
    %c2_36 = arith.constant 2 : index
    %c0_37 = arith.constant 0 : index
    %c0_38 = arith.constant 0 : index
    %24 = vector.load %arg2[%c0_34, %c0_35, %c2_36, %c0_37, %c0_38] : memref<1x1x18x18x128xf32, #tpu.memory_space<vmem>>, vector<1x1x16x16x128xf32>
    %25 = vector.shape_cast %24 : vector<1x1x16x16x128xf32> to vector<16x16x128xf32>
    %26 = vector.shape_cast %25 : vector<16x16x128xf32> to vector<256x128xf32>
    %c0_39 = arith.constant 0 : index
    %c768 = arith.constant 768 : index
    %27 = vector.load %arg6[%c0_39, %c768] : memref<256x1152xf32, #tpu.memory_space<vmem>>, vector<256x128xf32>
    tpu.vector_store %arg6[%c0_39, %c768], %26 {strides = array<i32>} : memref<256x1152xf32, #tpu.memory_space<vmem>>, vector<256x128xf32>,
    %c0_40 = arith.constant 0 : index
    %c0_41 = arith.constant 0 : index
    %c2_42 = arith.constant 2 : index
    %c1_43 = arith.constant 1 : index
    %c0_44 = arith.constant 0 : index
    %28 = vector.load %arg2[%c0_40, %c0_41, %c2_42, %c1_43, %c0_44] : memref<1x1x18x18x128xf32, #tpu.memory_space<vmem>>, vector<1x1x16x16x128xf32>
    %29 = vector.shape_cast %28 : vector<1x1x16x16x128xf32> to vector<16x16x128xf32>
    %30 = vector.shape_cast %29 : vector<16x16x128xf32> to vector<256x128xf32>
    %c0_45 = arith.constant 0 : index
    %c896 = arith.constant 896 : index
    %31 = vector.load %arg6[%c0_45, %c896] : memref<256x1152xf32, #tpu.memory_space<vmem>>, vector<256x128xf32>
    tpu.vector_store %arg6[%c0_45, %c896], %30 {strides = array<i32>} : memref<256x1152xf32, #tpu.memory_space<vmem>>, vector<256x128xf32>,
    %c0_46 = arith.constant 0 : index
    %c0_47 = arith.constant 0 : index
    %c2_48 = arith.constant 2 : index
    %c2_49 = arith.constant 2 : index
    %c0_50 = arith.constant 0 : index
    %32 = vector.load %arg2[%c0_46, %c0_47, %c2_48, %c2_49, %c0_50] : memref<1x1x18x18x128xf32, #tpu.memory_space<vmem>>, vector<1x1x16x16x128xf32>
    %33 = vector.shape_cast %32 : vector<1x1x16x16x128xf32> to vector<16x16x128xf32>
    %34 = vector.shape_cast %33 : vector<16x16x128xf32> to vector<256x128xf32>
    %c0_51 = arith.constant 0 : index
    %c1024 = arith.constant 1024 : index
    %35 = vector.load %arg6[%c0_51, %c1024] : memref<256x1152xf32, #tpu.memory_space<vmem>>, vector<256x128xf32>
    tpu.vector_store %arg6[%c0_51, %c1024], %34 {strides = array<i32>} : memref<256x1152xf32, #tpu.memory_space<vmem>>, vector<256x128xf32>,
    %c0_52 = arith.constant 0 : index
    %c0_53 = arith.constant 0 : index
    %36 = vector.load %arg6[%c0_52, %c0_53] : memref<256x1152xf32, #tpu.memory_space<vmem>>, vector<256x1152xf32>
    %c0_54 = arith.constant 0 : index
    %c0_55 = arith.constant 0 : index
    %37 = vector.load %arg3[%c0_54, %c0_55] : memref<1152x128xf32, #tpu.memory_space<vmem>>, vector<1152x128xf32>
    %cst = arith.constant dense<0.000000e+00> : vector<256x128xf32>
    %38 = tpu.matmul %36, %37, %cst {dimension_numbers = #tpu.dot_dimension_numbers<[1], [0], [0], [1], [0, 0, 1, 1], [], []>} : vector<256x1152xf32>, vector<1152x128xf32>, vector<256x128xf32> -> vector<256x128xf32>
    %c0_56 = arith.constant 0 : index
    %c0_57 = arith.constant 0 : index
    %39 = vector.load %arg4[%c0_56, %c0_57] : memref<1x128xf32, #tpu.memory_space<vmem>>, vector<1x128xf32>
    %40 = vector.broadcast %39 : vector<1x128xf32> to vector<256x128xf32>
    %41 = arith.addf %38, %40 : vector<256x128xf32>
    %cst_58 = arith.constant 0.000000e+00 : f32
    %42 = vector.broadcast %cst_58 : f32 to vector<256x128xf32>
    %43 = arith.cmpf oge, %41, %42 : vector<256x128xf32>
    %cst_59 = arith.constant 2.000000e-01 : f32
    %44 = vector.broadcast %cst_59 : f32 to vector<256x128xf32>
    %45 = arith.mulf %44, %41 : vector<256x128xf32>
    %46 = arith.select %43, %41, %45 : vector<256x128xi1>, vector<256x128xf32>
    %47 = vector.shape_cast %46 : vector<256x128xf32> to vector<1x16x16x128xf32>
    %c0_60 = arith.constant 0 : index
    %c0_61 = arith.constant 0 : index
    %c0_62 = arith.constant 0 : index
    %c0_63 = arith.constant 0 : index
    %48 = vector.load %arg5[%c0_60, %c0_61, %c0_62, %c0_63] : memref<1x16x16x128xf32, #tpu.memory_space<vmem>>, vector<1x16x16x128xf32>
    tpu.vector_store %arg5[%c0_60, %c0_61, %c0_62, %c0_63], %47 {strides = array<i32>} : memref<1x16x16x128xf32, #tpu.memory_space<vmem>>, vector<1x16x16x128xf32>,
    return
  }
  func.func @transform_0(%arg0: i32, %arg1: i32) -> (i32, i32, i32, i32, i32) {
    %c0_i32 = arith.constant 0 : i32
    %c0_i32_0 = arith.constant 0 : i32
    %c0_i32_1 = arith.constant 0 : i32
    %c0_i32_2 = arith.constant 0 : i32
    return %arg0, %arg1, %c0_i32, %c0_i32_0, %c0_i32_1 : i32, i32, i32, i32, i32
  }
  func.func @transform_1(%arg0: i32, %arg1: i32) -> (i32, i32) {
    %c0_i32 = arith.constant 0 : i32
    %c0_i32_0 = arith.constant 0 : i32
    %c0_i32_1 = arith.constant 0 : i32
    return %c0_i32, %c0_i32_0 : i32, i32
  }
  func.func @transform_2(%arg0: i32, %arg1: i32) -> (i32, i32) {
    %c0_i32 = arith.constant 0 : i32
    %c0_i32_0 = arith.constant 0 : i32
    %c0_i32_1 = arith.constant 0 : i32
    return %c0_i32, %c0_i32_0 : i32, i32
  }
  func.func @transform_3(%arg0: i32, %arg1: i32) -> (i32, i32, i32, i32) {
    %c0_i32 = arith.constant 0 : i32
    %c0_i32_0 = arith.constant 0 : i32
    %c0_i32_1 = arith.constant 0 : i32
    return %arg0, %arg1, %c0_i32, %c0_i32_0 : i32, i32, i32, i32
  }
}

module attributes {stable_mosaic.version = 11 : i64} {
  func.func @_conv3x3_kernel(%arg0: i32, %arg1: i32, %arg2: memref<1x1x18x18x256xf32, #tpu.memory_space<vmem>>, %arg3: memref<2304x128xf32, #tpu.memory_space<vmem>>, %arg4: memref<1x128xf32, #tpu.memory_space<vmem>>, %arg5: memref<1x16x16x128xf32, #tpu.memory_space<vmem>>, %arg6: memref<256x2304xf32, #tpu.memory_space<vmem>>) attributes {dimension_semantics = [#tpu.dimension_semantics<parallel>, #tpu.dimension_semantics<parallel>], iteration_bounds = array<i64: 2, 1>, scalar_prefetch = 0 : i64, scratch_operands = 1 : i64, tpu.core_type = #tpu.core_type<tc>, window_params = [{transform_indices = @transform_0, window_bounds = array<i64: 1, 1, 18, 18, 256>}, {pipeline_mode = #tpu.pipeline_mode<synchronous>, transform_indices = @transform_1, window_bounds = array<i64: 2304, 128>}, {pipeline_mode = #tpu.pipeline_mode<synchronous>, transform_indices = @transform_2, window_bounds = array<i64: 1, 128>}, {transform_indices = @transform_3, window_bounds = array<i64: 1, 16, 16, 128>}]} {
    %c0 = arith.constant 0 : index
    %c0_0 = arith.constant 0 : index
    %c0_1 = arith.constant 0 : index
    %c0_2 = arith.constant 0 : index
    %c0_3 = arith.constant 0 : index
    %0 = vector.load %arg2[%c0, %c0_0, %c0_1, %c0_2, %c0_3] : memref<1x1x18x18x256xf32, #tpu.memory_space<vmem>>, vector<1x1x16x16x256xf32>
    %1 = vector.shape_cast %0 : vector<1x1x16x16x256xf32> to vector<16x16x256xf32>
    %2 = vector.shape_cast %1 : vector<16x16x256xf32> to vector<256x256xf32>
    %c0_4 = arith.constant 0 : index
    %c0_5 = arith.constant 0 : index
    %3 = vector.load %arg6[%c0_4, %c0_5] : memref<256x2304xf32, #tpu.memory_space<vmem>>, vector<256x256xf32>
    tpu.vector_store %arg6[%c0_4, %c0_5], %2 {strides = array<i32>} : memref<256x2304xf32, #tpu.memory_space<vmem>>, vector<256x256xf32>,
    %c0_6 = arith.constant 0 : index
    %c0_7 = arith.constant 0 : index
    %c0_8 = arith.constant 0 : index
    %c1 = arith.constant 1 : index
    %c0_9 = arith.constant 0 : index
    %4 = vector.load %arg2[%c0_6, %c0_7, %c0_8, %c1, %c0_9] : memref<1x1x18x18x256xf32, #tpu.memory_space<vmem>>, vector<1x1x16x16x256xf32>
    %5 = vector.shape_cast %4 : vector<1x1x16x16x256xf32> to vector<16x16x256xf32>
    %6 = vector.shape_cast %5 : vector<16x16x256xf32> to vector<256x256xf32>
    %c0_10 = arith.constant 0 : index
    %c256 = arith.constant 256 : index
    %7 = vector.load %arg6[%c0_10, %c256] : memref<256x2304xf32, #tpu.memory_space<vmem>>, vector<256x256xf32>
    tpu.vector_store %arg6[%c0_10, %c256], %6 {strides = array<i32>} : memref<256x2304xf32, #tpu.memory_space<vmem>>, vector<256x256xf32>,
    %c0_11 = arith.constant 0 : index
    %c0_12 = arith.constant 0 : index
    %c0_13 = arith.constant 0 : index
    %c2 = arith.constant 2 : index
    %c0_14 = arith.constant 0 : index
    %8 = vector.load %arg2[%c0_11, %c0_12, %c0_13, %c2, %c0_14] : memref<1x1x18x18x256xf32, #tpu.memory_space<vmem>>, vector<1x1x16x16x256xf32>
    %9 = vector.shape_cast %8 : vector<1x1x16x16x256xf32> to vector<16x16x256xf32>
    %10 = vector.shape_cast %9 : vector<16x16x256xf32> to vector<256x256xf32>
    %c0_15 = arith.constant 0 : index
    %c512 = arith.constant 512 : index
    %11 = vector.load %arg6[%c0_15, %c512] : memref<256x2304xf32, #tpu.memory_space<vmem>>, vector<256x256xf32>
    tpu.vector_store %arg6[%c0_15, %c512], %10 {strides = array<i32>} : memref<256x2304xf32, #tpu.memory_space<vmem>>, vector<256x256xf32>,
    %c0_16 = arith.constant 0 : index
    %c0_17 = arith.constant 0 : index
    %c1_18 = arith.constant 1 : index
    %c0_19 = arith.constant 0 : index
    %c0_20 = arith.constant 0 : index
    %12 = vector.load %arg2[%c0_16, %c0_17, %c1_18, %c0_19, %c0_20] : memref<1x1x18x18x256xf32, #tpu.memory_space<vmem>>, vector<1x1x16x16x256xf32>
    %13 = vector.shape_cast %12 : vector<1x1x16x16x256xf32> to vector<16x16x256xf32>
    %14 = vector.shape_cast %13 : vector<16x16x256xf32> to vector<256x256xf32>
    %c0_21 = arith.constant 0 : index
    %c768 = arith.constant 768 : index
    %15 = vector.load %arg6[%c0_21, %c768] : memref<256x2304xf32, #tpu.memory_space<vmem>>, vector<256x256xf32>
    tpu.vector_store %arg6[%c0_21, %c768], %14 {strides = array<i32>} : memref<256x2304xf32, #tpu.memory_space<vmem>>, vector<256x256xf32>,
    %c0_22 = arith.constant 0 : index
    %c0_23 = arith.constant 0 : index
    %c1_24 = arith.constant 1 : index
    %c1_25 = arith.constant 1 : index
    %c0_26 = arith.constant 0 : index
    %16 = vector.load %arg2[%c0_22, %c0_23, %c1_24, %c1_25, %c0_26] : memref<1x1x18x18x256xf32, #tpu.memory_space<vmem>>, vector<1x1x16x16x256xf32>
    %17 = vector.shape_cast %16 : vector<1x1x16x16x256xf32> to vector<16x16x256xf32>
    %18 = vector.shape_cast %17 : vector<16x16x256xf32> to vector<256x256xf32>
    %c0_27 = arith.constant 0 : index
    %c1024 = arith.constant 1024 : index
    %19 = vector.load %arg6[%c0_27, %c1024] : memref<256x2304xf32, #tpu.memory_space<vmem>>, vector<256x256xf32>
    tpu.vector_store %arg6[%c0_27, %c1024], %18 {strides = array<i32>} : memref<256x2304xf32, #tpu.memory_space<vmem>>, vector<256x256xf32>,
    %c0_28 = arith.constant 0 : index
    %c0_29 = arith.constant 0 : index
    %c1_30 = arith.constant 1 : index
    %c2_31 = arith.constant 2 : index
    %c0_32 = arith.constant 0 : index
    %20 = vector.load %arg2[%c0_28, %c0_29, %c1_30, %c2_31, %c0_32] : memref<1x1x18x18x256xf32, #tpu.memory_space<vmem>>, vector<1x1x16x16x256xf32>
    %21 = vector.shape_cast %20 : vector<1x1x16x16x256xf32> to vector<16x16x256xf32>
    %22 = vector.shape_cast %21 : vector<16x16x256xf32> to vector<256x256xf32>
    %c0_33 = arith.constant 0 : index
    %c1280 = arith.constant 1280 : index
    %23 = vector.load %arg6[%c0_33, %c1280] : memref<256x2304xf32, #tpu.memory_space<vmem>>, vector<256x256xf32>
    tpu.vector_store %arg6[%c0_33, %c1280], %22 {strides = array<i32>} : memref<256x2304xf32, #tpu.memory_space<vmem>>, vector<256x256xf32>,
    %c0_34 = arith.constant 0 : index
    %c0_35 = arith.constant 0 : index
    %c2_36 = arith.constant 2 : index
    %c0_37 = arith.constant 0 : index
    %c0_38 = arith.constant 0 : index
    %24 = vector.load %arg2[%c0_34, %c0_35, %c2_36, %c0_37, %c0_38] : memref<1x1x18x18x256xf32, #tpu.memory_space<vmem>>, vector<1x1x16x16x256xf32>
    %25 = vector.shape_cast %24 : vector<1x1x16x16x256xf32> to vector<16x16x256xf32>
    %26 = vector.shape_cast %25 : vector<16x16x256xf32> to vector<256x256xf32>
    %c0_39 = arith.constant 0 : index
    %c1536 = arith.constant 1536 : index
    %27 = vector.load %arg6[%c0_39, %c1536] : memref<256x2304xf32, #tpu.memory_space<vmem>>, vector<256x256xf32>
    tpu.vector_store %arg6[%c0_39, %c1536], %26 {strides = array<i32>} : memref<256x2304xf32, #tpu.memory_space<vmem>>, vector<256x256xf32>,
    %c0_40 = arith.constant 0 : index
    %c0_41 = arith.constant 0 : index
    %c2_42 = arith.constant 2 : index
    %c1_43 = arith.constant 1 : index
    %c0_44 = arith.constant 0 : index
    %28 = vector.load %arg2[%c0_40, %c0_41, %c2_42, %c1_43, %c0_44] : memref<1x1x18x18x256xf32, #tpu.memory_space<vmem>>, vector<1x1x16x16x256xf32>
    %29 = vector.shape_cast %28 : vector<1x1x16x16x256xf32> to vector<16x16x256xf32>
    %30 = vector.shape_cast %29 : vector<16x16x256xf32> to vector<256x256xf32>
    %c0_45 = arith.constant 0 : index
    %c1792 = arith.constant 1792 : index
    %31 = vector.load %arg6[%c0_45, %c1792] : memref<256x2304xf32, #tpu.memory_space<vmem>>, vector<256x256xf32>
    tpu.vector_store %arg6[%c0_45, %c1792], %30 {strides = array<i32>} : memref<256x2304xf32, #tpu.memory_space<vmem>>, vector<256x256xf32>,
    %c0_46 = arith.constant 0 : index
    %c0_47 = arith.constant 0 : index
    %c2_48 = arith.constant 2 : index
    %c2_49 = arith.constant 2 : index
    %c0_50 = arith.constant 0 : index
    %32 = vector.load %arg2[%c0_46, %c0_47, %c2_48, %c2_49, %c0_50] : memref<1x1x18x18x256xf32, #tpu.memory_space<vmem>>, vector<1x1x16x16x256xf32>
    %33 = vector.shape_cast %32 : vector<1x1x16x16x256xf32> to vector<16x16x256xf32>
    %34 = vector.shape_cast %33 : vector<16x16x256xf32> to vector<256x256xf32>
    %c0_51 = arith.constant 0 : index
    %c2048 = arith.constant 2048 : index
    %35 = vector.load %arg6[%c0_51, %c2048] : memref<256x2304xf32, #tpu.memory_space<vmem>>, vector<256x256xf32>
    tpu.vector_store %arg6[%c0_51, %c2048], %34 {strides = array<i32>} : memref<256x2304xf32, #tpu.memory_space<vmem>>, vector<256x256xf32>,
    %c0_52 = arith.constant 0 : index
    %c0_53 = arith.constant 0 : index
    %36 = vector.load %arg6[%c0_52, %c0_53] : memref<256x2304xf32, #tpu.memory_space<vmem>>, vector<256x2304xf32>
    %c0_54 = arith.constant 0 : index
    %c0_55 = arith.constant 0 : index
    %37 = vector.load %arg3[%c0_54, %c0_55] : memref<2304x128xf32, #tpu.memory_space<vmem>>, vector<2304x128xf32>
    %cst = arith.constant dense<0.000000e+00> : vector<256x128xf32>
    %38 = tpu.matmul %36, %37, %cst {dimension_numbers = #tpu.dot_dimension_numbers<[1], [0], [0], [1], [0, 0, 1, 1], [], []>} : vector<256x2304xf32>, vector<2304x128xf32>, vector<256x128xf32> -> vector<256x128xf32>
    %c0_56 = arith.constant 0 : index
    %c0_57 = arith.constant 0 : index
    %39 = vector.load %arg4[%c0_56, %c0_57] : memref<1x128xf32, #tpu.memory_space<vmem>>, vector<1x128xf32>
    %40 = vector.broadcast %39 : vector<1x128xf32> to vector<256x128xf32>
    %41 = arith.addf %38, %40 : vector<256x128xf32>
    %42 = vector.shape_cast %41 : vector<256x128xf32> to vector<1x16x16x128xf32>
    %c0_58 = arith.constant 0 : index
    %c0_59 = arith.constant 0 : index
    %c0_60 = arith.constant 0 : index
    %c0_61 = arith.constant 0 : index
    %43 = vector.load %arg5[%c0_58, %c0_59, %c0_60, %c0_61] : memref<1x16x16x128xf32, #tpu.memory_space<vmem>>, vector<1x16x16x128xf32>
    tpu.vector_store %arg5[%c0_58, %c0_59, %c0_60, %c0_61], %42 {strides = array<i32>} : memref<1x16x16x128xf32, #tpu.memory_space<vmem>>, vector<1x16x16x128xf32>,
    return
  }
  func.func @transform_0(%arg0: i32, %arg1: i32) -> (i32, i32, i32, i32, i32) {
    %c0_i32 = arith.constant 0 : i32
    %c0_i32_0 = arith.constant 0 : i32
    %c0_i32_1 = arith.constant 0 : i32
    %c0_i32_2 = arith.constant 0 : i32
    return %arg0, %arg1, %c0_i32, %c0_i32_0, %c0_i32_1 : i32, i32, i32, i32, i32
  }
  func.func @transform_1(%arg0: i32, %arg1: i32) -> (i32, i32) {
    %c0_i32 = arith.constant 0 : i32
    %c0_i32_0 = arith.constant 0 : i32
    %c0_i32_1 = arith.constant 0 : i32
    return %c0_i32, %c0_i32_0 : i32, i32
  }
  func.func @transform_2(%arg0: i32, %arg1: i32) -> (i32, i32) {
    %c0_i32 = arith.constant 0 : i32
    %c0_i32_0 = arith.constant 0 : i32
    %c0_i32_1 = arith.constant 0 : i32
    return %c0_i32, %c0_i32_0 : i32, i32
  }
  func.func @transform_3(%arg0: i32, %arg1: i32) -> (i32, i32, i32, i32) {
    %c0_i32 = arith.constant 0 : i32
    %c0_i32_0 = arith.constant 0 : i32
    %c0_i32_1 = arith.constant 0 : i32
    return %arg0, %arg1, %c0_i32, %c0_i32_0 : i32, i32, i32, i32
  }
}

</mosaic_0001>

<llo_original>
// kernel: rrdb_forward.15
$region0: #{rrdb_forward.15}
  #allocation0 [shape = 'u32[]', space=smem, size = 0x4, offset = 0x4, fixed_abs, tag = 'smem constant byte address 0x4 - core index']
  #allocation1 [shape = 'u32[144,128]{1,0:T(1,128)}', space=vmem, size = 0x12000, scoped, tag = 'internal scratch']
  #allocation2 [shape = 'f32[256,1152]{1,0:T(8,128)}', space=vmem, size = 0x120000, scoped, tag = 'scratch operand']
  %s0 = inlined_call_operand.vmem [shape: f32[2,1,18,18,128], index: 0, kind: input, shape index: {}]
  %s1 = inlined_call_operand.vmem [shape: f32[1152,128], index: 1, kind: input, shape index: {}]
  %s2 = inlined_call_operand.vmem [shape: f32[1,128], index: 2, kind: input, shape index: {}]
  %s3 = inlined_call_operand.vmem [shape: f32[2,16,16,128], index: 3, kind: output, shape index: {}]
  %s4 = sld [smem:[#allocation0]]
  $region45: #{rrdb_forward.15} parent=0
    _
  %s6 = ssub.s32 1, %s4
  %s7 = scalar_select 0, %s6, %s4
  loop: start=0, step=1, limit=4
  $region2: #{rrdb_forward.15} parent=0 // loop_pre_header
    _
  $region3: #{rrdb_forward.15} parent=0 // loop_header
    %s9 = sphi 0, %s13
    %p10 = scmp.ge.s32.totalorder %s9, 4
    %s16 = sphi 0, %s28
    %s17 = sphi 0, %s24
    %s18 = sphi 0, %s16
    %s19 = sphi 0, %s17
    %s20 = sphi 0, %s18
    %s21 = sphi 0, %s19
    %s33 = sphi 0, %s35
    %s36 = sphi 0, %s33
    %s37 = sphi 0, %s36
    %s53 = sphi 0, %s37
    %s57 = sphi 0, %s57
    %s59 = sphi 0, %s57
    %s60 = sphi 0, %s59
    %s74 = sphi 0, %s60
    %s78 = sphi 0, %s78
    %s80 = sphi 0, %s78
    %s81 = sphi 0, %s80
    %s95 = sphi 0, %s81
    %s103 = sphi 0, %s105
    %s106 = sphi 0, %s103
    %s107 = sphi 0, %s106
    %s123 = sphi 0, %s107
  $region4: #{rrdb_forward.15} parent=0 // loop_header_branch
    %12 = sbr.rel (%p10) target = $region8
  $region5: #{rrdb_forward.15} parent=0 // loop_body
    %s14 = ssub.s32 %s9, 1
    %s15 = ssub.s32 %s9, 2
    %s22 = sadd.s32 1, %s17
    %p23 = scmp.ge.s32.totalorder %s22, 1
    %s24 = scalar_select %p23, 0, %s22
    %s25 = sadd.s32 1, %s16
    %s26 = scalar_select %p23, %s25, %s16
    %p27 = scmp.ge.s32.totalorder %s26, 2
    %s28 = scalar_select %p27, 0, %s26
    %s29 = ssub.s32 %s16, %s28
    %s30 = ssub.s32 %s17, %s24
    %s31 = sor.u32 %s29, %s30
    %p32 = scmp.eq.s32.totalorder %s31, 0
    %s34 = sadd.s32 %s33, 1
    %s35 = scalar_select %p32, %s33, %s34
    %p38 = pneg %p32
    %p39 = scmp.eq.s32.totalorder %s9, 1
    %p40 = por %p38, %p39
    %p41 = scmp.ne.s32.totalorder %s33, %s36
    %p42 = scmp.eq.s32.totalorder %s9, 0
    %p43 = por %p41, %p42
    %p44 = scmp.ne.s32.totalorder %s33, %s36
    %p45 = scmp.eq.s32.totalorder %s14, 1
    %p46 = por %p44, %p45
    %p47 = scmp.ne.s32.totalorder %s36, %s37
    %p48 = scmp.eq.s32.totalorder %s14, 0
    %p49 = por %p47, %p48
    %p50 = scmp.ne.s32.totalorder %s36, %s37
    %p51 = scmp.eq.s32.totalorder %s15, 1
    %p52 = por %p50, %p51
    %p54 = scmp.ne.s32.totalorder %s37, %s53
    %p55 = scmp.eq.s32.totalorder %s15, 0
    %p56 = por %p54, %p55
    %s58 = sadd.s32 %s57, 1
    %p61 = scmp.eq.s32.totalorder %s9, 1
    %p62 = scmp.ne.s32.totalorder %s57, %s59
    %p63 = scmp.eq.s32.totalorder %s9, 0
    %p64 = por %p62, %p63
    %p65 = scmp.ne.s32.totalorder %s57, %s59
    %p66 = scmp.eq.s32.totalorder %s14, 1
    %p67 = por %p65, %p66
    %p68 = scmp.ne.s32.totalorder %s59, %s60
    %p69 = scmp.eq.s32.totalorder %s14, 0
    %p70 = por %p68, %p69
    %p71 = scmp.ne.s32.totalorder %s59, %s60
    %p72 = scmp.eq.s32.totalorder %s15, 1
    %p73 = por %p71, %p72
    %p75 = scmp.ne.s32.totalorder %s60, %s74
    %p76 = scmp.eq.s32.totalorder %s15, 0
    %p77 = por %p75, %p76
    %s79 = sadd.s32 %s78, 1
    %p82 = scmp.eq.s32.totalorder %s9, 1
    %p83 = scmp.ne.s32.totalorder %s78, %s80
    %p84 = scmp.eq.s32.totalorder %s9, 0
    %p85 = por %p83, %p84
    %p86 = scmp.ne.s32.totalorder %s78, %s80
    %p87 = scmp.eq.s32.totalorder %s14, 1
    %p88 = por %p86, %p87
    %p89 = scmp.ne.s32.totalorder %s80, %s81
    %p90 = scmp.eq.s32.totalorder %s14, 0
    %p91 = por %p89, %p90
    %p92 = scmp.ne.s32.totalorder %s80, %s81
    %p93 = scmp.eq.s32.totalorder %s15, 1
    %p94 = por %p92, %p93
    %p96 = scmp.ne.s32.totalorder %s81, %s95
    %p97 = scmp.eq.s32.totalorder %s15, 0
    %p98 = por %p96, %p97
    %s99 = ssub.s32 %s16, %s28
    %s100 = ssub.s32 %s17, %s24
    %s101 = sor.u32 %s99, %s100
    %p102 = scmp.eq.s32.totalorder %s101, 0
    %s104 = sadd.s32 %s103, 1
    %s105 = scalar_select %p102, %s103, %s104
    %p108 = pneg %p102
    %p109 = scmp.eq.s32.totalorder %s9, 1
    %p110 = por %p108, %p109
    %p111 = scmp.ne.s32.totalorder %s103, %s106
    %p112 = scmp.eq.s32.totalorder %s9, 0
    %p113 = por %p111, %p112
    %p114 = scmp.ne.s32.totalorder %s103, %s106
    %p115 = scmp.eq.s32.totalorder %s14, 1
    %p116 = por %p114, %p115
    %p117 = scmp.ne.s32.totalorder %s106, %s107
    %p118 = scmp.eq.s32.totalorder %s14, 0
    %p119 = por %p117, %p118
    %p120 = scmp.ne.s32.totalorder %s106, %s107
    %p121 = scmp.eq.s32.totalorder %s15, 1
    %p122 = por %p120, %p121
    %p124 = scmp.ne.s32.totalorder %s107, %s123
    %p125 = scmp.eq.s32.totalorder %s15, 0
    %p126 = por %p124, %p125
    %p127 = scmp.le.s32.totalorder 1, %s9
    %p128 = scmp.lt.s32.totalorder %s9, 3
    %p129 = pnand %p127, %p128
    %p130 = pneg %p129
    // Predicated region
    $region9: #{rrdb_forward.15} parent=5 // pred_check
      _
    $region10: #{rrdb_forward.15} parent=5 // pred_check_branch
      %132 = sbr.rel (%p129) target = $region12
    $region11: #{rrdb_forward.15} parent=5 // pred_region
      %s133 = ssub.s32 %s9, 1
      // Predicated region
      $region13: #{rrdb_forward.15} parent=11 // pred_check
        %p134 = pneg %p70
      $region14: #{rrdb_forward.15} parent=11 // pred_check_branch
        %136 = sbr.rel (%p134) target = $region16
      $region15: #{rrdb_forward.15} parent=11 // pred_region
        _
      $region16: #{rrdb_forward.15} parent=11 // pred_fallthru
        _
      // Predicated region
      $region17: #{rrdb_forward.15} parent=11 // pred_check
        %p137 = pneg %p91
      $region18: #{rrdb_forward.15} parent=11 // pred_check_branch
        %139 = sbr.rel (%p137) target = $region20
      $region19: #{rrdb_forward.15} parent=11 // pred_region
        _
      $region20: #{rrdb_forward.15} parent=11 // pred_fallthru
        _
    $region12: #{rrdb_forward.15} parent=5 // pred_fallthru
      _
    %p140 = scmp.lt.s32.totalorder %s9, 2
    // Predicated region
    $region21: #{rrdb_forward.15} parent=5 // pred_check
      %p141 = pneg %p140
    $region22: #{rrdb_forward.15} parent=5 // pred_check_branch
      %143 = sbr.rel (%p141) target = $region24
    $region23: #{rrdb_forward.15} parent=5 // pred_region
      // Predicated region
      $region25: #{rrdb_forward.15} parent=23 // pred_check
        %p144 = pneg %p43
      $region26: #{rrdb_forward.15} parent=23 // pred_check_branch
        %146 = sbr.rel (%p144) target = $region28
      $region27: #{rrdb_forward.15} parent=23 // pred_region
        %p147 = scmp.lt.s32.totalorder %s16, 1
        %s148 = scalar_select %p147, %s16, 1
        %p149 = scmp.lt.s32.totalorder %s17, 0
        %s150 = scalar_select %p149, %s17, 0
        %s151 = smul.addr %s150, 54
        %s152 = smul.addr %s148, 54
        %s153 = sadd.s32 %s151, %s152
        %s154 = smul.addr %s153, 8
        %s155 = scalar_lea.vmem %s0, %s154
      $region28: #{rrdb_forward.15} parent=23 // pred_fallthru
        _
    $region24: #{rrdb_forward.15} parent=5 // pred_fallthru
      _
    %p156 = scmp.le.s32.totalorder 1, %s9
    %p157 = scmp.lt.s32.totalorder %s9, 3
    %p158 = pnand %p156, %p157
    %p159 = pneg %p158
    // Predicated region
    $region29: #{rrdb_forward.15} parent=5 // pred_check
      _
    $region30: #{rrdb_forward.15} parent=5 // pred_check_branch
      %161 = sbr.rel (%p158) target = $region32
    $region31: #{rrdb_forward.15} parent=5 // pred_region
      %s162 = ssub.s32 %s9, 1
      %p163 = scmp.lt.s32.totalorder %s18, 1
      %s164 = scalar_select %p163, %s18, 1
      %p165 = scmp.lt.s32.totalorder %s19, 0
      %s166 = scalar_select %p165, %s19, 0
      %s167 = smul.addr %s166, 54
      %s168 = smul.addr %s164, 54
      %s169 = sadd.s32 %s167, %s168
      %s170 = smul.addr %s169, 8
      %s171 = scalar_lea.vmem %s0, %s170
      %p172 = pneg %p49
      %p173 = pneg %p46
      %p174 = pneg %p70
      %p175 = pneg %p67
      %p176 = pneg %p91
      %p177 = pneg %p88
      %p178 = pneg %p119
      %p179 = pneg %p116
      %s180 = smul.u32 16, %s19
      %p181 = scmp.lt.s32.totalorder %s18, 1
      %s182 = scalar_select %p181, %s18, 1
      %p183 = scmp.lt.s32.totalorder %s180, 15
      %s184 = scalar_select %p183, %s180, 15
      %s185 = smul.addr %s184, 2
      %s186 = smul.addr %s182, 32
      %s187 = sadd.s32 %s185, %s186
      %s188 = smul.addr %s187, 8
      %s189 = scalar_lea.vmem %s3, %s188
      %p190 = scmp.lt.s32.totalorder %s18, 1
      %s191 = scalar_select %p190, %s18, 1
      %p192 = scmp.lt.s32.totalorder %s19, 0
      %s193 = scalar_select %p192, %s19, 0
      %s194 = smul.addr %s193, 54
      %s195 = smul.addr %s191, 54
      %s196 = sadd.s32 %s194, %s195
      %s197 = smul.addr %s196, 8
      %s198 = scalar_lea.vmem %s0, %s197
      %s199 = smul.u32 16, %s19
      %p200 = scmp.lt.s32.totalorder %s18, 1
      %s201 = scalar_select %p200, %s18, 1
      %p202 = scmp.lt.s32.totalorder %s199, 15
      %s203 = scalar_select %p202, %s199, 15
      %s204 = smul.addr %s203, 2
      %s205 = smul.addr %s201, 32
      %s206 = sadd.s32 %s204, %s205
      %s207 = smul.addr %s206, 8
      %s208 = scalar_lea.vmem %s3, %s207
      %s209 = smul.u32 16, %s19
      %v210 = vld [vmem:[%s198] sm:$0xff]
      %v211 = vld [vmem:[%s198 + $0x8] sm:$0xff]
      %v212 = vld [vmem:[%s198 + $0x18] sm:$0xff]
      %v213 = vld [vmem:[%s198 + $0x20] sm:$0xff]
      %v214 = vld [vmem:[%s198 + $0x30] sm:$0xff]
      %v215 = vld [vmem:[%s198 + $0x38] sm:$0xff]
      %v216 = vld [vmem:[%s198 + $0x48] sm:$0xff]
      %v217 = vld [vmem:[%s198 + $0x50] sm:$0xff]
      %v218 = vld [vmem:[%s198 + $0x60] sm:$0xff]
      %v219 = vld [vmem:[%s198 + $0x68] sm:$0xff]
      %v220 = vld [vmem:[%s198 + $0x78] sm:$0xff]
      %v221 = vld [vmem:[%s198 + $0x80] sm:$0xff]
      %v222 = vld [vmem:[%s198 + $0x90] sm:$0xff]
      %v223 = vld [vmem:[%s198 + $0x98] sm:$0xff]
      %v224 = vld [vmem:[%s198 + $0xa8] sm:$0xff]
      %v225 = vld [vmem:[%s198 + $0xb0] sm:$0xff]
      %v226 = vld [vmem:[%s198 + $0xc0] sm:$0xff]
      %v227 = vld [vmem:[%s198 + $0xc8] sm:$0xff]
      %v228 = vld [vmem:[%s198 + $0xd8] sm:$0xff]
      %v229 = vld [vmem:[%s198 + $0xe0] sm:$0xff]
      %v230 = vld [vmem:[%s198 + $0xf0] sm:$0xff]
      %v231 = vld [vmem:[%s198 + $0xf8] sm:$0xff]
      %v232 = vld [vmem:[%s198 + $0x108] sm:$0xff]
      %v233 = vld [vmem:[%s198 + $0x110] sm:$0xff]
      %v234 = vld [vmem:[%s198 + $0x120] sm:$0xff]
      %v235 = vld [vmem:[%s198 + $0x128] sm:$0xff]
      %v236 = vld [vmem:[%s198 + $0x138] sm:$0xff]
      %v237 = vld [vmem:[%s198 + $0x140] sm:$0xff]
      %v238 = vld [vmem:[%s198 + $0x150] sm:$0xff]
      %v239 = vld [vmem:[%s198 + $0x158] sm:$0xff]
      %v240 = vld [vmem:[%s198 + $0x168] sm:$0xff]
      %v241 = vld [vmem:[%s198 + $0x170] sm:$0xff]
      %242 = vst [vmem:[#allocation2] sm:$0xff] %v210
      %243 = vst [vmem:[#allocation2 + $0x48] sm:$0xff] %v211
      %244 = vst [vmem:[#allocation2 + $0x90] sm:$0xff] %v212
      %245 = vst [vmem:[#allocation2 + $0xd8] sm:$0xff] %v213
      %246 = vst [vmem:[#allocation2 + $0x120] sm:$0xff] %v214
      %247 = vst [vmem:[#allocation2 + $0x168] sm:$0xff] %v215
      %248 = vst [vmem:[#allocation2 + $0x1b0] sm:$0xff] %v216
      %249 = vst [vmem:[#allocation2 + $0x1f8] sm:$0xff] %v217
      %250 = vst [vmem:[#allocation2 + $0x240] sm:$0xff] %v218
      %251 = vst [vmem:[#allocation2 + $0x288] sm:$0xff] %v219
      %252 = vst [vmem:[#allocation2 + $0x2d0] sm:$0xff] %v220
      %253 = vst [vmem:[#allocation2 + $0x318] sm:$0xff] %v221
      %254 = vst [vmem:[#allocation2 + $0x360] sm:$0xff] %v222
      %255 = vst [vmem:[#allocation2 + $0x3a8] sm:$0xff] %v223
      %256 = vst [vmem:[#allocation2 + $0x3f0] sm:$0xff] %v224
      %257 = vst [vmem:[#allocation2 + $0x438] sm:$0xff] %v225
      %258 = vst [vmem:[#allocation2 + $0x480] sm:$0xff] %v226
      %259 = vst [vmem:[#allocation2 + $0x4c8] sm:$0xff] %v227
      %260 = vst [vmem:[#allocation2 + $0x510] sm:$0xff] %v228
      %261 = vst [vmem:[#allocation2 + $0x558] sm:$0xff] %v229
      %262 = vst [vmem:[#allocation2 + $0x5a0] sm:$0xff] %v230
      %263 = vst [vmem:[#allocation2 + $0x5e8] sm:$0xff] %v231
      %264 = vst [vmem:[#allocation2 + $0x630] sm:$0xff] %v232
      %265 = vst [vmem:[#allocation2 + $0x678] sm:$0xff] %v233
      %266 = vst [vmem:[#allocation2 + $0x6c0] sm:$0xff] %v234
      %267 = vst [vmem:[#allocation2 + $0x708] sm:$0xff] %v235
      %268 = vst [vmem:[#allocation2 + $0x750] sm:$0xff] %v236
      %269 = vst [vmem:[#allocation2 + $0x798] sm:$0xff] %v237
      %270 = vst [vmem:[#allocation2 + $0x7e0] sm:$0xff] %v238
      %271 = vst [vmem:[#allocation2 + $0x828] sm:$0xff] %v239
      %272 = vst [vmem:[#allocation2 + $0x870] sm:$0xff] %v240
      %273 = vst [vmem:[#allocation2 + $0x8b8] sm:$0xff] %v241
      %v274 = vld [vmem:[%s198 + $0x1] sm:$0xff]
      %v275 = vld [vmem:[%s198 + $0x9] sm:$0xff]
      %v276 = vld [vmem:[%s198 + $0x19] sm:$0xff]
      %v277 = vld [vmem:[%s198 + $0x21] sm:$0xff]
      %v278 = vld [vmem:[%s198 + $0x31] sm:$0xff]
      %v279 = vld [vmem:[%s198 + $0x39] sm:$0xff]
      %v280 = vld [vmem:[%s198 + $0x49] sm:$0xff]
      %v281 = vld [vmem:[%s198 + $0x51] sm:$0xff]
      %v282 = vld [vmem:[%s198 + $0x61] sm:$0xff]
      %v283 = vld [vmem:[%s198 + $0x69] sm:$0xff]
      %v284 = vld [vmem:[%s198 + $0x79] sm:$0xff]
      %v285 = vld [vmem:[%s198 + $0x81] sm:$0xff]
      %v286 = vld [vmem:[%s198 + $0x91] sm:$0xff]
      %v287 = vld [vmem:[%s198 + $0x99] sm:$0xff]
      %v288 = vld [vmem:[%s198 + $0xa9] sm:$0xff]
      %v289 = vld [vmem:[%s198 + $0xb1] sm:$0xff]
      %v290 = vld [vmem:[%s198 + $0xc1] sm:$0xff]
      %v291 = vld [vmem:[%s198 + $0xc9] sm:$0xff]
      %v292 = vld [vmem:[%s198 + $0xd9] sm:$0xff]
      %v293 = vld [vmem:[%s198 + $0xe1] sm:$0xff]
      %v294 = vld [vmem:[%s198 + $0xf1] sm:$0xff]
      %v295 = vld [vmem:[%s198 + $0xf9] sm:$0xff]
      %v296 = vld [vmem:[%s198 + $0x109] sm:$0xff]
      %v297 = vld [vmem:[%s198 + $0x111] sm:$0xff]
      %v298 = vld [vmem:[%s198 + $0x121] sm:$0xff]
      %v299 = vld [vmem:[%s198 + $0x129] sm:$0xff]
      %v300 = vld [vmem:[%s198 + $0x139] sm:$0xff]
      %v301 = vld [vmem:[%s198 + $0x141] sm:$0xff]
      %v302 = vld [vmem:[%s198 + $0x151] sm:$0xff]
      %v303 = vld [vmem:[%s198 + $0x159] sm:$0xff]
      %v304 = vld [vmem:[%s198 + $0x169] sm:$0xff]
      %v305 = vld [vmem:[%s198 + $0x171] sm:$0xff]
      %306 = vst [vmem:[#allocation2 + $0x8] sm:$0xff] %v274
      %307 = vst [vmem:[#allocation2 + $0x50] sm:$0xff] %v275
      %308 = vst [vmem:[#allocation2 + $0x98] sm:$0xff] %v276
      %309 = vst [vmem:[#allocation2 + $0xe0] sm:$0xff] %v277
      %310 = vst [vmem:[#allocation2 + $0x128] sm:$0xff] %v278
      %311 = vst [vmem:[#allocation2 + $0x170] sm:$0xff] %v279
      %312 = vst [vmem:[#allocation2 + $0x1b8] sm:$0xff] %v280
      %313 = vst [vmem:[#allocation2 + $0x200] sm:$0xff] %v281
      %314 = vst [vmem:[#allocation2 + $0x248] sm:$0xff] %v282
      %315 = vst [vmem:[#allocation2 + $0x290] sm:$0xff] %v283
      %316 = vst [vmem:[#allocation2 + $0x2d8] sm:$0xff] %v284
      %317 = vst [vmem:[#allocation2 + $0x320] sm:$0xff] %v285
      %318 = vst [vmem:[#allocation2 + $0x368] sm:$0xff] %v286
      %319 = vst [vmem:[#allocation2 + $0x3b0] sm:$0xff] %v287
      %320 = vst [vmem:[#allocation2 + $0x3f8] sm:$0xff] %v288
      %321 = vst [vmem:[#allocation2 + $0x440] sm:$0xff] %v289
      %322 = vst [vmem:[#allocation2 + $0x488] sm:$0xff] %v290
      %323 = vst [vmem:[#allocation2 + $0x4d0] sm:$0xff] %v291
      %324 = vst [vmem:[#allocation2 + $0x518] sm:$0xff] %v292
      %325 = vst [vmem:[#allocation2 + $0x560] sm:$0xff] %v293
      %326 = vst [vmem:[#allocation2 + $0x5a8] sm:$0xff] %v294
      %327 = vst [vmem:[#allocation2 + $0x5f0] sm:$0xff] %v295
      %328 = vst [vmem:[#allocation2 + $0x638] sm:$0xff] %v296
      %329 = vst [vmem:[#allocation2 + $0x680] sm:$0xff] %v297
      %330 = vst [vmem:[#allocation2 + $0x6c8] sm:$0xff] %v298
      %331 = vst [vmem:[#allocation2 + $0x710] sm:$0xff] %v299
      %332 = vst [vmem:[#allocation2 + $0x758] sm:$0xff] %v300
      %333 = vst [vmem:[#allocation2 + $0x7a0] sm:$0xff] %v301
      %334 = vst [vmem:[#allocation2 + $0x7e8] sm:$0xff] %v302
      %335 = vst [vmem:[#allocation2 + $0x830] sm:$0xff] %v303
      %336 = vst [vmem:[#allocation2 + $0x878] sm:$0xff] %v304
      %337 = vst [vmem:[#allocation2 + $0x8c0] sm:$0xff] %v305
      %v338 = vld [vmem:[%s198 + $0x2] sm:$0xff]
      %v339 = vld [vmem:[%s198 + $0xa] sm:$0xff]
      %v340 = vld [vmem:[%s198 + $0x1a] sm:$0xff]
      %v341 = vld [vmem:[%s198 + $0x22] sm:$0xff]
      %v342 = vld [vmem:[%s198 + $0x32] sm:$0xff]
      %v343 = vld [vmem:[%s198 + $0x3a] sm:$0xff]
      %v344 = vld [vmem:[%s198 + $0x4a] sm:$0xff]
      %v345 = vld [vmem:[%s198 + $0x52] sm:$0xff]
      %v346 = vld [vmem:[%s198 + $0x62] sm:$0xff]
      %v347 = vld [vmem:[%s198 + $0x6a] sm:$0xff]
      %v348 = vld [vmem:[%s198 + $0x7a] sm:$0xff]
      %v349 = vld [vmem:[%s198 + $0x82] sm:$0xff]
      %v350 = vld [vmem:[%s198 + $0x92] sm:$0xff]
      %v351 = vld [vmem:[%s198 + $0x9a] sm:$0xff]
      %v352 = vld [vmem:[%s198 + $0xaa] sm:$0xff]
      %v353 = vld [vmem:[%s198 + $0xb2] sm:$0xff]
      %v354 = vld [vmem:[%s198 + $0xc2] sm:$0xff]
      %v355 = vld [vmem:[%s198 + $0xca] sm:$0xff]
      %v356 = vld [vmem:[%s198 + $0xda] sm:$0xff]
      %v357 = vld [vmem:[%s198 + $0xe2] sm:$0xff]
      %v358 = vld [vmem:[%s198 + $0xf2] sm:$0xff]
      %v359 = vld [vmem:[%s198 + $0xfa] sm:$0xff]
      %v360 = vld [vmem:[%s198 + $0x10a] sm:$0xff]
      %v361 = vld [vmem:[%s198 + $0x112] sm:$0xff]
      %v362 = vld [vmem:[%s198 + $0x122] sm:$0xff]
      %v363 = vld [vmem:[%s198 + $0x12a] sm:$0xff]
      %v364 = vld [vmem:[%s198 + $0x13a] sm:$0xff]
      %v365 = vld [vmem:[%s198 + $0x142] sm:$0xff]
      %v366 = vld [vmem:[%s198 + $0x152] sm:$0xff]
      %v367 = vld [vmem:[%s198 + $0x15a] sm:$0xff]
      %v368 = vld [vmem:[%s198 + $0x16a] sm:$0xff]
      %v369 = vld [vmem:[%s198 + $0x172] sm:$0xff]
      %370 = vst [vmem:[#allocation2 + $0x10] sm:$0xff] %v338
      %371 = vst [vmem:[#allocation2 + $0x58] sm:$0xff] %v339
      %372 = vst [vmem:[#allocation2 + $0xa0] sm:$0xff] %v340
      %373 = vst [vmem:[#allocation2 + $0xe8] sm:$0xff] %v341
      %374 = vst [vmem:[#allocation2 + $0x130] sm:$0xff] %v342
      %375 = vst [vmem:[#allocation2 + $0x178] sm:$0xff] %v343
      %376 = vst [vmem:[#allocation2 + $0x1c0] sm:$0xff] %v344
      %377 = vst [vmem:[#allocation2 + $0x208] sm:$0xff] %v345
      %378 = vst [vmem:[#allocation2 + $0x250] sm:$0xff] %v346
      %379 = vst [vmem:[#allocation2 + $0x298] sm:$0xff] %v347
      %380 = vst [vmem:[#allocation2 + $0x2e0] sm:$0xff] %v348
      %381 = vst [vmem:[#allocation2 + $0x328] sm:$0xff] %v349
      %382 = vst [vmem:[#allocation2 + $0x370] sm:$0xff] %v350
      %383 = vst [vmem:[#allocation2 + $0x3b8] sm:$0xff] %v351
      %384 = vst [vmem:[#allocation2 + $0x400] sm:$0xff] %v352
      %385 = vst [vmem:[#allocation2 + $0x448] sm:$0xff] %v353
      %386 = vst [vmem:[#allocation2 + $0x490] sm:$0xff] %v354
      %387 = vst [vmem:[#allocation2 + $0x4d8] sm:$0xff] %v355
      %388 = vst [vmem:[#allocation2 + $0x520] sm:$0xff] %v356
      %389 = vst [vmem:[#allocation2 + $0x568] sm:$0xff] %v357
      %390 = vst [vmem:[#allocation2 + $0x5b0] sm:$0xff] %v358
      %391 = vst [vmem:[#allocation2 + $0x5f8] sm:$0xff] %v359
      %392 = vst [vmem:[#allocation2 + $0x640] sm:$0xff] %v360
      %393 = vst [vmem:[#allocation2 + $0x688] sm:$0xff] %v361
      %394 = vst [vmem:[#allocation2 + $0x6d0] sm:$0xff] %v362
      %395 = vst [vmem:[#allocation2 + $0x718] sm:$0xff] %v363
      %396 = vst [vmem:[#allocation2 + $0x760] sm:$0xff] %v364
      %397 = vst [vmem:[#allocation2 + $0x7a8] sm:$0xff] %v365
      %398 = vst [vmem:[#allocation2 + $0x7f0] sm:$0xff] %v366
      %399 = vst [vmem:[#allocation2 + $0x838] sm:$0xff] %v367
      %400 = vst [vmem:[#allocation2 + $0x880] sm:$0xff] %v368
      %401 = vst [vmem:[#allocation2 + $0x8c8] sm:$0xff] %v369
      %s402 = scalar_lea.vmem %s198, 24
      %v403 = vld [vmem:[%s402] sm:$0xff]
      %v404 = vld [vmem:[%s402 + $0x8] sm:$0xff]
      %v405 = vld [vmem:[%s402 + $0x18] sm:$0xff]
      %v406 = vld [vmem:[%s402 + $0x20] sm:$0xff]
      %v407 = vld [vmem:[%s402 + $0x30] sm:$0xff]
      %v408 = vld [vmem:[%s402 + $0x38] sm:$0xff]
      %v409 = vld [vmem:[%s402 + $0x48] sm:$0xff]
      %v410 = vld [vmem:[%s402 + $0x50] sm:$0xff]
      %v411 = vld [vmem:[%s402 + $0x60] sm:$0xff]
      %v412 = vld [vmem:[%s402 + $0x68] sm:$0xff]
      %v413 = vld [vmem:[%s402 + $0x78] sm:$0xff]
      %v414 = vld [vmem:[%s402 + $0x80] sm:$0xff]
      %v415 = vld [vmem:[%s402 + $0x90] sm:$0xff]
      %v416 = vld [vmem:[%s402 + $0x98] sm:$0xff]
      %v417 = vld [vmem:[%s402 + $0xa8] sm:$0xff]
      %v418 = vld [vmem:[%s402 + $0xb0] sm:$0xff]
      %v419 = vld [vmem:[%s402 + $0xc0] sm:$0xff]
      %v420 = vld [vmem:[%s402 + $0xc8] sm:$0xff]
      %v421 = vld [vmem:[%s402 + $0xd8] sm:$0xff]
      %v422 = vld [vmem:[%s402 + $0xe0] sm:$0xff]
      %v423 = vld [vmem:[%s402 + $0xf0] sm:$0xff]
      %v424 = vld [vmem:[%s402 + $0xf8] sm:$0xff]
      %v425 = vld [vmem:[%s402 + $0x108] sm:$0xff]
      %v426 = vld [vmem:[%s402 + $0x110] sm:$0xff]
      %v427 = vld [vmem:[%s402 + $0x120] sm:$0xff]
      %v428 = vld [vmem:[%s402 + $0x128] sm:$0xff]
      %v429 = vld [vmem:[%s402 + $0x138] sm:$0xff]
      %v430 = vld [vmem:[%s402 + $0x140] sm:$0xff]
      %v431 = vld [vmem:[%s402 + $0x150] sm:$0xff]
      %v432 = vld [vmem:[%s402 + $0x158] sm:$0xff]
      %v433 = vld [vmem:[%s402 + $0x168] sm:$0xff]
      %v434 = vld [vmem:[%s402 + $0x170] sm:$0xff]
      %435 = vst [vmem:[#allocation2 + $0x18] sm:$0xff] %v403
      %436 = vst [vmem:[#allocation2 + $0x60] sm:$0xff] %v404
      %437 = vst [vmem:[#allocation2 + $0xa8] sm:$0xff] %v405
      %438 = vst [vmem:[#allocation2 + $0xf0] sm:$0xff] %v406
      %439 = vst [vmem:[#allocation2 + $0x138] sm:$0xff] %v407
      %440 = vst [vmem:[#allocation2 + $0x180] sm:$0xff] %v408
      %441 = vst [vmem:[#allocation2 + $0x1c8] sm:$0xff] %v409
      %442 = vst [vmem:[#allocation2 + $0x210] sm:$0xff] %v410
      %443 = vst [vmem:[#allocation2 + $0x258] sm:$0xff] %v411
      %444 = vst [vmem:[#allocation2 + $0x2a0] sm:$0xff] %v412
      %445 = vst [vmem:[#allocation2 + $0x2e8] sm:$0xff] %v413
      %446 = vst [vmem:[#allocation2 + $0x330] sm:$0xff] %v414
      %447 = vst [vmem:[#allocation2 + $0x378] sm:$0xff] %v415
      %448 = vst [vmem:[#allocation2 + $0x3c0] sm:$0xff] %v416
      %449 = vst [vmem:[#allocation2 + $0x408] sm:$0xff] %v417
      %450 = vst [vmem:[#allocation2 + $0x450] sm:$0xff] %v418
      %451 = vst [vmem:[#allocation2 + $0x498] sm:$0xff] %v419
      %452 = vst [vmem:[#allocation2 + $0x4e0] sm:$0xff] %v420
      %453 = vst [vmem:[#allocation2 + $0x528] sm:$0xff] %v421
      %454 = vst [vmem:[#allocation2 + $0x570] sm:$0xff] %v422
      %455 = vst [vmem:[#allocation2 + $0x5b8] sm:$0xff] %v423
      %456 = vst [vmem:[#allocation2 + $0x600] sm:$0xff] %v424
      %457 = vst [vmem:[#allocation2 + $0x648] sm:$0xff] %v425
      %458 = vst [vmem:[#allocation2 + $0x690] sm:$0xff] %v426
      %459 = vst [vmem:[#allocation2 + $0x6d8] sm:$0xff] %v427
      %460 = vst [vmem:[#allocation2 + $0x720] sm:$0xff] %v428
      %461 = vst [vmem:[#allocation2 + $0x768] sm:$0xff] %v429
      %462 = vst [vmem:[#allocation2 + $0x7b0] sm:$0xff] %v430
      %463 = vst [vmem:[#allocation2 + $0x7f8] sm:$0xff] %v431
      %464 = vst [vmem:[#allocation2 + $0x840] sm:$0xff] %v432
      %465 = vst [vmem:[#allocation2 + $0x888] sm:$0xff] %v433
      %466 = vst [vmem:[#allocation2 + $0x8d0] sm:$0xff] %v434
      %v467 = vld [vmem:[%s402 + $0x1] sm:$0xff]
      %v468 = vld [vmem:[%s402 + $0x9] sm:$0xff]
      %v469 = vld [vmem:[%s402 + $0x19] sm:$0xff]
      %v470 = vld [vmem:[%s402 + $0x21] sm:$0xff]
      %v471 = vld [vmem:[%s402 + $0x31] sm:$0xff]
      %v472 = vld [vmem:[%s402 + $0x39] sm:$0xff]
      %v473 = vld [vmem:[%s402 + $0x49] sm:$0xff]
      %v474 = vld [vmem:[%s402 + $0x51] sm:$0xff]
      %v475 = vld [vmem:[%s402 + $0x61] sm:$0xff]
      %v476 = vld [vmem:[%s402 + $0x69] sm:$0xff]
      %v477 = vld [vmem:[%s402 + $0x79] sm:$0xff]
      %v478 = vld [vmem:[%s402 + $0x81] sm:$0xff]
      %v479 = vld [vmem:[%s402 + $0x91] sm:$0xff]
      %v480 = vld [vmem:[%s402 + $0x99] sm:$0xff]
      %v481 = vld [vmem:[%s402 + $0xa9] sm:$0xff]
      %v482 = vld [vmem:[%s402 + $0xb1] sm:$0xff]
      %v483 = vld [vmem:[%s402 + $0xc1] sm:$0xff]
      %v484 = vld [vmem:[%s402 + $0xc9] sm:$0xff]
      %v485 = vld [vmem:[%s402 + $0xd9] sm:$0xff]
      %v486 = vld [vmem:[%s402 + $0xe1] sm:$0xff]
      %v487 = vld [vmem:[%s402 + $0xf1] sm:$0xff]
      %v488 = vld [vmem:[%s402 + $0xf9] sm:$0xff]
      %v489 = vld [vmem:[%s402 + $0x109] sm:$0xff]
      %v490 = vld [vmem:[%s402 + $0x111] sm:$0xff]
      %v491 = vld [vmem:[%s402 + $0x121] sm:$0xff]
      %v492 = vld [vmem:[%s402 + $0x129] sm:$0xff]
      %v493 = vld [vmem:[%s402 + $0x139] sm:$0xff]
      %v494 = vld [vmem:[%s402 + $0x141] sm:$0xff]
      %v495 = vld [vmem:[%s402 + $0x151] sm:$0xff]
      %v496 = vld [vmem:[%s402 + $0x159] sm:$0xff]
      %v497 = vld [vmem:[%s402 + $0x169] sm:$0xff]
      %v498 = vld [vmem:[%s402 + $0x171] sm:$0xff]
      %499 = vst [vmem:[#allocation2 + $0x20] sm:$0xff] %v467
      %500 = vst [vmem:[#allocation2 + $0x68] sm:$0xff] %v468
      %501 = vst [vmem:[#allocation2 + $0xb0] sm:$0xff] %v469
      %502 = vst [vmem:[#allocation2 + $0xf8] sm:$0xff] %v470
      %503 = vst [vmem:[#allocation2 + $0x140] sm:$0xff] %v471
      %504 = vst [vmem:[#allocation2 + $0x188] sm:$0xff] %v472
      %505 = vst [vmem:[#allocation2 + $0x1d0] sm:$0xff] %v473
      %506 = vst [vmem:[#allocation2 + $0x218] sm:$0xff] %v474
      %507 = vst [vmem:[#allocation2 + $0x260] sm:$0xff] %v475
      %508 = vst [vmem:[#allocation2 + $0x2a8] sm:$0xff] %v476
      %509 = vst [vmem:[#allocation2 + $0x2f0] sm:$0xff] %v477
      %510 = vst [vmem:[#allocation2 + $0x338] sm:$0xff] %v478
      %511 = vst [vmem:[#allocation2 + $0x380] sm:$0xff] %v479
      %512 = vst [vmem:[#allocation2 + $0x3c8] sm:$0xff] %v480
      %513 = vst [vmem:[#allocation2 + $0x410] sm:$0xff] %v481
      %514 = vst [vmem:[#allocation2 + $0x458] sm:$0xff] %v482
      %515 = vst [vmem:[#allocation2 + $0x4a0] sm:$0xff] %v483
      %516 = vst [vmem:[#allocation2 + $0x4e8] sm:$0xff] %v484
      %517 = vst [vmem:[#allocation2 + $0x530] sm:$0xff] %v485
      %518 = vst [vmem:[#allocation2 + $0x578] sm:$0xff] %v486
      %519 = vst [vmem:[#allocation2 + $0x5c0] sm:$0xff] %v487
      %520 = vst [vmem:[#allocation2 + $0x608] sm:$0xff] %v488
      %521 = vst [vmem:[#allocation2 + $0x650] sm:$0xff] %v489
      %522 = vst [vmem:[#allocation2 + $0x698] sm:$0xff] %v490
      %523 = vst [vmem:[#allocation2 + $0x6e0] sm:$0xff] %v491
      %524 = vst [vmem:[#allocation2 + $0x728] sm:$0xff] %v492
      %525 = vst [vmem:[#allocation2 + $0x770] sm:$0xff] %v493
      %526 = vst [vmem:[#allocation2 + $0x7b8] sm:$0xff] %v494
      %527 = vst [vmem:[#allocation2 + $0x800] sm:$0xff] %v495
      %528 = vst [vmem:[#allocation2 + $0x848] sm:$0xff] %v496
      %529 = vst [vmem:[#allocation2 + $0x890] sm:$0xff] %v497
      %530 = vst [vmem:[#allocation2 + $0x8d8] sm:$0xff] %v498
      %v531 = vld [vmem:[%s402 + $0x2] sm:$0xff]
      %v532 = vld [vmem:[%s402 + $0xa] sm:$0xff]
      %v533 = vld [vmem:[%s402 + $0x1a] sm:$0xff]
      %v534 = vld [vmem:[%s402 + $0x22] sm:$0xff]
      %v535 = vld [vmem:[%s402 + $0x32] sm:$0xff]
      %v536 = vld [vmem:[%s402 + $0x3a] sm:$0xff]
      %v537 = vld [vmem:[%s402 + $0x4a] sm:$0xff]
      %v538 = vld [vmem:[%s402 + $0x52] sm:$0xff]
      %v539 = vld [vmem:[%s402 + $0x62] sm:$0xff]
      %v540 = vld [vmem:[%s402 + $0x6a] sm:$0xff]
      %v541 = vld [vmem:[%s402 + $0x7a] sm:$0xff]
      %v542 = vld [vmem:[%s402 + $0x82] sm:$0xff]
      %v543 = vld [vmem:[%s402 + $0x92] sm:$0xff]
      %v544 = vld [vmem:[%s402 + $0x9a] sm:$0xff]
      %v545 = vld [vmem:[%s402 + $0xaa] sm:$0xff]
      %v546 = vld [vmem:[%s402 + $0xb2] sm:$0xff]
      %v547 = vld [vmem:[%s402 + $0xc2] sm:$0xff]
      %v548 = vld [vmem:[%s402 + $0xca] sm:$0xff]
      %v549 = vld [vmem:[%s402 + $0xda] sm:$0xff]
      %v550 = vld [vmem:[%s402 + $0xe2] sm:$0xff]
      %v551 = vld [vmem:[%s402 + $0xf2] sm:$0xff]
      %v552 = vld [vmem:[%s402 + $0xfa] sm:$0xff]
      %v553 = vld [vmem:[%s402 + $0x10a] sm:$0xff]
      %v554 = vld [vmem:[%s402 + $0x112] sm:$0xff]
      %v555 = vld [vmem:[%s402 + $0x122] sm:$0xff]
      %v556 = vld [vmem:[%s402 + $0x12a] sm:$0xff]
      %v557 = vld [vmem:[%s402 + $0x13a] sm:$0xff]
      %v558 = vld [vmem:[%s402 + $0x142] sm:$0xff]
      %v559 = vld [vmem:[%s402 + $0x152] sm:$0xff]
      %v560 = vld [vmem:[%s402 + $0x15a] sm:$0xff]
      %v561 = vld [vmem:[%s402 + $0x16a] sm:$0xff]
      %v562 = vld [vmem:[%s402 + $0x172] sm:$0xff]
      %563 = vst [vmem:[#allocation2 + $0x28] sm:$0xff] %v531
      %564 = vst [vmem:[#allocation2 + $0x70] sm:$0xff] %v532
      %565 = vst [vmem:[#allocation2 + $0xb8] sm:$0xff] %v533
      %566 = vst [vmem:[#allocation2 + $0x100] sm:$0xff] %v534
      %567 = vst [vmem:[#allocation2 + $0x148] sm:$0xff] %v535
      %568 = vst [vmem:[#allocation2 + $0x190] sm:$0xff] %v536
      %569 = vst [vmem:[#allocation2 + $0x1d8] sm:$0xff] %v537
      %570 = vst [vmem:[#allocation2 + $0x220] sm:$0xff] %v538
      %571 = vst [vmem:[#allocation2 + $0x268] sm:$0xff] %v539
      %572 = vst [vmem:[#allocation2 + $0x2b0] sm:$0xff] %v540
      %573 = vst [vmem:[#allocation2 + $0x2f8] sm:$0xff] %v541
      %574 = vst [vmem:[#allocation2 + $0x340] sm:$0xff] %v542
      %575 = vst [vmem:[#allocation2 + $0x388] sm:$0xff] %v543
      %576 = vst [vmem:[#allocation2 + $0x3d0] sm:$0xff] %v544
      %577 = vst [vmem:[#allocation2 + $0x418] sm:$0xff] %v545
      %578 = vst [vmem:[#allocation2 + $0x460] sm:$0xff] %v546
      %579 = vst [vmem:[#allocation2 + $0x4a8] sm:$0xff] %v547
      %580 = vst [vmem:[#allocation2 + $0x4f0] sm:$0xff] %v548
      %581 = vst [vmem:[#allocation2 + $0x538] sm:$0xff] %v549
      %582 = vst [vmem:[#allocation2 + $0x580] sm:$0xff] %v550
      %583 = vst [vmem:[#allocation2 + $0x5c8] sm:$0xff] %v551
      %584 = vst [vmem:[#allocation2 + $0x610] sm:$0xff] %v552
      %585 = vst [vmem:[#allocation2 + $0x658] sm:$0xff] %v553
      %586 = vst [vmem:[#allocation2 + $0x6a0] sm:$0xff] %v554
      %587 = vst [vmem:[#allocation2 + $0x6e8] sm:$0xff] %v555
      %588 = vst [vmem:[#allocation2 + $0x730] sm:$0xff] %v556
      %589 = vst [vmem:[#allocation2 + $0x778] sm:$0xff] %v557
      %590 = vst [vmem:[#allocation2 + $0x7c0] sm:$0xff] %v558
      %591 = vst [vmem:[#allocation2 + $0x808] sm:$0xff] %v559
      %592 = vst [vmem:[#allocation2 + $0x850] sm:$0xff] %v560
      %593 = vst [vmem:[#allocation2 + $0x898] sm:$0xff] %v561
      %594 = vst [vmem:[#allocation2 + $0x8e0] sm:$0xff] %v562
      %s595 = scalar_lea.vmem %s198, 48
      %v596 = vld [vmem:[%s595] sm:$0xff]
      %v597 = vld [vmem:[%s595 + $0x8] sm:$0xff]
      %v598 = vld [vmem:[%s595 + $0x18] sm:$0xff]
      %v599 = vld [vmem:[%s595 + $0x20] sm:$0xff]
      %v600 = vld [vmem:[%s595 + $0x30] sm:$0xff]
      %v601 = vld [vmem:[%s595 + $0x38] sm:$0xff]
      %v602 = vld [vmem:[%s595 + $0x48] sm:$0xff]
      %v603 = vld [vmem:[%s595 + $0x50] sm:$0xff]
      %v604 = vld [vmem:[%s595 + $0x60] sm:$0xff]
      %v605 = vld [vmem:[%s595 + $0x68] sm:$0xff]
      %v606 = vld [vmem:[%s595 + $0x78] sm:$0xff]
      %v607 = vld [vmem:[%s595 + $0x80] sm:$0xff]
      %v608 = vld [vmem:[%s595 + $0x90] sm:$0xff]
      %v609 = vld [vmem:[%s595 + $0x98] sm:$0xff]
      %v610 = vld [vmem:[%s595 + $0xa8] sm:$0xff]
      %v611 = vld [vmem:[%s595 + $0xb0] sm:$0xff]
      %v612 = vld [vmem:[%s595 + $0xc0] sm:$0xff]
      %v613 = vld [vmem:[%s595 + $0xc8] sm:$0xff]
      %v614 = vld [vmem:[%s595 + $0xd8] sm:$0xff]
      %v615 = vld [vmem:[%s595 + $0xe0] sm:$0xff]
      %v616 = vld [vmem:[%s595 + $0xf0] sm:$0xff]
      %v617 = vld [vmem:[%s595 + $0xf8] sm:$0xff]
      %v618 = vld [vmem:[%s595 + $0x108] sm:$0xff]
      %v619 = vld [vmem:[%s595 + $0x110] sm:$0xff]
      %v620 = vld [vmem:[%s595 + $0x120] sm:$0xff]
      %v621 = vld [vmem:[%s595 + $0x128] sm:$0xff]
      %v622 = vld [vmem:[%s595 + $0x138] sm:$0xff]
      %v623 = vld [vmem:[%s595 + $0x140] sm:$0xff]
      %v624 = vld [vmem:[%s595 + $0x150] sm:$0xff]
      %v625 = vld [vmem:[%s595 + $0x158] sm:$0xff]
      %v626 = vld [vmem:[%s595 + $0x168] sm:$0xff]
      %v627 = vld [vmem:[%s595 + $0x170] sm:$0xff]
      %628 = vst [vmem:[#allocation2 + $0x30] sm:$0xff] %v596
      %629 = vst [vmem:[#allocation2 + $0x78] sm:$0xff] %v597
      %630 = vst [vmem:[#allocation2 + $0xc0] sm:$0xff] %v598
      %631 = vst [vmem:[#allocation2 + $0x108] sm:$0xff] %v599
      %632 = vst [vmem:[#allocation2 + $0x150] sm:$0xff] %v600
      %633 = vst [vmem:[#allocation2 + $0x198] sm:$0xff] %v601
      %634 = vst [vmem:[#allocation2 + $0x1e0] sm:$0xff] %v602
      %635 = vst [vmem:[#allocation2 + $0x228] sm:$0xff] %v603
      %636 = vst [vmem:[#allocation2 + $0x270] sm:$0xff] %v604
      %637 = vst [vmem:[#allocation2 + $0x2b8] sm:$0xff] %v605
      %638 = vst [vmem:[#allocation2 + $0x300] sm:$0xff] %v606
      %639 = vst [vmem:[#allocation2 + $0x348] sm:$0xff] %v607
      %640 = vst [vmem:[#allocation2 + $0x390] sm:$0xff] %v608
      %641 = vst [vmem:[#allocation2 + $0x3d8] sm:$0xff] %v609
      %642 = vst [vmem:[#allocation2 + $0x420] sm:$0xff] %v610
      %643 = vst [vmem:[#allocation2 + $0x468] sm:$0xff] %v611
      %644 = vst [vmem:[#allocation2 + $0x4b0] sm:$0xff] %v612
      %645 = vst [vmem:[#allocation2 + $0x4f8] sm:$0xff] %v613
      %646 = vst [vmem:[#allocation2 + $0x540] sm:$0xff] %v614
      %647 = vst [vmem:[#allocation2 + $0x588] sm:$0xff] %v615
      %648 = vst [vmem:[#allocation2 + $0x5d0] sm:$0xff] %v616
      %649 = vst [vmem:[#allocation2 + $0x618] sm:$0xff] %v617
      %650 = vst [vmem:[#allocation2 + $0x660] sm:$0xff] %v618
      %651 = vst [vmem:[#allocation2 + $0x6a8] sm:$0xff] %v619
      %652 = vst [vmem:[#allocation2 + $0x6f0] sm:$0xff] %v620
      %653 = vst [vmem:[#allocation2 + $0x738] sm:$0xff] %v621
      %654 = vst [vmem:[#allocation2 + $0x780] sm:$0xff] %v622
      %655 = vst [vmem:[#allocation2 + $0x7c8] sm:$0xff] %v623
      %656 = vst [vmem:[#allocation2 + $0x810] sm:$0xff] %v624
      %657 = vst [vmem:[#allocation2 + $0x858] sm:$0xff] %v625
      %658 = vst [vmem:[#allocation2 + $0x8a0] sm:$0xff] %v626
      %659 = vst [vmem:[#allocation2 + $0x8e8] sm:$0xff] %v627
      %v660 = vld [vmem:[%s595 + $0x1] sm:$0xff]
      %v661 = vld [vmem:[%s595 + $0x9] sm:$0xff]
      %v662 = vld [vmem:[%s595 + $0x19] sm:$0xff]
      %v663 = vld [vmem:[%s595 + $0x21] sm:$0xff]
      %v664 = vld [vmem:[%s595 + $0x31] sm:$0xff]
      %v665 = vld [vmem:[%s595 + $0x39] sm:$0xff]
      %v666 = vld [vmem:[%s595 + $0x49] sm:$0xff]
      %v667 = vld [vmem:[%s595 + $0x51] sm:$0xff]
      %v668 = vld [vmem:[%s595 + $0x61] sm:$0xff]
      %v669 = vld [vmem:[%s595 + $0x69] sm:$0xff]
      %v670 = vld [vmem:[%s595 + $0x79] sm:$0xff]
      %v671 = vld [vmem:[%s595 + $0x81] sm:$0xff]
      %v672 = vld [vmem:[%s595 + $0x91] sm:$0xff]
      %v673 = vld [vmem:[%s595 + $0x99] sm:$0xff]
      %v674 = vld [vmem:[%s595 + $0xa9] sm:$0xff]
      %v675 = vld [vmem:[%s595 + $0xb1] sm:$0xff]
      %v676 = vld [vmem:[%s595 + $0xc1] sm:$0xff]
      %v677 = vld [vmem:[%s595 + $0xc9] sm:$0xff]
      %v678 = vld [vmem:[%s595 + $0xd9] sm:$0xff]
      %v679 = vld [vmem:[%s595 + $0xe1] sm:$0xff]
      %v680 = vld [vmem:[%s595 + $0xf1] sm:$0xff]
      %v681 = vld [vmem:[%s595 + $0xf9] sm:$0xff]
      %v682 = vld [vmem:[%s595 + $0x109] sm:$0xff]
      %v683 = vld [vmem:[%s595 + $0x111] sm:$0xff]
      %v684 = vld [vmem:[%s595 + $0x121] sm:$0xff]
      %v685 = vld [vmem:[%s595 + $0x129] sm:$0xff]
      %v686 = vld [vmem:[%s595 + $0x139] sm:$0xff]
      %v687 = vld [vmem:[%s595 + $0x141] sm:$0xff]
      %v688 = vld [vmem:[%s595 + $0x151] sm:$0xff]
      %v689 = vld [vmem:[%s595 + $0x159] sm:$0xff]
      %v690 = vld [vmem:[%s595 + $0x169] sm:$0xff]
      %v691 = vld [vmem:[%s595 + $0x171] sm:$0xff]
      %692 = vst [vmem:[#allocation2 + $0x38] sm:$0xff] %v660
      %693 = vst [vmem:[#allocation2 + $0x80] sm:$0xff] %v661
      %694 = vst [vmem:[#allocation2 + $0xc8] sm:$0xff] %v662
      %695 = vst [vmem:[#allocation2 + $0x110] sm:$0xff] %v663
      %696 = vst [vmem:[#allocation2 + $0x158] sm:$0xff] %v664
      %697 = vst [vmem:[#allocation2 + $0x1a0] sm:$0xff] %v665
      %698 = vst [vmem:[#allocation2 + $0x1e8] sm:$0xff] %v666
      %699 = vst [vmem:[#allocation2 + $0x230] sm:$0xff] %v667
      %700 = vst [vmem:[#allocation2 + $0x278] sm:$0xff] %v668
      %701 = vst [vmem:[#allocation2 + $0x2c0] sm:$0xff] %v669
      %702 = vst [vmem:[#allocation2 + $0x308] sm:$0xff] %v670
      %703 = vst [vmem:[#allocation2 + $0x350] sm:$0xff] %v671
      %704 = vst [vmem:[#allocation2 + $0x398] sm:$0xff] %v672
      %705 = vst [vmem:[#allocation2 + $0x3e0] sm:$0xff] %v673
      %706 = vst [vmem:[#allocation2 + $0x428] sm:$0xff] %v674
      %707 = vst [vmem:[#allocation2 + $0x470] sm:$0xff] %v675
      %708 = vst [vmem:[#allocation2 + $0x4b8] sm:$0xff] %v676
      %709 = vst [vmem:[#allocation2 + $0x500] sm:$0xff] %v677
      %710 = vst [vmem:[#allocation2 + $0x548] sm:$0xff] %v678
      %711 = vst [vmem:[#allocation2 + $0x590] sm:$0xff] %v679
      %712 = vst [vmem:[#allocation2 + $0x5d8] sm:$0xff] %v680
      %713 = vst [vmem:[#allocation2 + $0x620] sm:$0xff] %v681
      %714 = vst [vmem:[#allocation2 + $0x668] sm:$0xff] %v682
      %715 = vst [vmem:[#allocation2 + $0x6b0] sm:$0xff] %v683
      %716 = vst [vmem:[#allocation2 + $0x6f8] sm:$0xff] %v684
      %717 = vst [vmem:[#allocation2 + $0x740] sm:$0xff] %v685
      %718 = vst [vmem:[#allocation2 + $0x788] sm:$0xff] %v686
      %719 = vst [vmem:[#allocation2 + $0x7d0] sm:$0xff] %v687
      %720 = vst [vmem:[#allocation2 + $0x818] sm:$0xff] %v688
      %721 = vst [vmem:[#allocation2 + $0x860] sm:$0xff] %v689
      %722 = vst [vmem:[#allocation2 + $0x8a8] sm:$0xff] %v690
      %723 = vst [vmem:[#allocation2 + $0x8f0] sm:$0xff] %v691
      %v724 = vld [vmem:[%s595 + $0x2] sm:$0xff]
      %v725 = vld [vmem:[%s595 + $0xa] sm:$0xff]
      %v726 = vld [vmem:[%s595 + $0x1a] sm:$0xff]
      %v727 = vld [vmem:[%s595 + $0x22] sm:$0xff]
      %v728 = vld [vmem:[%s595 + $0x32] sm:$0xff]
      %v729 = vld [vmem:[%s595 + $0x3a] sm:$0xff]
      %v730 = vld [vmem:[%s595 + $0x4a] sm:$0xff]
      %v731 = vld [vmem:[%s595 + $0x52] sm:$0xff]
      %v732 = vld [vmem:[%s595 + $0x62] sm:$0xff]
      %v733 = vld [vmem:[%s595 + $0x6a] sm:$0xff]
      %v734 = vld [vmem:[%s595 + $0x7a] sm:$0xff]
      %v735 = vld [vmem:[%s595 + $0x82] sm:$0xff]
      %v736 = vld [vmem:[%s595 + $0x92] sm:$0xff]
      %v737 = vld [vmem:[%s595 + $0x9a] sm:$0xff]
      %v738 = vld [vmem:[%s595 + $0xaa] sm:$0xff]
      %v739 = vld [vmem:[%s595 + $0xb2] sm:$0xff]
      %v740 = vld [vmem:[%s595 + $0xc2] sm:$0xff]
      %v741 = vld [vmem:[%s595 + $0xca] sm:$0xff]
      %v742 = vld [vmem:[%s595 + $0xda] sm:$0xff]
      %v743 = vld [vmem:[%s595 + $0xe2] sm:$0xff]
      %v744 = vld [vmem:[%s595 + $0xf2] sm:$0xff]
      %v745 = vld [vmem:[%s595 + $0xfa] sm:$0xff]
      %v746 = vld [vmem:[%s595 + $0x10a] sm:$0xff]
      %v747 = vld [vmem:[%s595 + $0x112] sm:$0xff]
      %v748 = vld [vmem:[%s595 + $0x122] sm:$0xff]
      %v749 = vld [vmem:[%s595 + $0x12a] sm:$0xff]
      %v750 = vld [vmem:[%s595 + $0x13a] sm:$0xff]
      %v751 = vld [vmem:[%s595 + $0x142] sm:$0xff]
      %v752 = vld [vmem:[%s595 + $0x152] sm:$0xff]
      %v753 = vld [vmem:[%s595 + $0x15a] sm:$0xff]
      %v754 = vld [vmem:[%s595 + $0x16a] sm:$0xff]
      %v755 = vld [vmem:[%s595 + $0x172] sm:$0xff]
      %756 = vst [vmem:[#allocation2 + $0x40] sm:$0xff] %v724
      %757 = vst [vmem:[#allocation2 + $0x88] sm:$0xff] %v725
      %758 = vst [vmem:[#allocation2 + $0xd0] sm:$0xff] %v726
      %759 = vst [vmem:[#allocation2 + $0x118] sm:$0xff] %v727
      %760 = vst [vmem:[#allocation2 + $0x160] sm:$0xff] %v728
      %761 = vst [vmem:[#allocation2 + $0x1a8] sm:$0xff] %v729
      %762 = vst [vmem:[#allocation2 + $0x1f0] sm:$0xff] %v730
      %763 = vst [vmem:[#allocation2 + $0x238] sm:$0xff] %v731
      %764 = vst [vmem:[#allocation2 + $0x280] sm:$0xff] %v732
      %765 = vst [vmem:[#allocation2 + $0x2c8] sm:$0xff] %v733
      %766 = vst [vmem:[#allocation2 + $0x310] sm:$0xff] %v734
      %767 = vst [vmem:[#allocation2 + $0x358] sm:$0xff] %v735
      %768 = vst [vmem:[#allocation2 + $0x3a0] sm:$0xff] %v736
      %769 = vst [vmem:[#allocation2 + $0x3e8] sm:$0xff] %v737
      %770 = vst [vmem:[#allocation2 + $0x430] sm:$0xff] %v738
      %771 = vst [vmem:[#allocation2 + $0x478] sm:$0xff] %v739
      %772 = vst [vmem:[#allocation2 + $0x4c0] sm:$0xff] %v740
      %773 = vst [vmem:[#allocation2 + $0x508] sm:$0xff] %v741
      %774 = vst [vmem:[#allocation2 + $0x550] sm:$0xff] %v742
      %775 = vst [vmem:[#allocation2 + $0x598] sm:$0xff] %v743
      %776 = vst [vmem:[#allocation2 + $0x5e0] sm:$0xff] %v744
      %777 = vst [vmem:[#allocation2 + $0x628] sm:$0xff] %v745
      %778 = vst [vmem:[#allocation2 + $0x670] sm:$0xff] %v746
      %779 = vst [vmem:[#allocation2 + $0x6b8] sm:$0xff] %v747
      %780 = vst [vmem:[#allocation2 + $0x700] sm:$0xff] %v748
      %781 = vst [vmem:[#allocation2 + $0x748] sm:$0xff] %v749
      %782 = vst [vmem:[#allocation2 + $0x790] sm:$0xff] %v750
      %783 = vst [vmem:[#allocation2 + $0x7d8] sm:$0xff] %v751
      %784 = vst [vmem:[#allocation2 + $0x820] sm:$0xff] %v752
      %785 = vst [vmem:[#allocation2 + $0x868] sm:$0xff] %v753
      %786 = vst [vmem:[#allocation2 + $0x8b0] sm:$0xff] %v754
      %787 = vst [vmem:[#allocation2 + $0x8f8] sm:$0xff] %v755
      %v788 = vld [vmem:[#allocation2] sm:$0xff]
      %v789 = vld [vmem:[#allocation2 + $0x8] sm:$0xff]
      %v790 = vld [vmem:[#allocation2 + $0x10] sm:$0xff]
      %v791 = vld [vmem:[#allocation2 + $0x18] sm:$0xff]
      %v792 = vld [vmem:[#allocation2 + $0x20] sm:$0xff]
      %v793 = vld [vmem:[#allocation2 + $0x28] sm:$0xff]
      %v794 = vld [vmem:[#allocation2 + $0x30] sm:$0xff]
      %v795 = vld [vmem:[#allocation2 + $0x38] sm:$0xff]
      %v796 = vld [vmem:[#allocation2 + $0x40] sm:$0xff]
      %v797 = vld [vmem:[#allocation2 + $0x48] sm:$0xff]
      %v798 = vld [vmem:[#allocation2 + $0x50] sm:$0xff]
      %v799 = vld [vmem:[#allocation2 + $0x58] sm:$0xff]
      %v800 = vld [vmem:[#allocation2 + $0x60] sm:$0xff]
      %v801 = vld [vmem:[#allocation2 + $0x68] sm:$0xff]
      %v802 = vld [vmem:[#allocation2 + $0x70] sm:$0xff]
      %v803 = vld [vmem:[#allocation2 + $0x78] sm:$0xff]
      %v804 = vld [vmem:[#allocation2 + $0x80] sm:$0xff]
      %v805 = vld [vmem:[#allocation2 + $0x88] sm:$0xff]
      %v806 = vld [vmem:[#allocation2 + $0x90] sm:$0xff]
      %v807 = vld [vmem:[#allocation2 + $0x98] sm:$0xff]
      %v808 = vld [vmem:[#allocation2 + $0xa0] sm:$0xff]
      %v809 = vld [vmem:[#allocation2 + $0xa8] sm:$0xff]
      %v810 = vld [vmem:[#allocation2 + $0xb0] sm:$0xff]
      %v811 = vld [vmem:[#allocation2 + $0xb8] sm:$0xff]
      %v812 = vld [vmem:[#allocation2 + $0xc0] sm:$0xff]
      %v813 = vld [vmem:[#allocation2 + $0xc8] sm:$0xff]
      %v814 = vld [vmem:[#allocation2 + $0xd0] sm:$0xff]
      %v815 = vld [vmem:[#allocation2 + $0xd8] sm:$0xff]
      %v816 = vld [vmem:[#allocation2 + $0xe0] sm:$0xff]
      %v817 = vld [vmem:[#allocation2 + $0xe8] sm:$0xff]
      %v818 = vld [vmem:[#allocation2 + $0xf0] sm:$0xff]
      %v819 = vld [vmem:[#allocation2 + $0xf8] sm:$0xff]
      %v820 = vld [vmem:[#allocation2 + $0x100] sm:$0xff]
      %v821 = vld [vmem:[#allocation2 + $0x108] sm:$0xff]
      %v822 = vld [vmem:[#allocation2 + $0x110] sm:$0xff]
      %v823 = vld [vmem:[#allocation2 + $0x118] sm:$0xff]
      %v824 = vld [vmem:[#allocation2 + $0x120] sm:$0xff]
      %v825 = vld [vmem:[#allocation2 + $0x128] sm:$0xff]
      %v826 = vld [vmem:[#allocation2 + $0x130] sm:$0xff]
      %v827 = vld [vmem:[#allocation2 + $0x138] sm:$0xff]
      %v828 = vld [vmem:[#allocation2 + $0x140] sm:$0xff]
      %v829 = vld [vmem:[#allocation2 + $0x148] sm:$0xff]
      %v830 = vld [vmem:[#allocation2 + $0x150] sm:$0xff]
      %v831 = vld [vmem:[#allocation2 + $0x158] sm:$0xff]
      %v832 = vld [vmem:[#allocation2 + $0x160] sm:$0xff]
      %v833 = vld [vmem:[#allocation2 + $0x168] sm:$0xff]
      %v834 = vld [vmem:[#allocation2 + $0x170] sm:$0xff]
      %v835 = vld [vmem:[#allocation2 + $0x178] sm:$0xff]
      %v836 = vld [vmem:[#allocation2 + $0x180] sm:$0xff]
      %v837 = vld [vmem:[#allocation2 + $0x188] sm:$0xff]
      %v838 = vld [vmem:[#allocation2 + $0x190] sm:$0xff]
      %v839 = vld [vmem:[#allocation2 + $0x198] sm:$0xff]
      %v840 = vld [vmem:[#allocation2 + $0x1a0] sm:$0xff]
      %v841 = vld [vmem:[#allocation2 + $0x1a8] sm:$0xff]
      %v842 = vld [vmem:[#allocation2 + $0x1b0] sm:$0xff]
      %v843 = vld [vmem:[#allocation2 + $0x1b8] sm:$0xff]
      %v844 = vld [vmem:[#allocation2 + $0x1c0] sm:$0xff]
      %v845 = vld [vmem:[#allocation2 + $0x1c8] sm:$0xff]
      %v846 = vld [vmem:[#allocation2 + $0x1d0] sm:$0xff]
      %v847 = vld [vmem:[#allocation2 + $0x1d8] sm:$0xff]
      %v848 = vld [vmem:[#allocation2 + $0x1e0] sm:$0xff]
      %v849 = vld [vmem:[#allocation2 + $0x1e8] sm:$0xff]
      %v850 = vld [vmem:[#allocation2 + $0x1f0] sm:$0xff]
      %v851 = vld [vmem:[#allocation2 + $0x1f8] sm:$0xff]
      %v852 = vld [vmem:[#allocation2 + $0x200] sm:$0xff]
      %v853 = vld [vmem:[#allocation2 + $0x208] sm:$0xff]
      %v854 = vld [vmem:[#allocation2 + $0x210] sm:$0xff]
      %v855 = vld [vmem:[#allocation2 + $0x218] sm:$0xff]
      %v856 = vld [vmem:[#allocation2 + $0x220] sm:$0xff]
      %v857 = vld [vmem:[#allocation2 + $0x228] sm:$0xff]
      %v858 = vld [vmem:[#allocation2 + $0x230] sm:$0xff]
      %v859 = vld [vmem:[#allocation2 + $0x238] sm:$0xff]
      %v860 = vld [vmem:[#allocation2 + $0x240] sm:$0xff]
      %v861 = vld [vmem:[#allocation2 + $0x248] sm:$0xff]
      %v862 = vld [vmem:[#allocation2 + $0x250] sm:$0xff]
      %v863 = vld [vmem:[#allocation2 + $0x258] sm:$0xff]
      %v864 = vld [vmem:[#allocation2 + $0x260] sm:$0xff]
      %v865 = vld [vmem:[#allocation2 + $0x268] sm:$0xff]
      %v866 = vld [vmem:[#allocation2 + $0x270] sm:$0xff]
      %v867 = vld [vmem:[#allocation2 + $0x278] sm:$0xff]
      %v868 = vld [vmem:[#allocation2 + $0x280] sm:$0xff]
      %v869 = vld [vmem:[#allocation2 + $0x288] sm:$0xff]
      %v870 = vld [vmem:[#allocation2 + $0x290] sm:$0xff]
      %v871 = vld [vmem:[#allocation2 + $0x298] sm:$0xff]
      %v872 = vld [vmem:[#allocation2 + $0x2a0] sm:$0xff]
      %v873 = vld [vmem:[#allocation2 + $0x2a8] sm:$0xff]
      %v874 = vld [vmem:[#allocation2 + $0x2b0] sm:$0xff]
      %v875 = vld [vmem:[#allocation2 + $0x2b8] sm:$0xff]
      %v876 = vld [vmem:[#allocation2 + $0x2c0] sm:$0xff]
      %v877 = vld [vmem:[#allocation2 + $0x2c8] sm:$0xff]
      %v878 = vld [vmem:[#allocation2 + $0x2d0] sm:$0xff]
      %v879 = vld [vmem:[#allocation2 + $0x2d8] sm:$0xff]
      %v880 = vld [vmem:[#allocation2 + $0x2e0] sm:$0xff]
      %v881 = vld [vmem:[#allocation2 + $0x2e8] sm:$0xff]
      %v882 = vld [vmem:[#allocation2 + $0x2f0] sm:$0xff]
      %v883 = vld [vmem:[#allocation2 + $0x2f8] sm:$0xff]
      %v884 = vld [vmem:[#allocation2 + $0x300] sm:$0xff]
      %v885 = vld [vmem:[#allocation2 + $0x308] sm:$0xff]
      %v886 = vld [vmem:[#allocation2 + $0x310] sm:$0xff]
      %v887 = vld [vmem:[#allocation2 + $0x318] sm:$0xff]
      %v888 = vld [vmem:[#allocation2 + $0x320] sm:$0xff]
      %v889 = vld [vmem:[#allocation2 + $0x328] sm:$0xff]
      %v890 = vld [vmem:[#allocation2 + $0x330] sm:$0xff]
      %v891 = vld [vmem:[#allocation2 + $0x338] sm:$0xff]
      %v892 = vld [vmem:[#allocation2 + $0x340] sm:$0xff]
      %v893 = vld [vmem:[#allocation2 + $0x348] sm:$0xff]
      %v894 = vld [vmem:[#allocation2 + $0x350] sm:$0xff]
      %v895 = vld [vmem:[#allocation2 + $0x358] sm:$0xff]
      %v896 = vld [vmem:[#allocation2 + $0x360] sm:$0xff]
      %v897 = vld [vmem:[#allocation2 + $0x368] sm:$0xff]
      %v898 = vld [vmem:[#allocation2 + $0x370] sm:$0xff]
      %v899 = vld [vmem:[#allocation2 + $0x378] sm:$0xff]
      %v900 = vld [vmem:[#allocation2 + $0x380] sm:$0xff]
      %v901 = vld [vmem:[#allocation2 + $0x388] sm:$0xff]
      %v902 = vld [vmem:[#allocation2 + $0x390] sm:$0xff]
      %v903 = vld [vmem:[#allocation2 + $0x398] sm:$0xff]
      %v904 = vld [vmem:[#allocation2 + $0x3a0] sm:$0xff]
      %v905 = vld [vmem:[#allocation2 + $0x3a8] sm:$0xff]
      %v906 = vld [vmem:[#allocation2 + $0x3b0] sm:$0xff]
      %v907 = vld [vmem:[#allocation2 + $0x3b8] sm:$0xff]
      %v908 = vld [vmem:[#allocation2 + $0x3c0] sm:$0xff]
      %v909 = vld [vmem:[#allocation2 + $0x3c8] sm:$0xff]
      %v910 = vld [vmem:[#allocation2 + $0x3d0] sm:$0xff]
      %v911 = vld [vmem:[#allocation2 + $0x3d8] sm:$0xff]
      %v912 = vld [vmem:[#allocation2 + $0x3e0] sm:$0xff]
      %v913 = vld [vmem:[#allocation2 + $0x3e8] sm:$0xff]
      %v914 = vld [vmem:[#allocation2 + $0x3f0] sm:$0xff]
      %v915 = vld [vmem:[#allocation2 + $0x3f8] sm:$0xff]
      %v916 = vld [vmem:[#allocation2 + $0x400] sm:$0xff]
      %v917 = vld [vmem:[#allocation2 + $0x408] sm:$0xff]
      %v918 = vld [vmem:[#allocation2 + $0x410] sm:$0xff]
      %v919 = vld [vmem:[#allocation2 + $0x418] sm:$0xff]
      %v920 = vld [vmem:[#allocation2 + $0x420] sm:$0xff]
      %v921 = vld [vmem:[#allocation2 + $0x428] sm:$0xff]
      %v922 = vld [vmem:[#allocation2 + $0x430] sm:$0xff]
      %v923 = vld [vmem:[#allocation2 + $0x438] sm:$0xff]
      %v924 = vld [vmem:[#allocation2 + $0x440] sm:$0xff]
      %v925 = vld [vmem:[#allocation2 + $0x448] sm:$0xff]
      %v926 = vld [vmem:[#allocation2 + $0x450] sm:$0xff]
      %v927 = vld [vmem:[#allocation2 + $0x458] sm:$0xff]
      %v928 = vld [vmem:[#allocation2 + $0x460] sm:$0xff]
      %v929 = vld [vmem:[#allocation2 + $0x468] sm:$0xff]
      %v930 = vld [vmem:[#allocation2 + $0x470] sm:$0xff]
      %v931 = vld [vmem:[#allocation2 + $0x478] sm:$0xff]
      %v932 = vld [vmem:[#allocation2 + $0x480] sm:$0xff]
      %v933 = vld [vmem:[#allocation2 + $0x488] sm:$0xff]
      %v934 = vld [vmem:[#allocation2 + $0x490] sm:$0xff]
      %v935 = vld [vmem:[#allocation2 + $0x498] sm:$0xff]
      %v936 = vld [vmem:[#allocation2 + $0x4a0] sm:$0xff]
      %v937 = vld [vmem:[#allocation2 + $0x4a8] sm:$0xff]
      %v938 = vld [vmem:[#allocation2 + $0x4b0] sm:$0xff]
      %v939 = vld [vmem:[#allocation2 + $0x4b8] sm:$0xff]
      %v940 = vld [vmem:[#allocation2 + $0x4c0] sm:$0xff]
      %v941 = vld [vmem:[#allocation2 + $0x4c8] sm:$0xff]
      %v942 = vld [vmem:[#allocation2 + $0x4d0] sm:$0xff]
      %v943 = vld [vmem:[#allocation2 + $0x4d8] sm:$0xff]
      %v944 = vld [vmem:[#allocation2 + $0x4e0] sm:$0xff]
      %v945 = vld [vmem:[#allocation2 + $0x4e8] sm:$0xff]
      %v946 = vld [vmem:[#allocation2 + $0x4f0] sm:$0xff]
      %v947 = vld [vmem:[#allocation2 + $0x4f8] sm:$0xff]
      %v948 = vld [vmem:[#allocation2 + $0x500] sm:$0xff]
      %v949 = vld [vmem:[#allocation2 + $0x508] sm:$0xff]
      %v950 = vld [vmem:[#allocation2 + $0x510] sm:$0xff]
      %v951 = vld [vmem:[#allocation2 + $0x518] sm:$0xff]
      %v952 = vld [vmem:[#allocation2 + $0x520] sm:$0xff]
      %v953 = vld [vmem:[#allocation2 + $0x528] sm:$0xff]
      %v954 = vld [vmem:[#allocation2 + $0x530] sm:$0xff]
      %v955 = vld [vmem:[#allocation2 + $0x538] sm:$0xff]
      %v956 = vld [vmem:[#allocation2 + $0x540] sm:$0xff]
      %v957 = vld [vmem:[#allocation2 + $0x548] sm:$0xff]
      %v958 = vld [vmem:[#allocation2 + $0x550] sm:$0xff]
      %v959 = vld [vmem:[#allocation2 + $0x558] sm:$0xff]
      %v960 = vld [vmem:[#allocation2 + $0x560] sm:$0xff]
      %v961 = vld [vmem:[#allocation2 + $0x568] sm:$0xff]
      %v962 = vld [vmem:[#allocation2 + $0x570] sm:$0xff]
      %v963 = vld [vmem:[#allocation2 + $0x578] sm:$0xff]
      %v964 = vld [vmem:[#allocation2 + $0x580] sm:$0xff]
      %v965 = vld [vmem:[#allocation2 + $0x588] sm:$0xff]
      %v966 = vld [vmem:[#allocation2 + $0x590] sm:$0xff]
      %v967 = vld [vmem:[#allocation2 + $0x598] sm:$0xff]
      %v968 = vld [vmem:[#allocation2 + $0x5a0] sm:$0xff]
      %v969 = vld [vmem:[#allocation2 + $0x5a8] sm:$0xff]
      %v970 = vld [vmem:[#allocation2 + $0x5b0] sm:$0xff]
      %v971 = vld [vmem:[#allocation2 + $0x5b8] sm:$0xff]
      %v972 = vld [vmem:[#allocation2 + $0x5c0] sm:$0xff]
      %v973 = vld [vmem:[#allocation2 + $0x5c8] sm:$0xff]
      %v974 = vld [vmem:[#allocation2 + $0x5d0] sm:$0xff]
      %v975 = vld [vmem:[#allocation2 + $0x5d8] sm:$0xff]
      %v976 = vld [vmem:[#allocation2 + $0x5e0] sm:$0xff]
      %v977 = vld [vmem:[#allocation2 + $0x5e8] sm:$0xff]
      %v978 = vld [vmem:[#allocation2 + $0x5f0] sm:$0xff]
      %v979 = vld [vmem:[#allocation2 + $0x5f8] sm:$0xff]
      %v980 = vld [vmem:[#allocation2 + $0x600] sm:$0xff]
      %v981 = vld [vmem:[#allocation2 + $0x608] sm:$0xff]
      %v982 = vld [vmem:[#allocation2 + $0x610] sm:$0xff]
      %v983 = vld [vmem:[#allocation2 + $0x618] sm:$0xff]
      %v984 = vld [vmem:[#allocation2 + $0x620] sm:$0xff]
      %v985 = vld [vmem:[#allocation2 + $0x628] sm:$0xff]
      %v986 = vld [vmem:[#allocation2 + $0x630] sm:$0xff]
      %v987 = vld [vmem:[#allocation2 + $0x638] sm:$0xff]
      %v988 = vld [vmem:[#allocation2 + $0x640] sm:$0xff]
      %v989 = vld [vmem:[#allocation2 + $0x648] sm:$0xff]
      %v990 = vld [vmem:[#allocation2 + $0x650] sm:$0xff]
      %v991 = vld [vmem:[#allocation2 + $0x658] sm:$0xff]
      %v992 = vld [vmem:[#allocation2 + $0x660] sm:$0xff]
      %v993 = vld [vmem:[#allocation2 + $0x668] sm:$0xff]
      %v994 = vld [vmem:[#allocation2 + $0x670] sm:$0xff]
      %v995 = vld [vmem:[#allocation2 + $0x678] sm:$0xff]
      %v996 = vld [vmem:[#allocation2 + $0x680] sm:$0xff]
      %v997 = vld [vmem:[#allocation2 + $0x688] sm:$0xff]
      %v998 = vld [vmem:[#allocation2 + $0x690] sm:$0xff]
      %v999 = vld [vmem:[#allocation2 + $0x698] sm:$0xff]
      %v1000 = vld [vmem:[#allocation2 + $0x6a0] sm:$0xff]
      %v1001 = vld [vmem:[#allocation2 + $0x6a8] sm:$0xff]
      %v1002 = vld [vmem:[#allocation2 + $0x6b0] sm:$0xff]
      %v1003 = vld [vmem:[#allocation2 + $0x6b8] sm:$0xff]
      %v1004 = vld [vmem:[#allocation2 + $0x6c0] sm:$0xff]
      %v1005 = vld [vmem:[#allocation2 + $0x6c8] sm:$0xff]
      %v1006 = vld [vmem:[#allocation2 + $0x6d0] sm:$0xff]
      %v1007 = vld [vmem:[#allocation2 + $0x6d8] sm:$0xff]
      %v1008 = vld [vmem:[#allocation2 + $0x6e0] sm:$0xff]
      %v1009 = vld [vmem:[#allocation2 + $0x6e8] sm:$0xff]
      %v1010 = vld [vmem:[#allocation2 + $0x6f0] sm:$0xff]
      %v1011 = vld [vmem:[#allocation2 + $0x6f8] sm:$0xff]
      %v1012 = vld [vmem:[#allocation2 + $0x700] sm:$0xff]
      %v1013 = vld [vmem:[#allocation2 + $0x708] sm:$0xff]
      %v1014 = vld [vmem:[#allocation2 + $0x710] sm:$0xff]
      %v1015 = vld [vmem:[#allocation2 + $0x718] sm:$0xff]
      %v1016 = vld [vmem:[#allocation2 + $0x720] sm:$0xff]
      %v1017 = vld [vmem:[#allocation2 + $0x728] sm:$0xff]
      %v1018 = vld [vmem:[#allocation2 + $0x730] sm:$0xff]
      %v1019 = vld [vmem:[#allocation2 + $0x738] sm:$0xff]
      %v1020 = vld [vmem:[#allocation2 + $0x740] sm:$0xff]
      %v1021 = vld [vmem:[#allocation2 + $0x748] sm:$0xff]
      %v1022 = vld [vmem:[#allocation2 + $0x750] sm:$0xff]
      %v1023 = vld [vmem:[#allocation2 + $0x758] sm:$0xff]
      %v1024 = vld [vmem:[#allocation2 + $0x760] sm:$0xff]
      %v1025 = vld [vmem:[#allocation2 + $0x768] sm:$0xff]
      %v1026 = vld [vmem:[#allocation2 + $0x770] sm:$0xff]
      %v1027 = vld [vmem:[#allocation2 + $0x778] sm:$0xff]
      %v1028 = vld [vmem:[#allocation2 + $0x780] sm:$0xff]
      %v1029 = vld [vmem:[#allocation2 + $0x788] sm:$0xff]
      %v1030 = vld [vmem:[#allocation2 + $0x790] sm:$0xff]
      %v1031 = vld [vmem:[#allocation2 + $0x798] sm:$0xff]
      %v1032 = vld [vmem:[#allocation2 + $0x7a0] sm:$0xff]
      %v1033 = vld [vmem:[#allocation2 + $0x7a8] sm:$0xff]
      %v1034 = vld [vmem:[#allocation2 + $0x7b0] sm:$0xff]
      %v1035 = vld [vmem:[#allocation2 + $0x7b8] sm:$0xff]
      %v1036 = vld [vmem:[#allocation2 + $0x7c0] sm:$0xff]
      %v1037 = vld [vmem:[#allocation2 + $0x7c8] sm:$0xff]
      %v1038 = vld [vmem:[#allocation2 + $0x7d0] sm:$0xff]
      %v1039 = vld [vmem:[#allocation2 + $0x7d8] sm:$0xff]
      %v1040 = vld [vmem:[#allocation2 + $0x7e0] sm:$0xff]
      %v1041 = vld [vmem:[#allocation2 + $0x7e8] sm:$0xff]
      %v1042 = vld [vmem:[#allocation2 + $0x7f0] sm:$0xff]
      %v1043 = vld [vmem:[#allocation2 + $0x7f8] sm:$0xff]
      %v1044 = vld [vmem:[#allocation2 + $0x800] sm:$0xff]
      %v1045 = vld [vmem:[#allocation2 + $0x808] sm:$0xff]
      %v1046 = vld [vmem:[#allocation2 + $0x810] sm:$0xff]
      %v1047 = vld [vmem:[#allocation2 + $0x818] sm:$0xff]
      %v1048 = vld [vmem:[#allocation2 + $0x820] sm:$0xff]
      %v1049 = vld [vmem:[#allocation2 + $0x828] sm:$0xff]
      %v1050 = vld [vmem:[#allocation2 + $0x830] sm:$0xff]
      %v1051 = vld [vmem:[#allocation2 + $0x838] sm:$0xff]
      %v1052 = vld [vmem:[#allocation2 + $0x840] sm:$0xff]
      %v1053 = vld [vmem:[#allocation2 + $0x848] sm:$0xff]
      %v1054 = vld [vmem:[#allocation2 + $0x850] sm:$0xff]
      %v1055 = vld [vmem:[#allocation2 + $0x858] sm:$0xff]
      %v1056 = vld [vmem:[#allocation2 + $0x860] sm:$0xff]
      %v1057 = vld [vmem:[#allocation2 + $0x868] sm:$0xff]
      %v1058 = vld [vmem:[#allocation2 + $0x870] sm:$0xff]
      %v1059 = vld [vmem:[#allocation2 + $0x878] sm:$0xff]
      %v1060 = vld [vmem:[#allocation2 + $0x880] sm:$0xff]
      %v1061 = vld [vmem:[#allocation2 + $0x888] sm:$0xff]
      %v1062 = vld [vmem:[#allocation2 + $0x890] sm:$0xff]
      %v1063 = vld [vmem:[#allocation2 + $0x898] sm:$0xff]
      %v1064 = vld [vmem:[#allocation2 + $0x8a0] sm:$0xff]
      %v1065 = vld [vmem:[#allocation2 + $0x8a8] sm:$0xff]
      %v1066 = vld [vmem:[#allocation2 + $0x8b0] sm:$0xff]
      %v1067 = vld [vmem:[#allocation2 + $0x8b8] sm:$0xff]
      %v1068 = vld [vmem:[#allocation2 + $0x8c0] sm:$0xff]
      %v1069 = vld [vmem:[#allocation2 + $0x8c8] sm:$0xff]
      %v1070 = vld [vmem:[#allocation2 + $0x8d0] sm:$0xff]
      %v1071 = vld [vmem:[#allocation2 + $0x8d8] sm:$0xff]
      %v1072 = vld [vmem:[#allocation2 + $0x8e0] sm:$0xff]
      %v1073 = vld [vmem:[#allocation2 + $0x8e8] sm:$0xff]
      %v1074 = vld [vmem:[#allocation2 + $0x8f0] sm:$0xff]
      %v1075 = vld [vmem:[#allocation2 + $0x8f8] sm:$0xff]
      %v1076 = vld [vmem:[%s1] sm:$0xff]
      %v1077 = vld [vmem:[%s1 + $0x8] sm:$0xff]
      %v1078 = vld [vmem:[%s1 + $0x10] sm:$0xff]
      %v1079 = vld [vmem:[%s1 + $0x18] sm:$0xff]
      %v1080 = vld [vmem:[%s1 + $0x20] sm:$0xff]
      %v1081 = vld [vmem:[%s1 + $0x28] sm:$0xff]
      %v1082 = vld [vmem:[%s1 + $0x30] sm:$0xff]
      %v1083 = vld [vmem:[%s1 + $0x38] sm:$0xff]
      %v1084 = vld [vmem:[%s1 + $0x40] sm:$0xff]
      %v1085 = vld [vmem:[%s1 + $0x48] sm:$0xff]
      %v1086 = vld [vmem:[%s1 + $0x50] sm:$0xff]
      %v1087 = vld [vmem:[%s1 + $0x58] sm:$0xff]
      %v1088 = vld [vmem:[%s1 + $0x60] sm:$0xff]
      %v1089 = vld [vmem:[%s1 + $0x68] sm:$0xff]
      %v1090 = vld [vmem:[%s1 + $0x70] sm:$0xff]
      %v1091 = vld [vmem:[%s1 + $0x78] sm:$0xff]
      %v1092 = vld [vmem:[%s1 + $0x80] sm:$0xff]
      %v1093 = vld [vmem:[%s1 + $0x88] sm:$0xff]
      %v1094 = vld [vmem:[%s1 + $0x90] sm:$0xff]
      %v1095 = vld [vmem:[%s1 + $0x98] sm:$0xff]
      %v1096 = vld [vmem:[%s1 + $0xa0] sm:$0xff]
      %v1097 = vld [vmem:[%s1 + $0xa8] sm:$0xff]
      %v1098 = vld [vmem:[%s1 + $0xb0] sm:$0xff]
      %v1099 = vld [vmem:[%s1 + $0xb8] sm:$0xff]
      %v1100 = vld [vmem:[%s1 + $0xc0] sm:$0xff]
      %v1101 = vld [vmem:[%s1 + $0xc8] sm:$0xff]
      %v1102 = vld [vmem:[%s1 + $0xd0] sm:$0xff]
      %v1103 = vld [vmem:[%s1 + $0xd8] sm:$0xff]
      %v1104 = vld [vmem:[%s1 + $0xe0] sm:$0xff]
      %v1105 = vld [vmem:[%s1 + $0xe8] sm:$0xff]
      %v1106 = vld [vmem:[%s1 + $0xf0] sm:$0xff]
      %v1107 = vld [vmem:[%s1 + $0xf8] sm:$0xff]
      %v1108 = vld [vmem:[%s1 + $0x100] sm:$0xff]
      %v1109 = vld [vmem:[%s1 + $0x108] sm:$0xff]
      %v1110 = vld [vmem:[%s1 + $0x110] sm:$0xff]
      %v1111 = vld [vmem:[%s1 + $0x118] sm:$0xff]
      %v1112 = vld [vmem:[%s1 + $0x120] sm:$0xff]
      %v1113 = vld [vmem:[%s1 + $0x128] sm:$0xff]
      %v1114 = vld [vmem:[%s1 + $0x130] sm:$0xff]
      %v1115 = vld [vmem:[%s1 + $0x138] sm:$0xff]
      %v1116 = vld [vmem:[%s1 + $0x140] sm:$0xff]
      %v1117 = vld [vmem:[%s1 + $0x148] sm:$0xff]
      %v1118 = vld [vmem:[%s1 + $0x150] sm:$0xff]
      %v1119 = vld [vmem:[%s1 + $0x158] sm:$0xff]
      %v1120 = vld [vmem:[%s1 + $0x160] sm:$0xff]
      %v1121 = vld [vmem:[%s1 + $0x168] sm:$0xff]
      %v1122 = vld [vmem:[%s1 + $0x170] sm:$0xff]
      %v1123 = vld [vmem:[%s1 + $0x178] sm:$0xff]
      %v1124 = vld [vmem:[%s1 + $0x180] sm:$0xff]
      %v1125 = vld [vmem:[%s1 + $0x188] sm:$0xff]
      %v1126 = vld [vmem:[%s1 + $0x190] sm:$0xff]
      %v1127 = vld [vmem:[%s1 + $0x198] sm:$0xff]
      %v1128 = vld [vmem:[%s1 + $0x1a0] sm:$0xff]
      %v1129 = vld [vmem:[%s1 + $0x1a8] sm:$0xff]
      %v1130 = vld [vmem:[%s1 + $0x1b0] sm:$0xff]
      %v1131 = vld [vmem:[%s1 + $0x1b8] sm:$0xff]
      %v1132 = vld [vmem:[%s1 + $0x1c0] sm:$0xff]
      %v1133 = vld [vmem:[%s1 + $0x1c8] sm:$0xff]
      %v1134 = vld [vmem:[%s1 + $0x1d0] sm:$0xff]
      %v1135 = vld [vmem:[%s1 + $0x1d8] sm:$0xff]
      %v1136 = vld [vmem:[%s1 + $0x1e0] sm:$0xff]
      %v1137 = vld [vmem:[%s1 + $0x1e8] sm:$0xff]
      %v1138 = vld [vmem:[%s1 + $0x1f0] sm:$0xff]
      %v1139 = vld [vmem:[%s1 + $0x1f8] sm:$0xff]
      %v1140 = vld [vmem:[%s1 + $0x200] sm:$0xff]
      %v1141 = vld [vmem:[%s1 + $0x208] sm:$0xff]
      %v1142 = vld [vmem:[%s1 + $0x210] sm:$0xff]
      %v1143 = vld [vmem:[%s1 + $0x218] sm:$0xff]
      %v1144 = vld [vmem:[%s1 + $0x220] sm:$0xff]
      %v1145 = vld [vmem:[%s1 + $0x228] sm:$0xff]
      %v1146 = vld [vmem:[%s1 + $0x230] sm:$0xff]
      %v1147 = vld [vmem:[%s1 + $0x238] sm:$0xff]
      %v1148 = vld [vmem:[%s1 + $0x240] sm:$0xff]
      %v1149 = vld [vmem:[%s1 + $0x248] sm:$0xff]
      %v1150 = vld [vmem:[%s1 + $0x250] sm:$0xff]
      %v1151 = vld [vmem:[%s1 + $0x258] sm:$0xff]
      %v1152 = vld [vmem:[%s1 + $0x260] sm:$0xff]
      %v1153 = vld [vmem:[%s1 + $0x268] sm:$0xff]
      %v1154 = vld [vmem:[%s1 + $0x270] sm:$0xff]
      %v1155 = vld [vmem:[%s1 + $0x278] sm:$0xff]
      %v1156 = vld [vmem:[%s1 + $0x280] sm:$0xff]
      %v1157 = vld [vmem:[%s1 + $0x288] sm:$0xff]
      %v1158 = vld [vmem:[%s1 + $0x290] sm:$0xff]
      %v1159 = vld [vmem:[%s1 + $0x298] sm:$0xff]
      %v1160 = vld [vmem:[%s1 + $0x2a0] sm:$0xff]
      %v1161 = vld [vmem:[%s1 + $0x2a8] sm:$0xff]
      %v1162 = vld [vmem:[%s1 + $0x2b0] sm:$0xff]
      %v1163 = vld [vmem:[%s1 + $0x2b8] sm:$0xff]
      %v1164 = vld [vmem:[%s1 + $0x2c0] sm:$0xff]
      %v1165 = vld [vmem:[%s1 + $0x2c8] sm:$0xff]
      %v1166 = vld [vmem:[%s1 + $0x2d0] sm:$0xff]
      %v1167 = vld [vmem:[%s1 + $0x2d8] sm:$0xff]
      %v1168 = vld [vmem:[%s1 + $0x2e0] sm:$0xff]
      %v1169 = vld [vmem:[%s1 + $0x2e8] sm:$0xff]
      %v1170 = vld [vmem:[%s1 + $0x2f0] sm:$0xff]
      %v1171 = vld [vmem:[%s1 + $0x2f8] sm:$0xff]
      %v1172 = vld [vmem:[%s1 + $0x300] sm:$0xff]
      %v1173 = vld [vmem:[%s1 + $0x308] sm:$0xff]
      %v1174 = vld [vmem:[%s1 + $0x310] sm:$0xff]
      %v1175 = vld [vmem:[%s1 + $0x318] sm:$0xff]
      %v1176 = vld [vmem:[%s1 + $0x320] sm:$0xff]
      %v1177 = vld [vmem:[%s1 + $0x328] sm:$0xff]
      %v1178 = vld [vmem:[%s1 + $0x330] sm:$0xff]
      %v1179 = vld [vmem:[%s1 + $0x338] sm:$0xff]
      %v1180 = vld [vmem:[%s1 + $0x340] sm:$0xff]
      %v1181 = vld [vmem:[%s1 + $0x348] sm:$0xff]
      %v1182 = vld [vmem:[%s1 + $0x350] sm:$0xff]
      %v1183 = vld [vmem:[%s1 + $0x358] sm:$0xff]
      %v1184 = vld [vmem:[%s1 + $0x360] sm:$0xff]
      %v1185 = vld [vmem:[%s1 + $0x368] sm:$0xff]
      %v1186 = vld [vmem:[%s1 + $0x370] sm:$0xff]
      %v1187 = vld [vmem:[%s1 + $0x378] sm:$0xff]
      %v1188 = vld [vmem:[%s1 + $0x380] sm:$0xff]
      %v1189 = vld [vmem:[%s1 + $0x388] sm:$0xff]
      %v1190 = vld [vmem:[%s1 + $0x390] sm:$0xff]
      %v1191 = vld [vmem:[%s1 + $0x398] sm:$0xff]
      %v1192 = vld [vmem:[%s1 + $0x3a0] sm:$0xff]
      %v1193 = vld [vmem:[%s1 + $0x3a8] sm:$0xff]
      %v1194 = vld [vmem:[%s1 + $0x3b0] sm:$0xff]
      %v1195 = vld [vmem:[%s1 + $0x3b8] sm:$0xff]
      %v1196 = vld [vmem:[%s1 + $0x3c0] sm:$0xff]
      %v1197 = vld [vmem:[%s1 + $0x3c8] sm:$0xff]
      %v1198 = vld [vmem:[%s1 + $0x3d0] sm:$0xff]
      %v1199 = vld [vmem:[%s1 + $0x3d8] sm:$0xff]
      %v1200 = vld [vmem:[%s1 + $0x3e0] sm:$0xff]
      %v1201 = vld [vmem:[%s1 + $0x3e8] sm:$0xff]
      %v1202 = vld [vmem:[%s1 + $0x3f0] sm:$0xff]
      %v1203 = vld [vmem:[%s1 + $0x3f8] sm:$0xff]
      %v1204 = vld [vmem:[%s1 + $0x400] sm:$0xff]
      %v1205 = vld [vmem:[%s1 + $0x408] sm:$0xff]
      %v1206 = vld [vmem:[%s1 + $0x410] sm:$0xff]
      %v1207 = vld [vmem:[%s1 + $0x418] sm:$0xff]
      %v1208 = vld [vmem:[%s1 + $0x420] sm:$0xff]
      %v1209 = vld [vmem:[%s1 + $0x428] sm:$0xff]
      %v1210 = vld [vmem:[%s1 + $0x430] sm:$0xff]
      %v1211 = vld [vmem:[%s1 + $0x438] sm:$0xff]
      %v1212 = vld [vmem:[%s1 + $0x440] sm:$0xff]
      %v1213 = vld [vmem:[%s1 + $0x448] sm:$0xff]
      %v1214 = vld [vmem:[%s1 + $0x450] sm:$0xff]
      %v1215 = vld [vmem:[%s1 + $0x458] sm:$0xff]
      %v1216 = vld [vmem:[%s1 + $0x460] sm:$0xff]
      %v1217 = vld [vmem:[%s1 + $0x468] sm:$0xff]
      %v1218 = vld [vmem:[%s1 + $0x470] sm:$0xff]
      %v1219 = vld [vmem:[%s1 + $0x478] sm:$0xff]
      %v1220 = vld [vmem:[%s2] sm:$0x1]
      %v1222 = vlaneseq
      %v1223 = vshrl.u32 %v1222, 7
      %v1224 = vsub.s32 0, %v1223
      %v1225 = vrot.slane %v1220, %v1224
      %1227 = vmatprep.subr.mxu0 0.0
      %1228 = vmatpush1.msra.mxu0 %v1076
      %1229 = vmatprep.subr.mxu0 0.0
      %1230 = vmatpush1.msra.mxu0 %v1077
      %1231 = vmatprep.subr.mxu0 0.0
      %1232 = vmatpush1.msra.mxu0 %v1078
      %1233 = vmatprep.subr.mxu0 0.0
      %1234 = vmatpush1.msra.mxu0 %v1079
      %1235 = vmatprep.subr.mxu0 0.0
      %1236 = vmatpush1.msra.mxu0 %v1080
      %1237 = vmatprep.subr.mxu0 0.0
      %1238 = vmatpush1.msra.mxu0 %v1081
      %1239 = vmatprep.subr.mxu0 0.0
      %1240 = vmatpush1.msra.mxu0 %v1082
      %1241 = vmatprep.subr.mxu0 0.0
      %1242 = vmatpush1.msra.mxu0 %v1083
      %1243 = vmatprep.subr.mxu0 0.0
      %1244 = vmatpush1.msra.mxu0 %v1084
      %1245 = vmatprep.subr.mxu0 0.0
      %1246 = vmatpush1.msra.mxu0 %v1085
      %1247 = vmatprep.subr.mxu0 0.0
      %1248 = vmatpush1.msra.mxu0 %v1086
      %1249 = vmatprep.subr.mxu0 0.0
      %1250 = vmatpush1.msra.mxu0 %v1087
      %1251 = vmatprep.subr.mxu0 0.0
      %1252 = vmatpush1.msra.mxu0 %v1088
      %1253 = vmatprep.subr.mxu0 0.0
      %1254 = vmatpush1.msra.mxu0 %v1089
      %1255 = vmatprep.subr.mxu0 0.0
      %1256 = vmatpush1.msra.mxu0 %v1090
      %1257 = vmatprep.subr.mxu0 0.0
      %1258 = vmatpush1.msra.mxu0 %v1091
      %1259 = vmatprep.subr.mxu0 0.0
      %1260 = vmatpush1.msra.mxu0 %v1092
      %1261 = vmatprep.subr.mxu0 0.0
      %1262 = vmatpush1.msra.mxu0 %v1093
      %1263 = vmatprep.subr.mxu0 0.0
      %1264 = vmatpush1.msra.mxu0 %v1094
      %1265 = vmatprep.subr.mxu0 0.0
      %1266 = vmatpush1.msra.mxu0 %v1095
      %1267 = vmatprep.subr.mxu0 0.0
      %1268 = vmatpush1.msra.mxu0 %v1096
      %1269 = vmatprep.subr.mxu0 0.0
      %1270 = vmatpush1.msra.mxu0 %v1097
      %1271 = vmatprep.subr.mxu0 0.0
      %1272 = vmatpush1.msra.mxu0 %v1098
      %1273 = vmatprep.subr.mxu0 0.0
      %1274 = vmatpush1.msra.mxu0 %v1099
      %1275 = vmatprep.subr.mxu0 0.0
      %1276 = vmatpush1.msra.mxu0 %v1100
      %1277 = vmatprep.subr.mxu0 0.0
      %1278 = vmatpush1.msra.mxu0 %v1101
      %1279 = vmatprep.subr.mxu0 0.0
      %1280 = vmatpush1.msra.mxu0 %v1102
      %1281 = vmatprep.subr.mxu0 0.0
      %1282 = vmatpush1.msra.mxu0 %v1103
      %1283 = vmatprep.subr.mxu0 0.0
      %1284 = vmatpush1.msra.mxu0 %v1104
      %1285 = vmatprep.subr.mxu0 0.0
      %1286 = vmatpush1.msra.mxu0 %v1105
      %1287 = vmatprep.subr.mxu0 0.0
      %1288 = vmatpush1.msra.mxu0 %v1106
      %1289 = vmatprep.subr.mxu0 0.0
      %1290 = vmatpush1.msra.mxu0 %v1107
      %1291 = vmatprep.mubr.f32.mxu0 %v789
      %1292 = vmatmul.mubr.f32.gmra.mrb[0].mxu0 %v788
      %v1293 = vpop.f32.mrb[0].mxu0
      %v1294 = vadd.f32 %v1225, %v1293
      %v1295 = vpop.f32.mrb[0].mxu0
      %1296 = vmatprep.mubr.f32.mxu0 %v798
      %1297 = vmatmul.mubr.f32.gmra.mrb[0].mxu0 %v797
      %v1298 = vpop.f32.mrb[0].mxu0
      %v1299 = vadd.f32 %v1225, %v1298
      %v1300 = vpop.f32.mrb[0].mxu0
      %1301 = vmatprep.mubr.f32.mxu0 %v807
      %1302 = vmatmul.mubr.f32.gmra.mrb[0].mxu0 %v806
      %v1303 = vpop.f32.mrb[0].mxu0
      %v1304 = vadd.f32 %v1225, %v1303
      %v1305 = vpop.f32.mrb[0].mxu0
      %1306 = vmatprep.mubr.f32.mxu0 %v816
      %1307 = vmatmul.mubr.f32.gmra.mrb[0].mxu0 %v815
      %v1308 = vpop.f32.mrb[0].mxu0
      %v1309 = vadd.f32 %v1225, %v1308
      %v1310 = vpop.f32.mrb[0].mxu0
      %1311 = vmatprep.mubr.f32.mxu0 %v825
      %1312 = vmatmul.mubr.f32.gmra.mrb[0].mxu0 %v824
      %v1313 = vpop.f32.mrb[0].mxu0
      %v1314 = vadd.f32 %v1225, %v1313
      %v1315 = vpop.f32.mrb[0].mxu0
      %1316 = vmatprep.mubr.f32.mxu0 %v834
      %1317 = vmatmul.mubr.f32.gmra.mrb[0].mxu0 %v833
      %v1318 = vpop.f32.mrb[0].mxu0
      %v1319 = vadd.f32 %v1225, %v1318
      %v1320 = vpop.f32.mrb[0].mxu0
      %1321 = vmatprep.mubr.f32.mxu0 %v843
      %1322 = vmatmul.mubr.f32.gmra.mrb[0].mxu0 %v842
      %v1323 = vpop.f32.mrb[0].mxu0
      %v1324 = vadd.f32 %v1225, %v1323
      %v1325 = vpop.f32.mrb[0].mxu0
      %1326 = vmatprep.mubr.f32.mxu0 %v852
      %1327 = vmatmul.mubr.f32.gmra.mrb[0].mxu0 %v851
      %v1328 = vpop.f32.mrb[0].mxu0
      %v1329 = vadd.f32 %v1225, %v1328
      %v1330 = vpop.f32.mrb[0].mxu0
      %1331 = vmatprep.mubr.f32.mxu0 %v861
      %1332 = vmatmul.mubr.f32.gmra.mrb[0].mxu0 %v860
      %v1333 = vpop.f32.mrb[0].mxu0
      %v1334 = vadd.f32 %v1225, %v1333
      %v1335 = vpop.f32.mrb[0].mxu0
      %1336 = vmatprep.mubr.f32.mxu0 %v870
      %1337 = vmatmul.mubr.f32.gmra.mrb[0].mxu0 %v869
      %v1338 = vpop.f32.mrb[0].mxu0
      %v1339 = vadd.f32 %v1225, %v1338
      %v1340 = vpop.f32.mrb[0].mxu0
      %1341 = vmatprep.mubr.f32.mxu0 %v879
      %1342 = vmatmul.mubr.f32.gmra.mrb[0].mxu0 %v878
      %v1343 = vpop.f32.mrb[0].mxu0
      %v1344 = vadd.f32 %v1225, %v1343
      %v1345 = vpop.f32.mrb[0].mxu0
      %1346 = vmatprep.mubr.f32.mxu0 %v888
      %1347 = vmatmul.mubr.f32.gmra.mrb[0].mxu0 %v887
      %v1348 = vpop.f32.mrb[0].mxu0
      %v1349 = vadd.f32 %v1225, %v1348
      %v1350 = vpop.f32.mrb[0].mxu0
      %1351 = vmatprep.mubr.f32.mxu0 %v897
      %1352 = vmatmul.mubr.f32.gmra.mrb[0].mxu0 %v896
      %v1353 = vpop.f32.mrb[0].mxu0
      %v1354 = vadd.f32 %v1225, %v1353
      %v1355 = vpop.f32.mrb[0].mxu0
      %1356 = vmatprep.mubr.f32.mxu0 %v906
      %1357 = vmatmul.mubr.f32.gmra.mrb[0].mxu0 %v905
      %v1358 = vpop.f32.mrb[0].mxu0
      %v1359 = vadd.f32 %v1225, %v1358
      %v1360 = vpop.f32.mrb[0].mxu0
      %1361 = vmatprep.mubr.f32.mxu0 %v915
      %1362 = vmatmul.mubr.f32.gmra.mrb[0].mxu0 %v914
      %v1363 = vpop.f32.mrb[0].mxu0
      %v1364 = vadd.f32 %v1225, %v1363
      %v1365 = vpop.f32.mrb[0].mxu0
      %1366 = vmatprep.mubr.f32.mxu0 %v924
      %1367 = vmatmul.mubr.f32.gmra.mrb[0].mxu0 %v923
      %v1368 = vpop.f32.mrb[0].mxu0
      %v1369 = vadd.f32 %v1225, %v1368
      %v1370 = vpop.f32.mrb[0].mxu0
      %1371 = vmatprep.mubr.f32.mxu0 %v933
      %1372 = vmatmul.mubr.f32.gmra.mrb[0].mxu0 %v932
      %v1373 = vpop.f32.mrb[0].mxu0
      %v1374 = vadd.f32 %v1225, %v1373
      %v1375 = vpop.f32.mrb[0].mxu0
      %1376 = vmatprep.mubr.f32.mxu0 %v942
      %1377 = vmatmul.mubr.f32.gmra.mrb[0].mxu0 %v941
      %v1378 = vpop.f32.mrb[0].mxu0
      %v1379 = vadd.f32 %v1225, %v1378
      %v1380 = vpop.f32.mrb[0].mxu0
      %1381 = vmatprep.mubr.f32.mxu0 %v951
      %1382 = vmatmul.mubr.f32.gmra.mrb[0].mxu0 %v950
      %v1383 = vpop.f32.mrb[0].mxu0
      %v1384 = vadd.f32 %v1225, %v1383
      %v1385 = vpop.f32.mrb[0].mxu0
      %1386 = vmatprep.mubr.f32.mxu0 %v960
      %1387 = vmatmul.mubr.f32.gmra.mrb[0].mxu0 %v959
      %v1388 = vpop.f32.mrb[0].mxu0
      %v1389 = vadd.f32 %v1225, %v1388
      %v1390 = vpop.f32.mrb[0].mxu0
      %1391 = vmatprep.mubr.f32.mxu0 %v969
      %1392 = vmatmul.mubr.f32.gmra.mrb[0].mxu0 %v968
      %v1393 = vpop.f32.mrb[0].mxu0
      %v1394 = vadd.f32 %v1225, %v1393
      %v1395 = vpop.f32.mrb[0].mxu0
      %1396 = vmatprep.mubr.f32.mxu0 %v978
      %1397 = vmatmul.mubr.f32.gmra.mrb[0].mxu0 %v977
      %v1398 = vpop.f32.mrb[0].mxu0
      %v1399 = vadd.f32 %v1225, %v1398
      %v1400 = vpop.f32.mrb[0].mxu0
      %1401 = vmatprep.mubr.f32.mxu0 %v987
      %1402 = vmatmul.mubr.f32.gmra.mrb[0].mxu0 %v986
      %v1403 = vpop.f32.mrb[0].mxu0
      %v1404 = vadd.f32 %v1225, %v1403
      %v1405 = vpop.f32.mrb[0].mxu0
      %1406 = vmatprep.mubr.f32.mxu0 %v996
      %1407 = vmatmul.mubr.f32.gmra.mrb[0].mxu0 %v995
      %v1408 = vpop.f32.mrb[0].mxu0
      %v1409 = vadd.f32 %v1225, %v1408
      %v1410 = vpop.f32.mrb[0].mxu0
      %1411 = vmatprep.mubr.f32.mxu0 %v1005
      %1412 = vmatmul.mubr.f32.gmra.mrb[0].mxu0 %v1004
      %v1413 = vpop.f32.mrb[0].mxu0
      %v1414 = vadd.f32 %v1225, %v1413
      %v1415 = vpop.f32.mrb[0].mxu0
      %1416 = vmatprep.mubr.f32.mxu0 %v1014
      %1417 = vmatmul.mubr.f32.gmra.mrb[0].mxu0 %v1013
      %v1418 = vpop.f32.mrb[0].mxu0
      %v1419 = vadd.f32 %v1225, %v1418
      %v1420 = vpop.f32.mrb[0].mxu0
      %1421 = vmatprep.mubr.f32.mxu0 %v1023
      %1422 = vmatmul.mubr.f32.gmra.mrb[0].mxu0 %v1022
      %v1423 = vpop.f32.mrb[0].mxu0
      %v1424 = vadd.f32 %v1225, %v1423
      %v1425 = vpop.f32.mrb[0].mxu0
      %1426 = vmatprep.mubr.f32.mxu0 %v1032
      %1427 = vmatmul.mubr.f32.gmra.mrb[0].mxu0 %v1031
      %v1428 = vpop.f32.mrb[0].mxu0
      %v1429 = vadd.f32 %v1225, %v1428
      %v1430 = vpop.f32.mrb[0].mxu0
      %1431 = vmatprep.mubr.f32.mxu0 %v1041
      %1432 = vmatmul.mubr.f32.gmra.mrb[0].mxu0 %v1040
      %v1433 = vpop.f32.mrb[0].mxu0
      %v1434 = vadd.f32 %v1225, %v1433
      %v1435 = vpop.f32.mrb[0].mxu0
      %1436 = vmatprep.mubr.f32.mxu0 %v1050
      %1437 = vmatmul.mubr.f32.gmra.mrb[0].mxu0 %v1049
      %v1438 = vpop.f32.mrb[0].mxu0
      %v1439 = vadd.f32 %v1225, %v1438
      %v1440 = vpop.f32.mrb[0].mxu0
      %1441 = vmatprep.mubr.f32.mxu0 %v1059
      %1442 = vmatmul.mubr.f32.gmra.mrb[0].mxu0 %v1058
      %v1443 = vpop.f32.mrb[0].mxu0
      %v1444 = vadd.f32 %v1225, %v1443
      %v1445 = vpop.f32.mrb[0].mxu0
      %1446 = vmatprep.mubr.f32.mxu0 %v1068
      %1447 = vmatmul.mubr.f32.gmra.mrb[0].mxu0 %v1067
      %v1448 = vpop.f32.mrb[0].mxu0
      %v1449 = vadd.f32 %v1225, %v1448
      %v1450 = vpop.f32.mrb[0].mxu0
      %1451 = vdwg.mxu0
      %1452 = vmatprep.subr.mxu0 0.0
      %1453 = vmatpush1.msra.mxu0 %v1108
      %1454 = vmatprep.subr.mxu0 0.0
      %1455 = vmatpush1.msra.mxu0 %v1109
      %1456 = vmatprep.subr.mxu0 0.0
      %1457 = vmatpush1.msra.mxu0 %v1110
      %1458 = vmatprep.subr.mxu0 0.0
      %1459 = vmatpush1.msra.mxu0 %v1111
      %1460 = vmatprep.subr.mxu0 0.0
      %1461 = vmatpush1.msra.mxu0 %v1112
      %1462 = vmatprep.subr.mxu0 0.0
      %1463 = vmatpush1.msra.mxu0 %v1113
      %1464 = vmatprep.subr.mxu0 0.0
      %1465 = vmatpush1.msra.mxu0 %v1114
      %1466 = vmatprep.subr.mxu0 0.0
      %1467 = vmatpush1.msra.mxu0 %v1115
      %1468 = vmatprep.subr.mxu0 0.0
      %1469 = vmatpush1.msra.mxu0 %v1116
      %1470 = vmatprep.subr.mxu0 0.0
      %1471 = vmatpush1.msra.mxu0 %v1117
      %1472 = vmatprep.subr.mxu0 0.0
      %1473 = vmatpush1.msra.mxu0 %v1118
      %1474 = vmatprep.subr.mxu0 0.0
      %1475 = vmatpush1.msra.mxu0 %v1119
      %1476 = vmatprep.subr.mxu0 0.0
      %1477 = vmatpush1.msra.mxu0 %v1120
      %1478 = vmatprep.subr.mxu0 0.0
      %1479 = vmatpush1.msra.mxu0 %v1121
      %1480 = vmatprep.subr.mxu0 0.0
      %1481 = vmatpush1.msra.mxu0 %v1122
      %1482 = vmatprep.subr.mxu0 0.0
      %1483 = vmatpush1.msra.mxu0 %v1123
      %1484 = vmatprep.subr.mxu0 0.0
      %1485 = vmatpush1.msra.mxu0 %v1124
      %1486 = vmatprep.subr.mxu0 0.0
      %1487 = vmatpush1.msra.mxu0 %v1125
      %1488 = vmatprep.subr.mxu0 0.0
      %1489 = vmatpush1.msra.mxu0 %v1126
      %1490 = vmatprep.subr.mxu0 0.0
      %1491 = vmatpush1.msra.mxu0 %v1127
      %1492 = vmatprep.subr.mxu0 0.0
      %1493 = vmatpush1.msra.mxu0 %v1128
      %1494 = vmatprep.subr.mxu0 0.0
      %1495 = vmatpush1.msra.mxu0 %v1129
      %1496 = vmatprep.subr.mxu0 0.0
      %1497 = vmatpush1.msra.mxu0 %v1130
      %1498 = vmatprep.subr.mxu0 0.0
      %1499 = vmatpush1.msra.mxu0 %v1131
      %1500 = vmatprep.subr.mxu0 0.0
      %1501 = vmatpush1.msra.mxu0 %v1132
      %1502 = vmatprep.subr.mxu0 0.0
      %1503 = vmatpush1.msra.mxu0 %v1133
      %1504 = vmatprep.subr.mxu0 0.0
      %1505 = vmatpush1.msra.mxu0 %v1134
      %1506 = vmatprep.subr.mxu0 0.0
      %1507 = vmatpush1.msra.mxu0 %v1135
      %1508 = vmatprep.subr.mxu0 0.0
      %1509 = vmatpush1.msra.mxu0 %v1136
      %1510 = vmatprep.subr.mxu0 0.0
      %1511 = vmatpush1.msra.mxu0 %v1137
      %1512 = vmatprep.subr.mxu0 0.0
      %1513 = vmatpush1.msra.mxu0 %v1138
      %1514 = vmatprep.subr.mxu0 0.0
      %1515 = vmatpush1.msra.mxu0 %v1139
      %1516 = vmatprep.mubr.f32.mxu0 %v791
      %1517 = vmatmul.mubr.f32.gmra.mrb[0].mxu0 %v790
      %v1518 = vpop.f32.mrb[0].mxu0
      %v1519 = vadd.f32 %v1294, %v1518
      %v1520 = vpop.f32.mrb[0].mxu0
      %1521 = vmatprep.mubr.f32.mxu0 %v800
      %1522 = vmatmul.mubr.f32.gmra.mrb[0].mxu0 %v799
      %v1523 = vpop.f32.mrb[0].mxu0
      %v1524 = vadd.f32 %v1299, %v1523
      %v1525 = vpop.f32.mrb[0].mxu0
      %1526 = vmatprep.mubr.f32.mxu0 %v809
      %1527 = vmatmul.mubr.f32.gmra.mrb[0].mxu0 %v808
      %v1528 = vpop.f32.mrb[0].mxu0
      %v1529 = vadd.f32 %v1304, %v1528
      %v1530 = vpop.f32.mrb[0].mxu0
      %1531 = vmatprep.mubr.f32.mxu0 %v818
      %1532 = vmatmul.mubr.f32.gmra.mrb[0].mxu0 %v817
      %v1533 = vpop.f32.mrb[0].mxu0
      %v1534 = vadd.f32 %v1309, %v1533
      %v1535 = vpop.f32.mrb[0].mxu0
      %1536 = vmatprep.mubr.f32.mxu0 %v827
      %1537 = vmatmul.mubr.f32.gmra.mrb[0].mxu0 %v826
      %v1538 = vpop.f32.mrb[0].mxu0
      %v1539 = vadd.f32 %v1314, %v1538
      %v1540 = vpop.f32.mrb[0].mxu0
      %1541 = vmatprep.mubr.f32.mxu0 %v836
      %1542 = vmatmul.mubr.f32.gmra.mrb[0].mxu0 %v835
      %v1543 = vpop.f32.mrb[0].mxu0
      %v1544 = vadd.f32 %v1319, %v1543
      %v1545 = vpop.f32.mrb[0].mxu0
      %1546 = vmatprep.mubr.f32.mxu0 %v845
      %1547 = vmatmul.mubr.f32.gmra.mrb[0].mxu0 %v844
      %v1548 = vpop.f32.mrb[0].mxu0
      %v1549 = vadd.f32 %v1324, %v1548
      %v1550 = vpop.f32.mrb[0].mxu0
      %1551 = vmatprep.mubr.f32.mxu0 %v854
      %1552 = vmatmul.mubr.f32.gmra.mrb[0].mxu0 %v853
      %v1553 = vpop.f32.mrb[0].mxu0
      %v1554 = vadd.f32 %v1329, %v1553
      %v1555 = vpop.f32.mrb[0].mxu0
      %1556 = vmatprep.mubr.f32.mxu0 %v863
      %1557 = vmatmul.mubr.f32.gmra.mrb[0].mxu0 %v862
      %v1558 = vpop.f32.mrb[0].mxu0
      %v1559 = vadd.f32 %v1334, %v1558
      %v1560 = vpop.f32.mrb[0].mxu0
      %1561 = vmatprep.mubr.f32.mxu0 %v872
      %1562 = vmatmul.mubr.f32.gmra.mrb[0].mxu0 %v871
      %v1563 = vpop.f32.mrb[0].mxu0
      %v1564 = vadd.f32 %v1339, %v1563
      %v1565 = vpop.f32.mrb[0].mxu0
      %1566 = vmatprep.mubr.f32.mxu0 %v881
      %1567 = vmatmul.mubr.f32.gmra.mrb[0].mxu0 %v880
      %v1568 = vpop.f32.mrb[0].mxu0
      %v1569 = vadd.f32 %v1344, %v1568
      %v1570 = vpop.f32.mrb[0].mxu0
      %1571 = vmatprep.mubr.f32.mxu0 %v890
      %1572 = vmatmul.mubr.f32.gmra.mrb[0].mxu0 %v889
      %v1573 = vpop.f32.mrb[0].mxu0
      %v1574 = vadd.f32 %v1349, %v1573
      %v1575 = vpop.f32.mrb[0].mxu0
      %1576 = vmatprep.mubr.f32.mxu0 %v899
      %1577 = vmatmul.mubr.f32.gmra.mrb[0].mxu0 %v898
      %v1578 = vpop.f32.mrb[0].mxu0
      %v1579 = vadd.f32 %v1354, %v1578
      %v1580 = vpop.f32.mrb[0].mxu0
      %1581 = vmatprep.mubr.f32.mxu0 %v908
      %1582 = vmatmul.mubr.f32.gmra.mrb[0].mxu0 %v907
      %v1583 = vpop.f32.mrb[0].mxu0
      %v1584 = vadd.f32 %v1359, %v1583
      %v1585 = vpop.f32.mrb[0].mxu0
      %1586 = vmatprep.mubr.f32.mxu0 %v917
      %1587 = vmatmul.mubr.f32.gmra.mrb[0].mxu0 %v916
      %v1588 = vpop.f32.mrb[0].mxu0
      %v1589 = vadd.f32 %v1364, %v1588
      %v1590 = vpop.f32.mrb[0].mxu0
      %1591 = vmatprep.mubr.f32.mxu0 %v926
      %1592 = vmatmul.mubr.f32.gmra.mrb[0].mxu0 %v925
      %v1593 = vpop.f32.mrb[0].mxu0
      %v1594 = vadd.f32 %v1369, %v1593
      %v1595 = vpop.f32.mrb[0].mxu0
      %1596 = vmatprep.mubr.f32.mxu0 %v935
      %1597 = vmatmul.mubr.f32.gmra.mrb[0].mxu0 %v934
      %v1598 = vpop.f32.mrb[0].mxu0
      %v1599 = vadd.f32 %v1374, %v1598
      %v1600 = vpop.f32.mrb[0].mxu0
      %1601 = vmatprep.mubr.f32.mxu0 %v944
      %1602 = vmatmul.mubr.f32.gmra.mrb[0].mxu0 %v943
      %v1603 = vpop.f32.mrb[0].mxu0
      %v1604 = vadd.f32 %v1379, %v1603
      %v1605 = vpop.f32.mrb[0].mxu0
      %1606 = vmatprep.mubr.f32.mxu0 %v953
      %1607 = vmatmul.mubr.f32.gmra.mrb[0].mxu0 %v952
      %v1608 = vpop.f32.mrb[0].mxu0
      %v1609 = vadd.f32 %v1384, %v1608
      %v1610 = vpop.f32.mrb[0].mxu0
      %1611 = vmatprep.mubr.f32.mxu0 %v962
      %1612 = vmatmul.mubr.f32.gmra.mrb[0].mxu0 %v961
      %v1613 = vpop.f32.mrb[0].mxu0
      %v1614 = vadd.f32 %v1389, %v1613
      %v1615 = vpop.f32.mrb[0].mxu0
      %1616 = vmatprep.mubr.f32.mxu0 %v971
      %1617 = vmatmul.mubr.f32.gmra.mrb[0].mxu0 %v970
      %v1618 = vpop.f32.mrb[0].mxu0
      %v1619 = vadd.f32 %v1394, %v1618
      %v1620 = vpop.f32.mrb[0].mxu0
      %1621 = vmatprep.mubr.f32.mxu0 %v980
      %1622 = vmatmul.mubr.f32.gmra.mrb[0].mxu0 %v979
      %v1623 = vpop.f32.mrb[0].mxu0
      %v1624 = vadd.f32 %v1399, %v1623
      %v1625 = vpop.f32.mrb[0].mxu0
      %1626 = vmatprep.mubr.f32.mxu0 %v989
      %1627 = vmatmul.mubr.f32.gmra.mrb[0].mxu0 %v988
      %v1628 = vpop.f32.mrb[0].mxu0
      %v1629 = vadd.f32 %v1404, %v1628
      %v1630 = vpop.f32.mrb[0].mxu0
      %1631 = vmatprep.mubr.f32.mxu0 %v998
      %1632 = vmatmul.mubr.f32.gmra.mrb[0].mxu0 %v997
      %v1633 = vpop.f32.mrb[0].mxu0
      %v1634 = vadd.f32 %v1409, %v1633
      %v1635 = vpop.f32.mrb[0].mxu0
      %1636 = vmatprep.mubr.f32.mxu0 %v1007
      %1637 = vmatmul.mubr.f32.gmra.mrb[0].mxu0 %v1006
      %v1638 = vpop.f32.mrb[0].mxu0
      %v1639 = vadd.f32 %v1414, %v1638
      %v1640 = vpop.f32.mrb[0].mxu0
      %1641 = vmatprep.mubr.f32.mxu0 %v1016
      %1642 = vmatmul.mubr.f32.gmra.mrb[0].mxu0 %v1015
      %v1643 = vpop.f32.mrb[0].mxu0
      %v1644 = vadd.f32 %v1419, %v1643
      %v1645 = vpop.f32.mrb[0].mxu0
      %1646 = vmatprep.mubr.f32.mxu0 %v1025
      %1647 = vmatmul.mubr.f32.gmra.mrb[0].mxu0 %v1024
      %v1648 = vpop.f32.mrb[0].mxu0
      %v1649 = vadd.f32 %v1424, %v1648
      %v1650 = vpop.f32.mrb[0].mxu0
      %1651 = vmatprep.mubr.f32.mxu0 %v1034
      %1652 = vmatmul.mubr.f32.gmra.mrb[0].mxu0 %v1033
      %v1653 = vpop.f32.mrb[0].mxu0
      %v1654 = vadd.f32 %v1429, %v1653
      %v1655 = vpop.f32.mrb[0].mxu0
      %1656 = vmatprep.mubr.f32.mxu0 %v1043
      %1657 = vmatmul.mubr.f32.gmra.mrb[0].mxu0 %v1042
      %v1658 = vpop.f32.mrb[0].mxu0
      %v1659 = vadd.f32 %v1434, %v1658
      %v1660 = vpop.f32.mrb[0].mxu0
      %1661 = vmatprep.mubr.f32.mxu0 %v1052
      %1662 = vmatmul.mubr.f32.gmra.mrb[0].mxu0 %v1051
      %v1663 = vpop.f32.mrb[0].mxu0
      %v1664 = vadd.f32 %v1439, %v1663
      %v1665 = vpop.f32.mrb[0].mxu0
      %1666 = vmatprep.mubr.f32.mxu0 %v1061
      %1667 = vmatmul.mubr.f32.gmra.mrb[0].mxu0 %v1060
      %v1668 = vpop.f32.mrb[0].mxu0
      %v1669 = vadd.f32 %v1444, %v1668
      %v1670 = vpop.f32.mrb[0].mxu0
      %1671 = vmatprep.mubr.f32.mxu0 %v1070
      %1672 = vmatmul.mubr.f32.gmra.mrb[0].mxu0 %v1069
      %v1673 = vpop.f32.mrb[0].mxu0
      %v1674 = vadd.f32 %v1449, %v1673
      %v1675 = vpop.f32.mrb[0].mxu0
      %1676 = vdwg.mxu0
      %1677 = vmatprep.subr.mxu0 0.0
      %1678 = vmatpush1.msra.mxu0 %v1140
      %1679 = vmatprep.subr.mxu0 0.0
      %1680 = vmatpush1.msra.mxu0 %v1141
      %1681 = vmatprep.subr.mxu0 0.0
      %1682 = vmatpush1.msra.mxu0 %v1142
      %1683 = vmatprep.subr.mxu0 0.0
      %1684 = vmatpush1.msra.mxu0 %v1143
      %1685 = vmatprep.subr.mxu0 0.0
      %1686 = vmatpush1.msra.mxu0 %v1144
      %1687 = vmatprep.subr.mxu0 0.0
      %1688 = vmatpush1.msra.mxu0 %v1145
      %1689 = vmatprep.subr.mxu0 0.0
      %1690 = vmatpush1.msra.mxu0 %v1146
      %1691 = vmatprep.subr.mxu0 0.0
      %1692 = vmatpush1.msra.mxu0 %v1147
      %1693 = vmatprep.subr.mxu0 0.0
      %1694 = vmatpush1.msra.mxu0 %v1148
      %1695 = vmatprep.subr.mxu0 0.0
      %1696 = vmatpush1.msra.mxu0 %v1149
      %1697 = vmatprep.subr.mxu0 0.0
      %1698 = vmatpush1.msra.mxu0 %v1150
      %1699 = vmatprep.subr.mxu0 0.0
      %1700 = vmatpush1.msra.mxu0 %v1151
      %1701 = vmatprep.subr.mxu0 0.0
      %1702 = vmatpush1.msra.mxu0 %v1152
      %1703 = vmatprep.subr.mxu0 0.0
      %1704 = vmatpush1.msra.mxu0 %v1153
      %1705 = vmatprep.subr.mxu0 0.0
      %1706 = vmatpush1.msra.mxu0 %v1154
      %1707 = vmatprep.subr.mxu0 0.0
      %1708 = vmatpush1.msra.mxu0 %v1155
      %1709 = vmatprep.subr.mxu0 0.0
      %1710 = vmatpush1.msra.mxu0 %v1156
      %1711 = vmatprep.subr.mxu0 0.0
      %1712 = vmatpush1.msra.mxu0 %v1157
      %1713 = vmatprep.subr.mxu0 0.0
      %1714 = vmatpush1.msra.mxu0 %v1158
      %1715 = vmatprep.subr.mxu0 0.0
      %1716 = vmatpush1.msra.mxu0 %v1159
      %1717 = vmatprep.subr.mxu0 0.0
      %1718 = vmatpush1.msra.mxu0 %v1160
      %1719 = vmatprep.subr.mxu0 0.0
      %1720 = vmatpush1.msra.mxu0 %v1161
      %1721 = vmatprep.subr.mxu0 0.0
      %1722 = vmatpush1.msra.mxu0 %v1162
      %1723 = vmatprep.subr.mxu0 0.0
      %1724 = vmatpush1.msra.mxu0 %v1163
      %1725 = vmatprep.subr.mxu0 0.0
      %1726 = vmatpush1.msra.mxu0 %v1164
      %1727 = vmatprep.subr.mxu0 0.0
      %1728 = vmatpush1.msra.mxu0 %v1165
      %1729 = vmatprep.subr.mxu0 0.0
      %1730 = vmatpush1.msra.mxu0 %v1166
      %1731 = vmatprep.subr.mxu0 0.0
      %1732 = vmatpush1.msra.mxu0 %v1167
      %1733 = vmatprep.subr.mxu0 0.0
      %1734 = vmatpush1.msra.mxu0 %v1168
      %1735 = vmatprep.subr.mxu0 0.0
      %1736 = vmatpush1.msra.mxu0 %v1169
      %1737 = vmatprep.subr.mxu0 0.0
      %1738 = vmatpush1.msra.mxu0 %v1170
      %1739 = vmatprep.subr.mxu0 0.0
      %1740 = vmatpush1.msra.mxu0 %v1171
      %1741 = vmatprep.mubr.f32.mxu0 %v793
      %1742 = vmatmul.mubr.f32.gmra.mrb[0].mxu0 %v792
      %v1743 = vpop.f32.mrb[0].mxu0
      %v1744 = vadd.f32 %v1519, %v1743
      %v1745 = vpop.f32.mrb[0].mxu0
      %1746 = vmatprep.mubr.f32.mxu0 %v802
      %1747 = vmatmul.mubr.f32.gmra.mrb[0].mxu0 %v801
      %v1748 = vpop.f32.mrb[0].mxu0
      %v1749 = vadd.f32 %v1524, %v1748
      %v1750 = vpop.f32.mrb[0].mxu0
      %1751 = vmatprep.mubr.f32.mxu0 %v811
      %1752 = vmatmul.mubr.f32.gmra.mrb[0].mxu0 %v810
      %v1753 = vpop.f32.mrb[0].mxu0
      %v1754 = vadd.f32 %v1529, %v1753
      %v1755 = vpop.f32.mrb[0].mxu0
      %1756 = vmatprep.mubr.f32.mxu0 %v820
      %1757 = vmatmul.mubr.f32.gmra.mrb[0].mxu0 %v819
      %v1758 = vpop.f32.mrb[0].mxu0
      %v1759 = vadd.f32 %v1534, %v1758
      %v1760 = vpop.f32.mrb[0].mxu0
      %1761 = vmatprep.mubr.f32.mxu0 %v829
      %1762 = vmatmul.mubr.f32.gmra.mrb[0].mxu0 %v828
      %v1763 = vpop.f32.mrb[0].mxu0
      %v1764 = vadd.f32 %v1539, %v1763
      %v1765 = vpop.f32.mrb[0].mxu0
      %1766 = vmatprep.mubr.f32.mxu0 %v838
      %1767 = vmatmul.mubr.f32.gmra.mrb[0].mxu0 %v837
      %v1768 = vpop.f32.mrb[0].mxu0
      %v1769 = vadd.f32 %v1544, %v1768
      %v1770 = vpop.f32.mrb[0].mxu0
      %1771 = vmatprep.mubr.f32.mxu0 %v847
      %1772 = vmatmul.mubr.f32.gmra.mrb[0].mxu0 %v846
      %v1773 = vpop.f32.mrb[0].mxu0
      %v1774 = vadd.f32 %v1549, %v1773
      %v1775 = vpop.f32.mrb[0].mxu0
      %1776 = vmatprep.mubr.f32.mxu0 %v856
      %1777 = vmatmul.mubr.f32.gmra.mrb[0].mxu0 %v855
      %v1778 = vpop.f32.mrb[0].mxu0
      %v1779 = vadd.f32 %v1554, %v1778
      %v1780 = vpop.f32.mrb[0].mxu0
      %1781 = vmatprep.mubr.f32.mxu0 %v865
      %1782 = vmatmul.mubr.f32.gmra.mrb[0].mxu0 %v864
      %v1783 = vpop.f32.mrb[0].mxu0
      %v1784 = vadd.f32 %v1559, %v1783
      %v1785 = vpop.f32.mrb[0].mxu0
      %1786 = vmatprep.mubr.f32.mxu0 %v874
      %1787 = vmatmul.mubr.f32.gmra.mrb[0].mxu0 %v873
      %v1788 = vpop.f32.mrb[0].mxu0
      %v1789 = vadd.f32 %v1564, %v1788
      %v1790 = vpop.f32.mrb[0].mxu0
      %1791 = vmatprep.mubr.f32.mxu0 %v883
      %1792 = vmatmul.mubr.f32.gmra.mrb[0].mxu0 %v882
      %v1793 = vpop.f32.mrb[0].mxu0
      %v1794 = vadd.f32 %v1569, %v1793
      %v1795 = vpop.f32.mrb[0].mxu0
      %1796 = vmatprep.mubr.f32.mxu0 %v892
      %1797 = vmatmul.mubr.f32.gmra.mrb[0].mxu0 %v891
      %v1798 = vpop.f32.mrb[0].mxu0
      %v1799 = vadd.f32 %v1574, %v1798
      %v1800 = vpop.f32.mrb[0].mxu0
      %1801 = vmatprep.mubr.f32.mxu0 %v901
      %1802 = vmatmul.mubr.f32.gmra.mrb[0].mxu0 %v900
      %v1803 = vpop.f32.mrb[0].mxu0
      %v1804 = vadd.f32 %v1579, %v1803
      %v1805 = vpop.f32.mrb[0].mxu0
      %1806 = vmatprep.mubr.f32.mxu0 %v910
      %1807 = vmatmul.mubr.f32.gmra.mrb[0].mxu0 %v909
      %v1808 = vpop.f32.mrb[0].mxu0
      %v1809 = vadd.f32 %v1584, %v1808
      %v1810 = vpop.f32.mrb[0].mxu0
      %1811 = vmatprep.mubr.f32.mxu0 %v919
      %1812 = vmatmul.mubr.f32.gmra.mrb[0].mxu0 %v918
      %v1813 = vpop.f32.mrb[0].mxu0
      %v1814 = vadd.f32 %v1589, %v1813
      %v1815 = vpop.f32.mrb[0].mxu0
      %1816 = vmatprep.mubr.f32.mxu0 %v928
      %1817 = vmatmul.mubr.f32.gmra.mrb[0].mxu0 %v927
      %v1818 = vpop.f32.mrb[0].mxu0
      %v1819 = vadd.f32 %v1594, %v1818
      %v1820 = vpop.f32.mrb[0].mxu0
      %1821 = vmatprep.mubr.f32.mxu0 %v937
      %1822 = vmatmul.mubr.f32.gmra.mrb[0].mxu0 %v936
      %v1823 = vpop.f32.mrb[0].mxu0
      %v1824 = vadd.f32 %v1599, %v1823
      %v1825 = vpop.f32.mrb[0].mxu0
      %1826 = vmatprep.mubr.f32.mxu0 %v946
      %1827 = vmatmul.mubr.f32.gmra.mrb[0].mxu0 %v945
      %v1828 = vpop.f32.mrb[0].mxu0
      %v1829 = vadd.f32 %v1604, %v1828
      %v1830 = vpop.f32.mrb[0].mxu0
      %1831 = vmatprep.mubr.f32.mxu0 %v955
      %1832 = vmatmul.mubr.f32.gmra.mrb[0].mxu0 %v954
      %v1833 = vpop.f32.mrb[0].mxu0
      %v1834 = vadd.f32 %v1609, %v1833
      %v1835 = vpop.f32.mrb[0].mxu0
      %1836 = vmatprep.mubr.f32.mxu0 %v964
      %1837 = vmatmul.mubr.f32.gmra.mrb[0].mxu0 %v963
      %v1838 = vpop.f32.mrb[0].mxu0
      %v1839 = vadd.f32 %v1614, %v1838
      %v1840 = vpop.f32.mrb[0].mxu0
      %1841 = vmatprep.mubr.f32.mxu0 %v973
      %1842 = vmatmul.mubr.f32.gmra.mrb[0].mxu0 %v972
      %v1843 = vpop.f32.mrb[0].mxu0
      %v1844 = vadd.f32 %v1619, %v1843
      %v1845 = vpop.f32.mrb[0].mxu0
      %1846 = vmatprep.mubr.f32.mxu0 %v982
      %1847 = vmatmul.mubr.f32.gmra.mrb[0].mxu0 %v981
      %v1848 = vpop.f32.mrb[0].mxu0
      %v1849 = vadd.f32 %v1624, %v1848
      %v1850 = vpop.f32.mrb[0].mxu0
      %1851 = vmatprep.mubr.f32.mxu0 %v991
      %1852 = vmatmul.mubr.f32.gmra.mrb[0].mxu0 %v990
      %v1853 = vpop.f32.mrb[0].mxu0
      %v1854 = vadd.f32 %v1629, %v1853
      %v1855 = vpop.f32.mrb[0].mxu0
      %1856 = vmatprep.mubr.f32.mxu0 %v1000
      %1857 = vmatmul.mubr.f32.gmra.mrb[0].mxu0 %v999
      %v1858 = vpop.f32.mrb[0].mxu0
      %v1859 = vadd.f32 %v1634, %v1858
      %v1860 = vpop.f32.mrb[0].mxu0
      %1861 = vmatprep.mubr.f32.mxu0 %v1009
      %1862 = vmatmul.mubr.f32.gmra.mrb[0].mxu0 %v1008
      %v1863 = vpop.f32.mrb[0].mxu0
      %v1864 = vadd.f32 %v1639, %v1863
      %v1865 = vpop.f32.mrb[0].mxu0
      %1866 = vmatprep.mubr.f32.mxu0 %v1018
      %1867 = vmatmul.mubr.f32.gmra.mrb[0].mxu0 %v1017
      %v1868 = vpop.f32.mrb[0].mxu0
      %v1869 = vadd.f32 %v1644, %v1868
      %v1870 = vpop.f32.mrb[0].mxu0
      %1871 = vmatprep.mubr.f32.mxu0 %v1027
      %1872 = vmatmul.mubr.f32.gmra.mrb[0].mxu0 %v1026
      %v1873 = vpop.f32.mrb[0].mxu0
      %v1874 = vadd.f32 %v1649, %v1873
      %v1875 = vpop.f32.mrb[0].mxu0
      %1876 = vmatprep.mubr.f32.mxu0 %v1036
      %1877 = vmatmul.mubr.f32.gmra.mrb[0].mxu0 %v1035
      %v1878 = vpop.f32.mrb[0].mxu0
      %v1879 = vadd.f32 %v1654, %v1878
      %v1880 = vpop.f32.mrb[0].mxu0
      %1881 = vmatprep.mubr.f32.mxu0 %v1045
      %1882 = vmatmul.mubr.f32.gmra.mrb[0].mxu0 %v1044
      %v1883 = vpop.f32.mrb[0].mxu0
      %v1884 = vadd.f32 %v1659, %v1883
      %v1885 = vpop.f32.mrb[0].mxu0
      %1886 = vmatprep.mubr.f32.mxu0 %v1054
      %1887 = vmatmul.mubr.f32.gmra.mrb[0].mxu0 %v1053
      %v1888 = vpop.f32.mrb[0].mxu0
      %v1889 = vadd.f32 %v1664, %v1888
      %v1890 = vpop.f32.mrb[0].mxu0
      %1891 = vmatprep.mubr.f32.mxu0 %v1063
      %1892 = vmatmul.mubr.f32.gmra.mrb[0].mxu0 %v1062
      %v1893 = vpop.f32.mrb[0].mxu0
      %v1894 = vadd.f32 %v1669, %v1893
      %v1895 = vpop.f32.mrb[0].mxu0
      %1896 = vmatprep.mubr.f32.mxu0 %v1072
      %1897 = vmatmul.mubr.f32.gmra.mrb[0].mxu0 %v1071
      %v1898 = vpop.f32.mrb[0].mxu0
      %v1899 = vadd.f32 %v1674, %v1898
      %v1900 = vpop.f32.mrb[0].mxu0
      %1901 = vdwg.mxu0
      %1902 = vmatprep.subr.mxu0 0.0
      %1903 = vmatpush1.msra.mxu0 %v1172
      %1904 = vmatprep.subr.mxu0 0.0
      %1905 = vmatpush1.msra.mxu0 %v1173
      %1906 = vmatprep.subr.mxu0 0.0
      %1907 = vmatpush1.msra.mxu0 %v1174
      %1908 = vmatprep.subr.mxu0 0.0
      %1909 = vmatpush1.msra.mxu0 %v1175
      %1910 = vmatprep.subr.mxu0 0.0
      %1911 = vmatpush1.msra.mxu0 %v1176
      %1912 = vmatprep.subr.mxu0 0.0
      %1913 = vmatpush1.msra.mxu0 %v1177
      %1914 = vmatprep.subr.mxu0 0.0
      %1915 = vmatpush1.msra.mxu0 %v1178
      %1916 = vmatprep.subr.mxu0 0.0
      %1917 = vmatpush1.msra.mxu0 %v1179
      %1918 = vmatprep.subr.mxu0 0.0
      %1919 = vmatpush1.msra.mxu0 %v1180
      %1920 = vmatprep.subr.mxu0 0.0
      %1921 = vmatpush1.msra.mxu0 %v1181
      %1922 = vmatprep.subr.mxu0 0.0
      %1923 = vmatpush1.msra.mxu0 %v1182
      %1924 = vmatprep.subr.mxu0 0.0
      %1925 = vmatpush1.msra.mxu0 %v1183
      %1926 = vmatprep.subr.mxu0 0.0
      %1927 = vmatpush1.msra.mxu0 %v1184
      %1928 = vmatprep.subr.mxu0 0.0
      %1929 = vmatpush1.msra.mxu0 %v1185
      %1930 = vmatprep.subr.mxu0 0.0
      %1931 = vmatpush1.msra.mxu0 %v1186
      %1932 = vmatprep.subr.mxu0 0.0
      %1933 = vmatpush1.msra.mxu0 %v1187
      %1934 = vmatprep.subr.mxu0 0.0
      %1935 = vmatpush1.msra.mxu0 %v1188
      %1936 = vmatprep.subr.mxu0 0.0
      %1937 = vmatpush1.msra.mxu0 %v1189
      %1938 = vmatprep.subr.mxu0 0.0
      %1939 = vmatpush1.msra.mxu0 %v1190
      %1940 = vmatprep.subr.mxu0 0.0
      %1941 = vmatpush1.msra.mxu0 %v1191
      %1942 = vmatprep.subr.mxu0 0.0
      %1943 = vmatpush1.msra.mxu0 %v1192
      %1944 = vmatprep.subr.mxu0 0.0
      %1945 = vmatpush1.msra.mxu0 %v1193
      %1946 = vmatprep.subr.mxu0 0.0
      %1947 = vmatpush1.msra.mxu0 %v1194
      %1948 = vmatprep.subr.mxu0 0.0
      %1949 = vmatpush1.msra.mxu0 %v1195
      %1950 = vmatprep.subr.mxu0 0.0
      %1951 = vmatpush1.msra.mxu0 %v1196
      %1952 = vmatprep.subr.mxu0 0.0
      %1953 = vmatpush1.msra.mxu0 %v1197
      %1954 = vmatprep.subr.mxu0 0.0
      %1955 = vmatpush1.msra.mxu0 %v1198
      %1956 = vmatprep.subr.mxu0 0.0
      %1957 = vmatpush1.msra.mxu0 %v1199
      %1958 = vmatprep.subr.mxu0 0.0
      %1959 = vmatpush1.msra.mxu0 %v1200
      %1960 = vmatprep.subr.mxu0 0.0
      %1961 = vmatpush1.msra.mxu0 %v1201
      %1962 = vmatprep.subr.mxu0 0.0
      %1963 = vmatpush1.msra.mxu0 %v1202
      %1964 = vmatprep.subr.mxu0 0.0
      %1965 = vmatpush1.msra.mxu0 %v1203
      %1966 = vmatprep.mubr.f32.mxu0 %v795
      %1967 = vmatmul.mubr.f32.gmra.mrb[0].mxu0 %v794
      %v1968 = vpop.f32.mrb[0].mxu0
      %v1969 = vadd.f32 %v1744, %v1968
      %v1970 = vpop.f32.mrb[0].mxu0
      %1971 = vmatprep.mubr.f32.mxu0 %v804
      %1972 = vmatmul.mubr.f32.gmra.mrb[0].mxu0 %v803
      %v1973 = vpop.f32.mrb[0].mxu0
      %v1974 = vadd.f32 %v1749, %v1973
      %v1975 = vpop.f32.mrb[0].mxu0
      %1976 = vmatprep.mubr.f32.mxu0 %v813
      %1977 = vmatmul.mubr.f32.gmra.mrb[0].mxu0 %v812
      %v1978 = vpop.f32.mrb[0].mxu0
      %v1979 = vadd.f32 %v1754, %v1978
      %v1980 = vpop.f32.mrb[0].mxu0
      %1981 = vmatprep.mubr.f32.mxu0 %v822
      %1982 = vmatmul.mubr.f32.gmra.mrb[0].mxu0 %v821
      %v1983 = vpop.f32.mrb[0].mxu0
      %v1984 = vadd.f32 %v1759, %v1983
      %v1985 = vpop.f32.mrb[0].mxu0
      %1986 = vmatprep.mubr.f32.mxu0 %v831
      %1987 = vmatmul.mubr.f32.gmra.mrb[0].mxu0 %v830
      %v1988 = vpop.f32.mrb[0].mxu0
      %v1989 = vadd.f32 %v1764, %v1988
      %v1990 = vpop.f32.mrb[0].mxu0
      %1991 = vmatprep.mubr.f32.mxu0 %v840
      %1992 = vmatmul.mubr.f32.gmra.mrb[0].mxu0 %v839
      %v1993 = vpop.f32.mrb[0].mxu0
      %v1994 = vadd.f32 %v1769, %v1993
      %v1995 = vpop.f32.mrb[0].mxu0
      %1996 = vmatprep.mubr.f32.mxu0 %v849
      %1997 = vmatmul.mubr.f32.gmra.mrb[0].mxu0 %v848
      %v1998 = vpop.f32.mrb[0].mxu0
      %v1999 = vadd.f32 %v1774, %v1998
      %v2000 = vpop.f32.mrb[0].mxu0
      %2001 = vmatprep.mubr.f32.mxu0 %v858
      %2002 = vmatmul.mubr.f32.gmra.mrb[0].mxu0 %v857
      %v2003 = vpop.f32.mrb[0].mxu0
      %v2004 = vadd.f32 %v1779, %v2003
      %v2005 = vpop.f32.mrb[0].mxu0
      %2006 = vmatprep.mubr.f32.mxu0 %v867
      %2007 = vmatmul.mubr.f32.gmra.mrb[0].mxu0 %v866
      %v2008 = vpop.f32.mrb[0].mxu0
      %v2009 = vadd.f32 %v1784, %v2008
      %v2010 = vpop.f32.mrb[0].mxu0
      %2011 = vmatprep.mubr.f32.mxu0 %v876
      %2012 = vmatmul.mubr.f32.gmra.mrb[0].mxu0 %v875
      %v2013 = vpop.f32.mrb[0].mxu0
      %v2014 = vadd.f32 %v1789, %v2013
      %v2015 = vpop.f32.mrb[0].mxu0
      %2016 = vmatprep.mubr.f32.mxu0 %v885
      %2017 = vmatmul.mubr.f32.gmra.mrb[0].mxu0 %v884
      %v2018 = vpop.f32.mrb[0].mxu0
      %v2019 = vadd.f32 %v1794, %v2018
      %v2020 = vpop.f32.mrb[0].mxu0
      %2021 = vmatprep.mubr.f32.mxu0 %v894
      %2022 = vmatmul.mubr.f32.gmra.mrb[0].mxu0 %v893
      %v2023 = vpop.f32.mrb[0].mxu0
      %v2024 = vadd.f32 %v1799, %v2023
      %v2025 = vpop.f32.mrb[0].mxu0
      %2026 = vmatprep.mubr.f32.mxu0 %v903
      %2027 = vmatmul.mubr.f32.gmra.mrb[0].mxu0 %v902
      %v2028 = vpop.f32.mrb[0].mxu0
      %v2029 = vadd.f32 %v1804, %v2028
      %v2030 = vpop.f32.mrb[0].mxu0
      %2031 = vmatprep.mubr.f32.mxu0 %v912
      %2032 = vmatmul.mubr.f32.gmra.mrb[0].mxu0 %v911
      %v2033 = vpop.f32.mrb[0].mxu0
      %v2034 = vadd.f32 %v1809, %v2033
      %v2035 = vpop.f32.mrb[0].mxu0
      %2036 = vmatprep.mubr.f32.mxu0 %v921
      %2037 = vmatmul.mubr.f32.gmra.mrb[0].mxu0 %v920
      %v2038 = vpop.f32.mrb[0].mxu0
      %v2039 = vadd.f32 %v1814, %v2038
      %v2040 = vpop.f32.mrb[0].mxu0
      %2041 = vmatprep.mubr.f32.mxu0 %v930
      %2042 = vmatmul.mubr.f32.gmra.mrb[0].mxu0 %v929
      %v2043 = vpop.f32.mrb[0].mxu0
      %v2044 = vadd.f32 %v1819, %v2043
      %v2045 = vpop.f32.mrb[0].mxu0
      %2046 = vmatprep.mubr.f32.mxu0 %v939
      %2047 = vmatmul.mubr.f32.gmra.mrb[0].mxu0 %v938
      %v2048 = vpop.f32.mrb[0].mxu0
      %v2049 = vadd.f32 %v1824, %v2048
      %v2050 = vpop.f32.mrb[0].mxu0
      %2051 = vmatprep.mubr.f32.mxu0 %v948
      %2052 = vmatmul.mubr.f32.gmra.mrb[0].mxu0 %v947
      %v2053 = vpop.f32.mrb[0].mxu0
      %v2054 = vadd.f32 %v1829, %v2053
      %v2055 = vpop.f32.mrb[0].mxu0
      %2056 = vmatprep.mubr.f32.mxu0 %v957
      %2057 = vmatmul.mubr.f32.gmra.mrb[0].mxu0 %v956
      %v2058 = vpop.f32.mrb[0].mxu0
      %v2059 = vadd.f32 %v1834, %v2058
      %v2060 = vpop.f32.mrb[0].mxu0
      %2061 = vmatprep.mubr.f32.mxu0 %v966
      %2062 = vmatmul.mubr.f32.gmra.mrb[0].mxu0 %v965
      %v2063 = vpop.f32.mrb[0].mxu0
      %v2064 = vadd.f32 %v1839, %v2063
      %v2065 = vpop.f32.mrb[0].mxu0
      %2066 = vmatprep.mubr.f32.mxu0 %v975
      %2067 = vmatmul.mubr.f32.gmra.mrb[0].mxu0 %v974
      %v2068 = vpop.f32.mrb[0].mxu0
      %v2069 = vadd.f32 %v1844, %v2068
      %v2070 = vpop.f32.mrb[0].mxu0
      %2071 = vmatprep.mubr.f32.mxu0 %v984
      %2072 = vmatmul.mubr.f32.gmra.mrb[0].mxu0 %v983
      %v2073 = vpop.f32.mrb[0].mxu0
      %v2074 = vadd.f32 %v1849, %v2073
      %v2075 = vpop.f32.mrb[0].mxu0
      %2076 = vmatprep.mubr.f32.mxu0 %v993
      %2077 = vmatmul.mubr.f32.gmra.mrb[0].mxu0 %v992
      %v2078 = vpop.f32.mrb[0].mxu0
      %v2079 = vadd.f32 %v1854, %v2078
      %v2080 = vpop.f32.mrb[0].mxu0
      %2081 = vmatprep.mubr.f32.mxu0 %v1002
      %2082 = vmatmul.mubr.f32.gmra.mrb[0].mxu0 %v1001
      %v2083 = vpop.f32.mrb[0].mxu0
      %v2084 = vadd.f32 %v1859, %v2083
      %v2085 = vpop.f32.mrb[0].mxu0
      %2086 = vmatprep.mubr.f32.mxu0 %v1011
      %2087 = vmatmul.mubr.f32.gmra.mrb[0].mxu0 %v1010
      %v2088 = vpop.f32.mrb[0].mxu0
      %v2089 = vadd.f32 %v1864, %v2088
      %v2090 = vpop.f32.mrb[0].mxu0
      %2091 = vmatprep.mubr.f32.mxu0 %v1020
      %2092 = vmatmul.mubr.f32.gmra.mrb[0].mxu0 %v1019
      %v2093 = vpop.f32.mrb[0].mxu0
      %v2094 = vadd.f32 %v1869, %v2093
      %v2095 = vpop.f32.mrb[0].mxu0
      %2096 = vmatprep.mubr.f32.mxu0 %v1029
      %2097 = vmatmul.mubr.f32.gmra.mrb[0].mxu0 %v1028
      %v2098 = vpop.f32.mrb[0].mxu0
      %v2099 = vadd.f32 %v1874, %v2098
      %v2100 = vpop.f32.mrb[0].mxu0
      %2101 = vmatprep.mubr.f32.mxu0 %v1038
      %2102 = vmatmul.mubr.f32.gmra.mrb[0].mxu0 %v1037
      %v2103 = vpop.f32.mrb[0].mxu0
      %v2104 = vadd.f32 %v1879, %v2103
      %v2105 = vpop.f32.mrb[0].mxu0
      %2106 = vmatprep.mubr.f32.mxu0 %v1047
      %2107 = vmatmul.mubr.f32.gmra.mrb[0].mxu0 %v1046
      %v2108 = vpop.f32.mrb[0].mxu0
      %v2109 = vadd.f32 %v1884, %v2108
      %v2110 = vpop.f32.mrb[0].mxu0
      %2111 = vmatprep.mubr.f32.mxu0 %v1056
      %2112 = vmatmul.mubr.f32.gmra.mrb[0].mxu0 %v1055
      %v2113 = vpop.f32.mrb[0].mxu0
      %v2114 = vadd.f32 %v1889, %v2113
      %v2115 = vpop.f32.mrb[0].mxu0
      %2116 = vmatprep.mubr.f32.mxu0 %v1065
      %2117 = vmatmul.mubr.f32.gmra.mrb[0].mxu0 %v1064
      %v2118 = vpop.f32.mrb[0].mxu0
      %v2119 = vadd.f32 %v1894, %v2118
      %v2120 = vpop.f32.mrb[0].mxu0
      %2121 = vmatprep.mubr.f32.mxu0 %v1074
      %2122 = vmatmul.mubr.f32.gmra.mrb[0].mxu0 %v1073
      %v2123 = vpop.f32.mrb[0].mxu0
      %v2124 = vadd.f32 %v1899, %v2123
      %v2125 = vpop.f32.mrb[0].mxu0
      %2126 = vdwg.mxu0
      %2127 = vmatprep.subr.mxu0 0.0
      %2128 = vmatpush1.msra.mxu0 %v1204
      %2129 = vmatprep.subr.mxu0 0.0
      %2130 = vmatpush1.msra.mxu0 %v1205
      %2131 = vmatprep.subr.mxu0 0.0
      %2132 = vmatpush1.msra.mxu0 %v1206
      %2133 = vmatprep.subr.mxu0 0.0
      %2134 = vmatpush1.msra.mxu0 %v1207
      %2135 = vmatprep.subr.mxu0 0.0
      %2136 = vmatpush1.msra.mxu0 %v1208
      %2137 = vmatprep.subr.mxu0 0.0
      %2138 = vmatpush1.msra.mxu0 %v1209
      %2139 = vmatprep.subr.mxu0 0.0
      %2140 = vmatpush1.msra.mxu0 %v1210
      %2141 = vmatprep.subr.mxu0 0.0
      %2142 = vmatpush1.msra.mxu0 %v1211
      %2143 = vmatprep.subr.mxu0 0.0
      %2144 = vmatpush1.msra.mxu0 %v1212
      %2145 = vmatprep.subr.mxu0 0.0
      %2146 = vmatpush1.msra.mxu0 %v1213
      %2147 = vmatprep.subr.mxu0 0.0
      %2148 = vmatpush1.msra.mxu0 %v1214
      %2149 = vmatprep.subr.mxu0 0.0
      %2150 = vmatpush1.msra.mxu0 %v1215
      %2151 = vmatprep.subr.mxu0 0.0
      %2152 = vmatpush1.msra.mxu0 %v1216
      %2153 = vmatprep.subr.mxu0 0.0
      %2154 = vmatpush1.msra.mxu0 %v1217
      %2155 = vmatprep.subr.mxu0 0.0
      %2156 = vmatpush1.msra.mxu0 %v1218
      %2157 = vmatprep.subr.mxu0 0.0
      %2158 = vmatpush1.msra.mxu0 %v1219
      %2159 = vmatprep.subr.mxu0 0.0
      %2160 = vmatpush1.msra.mxu0 0.0
      %2161 = vmatprep.subr.mxu0 0.0
      %2162 = vmatpush1.msra.mxu0 0.0
      %2163 = vmatprep.subr.mxu0 0.0
      %2164 = vmatpush1.msra.mxu0 0.0
      %2165 = vmatprep.subr.mxu0 0.0
      %2166 = vmatpush1.msra.mxu0 0.0
      %2167 = vmatprep.subr.mxu0 0.0
      %2168 = vmatpush1.msra.mxu0 0.0
      %2169 = vmatprep.subr.mxu0 0.0
      %2170 = vmatpush1.msra.mxu0 0.0
      %2171 = vmatprep.subr.mxu0 0.0
      %2172 = vmatpush1.msra.mxu0 0.0
      %2173 = vmatprep.subr.mxu0 0.0
      %2174 = vmatpush1.msra.mxu0 0.0
      %2175 = vmatprep.subr.mxu0 0.0
      %2176 = vmatpush1.msra.mxu0 0.0
      %2177 = vmatprep.subr.mxu0 0.0
      %2178 = vmatpush1.msra.mxu0 0.0
      %2179 = vmatprep.subr.mxu0 0.0
      %2180 = vmatpush1.msra.mxu0 0.0
      %2181 = vmatprep.subr.mxu0 0.0
      %2182 = vmatpush1.msra.mxu0 0.0
      %2183 = vmatprep.subr.mxu0 0.0
      %2184 = vmatpush1.msra.mxu0 0.0
      %2185 = vmatprep.subr.mxu0 0.0
      %2186 = vmatpush1.msra.mxu0 0.0
      %2187 = vmatprep.subr.mxu0 0.0
      %2188 = vmatpush1.msra.mxu0 0.0
      %2189 = vmatprep.subr.mxu0 0.0
      %2190 = vmatpush1.msra.mxu0 0.0
      %2191 = vmatprep.mubr.f32.mxu0 0.0
      %2192 = vmatmul.mubr.f32.gmra.mrb[0].mxu0 %v796
      %v2193 = vpop.f32.mrb[0].mxu0
      %v2194 = vadd.f32 %v1969, %v2193
      %v2195 = vpop.f32.mrb[0].mxu0
      %2196 = vmatprep.mubr.f32.mxu0 0.0
      %2197 = vmatmul.mubr.f32.gmra.mrb[0].mxu0 %v805
      %v2198 = vpop.f32.mrb[0].mxu0
      %v2199 = vadd.f32 %v1974, %v2198
      %v2200 = vpop.f32.mrb[0].mxu0
      %2201 = vmatprep.mubr.f32.mxu0 0.0
      %2202 = vmatmul.mubr.f32.gmra.mrb[0].mxu0 %v814
      %v2203 = vpop.f32.mrb[0].mxu0
      %v2204 = vadd.f32 %v1979, %v2203
      %v2205 = vpop.f32.mrb[0].mxu0
      %2206 = vmatprep.mubr.f32.mxu0 0.0
      %2207 = vmatmul.mubr.f32.gmra.mrb[0].mxu0 %v823
      %v2208 = vpop.f32.mrb[0].mxu0
      %v2209 = vadd.f32 %v1984, %v2208
      %v2210 = vpop.f32.mrb[0].mxu0
      %2211 = vmatprep.mubr.f32.mxu0 0.0
      %2212 = vmatmul.mubr.f32.gmra.mrb[0].mxu0 %v832
      %v2213 = vpop.f32.mrb[0].mxu0
      %v2214 = vadd.f32 %v1989, %v2213
      %v2215 = vpop.f32.mrb[0].mxu0
      %2216 = vmatprep.mubr.f32.mxu0 0.0
      %2217 = vmatmul.mubr.f32.gmra.mrb[0].mxu0 %v841
      %v2218 = vpop.f32.mrb[0].mxu0
      %v2219 = vadd.f32 %v1994, %v2218
      %v2220 = vpop.f32.mrb[0].mxu0
      %2221 = vmatprep.mubr.f32.mxu0 0.0
      %2222 = vmatmul.mubr.f32.gmra.mrb[0].mxu0 %v850
      %v2223 = vpop.f32.mrb[0].mxu0
      %v2224 = vadd.f32 %v1999, %v2223
      %v2225 = vpop.f32.mrb[0].mxu0
      %2226 = vmatprep.mubr.f32.mxu0 0.0
      %2227 = vmatmul.mubr.f32.gmra.mrb[0].mxu0 %v859
      %v2228 = vpop.f32.mrb[0].mxu0
      %v2229 = vadd.f32 %v2004, %v2228
      %v2230 = vpop.f32.mrb[0].mxu0
      %2231 = vmatprep.mubr.f32.mxu0 0.0
      %2232 = vmatmul.mubr.f32.gmra.mrb[0].mxu0 %v868
      %v2233 = vpop.f32.mrb[0].mxu0
      %v2234 = vadd.f32 %v2009, %v2233
      %v2235 = vpop.f32.mrb[0].mxu0
      %2236 = vmatprep.mubr.f32.mxu0 0.0
      %2237 = vmatmul.mubr.f32.gmra.mrb[0].mxu0 %v877
      %v2238 = vpop.f32.mrb[0].mxu0
      %v2239 = vadd.f32 %v2014, %v2238
      %v2240 = vpop.f32.mrb[0].mxu0
      %2241 = vmatprep.mubr.f32.mxu0 0.0
      %2242 = vmatmul.mubr.f32.gmra.mrb[0].mxu0 %v886
      %v2243 = vpop.f32.mrb[0].mxu0
      %v2244 = vadd.f32 %v2019, %v2243
      %v2245 = vpop.f32.mrb[0].mxu0
      %2246 = vmatprep.mubr.f32.mxu0 0.0
      %2247 = vmatmul.mubr.f32.gmra.mrb[0].mxu0 %v895
      %v2248 = vpop.f32.mrb[0].mxu0
      %v2249 = vadd.f32 %v2024, %v2248
      %v2250 = vpop.f32.mrb[0].mxu0
      %2251 = vmatprep.mubr.f32.mxu0 0.0
      %2252 = vmatmul.mubr.f32.gmra.mrb[0].mxu0 %v904
      %v2253 = vpop.f32.mrb[0].mxu0
      %v2254 = vadd.f32 %v2029, %v2253
      %v2255 = vpop.f32.mrb[0].mxu0
      %2256 = vmatprep.mubr.f32.mxu0 0.0
      %2257 = vmatmul.mubr.f32.gmra.mrb[0].mxu0 %v913
      %v2258 = vpop.f32.mrb[0].mxu0
      %v2259 = vadd.f32 %v2034, %v2258
      %v2260 = vpop.f32.mrb[0].mxu0
      %2261 = vmatprep.mubr.f32.mxu0 0.0
      %2262 = vmatmul.mubr.f32.gmra.mrb[0].mxu0 %v922
      %v2263 = vpop.f32.mrb[0].mxu0
      %v2264 = vadd.f32 %v2039, %v2263
      %v2265 = vpop.f32.mrb[0].mxu0
      %2266 = vmatprep.mubr.f32.mxu0 0.0
      %2267 = vmatmul.mubr.f32.gmra.mrb[0].mxu0 %v931
      %v2268 = vpop.f32.mrb[0].mxu0
      %v2269 = vadd.f32 %v2044, %v2268
      %v2270 = vpop.f32.mrb[0].mxu0
      %2271 = vmatprep.mubr.f32.mxu0 0.0
      %2272 = vmatmul.mubr.f32.gmra.mrb[0].mxu0 %v940
      %v2273 = vpop.f32.mrb[0].mxu0
      %v2274 = vadd.f32 %v2049, %v2273
      %v2275 = vpop.f32.mrb[0].mxu0
      %2276 = vmatprep.mubr.f32.mxu0 0.0
      %2277 = vmatmul.mubr.f32.gmra.mrb[0].mxu0 %v949
      %v2278 = vpop.f32.mrb[0].mxu0
      %v2279 = vadd.f32 %v2054, %v2278
      %v2280 = vpop.f32.mrb[0].mxu0
      %2281 = vmatprep.mubr.f32.mxu0 0.0
      %2282 = vmatmul.mubr.f32.gmra.mrb[0].mxu0 %v958
      %v2283 = vpop.f32.mrb[0].mxu0
      %v2284 = vadd.f32 %v2059, %v2283
      %v2285 = vpop.f32.mrb[0].mxu0
      %2286 = vmatprep.mubr.f32.mxu0 0.0
      %2287 = vmatmul.mubr.f32.gmra.mrb[0].mxu0 %v967
      %v2288 = vpop.f32.mrb[0].mxu0
      %v2289 = vadd.f32 %v2064, %v2288
      %v2290 = vpop.f32.mrb[0].mxu0
      %2291 = vmatprep.mubr.f32.mxu0 0.0
      %2292 = vmatmul.mubr.f32.gmra.mrb[0].mxu0 %v976
      %v2293 = vpop.f32.mrb[0].mxu0
      %v2294 = vadd.f32 %v2069, %v2293
      %v2295 = vpop.f32.mrb[0].mxu0
      %2296 = vmatprep.mubr.f32.mxu0 0.0
      %2297 = vmatmul.mubr.f32.gmra.mrb[0].mxu0 %v985
      %v2298 = vpop.f32.mrb[0].mxu0
      %v2299 = vadd.f32 %v2074, %v2298
      %v2300 = vpop.f32.mrb[0].mxu0
      %2301 = vmatprep.mubr.f32.mxu0 0.0
      %2302 = vmatmul.mubr.f32.gmra.mrb[0].mxu0 %v994
      %v2303 = vpop.f32.mrb[0].mxu0
      %v2304 = vadd.f32 %v2079, %v2303
      %v2305 = vpop.f32.mrb[0].mxu0
      %2306 = vmatprep.mubr.f32.mxu0 0.0
      %2307 = vmatmul.mubr.f32.gmra.mrb[0].mxu0 %v1003
      %v2308 = vpop.f32.mrb[0].mxu0
      %v2309 = vadd.f32 %v2084, %v2308
      %v2310 = vpop.f32.mrb[0].mxu0
      %2311 = vmatprep.mubr.f32.mxu0 0.0
      %2312 = vmatmul.mubr.f32.gmra.mrb[0].mxu0 %v1012
      %v2313 = vpop.f32.mrb[0].mxu0
      %v2314 = vadd.f32 %v2089, %v2313
      %v2315 = vpop.f32.mrb[0].mxu0
      %2316 = vmatprep.mubr.f32.mxu0 0.0
      %2317 = vmatmul.mubr.f32.gmra.mrb[0].mxu0 %v1021
      %v2318 = vpop.f32.mrb[0].mxu0
      %v2319 = vadd.f32 %v2094, %v2318
      %v2320 = vpop.f32.mrb[0].mxu0
      %2321 = vmatprep.mubr.f32.mxu0 0.0
      %2322 = vmatmul.mubr.f32.gmra.mrb[0].mxu0 %v1030
      %v2323 = vpop.f32.mrb[0].mxu0
      %v2324 = vadd.f32 %v2099, %v2323
      %v2325 = vpop.f32.mrb[0].mxu0
      %2326 = vmatprep.mubr.f32.mxu0 0.0
      %2327 = vmatmul.mubr.f32.gmra.mrb[0].mxu0 %v1039
      %v2328 = vpop.f32.mrb[0].mxu0
      %v2329 = vadd.f32 %v2104, %v2328
      %v2330 = vpop.f32.mrb[0].mxu0
      %2331 = vmatprep.mubr.f32.mxu0 0.0
      %2332 = vmatmul.mubr.f32.gmra.mrb[0].mxu0 %v1048
      %v2333 = vpop.f32.mrb[0].mxu0
      %v2334 = vadd.f32 %v2109, %v2333
      %v2335 = vpop.f32.mrb[0].mxu0
      %2336 = vmatprep.mubr.f32.mxu0 0.0
      %2337 = vmatmul.mubr.f32.gmra.mrb[0].mxu0 %v1057
      %v2338 = vpop.f32.mrb[0].mxu0
      %v2339 = vadd.f32 %v2114, %v2338
      %v2340 = vpop.f32.mrb[0].mxu0
      %2341 = vmatprep.mubr.f32.mxu0 0.0
      %2342 = vmatmul.mubr.f32.gmra.mrb[0].mxu0 %v1066
      %v2343 = vpop.f32.mrb[0].mxu0
      %v2344 = vadd.f32 %v2119, %v2343
      %v2345 = vpop.f32.mrb[0].mxu0
      %2346 = vmatprep.mubr.f32.mxu0 0.0
      %2347 = vmatmul.mubr.f32.gmra.mrb[0].mxu0 %v1075
      %v2348 = vpop.f32.mrb[0].mxu0
      %v2349 = vadd.f32 %v2124, %v2348
      %v2350 = vpop.f32.mrb[0].mxu0
      %2351 = vdwg.mxu0
      %vm2352 = vcmp.ge.f32.partialorder %v2194, 0.0
      %vm2353 = vcmp.ge.f32.partialorder %v2199, 0.0
      %vm2354 = vcmp.ge.f32.partialorder %v2204, 0.0
      %vm2355 = vcmp.ge.f32.partialorder %v2209, 0.0
      %vm2356 = vcmp.ge.f32.partialorder %v2214, 0.0
      %vm2357 = vcmp.ge.f32.partialorder %v2219, 0.0
      %vm2358 = vcmp.ge.f32.partialorder %v2224, 0.0
      %vm2359 = vcmp.ge.f32.partialorder %v2229, 0.0
      %vm2360 = vcmp.ge.f32.partialorder %v2234, 0.0
      %vm2361 = vcmp.ge.f32.partialorder %v2239, 0.0
      %vm2362 = vcmp.ge.f32.partialorder %v2244, 0.0
      %vm2363 = vcmp.ge.f32.partialorder %v2249, 0.0
      %vm2364 = vcmp.ge.f32.partialorder %v2254, 0.0
      %vm2365 = vcmp.ge.f32.partialorder %v2259, 0.0
      %vm2366 = vcmp.ge.f32.partialorder %v2264, 0.0
      %vm2367 = vcmp.ge.f32.partialorder %v2269, 0.0
      %vm2368 = vcmp.ge.f32.partialorder %v2274, 0.0
      %vm2369 = vcmp.ge.f32.partialorder %v2279, 0.0
      %vm2370 = vcmp.ge.f32.partialorder %v2284, 0.0
      %vm2371 = vcmp.ge.f32.partialorder %v2289, 0.0
      %vm2372 = vcmp.ge.f32.partialorder %v2294, 0.0
      %vm2373 = vcmp.ge.f32.partialorder %v2299, 0.0
      %vm2374 = vcmp.ge.f32.partialorder %v2304, 0.0
      %vm2375 = vcmp.ge.f32.partialorder %v2309, 0.0
      %vm2376 = vcmp.ge.f32.partialorder %v2314, 0.0
      %vm2377 = vcmp.ge.f32.partialorder %v2319, 0.0
      %vm2378 = vcmp.ge.f32.partialorder %v2324, 0.0
      %vm2379 = vcmp.ge.f32.partialorder %v2329, 0.0
      %vm2380 = vcmp.ge.f32.partialorder %v2334, 0.0
      %vm2381 = vcmp.ge.f32.partialorder %v2339, 0.0
      %vm2382 = vcmp.ge.f32.partialorder %v2344, 0.0
      %vm2383 = vcmp.ge.f32.partialorder %v2349, 0.0
      %v2384 = vmul.f32 %v2194, 0.2
      %v2385 = vmul.f32 %v2199, 0.2
      %v2386 = vmul.f32 %v2204, 0.2
      %v2387 = vmul.f32 %v2209, 0.2
      %v2388 = vmul.f32 %v2214, 0.2
      %v2389 = vmul.f32 %v2219, 0.2
      %v2390 = vmul.f32 %v2224, 0.2
      %v2391 = vmul.f32 %v2229, 0.2
      %v2392 = vmul.f32 %v2234, 0.2
      %v2393 = vmul.f32 %v2239, 0.2
      %v2394 = vmul.f32 %v2244, 0.2
      %v2395 = vmul.f32 %v2249, 0.2
      %v2396 = vmul.f32 %v2254, 0.2
      %v2397 = vmul.f32 %v2259, 0.2
      %v2398 = vmul.f32 %v2264, 0.2
      %v2399 = vmul.f32 %v2269, 0.2
      %v2400 = vmul.f32 %v2274, 0.2
      %v2401 = vmul.f32 %v2279, 0.2
      %v2402 = vmul.f32 %v2284, 0.2
      %v2403 = vmul.f32 %v2289, 0.2
      %v2404 = vmul.f32 %v2294, 0.2
      %v2405 = vmul.f32 %v2299, 0.2
      %v2406 = vmul.f32 %v2304, 0.2
      %v2407 = vmul.f32 %v2309, 0.2
      %v2408 = vmul.f32 %v2314, 0.2
      %v2409 = vmul.f32 %v2319, 0.2
      %v2410 = vmul.f32 %v2324, 0.2
      %v2411 = vmul.f32 %v2329, 0.2
      %v2412 = vmul.f32 %v2334, 0.2
      %v2413 = vmul.f32 %v2339, 0.2
      %v2414 = vmul.f32 %v2344, 0.2
      %v2415 = vmul.f32 %v2349, 0.2
      %v2416 = vsel %vm2352, %v2194, %v2384
      %v2417 = vsel %vm2353, %v2199, %v2385
      %v2418 = vsel %vm2354, %v2204, %v2386
      %v2419 = vsel %vm2355, %v2209, %v2387
      %v2420 = vsel %vm2356, %v2214, %v2388
      %v2421 = vsel %vm2357, %v2219, %v2389
      %v2422 = vsel %vm2358, %v2224, %v2390
      %v2423 = vsel %vm2359, %v2229, %v2391
      %v2424 = vsel %vm2360, %v2234, %v2392
      %v2425 = vsel %vm2361, %v2239, %v2393
      %v2426 = vsel %vm2362, %v2244, %v2394
      %v2427 = vsel %vm2363, %v2249, %v2395
      %v2428 = vsel %vm2364, %v2254, %v2396
      %v2429 = vsel %vm2365, %v2259, %v2397
      %v2430 = vsel %vm2366, %v2264, %v2398
      %v2431 = vsel %vm2367, %v2269, %v2399
      %v2432 = vsel %vm2368, %v2274, %v2400
      %v2433 = vsel %vm2369, %v2279, %v2401
      %v2434 = vsel %vm2370, %v2284, %v2402
      %v2435 = vsel %vm2371, %v2289, %v2403
      %v2436 = vsel %vm2372, %v2294, %v2404
      %v2437 = vsel %vm2373, %v2299, %v2405
      %v2438 = vsel %vm2374, %v2304, %v2406
      %v2439 = vsel %vm2375, %v2309, %v2407
      %v2440 = vsel %vm2376, %v2314, %v2408
      %v2441 = vsel %vm2377, %v2319, %v2409
      %v2442 = vsel %vm2378, %v2324, %v2410
      %v2443 = vsel %vm2379, %v2329, %v2411
      %v2444 = vsel %vm2380, %v2334, %v2412
      %v2445 = vsel %vm2381, %v2339, %v2413
      %v2446 = vsel %vm2382, %v2344, %v2414
      %v2447 = vsel %vm2383, %v2349, %v2415
      %2448 = vst [vmem:[%s208] sm:$0xff] %v2416
      %2449 = vst [vmem:[%s208 + $0x8] sm:$0xff] %v2417
      %2450 = vst [vmem:[%s208 + $0x10] sm:$0xff] %v2418
      %2451 = vst [vmem:[%s208 + $0x18] sm:$0xff] %v2419
      %2452 = vst [vmem:[%s208 + $0x20] sm:$0xff] %v2420
      %2453 = vst [vmem:[%s208 + $0x28] sm:$0xff] %v2421
      %2454 = vst [vmem:[%s208 + $0x30] sm:$0xff] %v2422
      %2455 = vst [vmem:[%s208 + $0x38] sm:$0xff] %v2423
      %2456 = vst [vmem:[%s208 + $0x40] sm:$0xff] %v2424
      %2457 = vst [vmem:[%s208 + $0x48] sm:$0xff] %v2425
      %2458 = vst [vmem:[%s208 + $0x50] sm:$0xff] %v2426
      %2459 = vst [vmem:[%s208 + $0x58] sm:$0xff] %v2427
      %2460 = vst [vmem:[%s208 + $0x60] sm:$0xff] %v2428
      %2461 = vst [vmem:[%s208 + $0x68] sm:$0xff] %v2429
      %2462 = vst [vmem:[%s208 + $0x70] sm:$0xff] %v2430
      %2463 = vst [vmem:[%s208 + $0x78] sm:$0xff] %v2431
      %2464 = vst [vmem:[%s208 + $0x80] sm:$0xff] %v2432
      %2465 = vst [vmem:[%s208 + $0x88] sm:$0xff] %v2433
      %2466 = vst [vmem:[%s208 + $0x90] sm:$0xff] %v2434
      %2467 = vst [vmem:[%s208 + $0x98] sm:$0xff] %v2435
      %2468 = vst [vmem:[%s208 + $0xa0] sm:$0xff] %v2436
      %2469 = vst [vmem:[%s208 + $0xa8] sm:$0xff] %v2437
      %2470 = vst [vmem:[%s208 + $0xb0] sm:$0xff] %v2438
      %2471 = vst [vmem:[%s208 + $0xb8] sm:$0xff] %v2439
      %2472 = vst [vmem:[%s208 + $0xc0] sm:$0xff] %v2440
      %2473 = vst [vmem:[%s208 + $0xc8] sm:$0xff] %v2441
      %2474 = vst [vmem:[%s208 + $0xd0] sm:$0xff] %v2442
      %2475 = vst [vmem:[%s208 + $0xd8] sm:$0xff] %v2443
      %2476 = vst [vmem:[%s208 + $0xe0] sm:$0xff] %v2444
      %2477 = vst [vmem:[%s208 + $0xe8] sm:$0xff] %v2445
      %2478 = vst [vmem:[%s208 + $0xf0] sm:$0xff] %v2446
      %2479 = vst [vmem:[%s208 + $0xf8] sm:$0xff] %v2447
      %s2480 = smul.u32 16, %s19
      %p2481 = scmp.lt.s32.totalorder %s18, 1
      %s2482 = scalar_select %p2481, %s18, 1
      %p2483 = scmp.lt.s32.totalorder %s2480, 15
      %s2484 = scalar_select %p2483, %s2480, 15
      %s2485 = smul.addr %s2484, 2
      %s2486 = smul.addr %s2482, 32
      %s2487 = sadd.s32 %s2485, %s2486
      %s2488 = smul.addr %s2487, 8
      %s2489 = scalar_lea.vmem %s3, %s2488
      // Predicated region
      $region33: #{rrdb_forward.15} parent=31 // pred_check
        %p2490 = pneg %p116
      $region34: #{rrdb_forward.15} parent=31 // pred_check_branch
        %2492 = sbr.rel (%p2490) target = $region36
      $region35: #{rrdb_forward.15} parent=31 // pred_region
        %s2493 = smul.u32 16, %s19
      $region36: #{rrdb_forward.15} parent=31 // pred_fallthru
        _
    $region32: #{rrdb_forward.15} parent=5 // pred_fallthru
      _
    %p2494 = scmp.le.s32.totalorder 2, %s9
    // Predicated region
    $region37: #{rrdb_forward.15} parent=5 // pred_check
      %p2495 = pneg %p2494
    $region38: #{rrdb_forward.15} parent=5 // pred_check_branch
      %2497 = sbr.rel (%p2495) target = $region40
    $region39: #{rrdb_forward.15} parent=5 // pred_region
      %s2498 = ssub.s32 %s9, 2
      // Predicated region
      $region41: #{rrdb_forward.15} parent=39 // pred_check
        %p2499 = pneg %p122
      $region42: #{rrdb_forward.15} parent=39 // pred_check_branch
        %2501 = sbr.rel (%p2499) target = $region44
      $region43: #{rrdb_forward.15} parent=39 // pred_region
        %s2502 = smul.u32 16, %s21
        %p2503 = scmp.lt.s32.totalorder %s20, 1
        %s2504 = scalar_select %p2503, %s20, 1
        %p2505 = scmp.lt.s32.totalorder %s2502, 15
        %s2506 = scalar_select %p2505, %s2502, 15
        %s2507 = smul.addr %s2506, 2
        %s2508 = smul.addr %s2504, 32
        %s2509 = sadd.s32 %s2507, %s2508
        %s2510 = smul.addr %s2509, 8
        %s2511 = scalar_lea.vmem %s3, %s2510
      $region44: #{rrdb_forward.15} parent=39 // pred_fallthru
        _
    $region40: #{rrdb_forward.15} parent=5 // pred_fallthru
      _
  $region6: #{rrdb_forward.15} parent=0 // loop_footer
    %s13 = sadd.s32 1, %s9
  $region7: #{rrdb_forward.15} parent=0 // loop_footer_branch
    %8 = sbr.rel target = $region3
  $region8: #{rrdb_forward.15} parent=0 // loop_exit
    _

// kernel: rrdb_forward.19
$region0: #{rrdb_forward.19}
  #allocation0 [shape = 'u32[]', space=smem, size = 0x4, offset = 0x4, fixed_abs, tag = 'smem constant byte address 0x4 - core index']
  #allocation1 [shape = 'u32[144,128]{1,0:T(1,128)}', space=vmem, size = 0x12000, scoped, tag = 'internal scratch']
  #allocation2 [shape = 'f32[256,2304]{1,0:T(8,128)}', space=vmem, size = 0x240000, scoped, tag = 'scratch operand']
  %s0 = inlined_call_operand.vmem [shape: f32[2,1,18,18,256], index: 0, kind: input, shape index: {}]
  %s1 = inlined_call_operand.vmem [shape: f32[2304,128], index: 1, kind: input, shape index: {}]
  %s2 = inlined_call_operand.vmem [shape: f32[1,128], index: 2, kind: input, shape index: {}]
  %s3 = inlined_call_operand.vmem [shape: f32[2,16,16,128], index: 3, kind: output, shape index: {}]
  %s4 = sld [smem:[#allocation0]]
  $region45: #{rrdb_forward.19} parent=0
    _
  %s6 = ssub.s32 1, %s4
  %s7 = scalar_select 0, %s6, %s4
  loop: start=0, step=1, limit=4
  $region2: #{rrdb_forward.19} parent=0 // loop_pre_header
    _
  $region3: #{rrdb_forward.19} parent=0 // loop_header
    %s9 = sphi 0, %s13
    %p10 = scmp.ge.s32.totalorder %s9, 4
    %s16 = sphi 0, %s28
    %s17 = sphi 0, %s24
    %s18 = sphi 0, %s16
    %s19 = sphi 0, %s17
    %s20 = sphi 0, %s18
    %s21 = sphi 0, %s19
    %s33 = sphi 0, %s35
    %s36 = sphi 0, %s33
    %s37 = sphi 0, %s36
    %s53 = sphi 0, %s37
    %s57 = sphi 0, %s57
    %s59 = sphi 0, %s57
    %s60 = sphi 0, %s59
    %s74 = sphi 0, %s60
    %s78 = sphi 0, %s78
    %s80 = sphi 0, %s78
    %s81 = sphi 0, %s80
    %s95 = sphi 0, %s81
    %s103 = sphi 0, %s105
    %s106 = sphi 0, %s103
    %s107 = sphi 0, %s106
    %s123 = sphi 0, %s107
  $region4: #{rrdb_forward.19} parent=0 // loop_header_branch
    %12 = sbr.rel (%p10) target = $region8
  $region5: #{rrdb_forward.19} parent=0 // loop_body
    %s14 = ssub.s32 %s9, 1
    %s15 = ssub.s32 %s9, 2
    %s22 = sadd.s32 1, %s17
    %p23 = scmp.ge.s32.totalorder %s22, 1
    %s24 = scalar_select %p23, 0, %s22
    %s25 = sadd.s32 1, %s16
    %s26 = scalar_select %p23, %s25, %s16
    %p27 = scmp.ge.s32.totalorder %s26, 2
    %s28 = scalar_select %p27, 0, %s26
    %s29 = ssub.s32 %s16, %s28
    %s30 = ssub.s32 %s17, %s24
    %s31 = sor.u32 %s29, %s30
    %p32 = scmp.eq.s32.totalorder %s31, 0
    %s34 = sadd.s32 %s33, 1
    %s35 = scalar_select %p32, %s33, %s34
    %p38 = pneg %p32
    %p39 = scmp.eq.s32.totalorder %s9, 1
    %p40 = por %p38, %p39
    %p41 = scmp.ne.s32.totalorder %s33, %s36
    %p42 = scmp.eq.s32.totalorder %s9, 0
    %p43 = por %p41, %p42
    %p44 = scmp.ne.s32.totalorder %s33, %s36
    %p45 = scmp.eq.s32.totalorder %s14, 1
    %p46 = por %p44, %p45
    %p47 = scmp.ne.s32.totalorder %s36, %s37
    %p48 = scmp.eq.s32.totalorder %s14, 0
    %p49 = por %p47, %p48
    %p50 = scmp.ne.s32.totalorder %s36, %s37
    %p51 = scmp.eq.s32.totalorder %s15, 1
    %p52 = por %p50, %p51
    %p54 = scmp.ne.s32.totalorder %s37, %s53
    %p55 = scmp.eq.s32.totalorder %s15, 0
    %p56 = por %p54, %p55
    %s58 = sadd.s32 %s57, 1
    %p61 = scmp.eq.s32.totalorder %s9, 1
    %p62 = scmp.ne.s32.totalorder %s57, %s59
    %p63 = scmp.eq.s32.totalorder %s9, 0
    %p64 = por %p62, %p63
    %p65 = scmp.ne.s32.totalorder %s57, %s59
    %p66 = scmp.eq.s32.totalorder %s14, 1
    %p67 = por %p65, %p66
    %p68 = scmp.ne.s32.totalorder %s59, %s60
    %p69 = scmp.eq.s32.totalorder %s14, 0
    %p70 = por %p68, %p69
    %p71 = scmp.ne.s32.totalorder %s59, %s60
    %p72 = scmp.eq.s32.totalorder %s15, 1
    %p73 = por %p71, %p72
    %p75 = scmp.ne.s32.totalorder %s60, %s74
    %p76 = scmp.eq.s32.totalorder %s15, 0
    %p77 = por %p75, %p76
    %s79 = sadd.s32 %s78, 1
    %p82 = scmp.eq.s32.totalorder %s9, 1
    %p83 = scmp.ne.s32.totalorder %s78, %s80
    %p84 = scmp.eq.s32.totalorder %s9, 0
    %p85 = por %p83, %p84
    %p86 = scmp.ne.s32.totalorder %s78, %s80
    %p87 = scmp.eq.s32.totalorder %s14, 1
    %p88 = por %p86, %p87
    %p89 = scmp.ne.s32.totalorder %s80, %s81
    %p90 = scmp.eq.s32.totalorder %s14, 0
    %p91 = por %p89, %p90
    %p92 = scmp.ne.s32.totalorder %s80, %s81
    %p93 = scmp.eq.s32.totalorder %s15, 1
    %p94 = por %p92, %p93
    %p96 = scmp.ne.s32.totalorder %s81, %s95
    %p97 = scmp.eq.s32.totalorder %s15, 0
    %p98 = por %p96, %p97
    %s99 = ssub.s32 %s16, %s28
    %s100 = ssub.s32 %s17, %s24
    %s101 = sor.u32 %s99, %s100
    %p102 = scmp.eq.s32.totalorder %s101, 0
    %s104 = sadd.s32 %s103, 1
    %s105 = scalar_select %p102, %s103, %s104
    %p108 = pneg %p102
    %p109 = scmp.eq.s32.totalorder %s9, 1
    %p110 = por %p108, %p109
    %p111 = scmp.ne.s32.totalorder %s103, %s106
    %p112 = scmp.eq.s32.totalorder %s9, 0
    %p113 = por %p111, %p112
    %p114 = scmp.ne.s32.totalorder %s103, %s106
    %p115 = scmp.eq.s32.totalorder %s14, 1
    %p116 = por %p114, %p115
    %p117 = scmp.ne.s32.totalorder %s106, %s107
    %p118 = scmp.eq.s32.totalorder %s14, 0
    %p119 = por %p117, %p118
    %p120 = scmp.ne.s32.totalorder %s106, %s107
    %p121 = scmp.eq.s32.totalorder %s15, 1
    %p122 = por %p120, %p121
    %p124 = scmp.ne.s32.totalorder %s107, %s123
    %p125 = scmp.eq.s32.totalorder %s15, 0
    %p126 = por %p124, %p125
    %p127 = scmp.le.s32.totalorder 1, %s9
    %p128 = scmp.lt.s32.totalorder %s9, 3
    %p129 = pnand %p127, %p128
    %p130 = pneg %p129
    // Predicated region
    $region9: #{rrdb_forward.19} parent=5 // pred_check
      _
    $region10: #{rrdb_forward.19} parent=5 // pred_check_branch
      %132 = sbr.rel (%p129) target = $region12
    $region11: #{rrdb_forward.19} parent=5 // pred_region
      %s133 = ssub.s32 %s9, 1
      // Predicated region
      $region13: #{rrdb_forward.19} parent=11 // pred_check
        %p134 = pneg %p70
      $region14: #{rrdb_forward.19} parent=11 // pred_check_branch
        %136 = sbr.rel (%p134) target = $region16
      $region15: #{rrdb_forward.19} parent=11 // pred_region
        _
      $region16: #{rrdb_forward.19} parent=11 // pred_fallthru
        _
      // Predicated region
      $region17: #{rrdb_forward.19} parent=11 // pred_check
        %p137 = pneg %p91
      $region18: #{rrdb_forward.19} parent=11 // pred_check_branch
        %139 = sbr.rel (%p137) target = $region20
      $region19: #{rrdb_forward.19} parent=11 // pred_region
        _
      $region20: #{rrdb_forward.19} parent=11 // pred_fallthru
        _
    $region12: #{rrdb_forward.19} parent=5 // pred_fallthru
      _
    %p140 = scmp.lt.s32.totalorder %s9, 2
    // Predicated region
    $region21: #{rrdb_forward.19} parent=5 // pred_check
      %p141 = pneg %p140
    $region22: #{rrdb_forward.19} parent=5 // pred_check_branch
      %143 = sbr.rel (%p141) target = $region24
    $region23: #{rrdb_forward.19} parent=5 // pred_region
      // Predicated region
      $region25: #{rrdb_forward.19} parent=23 // pred_check
        %p144 = pneg %p43
      $region26: #{rrdb_forward.19} parent=23 // pred_check_branch
        %146 = sbr.rel (%p144) target = $region28
      $region27: #{rrdb_forward.19} parent=23 // pred_region
        %p147 = scmp.lt.s32.totalorder %s16, 1
        %s148 = scalar_select %p147, %s16, 1
        %p149 = scmp.lt.s32.totalorder %s17, 0
        %s150 = scalar_select %p149, %s17, 0
        %s151 = smul.addr %s150, 108
        %s152 = smul.addr %s148, 108
        %s153 = sadd.s32 %s151, %s152
        %s154 = smul.addr %s153, 8
        %s155 = scalar_lea.vmem %s0, %s154
      $region28: #{rrdb_forward.19} parent=23 // pred_fallthru
        _
    $region24: #{rrdb_forward.19} parent=5 // pred_fallthru
      _
    %p156 = scmp.le.s32.totalorder 1, %s9
    %p157 = scmp.lt.s32.totalorder %s9, 3
    %p158 = pnand %p156, %p157
    %p159 = pneg %p158
    // Predicated region
    $region29: #{rrdb_forward.19} parent=5 // pred_check
      _
    $region30: #{rrdb_forward.19} parent=5 // pred_check_branch
      %161 = sbr.rel (%p158) target = $region32
    $region31: #{rrdb_forward.19} parent=5 // pred_region
      %s162 = ssub.s32 %s9, 1
      %p163 = scmp.lt.s32.totalorder %s18, 1
      %s164 = scalar_select %p163, %s18, 1
      %p165 = scmp.lt.s32.totalorder %s19, 0
      %s166 = scalar_select %p165, %s19, 0
      %s167 = smul.addr %s166, 108
      %s168 = smul.addr %s164, 108
      %s169 = sadd.s32 %s167, %s168
      %s170 = smul.addr %s169, 8
      %s171 = scalar_lea.vmem %s0, %s170
      %p172 = pneg %p49
      %p173 = pneg %p46
      %p174 = pneg %p70
      %p175 = pneg %p67
      %p176 = pneg %p91
      %p177 = pneg %p88
      %p178 = pneg %p119
      %p179 = pneg %p116
      %s180 = smul.u32 16, %s19
      %p181 = scmp.lt.s32.totalorder %s18, 1
      %s182 = scalar_select %p181, %s18, 1
      %p183 = scmp.lt.s32.totalorder %s180, 15
      %s184 = scalar_select %p183, %s180, 15
      %s185 = smul.addr %s184, 2
      %s186 = smul.addr %s182, 32
      %s187 = sadd.s32 %s185, %s186
      %s188 = smul.addr %s187, 8
      %s189 = scalar_lea.vmem %s3, %s188
      %p190 = scmp.lt.s32.totalorder %s18, 1
      %s191 = scalar_select %p190, %s18, 1
      %p192 = scmp.lt.s32.totalorder %s19, 0
      %s193 = scalar_select %p192, %s19, 0
      %s194 = smul.addr %s193, 108
      %s195 = smul.addr %s191, 108
      %s196 = sadd.s32 %s194, %s195
      %s197 = smul.addr %s196, 8
      %s198 = scalar_lea.vmem %s0, %s197
      %s199 = smul.u32 16, %s19
      %p200 = scmp.lt.s32.totalorder %s18, 1
      %s201 = scalar_select %p200, %s18, 1
      %p202 = scmp.lt.s32.totalorder %s199, 15
      %s203 = scalar_select %p202, %s199, 15
      %s204 = smul.addr %s203, 2
      %s205 = smul.addr %s201, 32
      %s206 = sadd.s32 %s204, %s205
      %s207 = smul.addr %s206, 8
      %s208 = scalar_lea.vmem %s3, %s207
      %s209 = smul.u32 16, %s19
      %v210 = vld [vmem:[%s198] sm:$0xff]
      %v211 = vld [vmem:[%s198 + $0x8] sm:$0xff]
      %v212 = vld [vmem:[%s198 + $0x10] sm:$0xff]
      %v213 = vld [vmem:[%s198 + $0x18] sm:$0xff]
      %v214 = vld [vmem:[%s198 + $0x30] sm:$0xff]
      %v215 = vld [vmem:[%s198 + $0x38] sm:$0xff]
      %v216 = vld [vmem:[%s198 + $0x40] sm:$0xff]
      %v217 = vld [vmem:[%s198 + $0x48] sm:$0xff]
      %v218 = vld [vmem:[%s198 + $0x60] sm:$0xff]
      %v219 = vld [vmem:[%s198 + $0x68] sm:$0xff]
      %v220 = vld [vmem:[%s198 + $0x70] sm:$0xff]
      %v221 = vld [vmem:[%s198 + $0x78] sm:$0xff]
      %v222 = vld [vmem:[%s198 + $0x90] sm:$0xff]
      %v223 = vld [vmem:[%s198 + $0x98] sm:$0xff]
      %v224 = vld [vmem:[%s198 + $0xa0] sm:$0xff]
      %v225 = vld [vmem:[%s198 + $0xa8] sm:$0xff]
      %v226 = vld [vmem:[%s198 + $0xc0] sm:$0xff]
      %v227 = vld [vmem:[%s198 + $0xc8] sm:$0xff]
      %v228 = vld [vmem:[%s198 + $0xd0] sm:$0xff]
      %v229 = vld [vmem:[%s198 + $0xd8] sm:$0xff]
      %v230 = vld [vmem:[%s198 + $0xf0] sm:$0xff]
      %v231 = vld [vmem:[%s198 + $0xf8] sm:$0xff]
      %v232 = vld [vmem:[%s198 + $0x100] sm:$0xff]
      %v233 = vld [vmem:[%s198 + $0x108] sm:$0xff]
      %v234 = vld [vmem:[%s198 + $0x120] sm:$0xff]
      %v235 = vld [vmem:[%s198 + $0x128] sm:$0xff]
      %v236 = vld [vmem:[%s198 + $0x130] sm:$0xff]
      %v237 = vld [vmem:[%s198 + $0x138] sm:$0xff]
      %v238 = vld [vmem:[%s198 + $0x150] sm:$0xff]
      %v239 = vld [vmem:[%s198 + $0x158] sm:$0xff]
      %v240 = vld [vmem:[%s198 + $0x160] sm:$0xff]
      %v241 = vld [vmem:[%s198 + $0x168] sm:$0xff]
      %v242 = vld [vmem:[%s198 + $0x180] sm:$0xff]
      %v243 = vld [vmem:[%s198 + $0x188] sm:$0xff]
      %v244 = vld [vmem:[%s198 + $0x190] sm:$0xff]
      %v245 = vld [vmem:[%s198 + $0x198] sm:$0xff]
      %v246 = vld [vmem:[%s198 + $0x1b0] sm:$0xff]
      %v247 = vld [vmem:[%s198 + $0x1b8] sm:$0xff]
      %v248 = vld [vmem:[%s198 + $0x1c0] sm:$0xff]
      %v249 = vld [vmem:[%s198 + $0x1c8] sm:$0xff]
      %v250 = vld [vmem:[%s198 + $0x1e0] sm:$0xff]
      %v251 = vld [vmem:[%s198 + $0x1e8] sm:$0xff]
      %v252 = vld [vmem:[%s198 + $0x1f0] sm:$0xff]
      %v253 = vld [vmem:[%s198 + $0x1f8] sm:$0xff]
      %v254 = vld [vmem:[%s198 + $0x210] sm:$0xff]
      %v255 = vld [vmem:[%s198 + $0x218] sm:$0xff]
      %v256 = vld [vmem:[%s198 + $0x220] sm:$0xff]
      %v257 = vld [vmem:[%s198 + $0x228] sm:$0xff]
      %v258 = vld [vmem:[%s198 + $0x240] sm:$0xff]
      %v259 = vld [vmem:[%s198 + $0x248] sm:$0xff]
      %v260 = vld [vmem:[%s198 + $0x250] sm:$0xff]
      %v261 = vld [vmem:[%s198 + $0x258] sm:$0xff]
      %v262 = vld [vmem:[%s198 + $0x270] sm:$0xff]
      %v263 = vld [vmem:[%s198 + $0x278] sm:$0xff]
      %v264 = vld [vmem:[%s198 + $0x280] sm:$0xff]
      %v265 = vld [vmem:[%s198 + $0x288] sm:$0xff]
      %v266 = vld [vmem:[%s198 + $0x2a0] sm:$0xff]
      %v267 = vld [vmem:[%s198 + $0x2a8] sm:$0xff]
      %v268 = vld [vmem:[%s198 + $0x2b0] sm:$0xff]
      %v269 = vld [vmem:[%s198 + $0x2b8] sm:$0xff]
      %v270 = vld [vmem:[%s198 + $0x2d0] sm:$0xff]
      %v271 = vld [vmem:[%s198 + $0x2d8] sm:$0xff]
      %v272 = vld [vmem:[%s198 + $0x2e0] sm:$0xff]
      %v273 = vld [vmem:[%s198 + $0x2e8] sm:$0xff]
      %274 = vst [vmem:[#allocation2] sm:$0xff] %v210
      %275 = vst [vmem:[#allocation2 + $0x8] sm:$0xff] %v211
      %276 = vst [vmem:[#allocation2 + $0x90] sm:$0xff] %v212
      %277 = vst [vmem:[#allocation2 + $0x98] sm:$0xff] %v213
      %278 = vst [vmem:[#allocation2 + $0x120] sm:$0xff] %v214
      %279 = vst [vmem:[#allocation2 + $0x128] sm:$0xff] %v215
      %280 = vst [vmem:[#allocation2 + $0x1b0] sm:$0xff] %v216
      %281 = vst [vmem:[#allocation2 + $0x1b8] sm:$0xff] %v217
      %282 = vst [vmem:[#allocation2 + $0x240] sm:$0xff] %v218
      %283 = vst [vmem:[#allocation2 + $0x248] sm:$0xff] %v219
      %284 = vst [vmem:[#allocation2 + $0x2d0] sm:$0xff] %v220
      %285 = vst [vmem:[#allocation2 + $0x2d8] sm:$0xff] %v221
      %286 = vst [vmem:[#allocation2 + $0x360] sm:$0xff] %v222
      %287 = vst [vmem:[#allocation2 + $0x368] sm:$0xff] %v223
      %288 = vst [vmem:[#allocation2 + $0x3f0] sm:$0xff] %v224
      %289 = vst [vmem:[#allocation2 + $0x3f8] sm:$0xff] %v225
      %290 = vst [vmem:[#allocation2 + $0x480] sm:$0xff] %v226
      %291 = vst [vmem:[#allocation2 + $0x488] sm:$0xff] %v227
      %292 = vst [vmem:[#allocation2 + $0x510] sm:$0xff] %v228
      %293 = vst [vmem:[#allocation2 + $0x518] sm:$0xff] %v229
      %294 = vst [vmem:[#allocation2 + $0x5a0] sm:$0xff] %v230
      %295 = vst [vmem:[#allocation2 + $0x5a8] sm:$0xff] %v231
      %296 = vst [vmem:[#allocation2 + $0x630] sm:$0xff] %v232
      %297 = vst [vmem:[#allocation2 + $0x638] sm:$0xff] %v233
      %298 = vst [vmem:[#allocation2 + $0x6c0] sm:$0xff] %v234
      %299 = vst [vmem:[#allocation2 + $0x6c8] sm:$0xff] %v235
      %300 = vst [vmem:[#allocation2 + $0x750] sm:$0xff] %v236
      %301 = vst [vmem:[#allocation2 + $0x758] sm:$0xff] %v237
      %302 = vst [vmem:[#allocation2 + $0x7e0] sm:$0xff] %v238
      %303 = vst [vmem:[#allocation2 + $0x7e8] sm:$0xff] %v239
      %304 = vst [vmem:[#allocation2 + $0x870] sm:$0xff] %v240
      %305 = vst [vmem:[#allocation2 + $0x878] sm:$0xff] %v241
      %306 = vst [vmem:[#allocation2 + $0x900] sm:$0xff] %v242
      %307 = vst [vmem:[#allocation2 + $0x908] sm:$0xff] %v243
      %308 = vst [vmem:[#allocation2 + $0x990] sm:$0xff] %v244
      %309 = vst [vmem:[#allocation2 + $0x998] sm:$0xff] %v245
      %310 = vst [vmem:[#allocation2 + $0xa20] sm:$0xff] %v246
      %311 = vst [vmem:[#allocation2 + $0xa28] sm:$0xff] %v247
      %312 = vst [vmem:[#allocation2 + $0xab0] sm:$0xff] %v248
      %313 = vst [vmem:[#allocation2 + $0xab8] sm:$0xff] %v249
      %314 = vst [vmem:[#allocation2 + $0xb40] sm:$0xff] %v250
      %315 = vst [vmem:[#allocation2 + $0xb48] sm:$0xff] %v251
      %316 = vst [vmem:[#allocation2 + $0xbd0] sm:$0xff] %v252
      %317 = vst [vmem:[#allocation2 + $0xbd8] sm:$0xff] %v253
      %318 = vst [vmem:[#allocation2 + $0xc60] sm:$0xff] %v254
      %319 = vst [vmem:[#allocation2 + $0xc68] sm:$0xff] %v255
      %320 = vst [vmem:[#allocation2 + $0xcf0] sm:$0xff] %v256
      %321 = vst [vmem:[#allocation2 + $0xcf8] sm:$0xff] %v257
      %322 = vst [vmem:[#allocation2 + $0xd80] sm:$0xff] %v258
      %323 = vst [vmem:[#allocation2 + $0xd88] sm:$0xff] %v259
      %324 = vst [vmem:[#allocation2 + $0xe10] sm:$0xff] %v260
      %325 = vst [vmem:[#allocation2 + $0xe18] sm:$0xff] %v261
      %326 = vst [vmem:[#allocation2 + $0xea0] sm:$0xff] %v262
      %327 = vst [vmem:[#allocation2 + $0xea8] sm:$0xff] %v263
      %328 = vst [vmem:[#allocation2 + $0xf30] sm:$0xff] %v264
      %329 = vst [vmem:[#allocation2 + $0xf38] sm:$0xff] %v265
      %330 = vst [vmem:[#allocation2 + $0xfc0] sm:$0xff] %v266
      %331 = vst [vmem:[#allocation2 + $0xfc8] sm:$0xff] %v267
      %332 = vst [vmem:[#allocation2 + $0x1050] sm:$0xff] %v268
      %333 = vst [vmem:[#allocation2 + $0x1058] sm:$0xff] %v269
      %334 = vst [vmem:[#allocation2 + $0x10e0] sm:$0xff] %v270
      %335 = vst [vmem:[#allocation2 + $0x10e8] sm:$0xff] %v271
      %336 = vst [vmem:[#allocation2 + $0x1170] sm:$0xff] %v272
      %337 = vst [vmem:[#allocation2 + $0x1178] sm:$0xff] %v273
      %v338 = vld [vmem:[%s198] sm:$0xfe]
      %v339 = vld [vmem:[%s198 + $0x8] sm:$0xfe]
      %v340 = vld [vmem:[%s198 + $0x10] sm:$0xff]
      %v341 = vld [vmem:[%s198 + $0x18] sm:$0xff]
      %v342 = vld [vmem:[%s198 + $0x20] sm:$0x1]
      %v343 = vld [vmem:[%s198 + $0x28] sm:$0x1]
      %v344 = vld [vmem:[%s198 + $0x30] sm:$0xfe]
      %v345 = vld [vmem:[%s198 + $0x38] sm:$0xfe]
      %v346 = vld [vmem:[%s198 + $0x40] sm:$0xff]
      %v347 = vld [vmem:[%s198 + $0x48] sm:$0xff]
      %v348 = vld [vmem:[%s198 + $0x50] sm:$0x1]
      %v349 = vld [vmem:[%s198 + $0x58] sm:$0x1]
      %v350 = vld [vmem:[%s198 + $0x60] sm:$0xfe]
      %v351 = vld [vmem:[%s198 + $0x68] sm:$0xfe]
      %v352 = vld [vmem:[%s198 + $0x70] sm:$0xff]
      %v353 = vld [vmem:[%s198 + $0x78] sm:$0xff]
      %v354 = vld [vmem:[%s198 + $0x80] sm:$0x1]
      %v355 = vld [vmem:[%s198 + $0x88] sm:$0x1]
      %v356 = vld [vmem:[%s198 + $0x90] sm:$0xfe]
      %v357 = vld [vmem:[%s198 + $0x98] sm:$0xfe]
      %v358 = vld [vmem:[%s198 + $0xa0] sm:$0xff]
      %v359 = vld [vmem:[%s198 + $0xa8] sm:$0xff]
      %v360 = vld [vmem:[%s198 + $0xb0] sm:$0x1]
      %v361 = vld [vmem:[%s198 + $0xb8] sm:$0x1]
      %v362 = vld [vmem:[%s198 + $0xc0] sm:$0xfe]
      %v363 = vld [vmem:[%s198 + $0xc8] sm:$0xfe]
      %v364 = vld [vmem:[%s198 + $0xd0] sm:$0xff]
      %v365 = vld [vmem:[%s198 + $0xd8] sm:$0xff]
      %v366 = vld [vmem:[%s198 + $0xe0] sm:$0x1]
      %v367 = vld [vmem:[%s198 + $0xe8] sm:$0x1]
      %v368 = vld [vmem:[%s198 + $0xf0] sm:$0xfe]
      %v369 = vld [vmem:[%s198 + $0xf8] sm:$0xfe]
      %v370 = vld [vmem:[%s198 + $0x100] sm:$0xff]
      %v371 = vld [vmem:[%s198 + $0x108] sm:$0xff]
      %v372 = vld [vmem:[%s198 + $0x110] sm:$0x1]
      %v373 = vld [vmem:[%s198 + $0x118] sm:$0x1]
      %v374 = vld [vmem:[%s198 + $0x120] sm:$0xfe]
      %v375 = vld [vmem:[%s198 + $0x128] sm:$0xfe]
      %v376 = vld [vmem:[%s198 + $0x130] sm:$0xff]
      %v377 = vld [vmem:[%s198 + $0x138] sm:$0xff]
      %v378 = vld [vmem:[%s198 + $0x140] sm:$0x1]
      %v379 = vld [vmem:[%s198 + $0x148] sm:$0x1]
      %v380 = vld [vmem:[%s198 + $0x150] sm:$0xfe]
      %v381 = vld [vmem:[%s198 + $0x158] sm:$0xfe]
      %v382 = vld [vmem:[%s198 + $0x160] sm:$0xff]
      %v383 = vld [vmem:[%s198 + $0x168] sm:$0xff]
      %v384 = vld [vmem:[%s198 + $0x170] sm:$0x1]
      %v385 = vld [vmem:[%s198 + $0x178] sm:$0x1]
      %v386 = vld [vmem:[%s198 + $0x180] sm:$0xfe]
      %v387 = vld [vmem:[%s198 + $0x188] sm:$0xfe]
      %v388 = vld [vmem:[%s198 + $0x190] sm:$0xff]
      %v389 = vld [vmem:[%s198 + $0x198] sm:$0xff]
      %v390 = vld [vmem:[%s198 + $0x1a0] sm:$0x1]
      %v391 = vld [vmem:[%s198 + $0x1a8] sm:$0x1]
      %v392 = vld [vmem:[%s198 + $0x1b0] sm:$0xfe]
      %v393 = vld [vmem:[%s198 + $0x1b8] sm:$0xfe]
      %v394 = vld [vmem:[%s198 + $0x1c0] sm:$0xff]
      %v395 = vld [vmem:[%s198 + $0x1c8] sm:$0xff]
      %v396 = vld [vmem:[%s198 + $0x1d0] sm:$0x1]
      %v397 = vld [vmem:[%s198 + $0x1d8] sm:$0x1]
      %v398 = vld [vmem:[%s198 + $0x1e0] sm:$0xfe]
      %v399 = vld [vmem:[%s198 + $0x1e8] sm:$0xfe]
      %v400 = vld [vmem:[%s198 + $0x1f0] sm:$0xff]
      %v401 = vld [vmem:[%s198 + $0x1f8] sm:$0xff]
      %v402 = vld [vmem:[%s198 + $0x200] sm:$0x1]
      %v403 = vld [vmem:[%s198 + $0x208] sm:$0x1]
      %v404 = vld [vmem:[%s198 + $0x210] sm:$0xfe]
      %v405 = vld [vmem:[%s198 + $0x218] sm:$0xfe]
      %v406 = vld [vmem:[%s198 + $0x220] sm:$0xff]
      %v407 = vld [vmem:[%s198 + $0x228] sm:$0xff]
      %v408 = vld [vmem:[%s198 + $0x230] sm:$0x1]
      %v409 = vld [vmem:[%s198 + $0x238] sm:$0x1]
      %v410 = vld [vmem:[%s198 + $0x240] sm:$0xfe]
      %v411 = vld [vmem:[%s198 + $0x248] sm:$0xfe]
      %v412 = vld [vmem:[%s198 + $0x250] sm:$0xff]
      %v413 = vld [vmem:[%s198 + $0x258] sm:$0xff]
      %v414 = vld [vmem:[%s198 + $0x260] sm:$0x1]
      %v415 = vld [vmem:[%s198 + $0x268] sm:$0x1]
      %v416 = vld [vmem:[%s198 + $0x270] sm:$0xfe]
      %v417 = vld [vmem:[%s198 + $0x278] sm:$0xfe]
      %v418 = vld [vmem:[%s198 + $0x280] sm:$0xff]
      %v419 = vld [vmem:[%s198 + $0x288] sm:$0xff]
      %v420 = vld [vmem:[%s198 + $0x290] sm:$0x1]
      %v421 = vld [vmem:[%s198 + $0x298] sm:$0x1]
      %v422 = vld [vmem:[%s198 + $0x2a0] sm:$0xfe]
      %v423 = vld [vmem:[%s198 + $0x2a8] sm:$0xfe]
      %v424 = vld [vmem:[%s198 + $0x2b0] sm:$0xff]
      %v425 = vld [vmem:[%s198 + $0x2b8] sm:$0xff]
      %v426 = vld [vmem:[%s198 + $0x2c0] sm:$0x1]
      %v427 = vld [vmem:[%s198 + $0x2c8] sm:$0x1]
      %v428 = vld [vmem:[%s198 + $0x2d0] sm:$0xfe]
      %v429 = vld [vmem:[%s198 + $0x2d8] sm:$0xfe]
      %v430 = vld [vmem:[%s198 + $0x2e0] sm:$0xff]
      %v431 = vld [vmem:[%s198 + $0x2e8] sm:$0xff]
      %v432 = vld [vmem:[%s198 + $0x2f0] sm:$0x1]
      %v433 = vld [vmem:[%s198 + $0x2f8] sm:$0x1]
      %vm530 = vcmask 1046528
      %v531 = vrot.slane %v338, 1
      %v532 = vrot.slane %v340, 1
      %v533 = vsel %vm530, %v531, %v532
      %v534 = vrot.slane %v339, 1
      %v535 = vrot.slane %v341, 1
      %v536 = vsel %vm530, %v534, %v535
      %v537 = vrot.slane %v342, 1
      %v538 = vsel %vm530, %v532, %v537
      %v539 = vrot.slane %v343, 1
      %v540 = vsel %vm530, %v535, %v539
      %v541 = vrot.slane %v344, 1
      %v542 = vrot.slane %v346, 1
      %v543 = vsel %vm530, %v541, %v542
      %v544 = vrot.slane %v345, 1
      %v545 = vrot.slane %v347, 1
      %v546 = vsel %vm530, %v544, %v545
      %v547 = vrot.slane %v348, 1
      %v548 = vsel %vm530, %v542, %v547
      %v549 = vrot.slane %v349, 1
      %v550 = vsel %vm530, %v545, %v549
      %v551 = vrot.slane %v350, 1
      %v552 = vrot.slane %v352, 1
      %v553 = vsel %vm530, %v551, %v552
      %v554 = vrot.slane %v351, 1
      %v555 = vrot.slane %v353, 1
      %v556 = vsel %vm530, %v554, %v555
      %v557 = vrot.slane %v354, 1
      %v558 = vsel %vm530, %v552, %v557
      %v559 = vrot.slane %v355, 1
      %v560 = vsel %vm530, %v555, %v559
      %v561 = vrot.slane %v356, 1
      %v562 = vrot.slane %v358, 1
      %v563 = vsel %vm530, %v561, %v562
      %v564 = vrot.slane %v357, 1
      %v565 = vrot.slane %v359, 1
      %v566 = vsel %vm530, %v564, %v565
      %v567 = vrot.slane %v360, 1
      %v568 = vsel %vm530, %v562, %v567
      %v569 = vrot.slane %v361, 1
      %v570 = vsel %vm530, %v565, %v569
      %v571 = vrot.slane %v362, 1
      %v572 = vrot.slane %v364, 1
      %v573 = vsel %vm530, %v571, %v572
      %v574 = vrot.slane %v363, 1
      %v575 = vrot.slane %v365, 1
      %v576 = vsel %vm530, %v574, %v575
      %v577 = vrot.slane %v366, 1
      %v578 = vsel %vm530, %v572, %v577
      %v579 = vrot.slane %v367, 1
      %v580 = vsel %vm530, %v575, %v579
      %v581 = vrot.slane %v368, 1
      %v582 = vrot.slane %v370, 1
      %v583 = vsel %vm530, %v581, %v582
      %v584 = vrot.slane %v369, 1
      %v585 = vrot.slane %v371, 1
      %v586 = vsel %vm530, %v584, %v585
      %v587 = vrot.slane %v372, 1
      %v588 = vsel %vm530, %v582, %v587
      %v589 = vrot.slane %v373, 1
      %v590 = vsel %vm530, %v585, %v589
      %v591 = vrot.slane %v374, 1
      %v592 = vrot.slane %v376, 1
      %v593 = vsel %vm530, %v591, %v592
      %v594 = vrot.slane %v375, 1
      %v595 = vrot.slane %v377, 1
      %v596 = vsel %vm530, %v594, %v595
      %v597 = vrot.slane %v378, 1
      %v598 = vsel %vm530, %v592, %v597
      %v599 = vrot.slane %v379, 1
      %v600 = vsel %vm530, %v595, %v599
      %v601 = vrot.slane %v380, 1
      %v602 = vrot.slane %v382, 1
      %v603 = vsel %vm530, %v601, %v602
      %v604 = vrot.slane %v381, 1
      %v605 = vrot.slane %v383, 1
      %v606 = vsel %vm530, %v604, %v605
      %v607 = vrot.slane %v384, 1
      %v608 = vsel %vm530, %v602, %v607
      %v609 = vrot.slane %v385, 1
      %v610 = vsel %vm530, %v605, %v609
      %v611 = vrot.slane %v386, 1
      %v612 = vrot.slane %v388, 1
      %v613 = vsel %vm530, %v611, %v612
      %v614 = vrot.slane %v387, 1
      %v615 = vrot.slane %v389, 1
      %v616 = vsel %vm530, %v614, %v615
      %v617 = vrot.slane %v390, 1
      %v618 = vsel %vm530, %v612, %v617
      %v619 = vrot.slane %v391, 1
      %v620 = vsel %vm530, %v615, %v619
      %v621 = vrot.slane %v392, 1
      %v622 = vrot.slane %v394, 1
      %v623 = vsel %vm530, %v621, %v622
      %v624 = vrot.slane %v393, 1
      %v625 = vrot.slane %v395, 1
      %v626 = vsel %vm530, %v624, %v625
      %v627 = vrot.slane %v396, 1
      %v628 = vsel %vm530, %v622, %v627
      %v629 = vrot.slane %v397, 1
      %v630 = vsel %vm530, %v625, %v629
      %v631 = vrot.slane %v398, 1
      %v632 = vrot.slane %v400, 1
      %v633 = vsel %vm530, %v631, %v632
      %v634 = vrot.slane %v399, 1
      %v635 = vrot.slane %v401, 1
      %v636 = vsel %vm530, %v634, %v635
      %v637 = vrot.slane %v402, 1
      %v638 = vsel %vm530, %v632, %v637
      %v639 = vrot.slane %v403, 1
      %v640 = vsel %vm530, %v635, %v639
      %v641 = vrot.slane %v404, 1
      %v642 = vrot.slane %v406, 1
      %v643 = vsel %vm530, %v641, %v642
      %v644 = vrot.slane %v405, 1
      %v645 = vrot.slane %v407, 1
      %v646 = vsel %vm530, %v644, %v645
      %v647 = vrot.slane %v408, 1
      %v648 = vsel %vm530, %v642, %v647
      %v649 = vrot.slane %v409, 1
      %v650 = vsel %vm530, %v645, %v649
      %v651 = vrot.slane %v410, 1
      %v652 = vrot.slane %v412, 1
      %v653 = vsel %vm530, %v651, %v652
      %v654 = vrot.slane %v411, 1
      %v655 = vrot.slane %v413, 1
      %v656 = vsel %vm530, %v654, %v655
      %v657 = vrot.slane %v414, 1
      %v658 = vsel %vm530, %v652, %v657
      %v659 = vrot.slane %v415, 1
      %v660 = vsel %vm530, %v655, %v659
      %v661 = vrot.slane %v416, 1
      %v662 = vrot.slane %v418, 1
      %v663 = vsel %vm530, %v661, %v662
      %v664 = vrot.slane %v417, 1
      %v665 = vrot.slane %v419, 1
      %v666 = vsel %vm530, %v664, %v665
      %v667 = vrot.slane %v420, 1
      %v668 = vsel %vm530, %v662, %v667
      %v669 = vrot.slane %v421, 1
      %v670 = vsel %vm530, %v665, %v669
      %v671 = vrot.slane %v422, 1
      %v672 = vrot.slane %v424, 1
      %v673 = vsel %vm530, %v671, %v672
      %v674 = vrot.slane %v423, 1
      %v675 = vrot.slane %v425, 1
      %v676 = vsel %vm530, %v674, %v675
      %v677 = vrot.slane %v426, 1
      %v678 = vsel %vm530, %v672, %v677
      %v679 = vrot.slane %v427, 1
      %v680 = vsel %vm530, %v675, %v679
      %v681 = vrot.slane %v428, 1
      %v682 = vrot.slane %v430, 1
      %v683 = vsel %vm530, %v681, %v682
      %v684 = vrot.slane %v429, 1
      %v685 = vrot.slane %v431, 1
      %v686 = vsel %vm530, %v684, %v685
      %v687 = vrot.slane %v432, 1
      %v688 = vsel %vm530, %v682, %v687
      %v689 = vrot.slane %v433, 1
      %v690 = vsel %vm530, %v685, %v689
      %755 = vst [vmem:[#allocation2 + $0x10] sm:$0xff] %v533
      %756 = vst [vmem:[#allocation2 + $0x18] sm:$0xff] %v536
      %757 = vst [vmem:[#allocation2 + $0xa0] sm:$0xff] %v538
      %758 = vst [vmem:[#allocation2 + $0xa8] sm:$0xff] %v540
      %759 = vst [vmem:[#allocation2 + $0x130] sm:$0xff] %v543
      %760 = vst [vmem:[#allocation2 + $0x138] sm:$0xff] %v546
      %761 = vst [vmem:[#allocation2 + $0x1c0] sm:$0xff] %v548
      %762 = vst [vmem:[#allocation2 + $0x1c8] sm:$0xff] %v550
      %763 = vst [vmem:[#allocation2 + $0x250] sm:$0xff] %v553
      %764 = vst [vmem:[#allocation2 + $0x258] sm:$0xff] %v556
      %765 = vst [vmem:[#allocation2 + $0x2e0] sm:$0xff] %v558
      %766 = vst [vmem:[#allocation2 + $0x2e8] sm:$0xff] %v560
      %767 = vst [vmem:[#allocation2 + $0x370] sm:$0xff] %v563
      %768 = vst [vmem:[#allocation2 + $0x378] sm:$0xff] %v566
      %769 = vst [vmem:[#allocation2 + $0x400] sm:$0xff] %v568
      %770 = vst [vmem:[#allocation2 + $0x408] sm:$0xff] %v570
      %771 = vst [vmem:[#allocation2 + $0x490] sm:$0xff] %v573
      %772 = vst [vmem:[#allocation2 + $0x498] sm:$0xff] %v576
      %773 = vst [vmem:[#allocation2 + $0x520] sm:$0xff] %v578
      %774 = vst [vmem:[#allocation2 + $0x528] sm:$0xff] %v580
      %775 = vst [vmem:[#allocation2 + $0x5b0] sm:$0xff] %v583
      %776 = vst [vmem:[#allocation2 + $0x5b8] sm:$0xff] %v586
      %777 = vst [vmem:[#allocation2 + $0x640] sm:$0xff] %v588
      %778 = vst [vmem:[#allocation2 + $0x648] sm:$0xff] %v590
      %779 = vst [vmem:[#allocation2 + $0x6d0] sm:$0xff] %v593
      %780 = vst [vmem:[#allocation2 + $0x6d8] sm:$0xff] %v596
      %781 = vst [vmem:[#allocation2 + $0x760] sm:$0xff] %v598
      %782 = vst [vmem:[#allocation2 + $0x768] sm:$0xff] %v600
      %783 = vst [vmem:[#allocation2 + $0x7f0] sm:$0xff] %v603
      %784 = vst [vmem:[#allocation2 + $0x7f8] sm:$0xff] %v606
      %785 = vst [vmem:[#allocation2 + $0x880] sm:$0xff] %v608
      %786 = vst [vmem:[#allocation2 + $0x888] sm:$0xff] %v610
      %787 = vst [vmem:[#allocation2 + $0x910] sm:$0xff] %v613
      %788 = vst [vmem:[#allocation2 + $0x918] sm:$0xff] %v616
      %789 = vst [vmem:[#allocation2 + $0x9a0] sm:$0xff] %v618
      %790 = vst [vmem:[#allocation2 + $0x9a8] sm:$0xff] %v620
      %791 = vst [vmem:[#allocation2 + $0xa30] sm:$0xff] %v623
      %792 = vst [vmem:[#allocation2 + $0xa38] sm:$0xff] %v626
      %793 = vst [vmem:[#allocation2 + $0xac0] sm:$0xff] %v628
      %794 = vst [vmem:[#allocation2 + $0xac8] sm:$0xff] %v630
      %795 = vst [vmem:[#allocation2 + $0xb50] sm:$0xff] %v633
      %796 = vst [vmem:[#allocation2 + $0xb58] sm:$0xff] %v636
      %797 = vst [vmem:[#allocation2 + $0xbe0] sm:$0xff] %v638
      %798 = vst [vmem:[#allocation2 + $0xbe8] sm:$0xff] %v640
      %799 = vst [vmem:[#allocation2 + $0xc70] sm:$0xff] %v643
      %800 = vst [vmem:[#allocation2 + $0xc78] sm:$0xff] %v646
      %801 = vst [vmem:[#allocation2 + $0xd00] sm:$0xff] %v648
      %802 = vst [vmem:[#allocation2 + $0xd08] sm:$0xff] %v650
      %803 = vst [vmem:[#allocation2 + $0xd90] sm:$0xff] %v653
      %804 = vst [vmem:[#allocation2 + $0xd98] sm:$0xff] %v656
      %805 = vst [vmem:[#allocation2 + $0xe20] sm:$0xff] %v658
      %806 = vst [vmem:[#allocation2 + $0xe28] sm:$0xff] %v660
      %807 = vst [vmem:[#allocation2 + $0xeb0] sm:$0xff] %v663
      %808 = vst [vmem:[#allocation2 + $0xeb8] sm:$0xff] %v666
      %809 = vst [vmem:[#allocation2 + $0xf40] sm:$0xff] %v668
      %810 = vst [vmem:[#allocation2 + $0xf48] sm:$0xff] %v670
      %811 = vst [vmem:[#allocation2 + $0xfd0] sm:$0xff] %v673
      %812 = vst [vmem:[#allocation2 + $0xfd8] sm:$0xff] %v676
      %813 = vst [vmem:[#allocation2 + $0x1060] sm:$0xff] %v678
      %814 = vst [vmem:[#allocation2 + $0x1068] sm:$0xff] %v680
      %815 = vst [vmem:[#allocation2 + $0x10f0] sm:$0xff] %v683
      %816 = vst [vmem:[#allocation2 + $0x10f8] sm:$0xff] %v686
      %817 = vst [vmem:[#allocation2 + $0x1180] sm:$0xff] %v688
      %818 = vst [vmem:[#allocation2 + $0x1188] sm:$0xff] %v690
      %v819 = vld [vmem:[%s198] sm:$0xfc]
      %v820 = vld [vmem:[%s198 + $0x8] sm:$0xfc]
      %v821 = vld [vmem:[%s198 + $0x10] sm:$0xff]
      %v822 = vld [vmem:[%s198 + $0x18] sm:$0xff]
      %v823 = vld [vmem:[%s198 + $0x20] sm:$0x3]
      %v824 = vld [vmem:[%s198 + $0x28] sm:$0x3]
      %v825 = vld [vmem:[%s198 + $0x30] sm:$0xfc]
      %v826 = vld [vmem:[%s198 + $0x38] sm:$0xfc]
      %v827 = vld [vmem:[%s198 + $0x40] sm:$0xff]
      %v828 = vld [vmem:[%s198 + $0x48] sm:$0xff]
      %v829 = vld [vmem:[%s198 + $0x50] sm:$0x3]
      %v830 = vld [vmem:[%s198 + $0x58] sm:$0x3]
      %v831 = vld [vmem:[%s198 + $0x60] sm:$0xfc]
      %v832 = vld [vmem:[%s198 + $0x68] sm:$0xfc]
      %v833 = vld [vmem:[%s198 + $0x70] sm:$0xff]
      %v834 = vld [vmem:[%s198 + $0x78] sm:$0xff]
      %v835 = vld [vmem:[%s198 + $0x80] sm:$0x3]
      %v836 = vld [vmem:[%s198 + $0x88] sm:$0x3]
      %v837 = vld [vmem:[%s198 + $0x90] sm:$0xfc]
      %v838 = vld [vmem:[%s198 + $0x98] sm:$0xfc]
      %v839 = vld [vmem:[%s198 + $0xa0] sm:$0xff]
      %v840 = vld [vmem:[%s198 + $0xa8] sm:$0xff]
      %v841 = vld [vmem:[%s198 + $0xb0] sm:$0x3]
      %v842 = vld [vmem:[%s198 + $0xb8] sm:$0x3]
      %v843 = vld [vmem:[%s198 + $0xc0] sm:$0xfc]
      %v844 = vld [vmem:[%s198 + $0xc8] sm:$0xfc]
      %v845 = vld [vmem:[%s198 + $0xd0] sm:$0xff]
      %v846 = vld [vmem:[%s198 + $0xd8] sm:$0xff]
      %v847 = vld [vmem:[%s198 + $0xe0] sm:$0x3]
      %v848 = vld [vmem:[%s198 + $0xe8] sm:$0x3]
      %v849 = vld [vmem:[%s198 + $0xf0] sm:$0xfc]
      %v850 = vld [vmem:[%s198 + $0xf8] sm:$0xfc]
      %v851 = vld [vmem:[%s198 + $0x100] sm:$0xff]
      %v852 = vld [vmem:[%s198 + $0x108] sm:$0xff]
      %v853 = vld [vmem:[%s198 + $0x110] sm:$0x3]
      %v854 = vld [vmem:[%s198 + $0x118] sm:$0x3]
      %v855 = vld [vmem:[%s198 + $0x120] sm:$0xfc]
      %v856 = vld [vmem:[%s198 + $0x128] sm:$0xfc]
      %v857 = vld [vmem:[%s198 + $0x130] sm:$0xff]
      %v858 = vld [vmem:[%s198 + $0x138] sm:$0xff]
      %v859 = vld [vmem:[%s198 + $0x140] sm:$0x3]
      %v860 = vld [vmem:[%s198 + $0x148] sm:$0x3]
      %v861 = vld [vmem:[%s198 + $0x150] sm:$0xfc]
      %v862 = vld [vmem:[%s198 + $0x158] sm:$0xfc]
      %v863 = vld [vmem:[%s198 + $0x160] sm:$0xff]
      %v864 = vld [vmem:[%s198 + $0x168] sm:$0xff]
      %v865 = vld [vmem:[%s198 + $0x170] sm:$0x3]
      %v866 = vld [vmem:[%s198 + $0x178] sm:$0x3]
      %v867 = vld [vmem:[%s198 + $0x180] sm:$0xfc]
      %v868 = vld [vmem:[%s198 + $0x188] sm:$0xfc]
      %v869 = vld [vmem:[%s198 + $0x190] sm:$0xff]
      %v870 = vld [vmem:[%s198 + $0x198] sm:$0xff]
      %v871 = vld [vmem:[%s198 + $0x1a0] sm:$0x3]
      %v872 = vld [vmem:[%s198 + $0x1a8] sm:$0x3]
      %v873 = vld [vmem:[%s198 + $0x1b0] sm:$0xfc]
      %v874 = vld [vmem:[%s198 + $0x1b8] sm:$0xfc]
      %v875 = vld [vmem:[%s198 + $0x1c0] sm:$0xff]
      %v876 = vld [vmem:[%s198 + $0x1c8] sm:$0xff]
      %v877 = vld [vmem:[%s198 + $0x1d0] sm:$0x3]
      %v878 = vld [vmem:[%s198 + $0x1d8] sm:$0x3]
      %v879 = vld [vmem:[%s198 + $0x1e0] sm:$0xfc]
      %v880 = vld [vmem:[%s198 + $0x1e8] sm:$0xfc]
      %v881 = vld [vmem:[%s198 + $0x1f0] sm:$0xff]
      %v882 = vld [vmem:[%s198 + $0x1f8] sm:$0xff]
      %v883 = vld [vmem:[%s198 + $0x200] sm:$0x3]
      %v884 = vld [vmem:[%s198 + $0x208] sm:$0x3]
      %v885 = vld [vmem:[%s198 + $0x210] sm:$0xfc]
      %v886 = vld [vmem:[%s198 + $0x218] sm:$0xfc]
      %v887 = vld [vmem:[%s198 + $0x220] sm:$0xff]
      %v888 = vld [vmem:[%s198 + $0x228] sm:$0xff]
      %v889 = vld [vmem:[%s198 + $0x230] sm:$0x3]
      %v890 = vld [vmem:[%s198 + $0x238] sm:$0x3]
      %v891 = vld [vmem:[%s198 + $0x240] sm:$0xfc]
      %v892 = vld [vmem:[%s198 + $0x248] sm:$0xfc]
      %v893 = vld [vmem:[%s198 + $0x250] sm:$0xff]
      %v894 = vld [vmem:[%s198 + $0x258] sm:$0xff]
      %v895 = vld [vmem:[%s198 + $0x260] sm:$0x3]
      %v896 = vld [vmem:[%s198 + $0x268] sm:$0x3]
      %v897 = vld [vmem:[%s198 + $0x270] sm:$0xfc]
      %v898 = vld [vmem:[%s198 + $0x278] sm:$0xfc]
      %v899 = vld [vmem:[%s198 + $0x280] sm:$0xff]
      %v900 = vld [vmem:[%s198 + $0x288] sm:$0xff]
      %v901 = vld [vmem:[%s198 + $0x290] sm:$0x3]
      %v902 = vld [vmem:[%s198 + $0x298] sm:$0x3]
      %v903 = vld [vmem:[%s198 + $0x2a0] sm:$0xfc]
      %v904 = vld [vmem:[%s198 + $0x2a8] sm:$0xfc]
      %v905 = vld [vmem:[%s198 + $0x2b0] sm:$0xff]
      %v906 = vld [vmem:[%s198 + $0x2b8] sm:$0xff]
      %v907 = vld [vmem:[%s198 + $0x2c0] sm:$0x3]
      %v908 = vld [vmem:[%s198 + $0x2c8] sm:$0x3]
      %v909 = vld [vmem:[%s198 + $0x2d0] sm:$0xfc]
      %v910 = vld [vmem:[%s198 + $0x2d8] sm:$0xfc]
      %v911 = vld [vmem:[%s198 + $0x2e0] sm:$0xff]
      %v912 = vld [vmem:[%s198 + $0x2e8] sm:$0xff]
      %v913 = vld [vmem:[%s198 + $0x2f0] sm:$0x3]
      %v914 = vld [vmem:[%s198 + $0x2f8] sm:$0x3]
      %vm1011 = vcmask 1045504
      %v1012 = vrot.slane %v819, 2
      %v1013 = vrot.slane %v821, 2
      %v1014 = vsel %vm1011, %v1012, %v1013
      %v1015 = vrot.slane %v820, 2
      %v1016 = vrot.slane %v822, 2
      %v1017 = vsel %vm1011, %v1015, %v1016
      %v1018 = vrot.slane %v823, 2
      %v1019 = vsel %vm1011, %v1013, %v1018
      %v1020 = vrot.slane %v824, 2
      %v1021 = vsel %vm1011, %v1016, %v1020
      %v1022 = vrot.slane %v825, 2
      %v1023 = vrot.slane %v827, 2
      %v1024 = vsel %vm1011, %v1022, %v1023
      %v1025 = vrot.slane %v826, 2
      %v1026 = vrot.slane %v828, 2
      %v1027 = vsel %vm1011, %v1025, %v1026
      %v1028 = vrot.slane %v829, 2
      %v1029 = vsel %vm1011, %v1023, %v1028
      %v1030 = vrot.slane %v830, 2
      %v1031 = vsel %vm1011, %v1026, %v1030
      %v1032 = vrot.slane %v831, 2
      %v1033 = vrot.slane %v833, 2
      %v1034 = vsel %vm1011, %v1032, %v1033
      %v1035 = vrot.slane %v832, 2
      %v1036 = vrot.slane %v834, 2
      %v1037 = vsel %vm1011, %v1035, %v1036
      %v1038 = vrot.slane %v835, 2
      %v1039 = vsel %vm1011, %v1033, %v1038
      %v1040 = vrot.slane %v836, 2
      %v1041 = vsel %vm1011, %v1036, %v1040
      %v1042 = vrot.slane %v837, 2
      %v1043 = vrot.slane %v839, 2
      %v1044 = vsel %vm1011, %v1042, %v1043
      %v1045 = vrot.slane %v838, 2
      %v1046 = vrot.slane %v840, 2
      %v1047 = vsel %vm1011, %v1045, %v1046
      %v1048 = vrot.slane %v841, 2
      %v1049 = vsel %vm1011, %v1043, %v1048
      %v1050 = vrot.slane %v842, 2
      %v1051 = vsel %vm1011, %v1046, %v1050
      %v1052 = vrot.slane %v843, 2
      %v1053 = vrot.slane %v845, 2
      %v1054 = vsel %vm1011, %v1052, %v1053
      %v1055 = vrot.slane %v844, 2
      %v1056 = vrot.slane %v846, 2
      %v1057 = vsel %vm1011, %v1055, %v1056
      %v1058 = vrot.slane %v847, 2
      %v1059 = vsel %vm1011, %v1053, %v1058
      %v1060 = vrot.slane %v848, 2
      %v1061 = vsel %vm1011, %v1056, %v1060
      %v1062 = vrot.slane %v849, 2
      %v1063 = vrot.slane %v851, 2
      %v1064 = vsel %vm1011, %v1062, %v1063
      %v1065 = vrot.slane %v850, 2
      %v1066 = vrot.slane %v852, 2
      %v1067 = vsel %vm1011, %v1065, %v1066
      %v1068 = vrot.slane %v853, 2
      %v1069 = vsel %vm1011, %v1063, %v1068
      %v1070 = vrot.slane %v854, 2
      %v1071 = vsel %vm1011, %v1066, %v1070
      %v1072 = vrot.slane %v855, 2
      %v1073 = vrot.slane %v857, 2
      %v1074 = vsel %vm1011, %v1072, %v1073
      %v1075 = vrot.slane %v856, 2
      %v1076 = vrot.slane %v858, 2
      %v1077 = vsel %vm1011, %v1075, %v1076
      %v1078 = vrot.slane %v859, 2
      %v1079 = vsel %vm1011, %v1073, %v1078
      %v1080 = vrot.slane %v860, 2
      %v1081 = vsel %vm1011, %v1076, %v1080
      %v1082 = vrot.slane %v861, 2
      %v1083 = vrot.slane %v863, 2
      %v1084 = vsel %vm1011, %v1082, %v1083
      %v1085 = vrot.slane %v862, 2
      %v1086 = vrot.slane %v864, 2
      %v1087 = vsel %vm1011, %v1085, %v1086
      %v1088 = vrot.slane %v865, 2
      %v1089 = vsel %vm1011, %v1083, %v1088
      %v1090 = vrot.slane %v866, 2
      %v1091 = vsel %vm1011, %v1086, %v1090
      %v1092 = vrot.slane %v867, 2
      %v1093 = vrot.slane %v869, 2
      %v1094 = vsel %vm1011, %v1092, %v1093
      %v1095 = vrot.slane %v868, 2
      %v1096 = vrot.slane %v870, 2
      %v1097 = vsel %vm1011, %v1095, %v1096
      %v1098 = vrot.slane %v871, 2
      %v1099 = vsel %vm1011, %v1093, %v1098
      %v1100 = vrot.slane %v872, 2
      %v1101 = vsel %vm1011, %v1096, %v1100
      %v1102 = vrot.slane %v873, 2
      %v1103 = vrot.slane %v875, 2
      %v1104 = vsel %vm1011, %v1102, %v1103
      %v1105 = vrot.slane %v874, 2
      %v1106 = vrot.slane %v876, 2
      %v1107 = vsel %vm1011, %v1105, %v1106
      %v1108 = vrot.slane %v877, 2
      %v1109 = vsel %vm1011, %v1103, %v1108
      %v1110 = vrot.slane %v878, 2
      %v1111 = vsel %vm1011, %v1106, %v1110
      %v1112 = vrot.slane %v879, 2
      %v1113 = vrot.slane %v881, 2
      %v1114 = vsel %vm1011, %v1112, %v1113
      %v1115 = vrot.slane %v880, 2
      %v1116 = vrot.slane %v882, 2
      %v1117 = vsel %vm1011, %v1115, %v1116
      %v1118 = vrot.slane %v883, 2
      %v1119 = vsel %vm1011, %v1113, %v1118
      %v1120 = vrot.slane %v884, 2
      %v1121 = vsel %vm1011, %v1116, %v1120
      %v1122 = vrot.slane %v885, 2
      %v1123 = vrot.slane %v887, 2
      %v1124 = vsel %vm1011, %v1122, %v1123
      %v1125 = vrot.slane %v886, 2
      %v1126 = vrot.slane %v888, 2
      %v1127 = vsel %vm1011, %v1125, %v1126
      %v1128 = vrot.slane %v889, 2
      %v1129 = vsel %vm1011, %v1123, %v1128
      %v1130 = vrot.slane %v890, 2
      %v1131 = vsel %vm1011, %v1126, %v1130
      %v1132 = vrot.slane %v891, 2
      %v1133 = vrot.slane %v893, 2
      %v1134 = vsel %vm1011, %v1132, %v1133
      %v1135 = vrot.slane %v892, 2
      %v1136 = vrot.slane %v894, 2
      %v1137 = vsel %vm1011, %v1135, %v1136
      %v1138 = vrot.slane %v895, 2
      %v1139 = vsel %vm1011, %v1133, %v1138
      %v1140 = vrot.slane %v896, 2
      %v1141 = vsel %vm1011, %v1136, %v1140
      %v1142 = vrot.slane %v897, 2
      %v1143 = vrot.slane %v899, 2
      %v1144 = vsel %vm1011, %v1142, %v1143
      %v1145 = vrot.slane %v898, 2
      %v1146 = vrot.slane %v900, 2
      %v1147 = vsel %vm1011, %v1145, %v1146
      %v1148 = vrot.slane %v901, 2
      %v1149 = vsel %vm1011, %v1143, %v1148
      %v1150 = vrot.slane %v902, 2
      %v1151 = vsel %vm1011, %v1146, %v1150
      %v1152 = vrot.slane %v903, 2
      %v1153 = vrot.slane %v905, 2
      %v1154 = vsel %vm1011, %v1152, %v1153
      %v1155 = vrot.slane %v904, 2
      %v1156 = vrot.slane %v906, 2
      %v1157 = vsel %vm1011, %v1155, %v1156
      %v1158 = vrot.slane %v907, 2
      %v1159 = vsel %vm1011, %v1153, %v1158
      %v1160 = vrot.slane %v908, 2
      %v1161 = vsel %vm1011, %v1156, %v1160
      %v1162 = vrot.slane %v909, 2
      %v1163 = vrot.slane %v911, 2
      %v1164 = vsel %vm1011, %v1162, %v1163
      %v1165 = vrot.slane %v910, 2
      %v1166 = vrot.slane %v912, 2
      %v1167 = vsel %vm1011, %v1165, %v1166
      %v1168 = vrot.slane %v913, 2
      %v1169 = vsel %vm1011, %v1163, %v1168
      %v1170 = vrot.slane %v914, 2
      %v1171 = vsel %vm1011, %v1166, %v1170
      %1236 = vst [vmem:[#allocation2 + $0x20] sm:$0xff] %v1014
      %1237 = vst [vmem:[#allocation2 + $0x28] sm:$0xff] %v1017
      %1238 = vst [vmem:[#allocation2 + $0xb0] sm:$0xff] %v1019
      %1239 = vst [vmem:[#allocation2 + $0xb8] sm:$0xff] %v1021
      %1240 = vst [vmem:[#allocation2 + $0x140] sm:$0xff] %v1024
      %1241 = vst [vmem:[#allocation2 + $0x148] sm:$0xff] %v1027
      %1242 = vst [vmem:[#allocation2 + $0x1d0] sm:$0xff] %v1029
      %1243 = vst [vmem:[#allocation2 + $0x1d8] sm:$0xff] %v1031
      %1244 = vst [vmem:[#allocation2 + $0x260] sm:$0xff] %v1034
      %1245 = vst [vmem:[#allocation2 + $0x268] sm:$0xff] %v1037
      %1246 = vst [vmem:[#allocation2 + $0x2f0] sm:$0xff] %v1039
      %1247 = vst [vmem:[#allocation2 + $0x2f8] sm:$0xff] %v1041
      %1248 = vst [vmem:[#allocation2 + $0x380] sm:$0xff] %v1044
      %1249 = vst [vmem:[#allocation2 + $0x388] sm:$0xff] %v1047
      %1250 = vst [vmem:[#allocation2 + $0x410] sm:$0xff] %v1049
      %1251 = vst [vmem:[#allocation2 + $0x418] sm:$0xff] %v1051
      %1252 = vst [vmem:[#allocation2 + $0x4a0] sm:$0xff] %v1054
      %1253 = vst [vmem:[#allocation2 + $0x4a8] sm:$0xff] %v1057
      %1254 = vst [vmem:[#allocation2 + $0x530] sm:$0xff] %v1059
      %1255 = vst [vmem:[#allocation2 + $0x538] sm:$0xff] %v1061
      %1256 = vst [vmem:[#allocation2 + $0x5c0] sm:$0xff] %v1064
      %1257 = vst [vmem:[#allocation2 + $0x5c8] sm:$0xff] %v1067
      %1258 = vst [vmem:[#allocation2 + $0x650] sm:$0xff] %v1069
      %1259 = vst [vmem:[#allocation2 + $0x658] sm:$0xff] %v1071
      %1260 = vst [vmem:[#allocation2 + $0x6e0] sm:$0xff] %v1074
      %1261 = vst [vmem:[#allocation2 + $0x6e8] sm:$0xff] %v1077
      %1262 = vst [vmem:[#allocation2 + $0x770] sm:$0xff] %v1079
      %1263 = vst [vmem:[#allocation2 + $0x778] sm:$0xff] %v1081
      %1264 = vst [vmem:[#allocation2 + $0x800] sm:$0xff] %v1084
      %1265 = vst [vmem:[#allocation2 + $0x808] sm:$0xff] %v1087
      %1266 = vst [vmem:[#allocation2 + $0x890] sm:$0xff] %v1089
      %1267 = vst [vmem:[#allocation2 + $0x898] sm:$0xff] %v1091
      %1268 = vst [vmem:[#allocation2 + $0x920] sm:$0xff] %v1094
      %1269 = vst [vmem:[#allocation2 + $0x928] sm:$0xff] %v1097
      %1270 = vst [vmem:[#allocation2 + $0x9b0] sm:$0xff] %v1099
      %1271 = vst [vmem:[#allocation2 + $0x9b8] sm:$0xff] %v1101
      %1272 = vst [vmem:[#allocation2 + $0xa40] sm:$0xff] %v1104
      %1273 = vst [vmem:[#allocation2 + $0xa48] sm:$0xff] %v1107
      %1274 = vst [vmem:[#allocation2 + $0xad0] sm:$0xff] %v1109
      %1275 = vst [vmem:[#allocation2 + $0xad8] sm:$0xff] %v1111
      %1276 = vst [vmem:[#allocation2 + $0xb60] sm:$0xff] %v1114
      %1277 = vst [vmem:[#allocation2 + $0xb68] sm:$0xff] %v1117
      %1278 = vst [vmem:[#allocation2 + $0xbf0] sm:$0xff] %v1119
      %1279 = vst [vmem:[#allocation2 + $0xbf8] sm:$0xff] %v1121
      %1280 = vst [vmem:[#allocation2 + $0xc80] sm:$0xff] %v1124
      %1281 = vst [vmem:[#allocation2 + $0xc88] sm:$0xff] %v1127
      %1282 = vst [vmem:[#allocation2 + $0xd10] sm:$0xff] %v1129
      %1283 = vst [vmem:[#allocation2 + $0xd18] sm:$0xff] %v1131
      %1284 = vst [vmem:[#allocation2 + $0xda0] sm:$0xff] %v1134
      %1285 = vst [vmem:[#allocation2 + $0xda8] sm:$0xff] %v1137
      %1286 = vst [vmem:[#allocation2 + $0xe30] sm:$0xff] %v1139
      %1287 = vst [vmem:[#allocation2 + $0xe38] sm:$0xff] %v1141
      %1288 = vst [vmem:[#allocation2 + $0xec0] sm:$0xff] %v1144
      %1289 = vst [vmem:[#allocation2 + $0xec8] sm:$0xff] %v1147
      %1290 = vst [vmem:[#allocation2 + $0xf50] sm:$0xff] %v1149
      %1291 = vst [vmem:[#allocation2 + $0xf58] sm:$0xff] %v1151
      %1292 = vst [vmem:[#allocation2 + $0xfe0] sm:$0xff] %v1154
      %1293 = vst [vmem:[#allocation2 + $0xfe8] sm:$0xff] %v1157
      %1294 = vst [vmem:[#allocation2 + $0x1070] sm:$0xff] %v1159
      %1295 = vst [vmem:[#allocation2 + $0x1078] sm:$0xff] %v1161
      %1296 = vst [vmem:[#allocation2 + $0x1100] sm:$0xff] %v1164
      %1297 = vst [vmem:[#allocation2 + $0x1108] sm:$0xff] %v1167
      %1298 = vst [vmem:[#allocation2 + $0x1190] sm:$0xff] %v1169
      %1299 = vst [vmem:[#allocation2 + $0x1198] sm:$0xff] %v1171
      %s1300 = scalar_lea.vmem %s198, 48
      %v1301 = vld [vmem:[%s1300] sm:$0xff]
      %v1302 = vld [vmem:[%s1300 + $0x8] sm:$0xff]
      %v1303 = vld [vmem:[%s1300 + $0x10] sm:$0xff]
      %v1304 = vld [vmem:[%s1300 + $0x18] sm:$0xff]
      %v1305 = vld [vmem:[%s1300 + $0x30] sm:$0xff]
      %v1306 = vld [vmem:[%s1300 + $0x38] sm:$0xff]
      %v1307 = vld [vmem:[%s1300 + $0x40] sm:$0xff]
      %v1308 = vld [vmem:[%s1300 + $0x48] sm:$0xff]
      %v1309 = vld [vmem:[%s1300 + $0x60] sm:$0xff]
      %v1310 = vld [vmem:[%s1300 + $0x68] sm:$0xff]
      %v1311 = vld [vmem:[%s1300 + $0x70] sm:$0xff]
      %v1312 = vld [vmem:[%s1300 + $0x78] sm:$0xff]
      %v1313 = vld [vmem:[%s1300 + $0x90] sm:$0xff]
      %v1314 = vld [vmem:[%s1300 + $0x98] sm:$0xff]
      %v1315 = vld [vmem:[%s1300 + $0xa0] sm:$0xff]
      %v1316 = vld [vmem:[%s1300 + $0xa8] sm:$0xff]
      %v1317 = vld [vmem:[%s1300 + $0xc0] sm:$0xff]
      %v1318 = vld [vmem:[%s1300 + $0xc8] sm:$0xff]
      %v1319 = vld [vmem:[%s1300 + $0xd0] sm:$0xff]
      %v1320 = vld [vmem:[%s1300 + $0xd8] sm:$0xff]
      %v1321 = vld [vmem:[%s1300 + $0xf0] sm:$0xff]
      %v1322 = vld [vmem:[%s1300 + $0xf8] sm:$0xff]
      %v1323 = vld [vmem:[%s1300 + $0x100] sm:$0xff]
      %v1324 = vld [vmem:[%s1300 + $0x108] sm:$0xff]
      %v1325 = vld [vmem:[%s1300 + $0x120] sm:$0xff]
      %v1326 = vld [vmem:[%s1300 + $0x128] sm:$0xff]
      %v1327 = vld [vmem:[%s1300 + $0x130] sm:$0xff]
      %v1328 = vld [vmem:[%s1300 + $0x138] sm:$0xff]
      %v1329 = vld [vmem:[%s1300 + $0x150] sm:$0xff]
      %v1330 = vld [vmem:[%s1300 + $0x158] sm:$0xff]
      %v1331 = vld [vmem:[%s1300 + $0x160] sm:$0xff]
      %v1332 = vld [vmem:[%s1300 + $0x168] sm:$0xff]
      %v1333 = vld [vmem:[%s1300 + $0x180] sm:$0xff]
      %v1334 = vld [vmem:[%s1300 + $0x188] sm:$0xff]
      %v1335 = vld [vmem:[%s1300 + $0x190] sm:$0xff]
      %v1336 = vld [vmem:[%s1300 + $0x198] sm:$0xff]
      %v1337 = vld [vmem:[%s1300 + $0x1b0] sm:$0xff]
      %v1338 = vld [vmem:[%s1300 + $0x1b8] sm:$0xff]
      %v1339 = vld [vmem:[%s1300 + $0x1c0] sm:$0xff]
      %v1340 = vld [vmem:[%s1300 + $0x1c8] sm:$0xff]
      %v1341 = vld [vmem:[%s1300 + $0x1e0] sm:$0xff]
      %v1342 = vld [vmem:[%s1300 + $0x1e8] sm:$0xff]
      %v1343 = vld [vmem:[%s1300 + $0x1f0] sm:$0xff]
      %v1344 = vld [vmem:[%s1300 + $0x1f8] sm:$0xff]
      %v1345 = vld [vmem:[%s1300 + $0x210] sm:$0xff]
      %v1346 = vld [vmem:[%s1300 + $0x218] sm:$0xff]
      %v1347 = vld [vmem:[%s1300 + $0x220] sm:$0xff]
      %v1348 = vld [vmem:[%s1300 + $0x228] sm:$0xff]
      %v1349 = vld [vmem:[%s1300 + $0x240] sm:$0xff]
      %v1350 = vld [vmem:[%s1300 + $0x248] sm:$0xff]
      %v1351 = vld [vmem:[%s1300 + $0x250] sm:$0xff]
      %v1352 = vld [vmem:[%s1300 + $0x258] sm:$0xff]
      %v1353 = vld [vmem:[%s1300 + $0x270] sm:$0xff]
      %v1354 = vld [vmem:[%s1300 + $0x278] sm:$0xff]
      %v1355 = vld [vmem:[%s1300 + $0x280] sm:$0xff]
      %v1356 = vld [vmem:[%s1300 + $0x288] sm:$0xff]
      %v1357 = vld [vmem:[%s1300 + $0x2a0] sm:$0xff]
      %v1358 = vld [vmem:[%s1300 + $0x2a8] sm:$0xff]
      %v1359 = vld [vmem:[%s1300 + $0x2b0] sm:$0xff]
      %v1360 = vld [vmem:[%s1300 + $0x2b8] sm:$0xff]
      %v1361 = vld [vmem:[%s1300 + $0x2d0] sm:$0xff]
      %v1362 = vld [vmem:[%s1300 + $0x2d8] sm:$0xff]
      %v1363 = vld [vmem:[%s1300 + $0x2e0] sm:$0xff]
      %v1364 = vld [vmem:[%s1300 + $0x2e8] sm:$0xff]
      %1365 = vst [vmem:[#allocation2 + $0x30] sm:$0xff] %v1301
      %1366 = vst [vmem:[#allocation2 + $0x38] sm:$0xff] %v1302
      %1367 = vst [vmem:[#allocation2 + $0xc0] sm:$0xff] %v1303
      %1368 = vst [vmem:[#allocation2 + $0xc8] sm:$0xff] %v1304
      %1369 = vst [vmem:[#allocation2 + $0x150] sm:$0xff] %v1305
      %1370 = vst [vmem:[#allocation2 + $0x158] sm:$0xff] %v1306
      %1371 = vst [vmem:[#allocation2 + $0x1e0] sm:$0xff] %v1307
      %1372 = vst [vmem:[#allocation2 + $0x1e8] sm:$0xff] %v1308
      %1373 = vst [vmem:[#allocation2 + $0x270] sm:$0xff] %v1309
      %1374 = vst [vmem:[#allocation2 + $0x278] sm:$0xff] %v1310
      %1375 = vst [vmem:[#allocation2 + $0x300] sm:$0xff] %v1311
      %1376 = vst [vmem:[#allocation2 + $0x308] sm:$0xff] %v1312
      %1377 = vst [vmem:[#allocation2 + $0x390] sm:$0xff] %v1313
      %1378 = vst [vmem:[#allocation2 + $0x398] sm:$0xff] %v1314
      %1379 = vst [vmem:[#allocation2 + $0x420] sm:$0xff] %v1315
      %1380 = vst [vmem:[#allocation2 + $0x428] sm:$0xff] %v1316
      %1381 = vst [vmem:[#allocation2 + $0x4b0] sm:$0xff] %v1317
      %1382 = vst [vmem:[#allocation2 + $0x4b8] sm:$0xff] %v1318
      %1383 = vst [vmem:[#allocation2 + $0x540] sm:$0xff] %v1319
      %1384 = vst [vmem:[#allocation2 + $0x548] sm:$0xff] %v1320
      %1385 = vst [vmem:[#allocation2 + $0x5d0] sm:$0xff] %v1321
      %1386 = vst [vmem:[#allocation2 + $0x5d8] sm:$0xff] %v1322
      %1387 = vst [vmem:[#allocation2 + $0x660] sm:$0xff] %v1323
      %1388 = vst [vmem:[#allocation2 + $0x668] sm:$0xff] %v1324
      %1389 = vst [vmem:[#allocation2 + $0x6f0] sm:$0xff] %v1325
      %1390 = vst [vmem:[#allocation2 + $0x6f8] sm:$0xff] %v1326
      %1391 = vst [vmem:[#allocation2 + $0x780] sm:$0xff] %v1327
      %1392 = vst [vmem:[#allocation2 + $0x788] sm:$0xff] %v1328
      %1393 = vst [vmem:[#allocation2 + $0x810] sm:$0xff] %v1329
      %1394 = vst [vmem:[#allocation2 + $0x818] sm:$0xff] %v1330
      %1395 = vst [vmem:[#allocation2 + $0x8a0] sm:$0xff] %v1331
      %1396 = vst [vmem:[#allocation2 + $0x8a8] sm:$0xff] %v1332
      %1397 = vst [vmem:[#allocation2 + $0x930] sm:$0xff] %v1333
      %1398 = vst [vmem:[#allocation2 + $0x938] sm:$0xff] %v1334
      %1399 = vst [vmem:[#allocation2 + $0x9c0] sm:$0xff] %v1335
      %1400 = vst [vmem:[#allocation2 + $0x9c8] sm:$0xff] %v1336
      %1401 = vst [vmem:[#allocation2 + $0xa50] sm:$0xff] %v1337
      %1402 = vst [vmem:[#allocation2 + $0xa58] sm:$0xff] %v1338
      %1403 = vst [vmem:[#allocation2 + $0xae0] sm:$0xff] %v1339
      %1404 = vst [vmem:[#allocation2 + $0xae8] sm:$0xff] %v1340
      %1405 = vst [vmem:[#allocation2 + $0xb70] sm:$0xff] %v1341
      %1406 = vst [vmem:[#allocation2 + $0xb78] sm:$0xff] %v1342
      %1407 = vst [vmem:[#allocation2 + $0xc00] sm:$0xff] %v1343
      %1408 = vst [vmem:[#allocation2 + $0xc08] sm:$0xff] %v1344
      %1409 = vst [vmem:[#allocation2 + $0xc90] sm:$0xff] %v1345
      %1410 = vst [vmem:[#allocation2 + $0xc98] sm:$0xff] %v1346
      %1411 = vst [vmem:[#allocation2 + $0xd20] sm:$0xff] %v1347
      %1412 = vst [vmem:[#allocation2 + $0xd28] sm:$0xff] %v1348
      %1413 = vst [vmem:[#allocation2 + $0xdb0] sm:$0xff] %v1349
      %1414 = vst [vmem:[#allocation2 + $0xdb8] sm:$0xff] %v1350
      %1415 = vst [vmem:[#allocation2 + $0xe40] sm:$0xff] %v1351
      %1416 = vst [vmem:[#allocation2 + $0xe48] sm:$0xff] %v1352
      %1417 = vst [vmem:[#allocation2 + $0xed0] sm:$0xff] %v1353
      %1418 = vst [vmem:[#allocation2 + $0xed8] sm:$0xff] %v1354
      %1419 = vst [vmem:[#allocation2 + $0xf60] sm:$0xff] %v1355
      %1420 = vst [vmem:[#allocation2 + $0xf68] sm:$0xff] %v1356
      %1421 = vst [vmem:[#allocation2 + $0xff0] sm:$0xff] %v1357
      %1422 = vst [vmem:[#allocation2 + $0xff8] sm:$0xff] %v1358
      %1423 = vst [vmem:[#allocation2 + $0x1080] sm:$0xff] %v1359
      %1424 = vst [vmem:[#allocation2 + $0x1088] sm:$0xff] %v1360
      %1425 = vst [vmem:[#allocation2 + $0x1110] sm:$0xff] %v1361
      %1426 = vst [vmem:[#allocation2 + $0x1118] sm:$0xff] %v1362
      %1427 = vst [vmem:[#allocation2 + $0x11a0] sm:$0xff] %v1363
      %1428 = vst [vmem:[#allocation2 + $0x11a8] sm:$0xff] %v1364
      %v1429 = vld [vmem:[%s1300] sm:$0xfe]
      %v1430 = vld [vmem:[%s1300 + $0x8] sm:$0xfe]
      %v1431 = vld [vmem:[%s1300 + $0x10] sm:$0xff]
      %v1432 = vld [vmem:[%s1300 + $0x18] sm:$0xff]
      %v1433 = vld [vmem:[%s1300 + $0x20] sm:$0x1]
      %v1434 = vld [vmem:[%s1300 + $0x28] sm:$0x1]
      %v1435 = vld [vmem:[%s1300 + $0x30] sm:$0xfe]
      %v1436 = vld [vmem:[%s1300 + $0x38] sm:$0xfe]
      %v1437 = vld [vmem:[%s1300 + $0x40] sm:$0xff]
      %v1438 = vld [vmem:[%s1300 + $0x48] sm:$0xff]
      %v1439 = vld [vmem:[%s1300 + $0x50] sm:$0x1]
      %v1440 = vld [vmem:[%s1300 + $0x58] sm:$0x1]
      %v1441 = vld [vmem:[%s1300 + $0x60] sm:$0xfe]
      %v1442 = vld [vmem:[%s1300 + $0x68] sm:$0xfe]
      %v1443 = vld [vmem:[%s1300 + $0x70] sm:$0xff]
      %v1444 = vld [vmem:[%s1300 + $0x78] sm:$0xff]
      %v1445 = vld [vmem:[%s1300 + $0x80] sm:$0x1]
      %v1446 = vld [vmem:[%s1300 + $0x88] sm:$0x1]
      %v1447 = vld [vmem:[%s1300 + $0x90] sm:$0xfe]
      %v1448 = vld [vmem:[%s1300 + $0x98] sm:$0xfe]
      %v1449 = vld [vmem:[%s1300 + $0xa0] sm:$0xff]
      %v1450 = vld [vmem:[%s1300 + $0xa8] sm:$0xff]
      %v1451 = vld [vmem:[%s1300 + $0xb0] sm:$0x1]
      %v1452 = vld [vmem:[%s1300 + $0xb8] sm:$0x1]
      %v1453 = vld [vmem:[%s1300 + $0xc0] sm:$0xfe]
      %v1454 = vld [vmem:[%s1300 + $0xc8] sm:$0xfe]
      %v1455 = vld [vmem:[%s1300 + $0xd0] sm:$0xff]
      %v1456 = vld [vmem:[%s1300 + $0xd8] sm:$0xff]
      %v1457 = vld [vmem:[%s1300 + $0xe0] sm:$0x1]
      %v1458 = vld [vmem:[%s1300 + $0xe8] sm:$0x1]
      %v1459 = vld [vmem:[%s1300 + $0xf0] sm:$0xfe]
      %v1460 = vld [vmem:[%s1300 + $0xf8] sm:$0xfe]
      %v1461 = vld [vmem:[%s1300 + $0x100] sm:$0xff]
      %v1462 = vld [vmem:[%s1300 + $0x108] sm:$0xff]
      %v1463 = vld [vmem:[%s1300 + $0x110] sm:$0x1]
      %v1464 = vld [vmem:[%s1300 + $0x118] sm:$0x1]
      %v1465 = vld [vmem:[%s1300 + $0x120] sm:$0xfe]
      %v1466 = vld [vmem:[%s1300 + $0x128] sm:$0xfe]
      %v1467 = vld [vmem:[%s1300 + $0x130] sm:$0xff]
      %v1468 = vld [vmem:[%s1300 + $0x138] sm:$0xff]
      %v1469 = vld [vmem:[%s1300 + $0x140] sm:$0x1]
      %v1470 = vld [vmem:[%s1300 + $0x148] sm:$0x1]
      %v1471 = vld [vmem:[%s1300 + $0x150] sm:$0xfe]
      %v1472 = vld [vmem:[%s1300 + $0x158] sm:$0xfe]
      %v1473 = vld [vmem:[%s1300 + $0x160] sm:$0xff]
      %v1474 = vld [vmem:[%s1300 + $0x168] sm:$0xff]
      %v1475 = vld [vmem:[%s1300 + $0x170] sm:$0x1]
      %v1476 = vld [vmem:[%s1300 + $0x178] sm:$0x1]
      %v1477 = vld [vmem:[%s1300 + $0x180] sm:$0xfe]
      %v1478 = vld [vmem:[%s1300 + $0x188] sm:$0xfe]
      %v1479 = vld [vmem:[%s1300 + $0x190] sm:$0xff]
      %v1480 = vld [vmem:[%s1300 + $0x198] sm:$0xff]
      %v1481 = vld [vmem:[%s1300 + $0x1a0] sm:$0x1]
      %v1482 = vld [vmem:[%s1300 + $0x1a8] sm:$0x1]
      %v1483 = vld [vmem:[%s1300 + $0x1b0] sm:$0xfe]
      %v1484 = vld [vmem:[%s1300 + $0x1b8] sm:$0xfe]
      %v1485 = vld [vmem:[%s1300 + $0x1c0] sm:$0xff]
      %v1486 = vld [vmem:[%s1300 + $0x1c8] sm:$0xff]
      %v1487 = vld [vmem:[%s1300 + $0x1d0] sm:$0x1]
      %v1488 = vld [vmem:[%s1300 + $0x1d8] sm:$0x1]
      %v1489 = vld [vmem:[%s1300 + $0x1e0] sm:$0xfe]
      %v1490 = vld [vmem:[%s1300 + $0x1e8] sm:$0xfe]
      %v1491 = vld [vmem:[%s1300 + $0x1f0] sm:$0xff]
      %v1492 = vld [vmem:[%s1300 + $0x1f8] sm:$0xff]
      %v1493 = vld [vmem:[%s1300 + $0x200] sm:$0x1]
      %v1494 = vld [vmem:[%s1300 + $0x208] sm:$0x1]
      %v1495 = vld [vmem:[%s1300 + $0x210] sm:$0xfe]
      %v1496 = vld [vmem:[%s1300 + $0x218] sm:$0xfe]
      %v1497 = vld [vmem:[%s1300 + $0x220] sm:$0xff]
      %v1498 = vld [vmem:[%s1300 + $0x228] sm:$0xff]
      %v1499 = vld [vmem:[%s1300 + $0x230] sm:$0x1]
      %v1500 = vld [vmem:[%s1300 + $0x238] sm:$0x1]
      %v1501 = vld [vmem:[%s1300 + $0x240] sm:$0xfe]
      %v1502 = vld [vmem:[%s1300 + $0x248] sm:$0xfe]
      %v1503 = vld [vmem:[%s1300 + $0x250] sm:$0xff]
      %v1504 = vld [vmem:[%s1300 + $0x258] sm:$0xff]
      %v1505 = vld [vmem:[%s1300 + $0x260] sm:$0x1]
      %v1506 = vld [vmem:[%s1300 + $0x268] sm:$0x1]
      %v1507 = vld [vmem:[%s1300 + $0x270] sm:$0xfe]
      %v1508 = vld [vmem:[%s1300 + $0x278] sm:$0xfe]
      %v1509 = vld [vmem:[%s1300 + $0x280] sm:$0xff]
      %v1510 = vld [vmem:[%s1300 + $0x288] sm:$0xff]
      %v1511 = vld [vmem:[%s1300 + $0x290] sm:$0x1]
      %v1512 = vld [vmem:[%s1300 + $0x298] sm:$0x1]
      %v1513 = vld [vmem:[%s1300 + $0x2a0] sm:$0xfe]
      %v1514 = vld [vmem:[%s1300 + $0x2a8] sm:$0xfe]
      %v1515 = vld [vmem:[%s1300 + $0x2b0] sm:$0xff]
      %v1516 = vld [vmem:[%s1300 + $0x2b8] sm:$0xff]
      %v1517 = vld [vmem:[%s1300 + $0x2c0] sm:$0x1]
      %v1518 = vld [vmem:[%s1300 + $0x2c8] sm:$0x1]
      %v1519 = vld [vmem:[%s1300 + $0x2d0] sm:$0xfe]
      %v1520 = vld [vmem:[%s1300 + $0x2d8] sm:$0xfe]
      %v1521 = vld [vmem:[%s1300 + $0x2e0] sm:$0xff]
      %v1522 = vld [vmem:[%s1300 + $0x2e8] sm:$0xff]
      %v1523 = vld [vmem:[%s1300 + $0x2f0] sm:$0x1]
      %v1524 = vld [vmem:[%s1300 + $0x2f8] sm:$0x1]
      %v1621 = vrot.slane %v1429, 1
      %v1622 = vrot.slane %v1431, 1
      %v1623 = vsel %vm530, %v1621, %v1622
      %v1624 = vrot.slane %v1430, 1
      %v1625 = vrot.slane %v1432, 1
      %v1626 = vsel %vm530, %v1624, %v1625
      %v1627 = vrot.slane %v1433, 1
      %v1628 = vsel %vm530, %v1622, %v1627
      %v1629 = vrot.slane %v1434, 1
      %v1630 = vsel %vm530, %v1625, %v1629
      %v1631 = vrot.slane %v1435, 1
      %v1632 = vrot.slane %v1437, 1
      %v1633 = vsel %vm530, %v1631, %v1632
      %v1634 = vrot.slane %v1436, 1
      %v1635 = vrot.slane %v1438, 1
      %v1636 = vsel %vm530, %v1634, %v1635
      %v1637 = vrot.slane %v1439, 1
      %v1638 = vsel %vm530, %v1632, %v1637
      %v1639 = vrot.slane %v1440, 1
      %v1640 = vsel %vm530, %v1635, %v1639
      %v1641 = vrot.slane %v1441, 1
      %v1642 = vrot.slane %v1443, 1
      %v1643 = vsel %vm530, %v1641, %v1642
      %v1644 = vrot.slane %v1442, 1
      %v1645 = vrot.slane %v1444, 1
      %v1646 = vsel %vm530, %v1644, %v1645
      %v1647 = vrot.slane %v1445, 1
      %v1648 = vsel %vm530, %v1642, %v1647
      %v1649 = vrot.slane %v1446, 1
      %v1650 = vsel %vm530, %v1645, %v1649
      %v1651 = vrot.slane %v1447, 1
      %v1652 = vrot.slane %v1449, 1
      %v1653 = vsel %vm530, %v1651, %v1652
      %v1654 = vrot.slane %v1448, 1
      %v1655 = vrot.slane %v1450, 1
      %v1656 = vsel %vm530, %v1654, %v1655
      %v1657 = vrot.slane %v1451, 1
      %v1658 = vsel %vm530, %v1652, %v1657
      %v1659 = vrot.slane %v1452, 1
      %v1660 = vsel %vm530, %v1655, %v1659
      %v1661 = vrot.slane %v1453, 1
      %v1662 = vrot.slane %v1455, 1
      %v1663 = vsel %vm530, %v1661, %v1662
      %v1664 = vrot.slane %v1454, 1
      %v1665 = vrot.slane %v1456, 1
      %v1666 = vsel %vm530, %v1664, %v1665
      %v1667 = vrot.slane %v1457, 1
      %v1668 = vsel %vm530, %v1662, %v1667
      %v1669 = vrot.slane %v1458, 1
      %v1670 = vsel %vm530, %v1665, %v1669
      %v1671 = vrot.slane %v1459, 1
      %v1672 = vrot.slane %v1461, 1
      %v1673 = vsel %vm530, %v1671, %v1672
      %v1674 = vrot.slane %v1460, 1
      %v1675 = vrot.slane %v1462, 1
      %v1676 = vsel %vm530, %v1674, %v1675
      %v1677 = vrot.slane %v1463, 1
      %v1678 = vsel %vm530, %v1672, %v1677
      %v1679 = vrot.slane %v1464, 1
      %v1680 = vsel %vm530, %v1675, %v1679
      %v1681 = vrot.slane %v1465, 1
      %v1682 = vrot.slane %v1467, 1
      %v1683 = vsel %vm530, %v1681, %v1682
      %v1684 = vrot.slane %v1466, 1
      %v1685 = vrot.slane %v1468, 1
      %v1686 = vsel %vm530, %v1684, %v1685
      %v1687 = vrot.slane %v1469, 1
      %v1688 = vsel %vm530, %v1682, %v1687
      %v1689 = vrot.slane %v1470, 1
      %v1690 = vsel %vm530, %v1685, %v1689
      %v1691 = vrot.slane %v1471, 1
      %v1692 = vrot.slane %v1473, 1
      %v1693 = vsel %vm530, %v1691, %v1692
      %v1694 = vrot.slane %v1472, 1
      %v1695 = vrot.slane %v1474, 1
      %v1696 = vsel %vm530, %v1694, %v1695
      %v1697 = vrot.slane %v1475, 1
      %v1698 = vsel %vm530, %v1692, %v1697
      %v1699 = vrot.slane %v1476, 1
      %v1700 = vsel %vm530, %v1695, %v1699
      %v1701 = vrot.slane %v1477, 1
      %v1702 = vrot.slane %v1479, 1
      %v1703 = vsel %vm530, %v1701, %v1702
      %v1704 = vrot.slane %v1478, 1
      %v1705 = vrot.slane %v1480, 1
      %v1706 = vsel %vm530, %v1704, %v1705
      %v1707 = vrot.slane %v1481, 1
      %v1708 = vsel %vm530, %v1702, %v1707
      %v1709 = vrot.slane %v1482, 1
      %v1710 = vsel %vm530, %v1705, %v1709
      %v1711 = vrot.slane %v1483, 1
      %v1712 = vrot.slane %v1485, 1
      %v1713 = vsel %vm530, %v1711, %v1712
      %v1714 = vrot.slane %v1484, 1
      %v1715 = vrot.slane %v1486, 1
      %v1716 = vsel %vm530, %v1714, %v1715
      %v1717 = vrot.slane %v1487, 1
      %v1718 = vsel %vm530, %v1712, %v1717
      %v1719 = vrot.slane %v1488, 1
      %v1720 = vsel %vm530, %v1715, %v1719
      %v1721 = vrot.slane %v1489, 1
      %v1722 = vrot.slane %v1491, 1
      %v1723 = vsel %vm530, %v1721, %v1722
      %v1724 = vrot.slane %v1490, 1
      %v1725 = vrot.slane %v1492, 1
      %v1726 = vsel %vm530, %v1724, %v1725
      %v1727 = vrot.slane %v1493, 1
      %v1728 = vsel %vm530, %v1722, %v1727
      %v1729 = vrot.slane %v1494, 1
      %v1730 = vsel %vm530, %v1725, %v1729
      %v1731 = vrot.slane %v1495, 1
      %v1732 = vrot.slane %v1497, 1
      %v1733 = vsel %vm530, %v1731, %v1732
      %v1734 = vrot.slane %v1496, 1
      %v1735 = vrot.slane %v1498, 1
      %v1736 = vsel %vm530, %v1734, %v1735
      %v1737 = vrot.slane %v1499, 1
      %v1738 = vsel %vm530, %v1732, %v1737
      %v1739 = vrot.slane %v1500, 1
      %v1740 = vsel %vm530, %v1735, %v1739
      %v1741 = vrot.slane %v1501, 1
      %v1742 = vrot.slane %v1503, 1
      %v1743 = vsel %vm530, %v1741, %v1742
      %v1744 = vrot.slane %v1502, 1
      %v1745 = vrot.slane %v1504, 1
      %v1746 = vsel %vm530, %v1744, %v1745
      %v1747 = vrot.slane %v1505, 1
      %v1748 = vsel %vm530, %v1742, %v1747
      %v1749 = vrot.slane %v1506, 1
      %v1750 = vsel %vm530, %v1745, %v1749
      %v1751 = vrot.slane %v1507, 1
      %v1752 = vrot.slane %v1509, 1
      %v1753 = vsel %vm530, %v1751, %v1752
      %v1754 = vrot.slane %v1508, 1
      %v1755 = vrot.slane %v1510, 1
      %v1756 = vsel %vm530, %v1754, %v1755
      %v1757 = vrot.slane %v1511, 1
      %v1758 = vsel %vm530, %v1752, %v1757
      %v1759 = vrot.slane %v1512, 1
      %v1760 = vsel %vm530, %v1755, %v1759
      %v1761 = vrot.slane %v1513, 1
      %v1762 = vrot.slane %v1515, 1
      %v1763 = vsel %vm530, %v1761, %v1762
      %v1764 = vrot.slane %v1514, 1
      %v1765 = vrot.slane %v1516, 1
      %v1766 = vsel %vm530, %v1764, %v1765
      %v1767 = vrot.slane %v1517, 1
      %v1768 = vsel %vm530, %v1762, %v1767
      %v1769 = vrot.slane %v1518, 1
      %v1770 = vsel %vm530, %v1765, %v1769
      %v1771 = vrot.slane %v1519, 1
      %v1772 = vrot.slane %v1521, 1
      %v1773 = vsel %vm530, %v1771, %v1772
      %v1774 = vrot.slane %v1520, 1
      %v1775 = vrot.slane %v1522, 1
      %v1776 = vsel %vm530, %v1774, %v1775
      %v1777 = vrot.slane %v1523, 1
      %v1778 = vsel %vm530, %v1772, %v1777
      %v1779 = vrot.slane %v1524, 1
      %v1780 = vsel %vm530, %v1775, %v1779
      %1845 = vst [vmem:[#allocation2 + $0x40] sm:$0xff] %v1623
      %1846 = vst [vmem:[#allocation2 + $0x48] sm:$0xff] %v1626
      %1847 = vst [vmem:[#allocation2 + $0xd0] sm:$0xff] %v1628
      %1848 = vst [vmem:[#allocation2 + $0xd8] sm:$0xff] %v1630
      %1849 = vst [vmem:[#allocation2 + $0x160] sm:$0xff] %v1633
      %1850 = vst [vmem:[#allocation2 + $0x168] sm:$0xff] %v1636
      %1851 = vst [vmem:[#allocation2 + $0x1f0] sm:$0xff] %v1638
      %1852 = vst [vmem:[#allocation2 + $0x1f8] sm:$0xff] %v1640
      %1853 = vst [vmem:[#allocation2 + $0x280] sm:$0xff] %v1643
      %1854 = vst [vmem:[#allocation2 + $0x288] sm:$0xff] %v1646
      %1855 = vst [vmem:[#allocation2 + $0x310] sm:$0xff] %v1648
      %1856 = vst [vmem:[#allocation2 + $0x318] sm:$0xff] %v1650
      %1857 = vst [vmem:[#allocation2 + $0x3a0] sm:$0xff] %v1653
      %1858 = vst [vmem:[#allocation2 + $0x3a8] sm:$0xff] %v1656
      %1859 = vst [vmem:[#allocation2 + $0x430] sm:$0xff] %v1658
      %1860 = vst [vmem:[#allocation2 + $0x438] sm:$0xff] %v1660
      %1861 = vst [vmem:[#allocation2 + $0x4c0] sm:$0xff] %v1663
      %1862 = vst [vmem:[#allocation2 + $0x4c8] sm:$0xff] %v1666
      %1863 = vst [vmem:[#allocation2 + $0x550] sm:$0xff] %v1668
      %1864 = vst [vmem:[#allocation2 + $0x558] sm:$0xff] %v1670
      %1865 = vst [vmem:[#allocation2 + $0x5e0] sm:$0xff] %v1673
      %1866 = vst [vmem:[#allocation2 + $0x5e8] sm:$0xff] %v1676
      %1867 = vst [vmem:[#allocation2 + $0x670] sm:$0xff] %v1678
      %1868 = vst [vmem:[#allocation2 + $0x678] sm:$0xff] %v1680
      %1869 = vst [vmem:[#allocation2 + $0x700] sm:$0xff] %v1683
      %1870 = vst [vmem:[#allocation2 + $0x708] sm:$0xff] %v1686
      %1871 = vst [vmem:[#allocation2 + $0x790] sm:$0xff] %v1688
      %1872 = vst [vmem:[#allocation2 + $0x798] sm:$0xff] %v1690
      %1873 = vst [vmem:[#allocation2 + $0x820] sm:$0xff] %v1693
      %1874 = vst [vmem:[#allocation2 + $0x828] sm:$0xff] %v1696
      %1875 = vst [vmem:[#allocation2 + $0x8b0] sm:$0xff] %v1698
      %1876 = vst [vmem:[#allocation2 + $0x8b8] sm:$0xff] %v1700
      %1877 = vst [vmem:[#allocation2 + $0x940] sm:$0xff] %v1703
      %1878 = vst [vmem:[#allocation2 + $0x948] sm:$0xff] %v1706
      %1879 = vst [vmem:[#allocation2 + $0x9d0] sm:$0xff] %v1708
      %1880 = vst [vmem:[#allocation2 + $0x9d8] sm:$0xff] %v1710
      %1881 = vst [vmem:[#allocation2 + $0xa60] sm:$0xff] %v1713
      %1882 = vst [vmem:[#allocation2 + $0xa68] sm:$0xff] %v1716
      %1883 = vst [vmem:[#allocation2 + $0xaf0] sm:$0xff] %v1718
      %1884 = vst [vmem:[#allocation2 + $0xaf8] sm:$0xff] %v1720
      %1885 = vst [vmem:[#allocation2 + $0xb80] sm:$0xff] %v1723
      %1886 = vst [vmem:[#allocation2 + $0xb88] sm:$0xff] %v1726
      %1887 = vst [vmem:[#allocation2 + $0xc10] sm:$0xff] %v1728
      %1888 = vst [vmem:[#allocation2 + $0xc18] sm:$0xff] %v1730
      %1889 = vst [vmem:[#allocation2 + $0xca0] sm:$0xff] %v1733
      %1890 = vst [vmem:[#allocation2 + $0xca8] sm:$0xff] %v1736
      %1891 = vst [vmem:[#allocation2 + $0xd30] sm:$0xff] %v1738
      %1892 = vst [vmem:[#allocation2 + $0xd38] sm:$0xff] %v1740
      %1893 = vst [vmem:[#allocation2 + $0xdc0] sm:$0xff] %v1743
      %1894 = vst [vmem:[#allocation2 + $0xdc8] sm:$0xff] %v1746
      %1895 = vst [vmem:[#allocation2 + $0xe50] sm:$0xff] %v1748
      %1896 = vst [vmem:[#allocation2 + $0xe58] sm:$0xff] %v1750
      %1897 = vst [vmem:[#allocation2 + $0xee0] sm:$0xff] %v1753
      %1898 = vst [vmem:[#allocation2 + $0xee8] sm:$0xff] %v1756
      %1899 = vst [vmem:[#allocation2 + $0xf70] sm:$0xff] %v1758
      %1900 = vst [vmem:[#allocation2 + $0xf78] sm:$0xff] %v1760
      %1901 = vst [vmem:[#allocation2 + $0x1000] sm:$0xff] %v1763
      %1902 = vst [vmem:[#allocation2 + $0x1008] sm:$0xff] %v1766
      %1903 = vst [vmem:[#allocation2 + $0x1090] sm:$0xff] %v1768
      %1904 = vst [vmem:[#allocation2 + $0x1098] sm:$0xff] %v1770
      %1905 = vst [vmem:[#allocation2 + $0x1120] sm:$0xff] %v1773
      %1906 = vst [vmem:[#allocation2 + $0x1128] sm:$0xff] %v1776
      %1907 = vst [vmem:[#allocation2 + $0x11b0] sm:$0xff] %v1778
      %1908 = vst [vmem:[#allocation2 + $0x11b8] sm:$0xff] %v1780
      %v1909 = vld [vmem:[%s1300] sm:$0xfc]
      %v1910 = vld [vmem:[%s1300 + $0x8] sm:$0xfc]
      %v1911 = vld [vmem:[%s1300 + $0x10] sm:$0xff]
      %v1912 = vld [vmem:[%s1300 + $0x18] sm:$0xff]
      %v1913 = vld [vmem:[%s1300 + $0x20] sm:$0x3]
      %v1914 = vld [vmem:[%s1300 + $0x28] sm:$0x3]
      %v1915 = vld [vmem:[%s1300 + $0x30] sm:$0xfc]
      %v1916 = vld [vmem:[%s1300 + $0x38] sm:$0xfc]
      %v1917 = vld [vmem:[%s1300 + $0x40] sm:$0xff]
      %v1918 = vld [vmem:[%s1300 + $0x48] sm:$0xff]
      %v1919 = vld [vmem:[%s1300 + $0x50] sm:$0x3]
      %v1920 = vld [vmem:[%s1300 + $0x58] sm:$0x3]
      %v1921 = vld [vmem:[%s1300 + $0x60] sm:$0xfc]
      %v1922 = vld [vmem:[%s1300 + $0x68] sm:$0xfc]
      %v1923 = vld [vmem:[%s1300 + $0x70] sm:$0xff]
      %v1924 = vld [vmem:[%s1300 + $0x78] sm:$0xff]
      %v1925 = vld [vmem:[%s1300 + $0x80] sm:$0x3]
      %v1926 = vld [vmem:[%s1300 + $0x88] sm:$0x3]
      %v1927 = vld [vmem:[%s1300 + $0x90] sm:$0xfc]
      %v1928 = vld [vmem:[%s1300 + $0x98] sm:$0xfc]
      %v1929 = vld [vmem:[%s1300 + $0xa0] sm:$0xff]
      %v1930 = vld [vmem:[%s1300 + $0xa8] sm:$0xff]
      %v1931 = vld [vmem:[%s1300 + $0xb0] sm:$0x3]
      %v1932 = vld [vmem:[%s1300 + $0xb8] sm:$0x3]
      %v1933 = vld [vmem:[%s1300 + $0xc0] sm:$0xfc]
      %v1934 = vld [vmem:[%s1300 + $0xc8] sm:$0xfc]
      %v1935 = vld [vmem:[%s1300 + $0xd0] sm:$0xff]
      %v1936 = vld [vmem:[%s1300 + $0xd8] sm:$0xff]
      %v1937 = vld [vmem:[%s1300 + $0xe0] sm:$0x3]
      %v1938 = vld [vmem:[%s1300 + $0xe8] sm:$0x3]
      %v1939 = vld [vmem:[%s1300 + $0xf0] sm:$0xfc]
      %v1940 = vld [vmem:[%s1300 + $0xf8] sm:$0xfc]
      %v1941 = vld [vmem:[%s1300 + $0x100] sm:$0xff]
      %v1942 = vld [vmem:[%s1300 + $0x108] sm:$0xff]
      %v1943 = vld [vmem:[%s1300 + $0x110] sm:$0x3]
      %v1944 = vld [vmem:[%s1300 + $0x118] sm:$0x3]
      %v1945 = vld [vmem:[%s1300 + $0x120] sm:$0xfc]
      %v1946 = vld [vmem:[%s1300 + $0x128] sm:$0xfc]
      %v1947 = vld [vmem:[%s1300 + $0x130] sm:$0xff]
      %v1948 = vld [vmem:[%s1300 + $0x138] sm:$0xff]
      %v1949 = vld [vmem:[%s1300 + $0x140] sm:$0x3]
      %v1950 = vld [vmem:[%s1300 + $0x148] sm:$0x3]
      %v1951 = vld [vmem:[%s1300 + $0x150] sm:$0xfc]
      %v1952 = vld [vmem:[%s1300 + $0x158] sm:$0xfc]
      %v1953 = vld [vmem:[%s1300 + $0x160] sm:$0xff]
      %v1954 = vld [vmem:[%s1300 + $0x168] sm:$0xff]
      %v1955 = vld [vmem:[%s1300 + $0x170] sm:$0x3]
      %v1956 = vld [vmem:[%s1300 + $0x178] sm:$0x3]
      %v1957 = vld [vmem:[%s1300 + $0x180] sm:$0xfc]
      %v1958 = vld [vmem:[%s1300 + $0x188] sm:$0xfc]
      %v1959 = vld [vmem:[%s1300 + $0x190] sm:$0xff]
      %v1960 = vld [vmem:[%s1300 + $0x198] sm:$0xff]
      %v1961 = vld [vmem:[%s1300 + $0x1a0] sm:$0x3]
      %v1962 = vld [vmem:[%s1300 + $0x1a8] sm:$0x3]
      %v1963 = vld [vmem:[%s1300 + $0x1b0] sm:$0xfc]
      %v1964 = vld [vmem:[%s1300 + $0x1b8] sm:$0xfc]
      %v1965 = vld [vmem:[%s1300 + $0x1c0] sm:$0xff]
      %v1966 = vld [vmem:[%s1300 + $0x1c8] sm:$0xff]
      %v1967 = vld [vmem:[%s1300 + $0x1d0] sm:$0x3]
      %v1968 = vld [vmem:[%s1300 + $0x1d8] sm:$0x3]
      %v1969 = vld [vmem:[%s1300 + $0x1e0] sm:$0xfc]
      %v1970 = vld [vmem:[%s1300 + $0x1e8] sm:$0xfc]
      %v1971 = vld [vmem:[%s1300 + $0x1f0] sm:$0xff]
      %v1972 = vld [vmem:[%s1300 + $0x1f8] sm:$0xff]
      %v1973 = vld [vmem:[%s1300 + $0x200] sm:$0x3]
      %v1974 = vld [vmem:[%s1300 + $0x208] sm:$0x3]
      %v1975 = vld [vmem:[%s1300 + $0x210] sm:$0xfc]
      %v1976 = vld [vmem:[%s1300 + $0x218] sm:$0xfc]
      %v1977 = vld [vmem:[%s1300 + $0x220] sm:$0xff]
      %v1978 = vld [vmem:[%s1300 + $0x228] sm:$0xff]
      %v1979 = vld [vmem:[%s1300 + $0x230] sm:$0x3]
      %v1980 = vld [vmem:[%s1300 + $0x238] sm:$0x3]
      %v1981 = vld [vmem:[%s1300 + $0x240] sm:$0xfc]
      %v1982 = vld [vmem:[%s1300 + $0x248] sm:$0xfc]
      %v1983 = vld [vmem:[%s1300 + $0x250] sm:$0xff]
      %v1984 = vld [vmem:[%s1300 + $0x258] sm:$0xff]
      %v1985 = vld [vmem:[%s1300 + $0x260] sm:$0x3]
      %v1986 = vld [vmem:[%s1300 + $0x268] sm:$0x3]
      %v1987 = vld [vmem:[%s1300 + $0x270] sm:$0xfc]
      %v1988 = vld [vmem:[%s1300 + $0x278] sm:$0xfc]
      %v1989 = vld [vmem:[%s1300 + $0x280] sm:$0xff]
      %v1990 = vld [vmem:[%s1300 + $0x288] sm:$0xff]
      %v1991 = vld [vmem:[%s1300 + $0x290] sm:$0x3]
      %v1992 = vld [vmem:[%s1300 + $0x298] sm:$0x3]
      %v1993 = vld [vmem:[%s1300 + $0x2a0] sm:$0xfc]
      %v1994 = vld [vmem:[%s1300 + $0x2a8] sm:$0xfc]
      %v1995 = vld [vmem:[%s1300 + $0x2b0] sm:$0xff]
      %v1996 = vld [vmem:[%s1300 + $0x2b8] sm:$0xff]
      %v1997 = vld [vmem:[%s1300 + $0x2c0] sm:$0x3]
      %v1998 = vld [vmem:[%s1300 + $0x2c8] sm:$0x3]
      %v1999 = vld [vmem:[%s1300 + $0x2d0] sm:$0xfc]
      %v2000 = vld [vmem:[%s1300 + $0x2d8] sm:$0xfc]
      %v2001 = vld [vmem:[%s1300 + $0x2e0] sm:$0xff]
      %v2002 = vld [vmem:[%s1300 + $0x2e8] sm:$0xff]
      %v2003 = vld [vmem:[%s1300 + $0x2f0] sm:$0x3]
      %v2004 = vld [vmem:[%s1300 + $0x2f8] sm:$0x3]
      %v2101 = vrot.slane %v1909, 2
      %v2102 = vrot.slane %v1911, 2
      %v2103 = vsel %vm1011, %v2101, %v2102
      %v2104 = vrot.slane %v1910, 2
      %v2105 = vrot.slane %v1912, 2
      %v2106 = vsel %vm1011, %v2104, %v2105
      %v2107 = vrot.slane %v1913, 2
      %v2108 = vsel %vm1011, %v2102, %v2107
      %v2109 = vrot.slane %v1914, 2
      %v2110 = vsel %vm1011, %v2105, %v2109
      %v2111 = vrot.slane %v1915, 2
      %v2112 = vrot.slane %v1917, 2
      %v2113 = vsel %vm1011, %v2111, %v2112
      %v2114 = vrot.slane %v1916, 2
      %v2115 = vrot.slane %v1918, 2
      %v2116 = vsel %vm1011, %v2114, %v2115
      %v2117 = vrot.slane %v1919, 2
      %v2118 = vsel %vm1011, %v2112, %v2117
      %v2119 = vrot.slane %v1920, 2
      %v2120 = vsel %vm1011, %v2115, %v2119
      %v2121 = vrot.slane %v1921, 2
      %v2122 = vrot.slane %v1923, 2
      %v2123 = vsel %vm1011, %v2121, %v2122
      %v2124 = vrot.slane %v1922, 2
      %v2125 = vrot.slane %v1924, 2
      %v2126 = vsel %vm1011, %v2124, %v2125
      %v2127 = vrot.slane %v1925, 2
      %v2128 = vsel %vm1011, %v2122, %v2127
      %v2129 = vrot.slane %v1926, 2
      %v2130 = vsel %vm1011, %v2125, %v2129
      %v2131 = vrot.slane %v1927, 2
      %v2132 = vrot.slane %v1929, 2
      %v2133 = vsel %vm1011, %v2131, %v2132
      %v2134 = vrot.slane %v1928, 2
      %v2135 = vrot.slane %v1930, 2
      %v2136 = vsel %vm1011, %v2134, %v2135
      %v2137 = vrot.slane %v1931, 2
      %v2138 = vsel %vm1011, %v2132, %v2137
      %v2139 = vrot.slane %v1932, 2
      %v2140 = vsel %vm1011, %v2135, %v2139
      %v2141 = vrot.slane %v1933, 2
      %v2142 = vrot.slane %v1935, 2
      %v2143 = vsel %vm1011, %v2141, %v2142
      %v2144 = vrot.slane %v1934, 2
      %v2145 = vrot.slane %v1936, 2
      %v2146 = vsel %vm1011, %v2144, %v2145
      %v2147 = vrot.slane %v1937, 2
      %v2148 = vsel %vm1011, %v2142, %v2147
      %v2149 = vrot.slane %v1938, 2
      %v2150 = vsel %vm1011, %v2145, %v2149
      %v2151 = vrot.slane %v1939, 2
      %v2152 = vrot.slane %v1941, 2
      %v2153 = vsel %vm1011, %v2151, %v2152
      %v2154 = vrot.slane %v1940, 2
      %v2155 = vrot.slane %v1942, 2
      %v2156 = vsel %vm1011, %v2154, %v2155
      %v2157 = vrot.slane %v1943, 2
      %v2158 = vsel %vm1011, %v2152, %v2157
      %v2159 = vrot.slane %v1944, 2
      %v2160 = vsel %vm1011, %v2155, %v2159
      %v2161 = vrot.slane %v1945, 2
      %v2162 = vrot.slane %v1947, 2
      %v2163 = vsel %vm1011, %v2161, %v2162
      %v2164 = vrot.slane %v1946, 2
      %v2165 = vrot.slane %v1948, 2
      %v2166 = vsel %vm1011, %v2164, %v2165
      %v2167 = vrot.slane %v1949, 2
      %v2168 = vsel %vm1011, %v2162, %v2167
      %v2169 = vrot.slane %v1950, 2
      %v2170 = vsel %vm1011, %v2165, %v2169
      %v2171 = vrot.slane %v1951, 2
      %v2172 = vrot.slane %v1953, 2
      %v2173 = vsel %vm1011, %v2171, %v2172
      %v2174 = vrot.slane %v1952, 2
      %v2175 = vrot.slane %v1954, 2
      %v2176 = vsel %vm1011, %v2174, %v2175
      %v2177 = vrot.slane %v1955, 2
      %v2178 = vsel %vm1011, %v2172, %v2177
      %v2179 = vrot.slane %v1956, 2
      %v2180 = vsel %vm1011, %v2175, %v2179
      %v2181 = vrot.slane %v1957, 2
      %v2182 = vrot.slane %v1959, 2
      %v2183 = vsel %vm1011, %v2181, %v2182
      %v2184 = vrot.slane %v1958, 2
      %v2185 = vrot.slane %v1960, 2
      %v2186 = vsel %vm1011, %v2184, %v2185
      %v2187 = vrot.slane %v1961, 2
      %v2188 = vsel %vm1011, %v2182, %v2187
      %v2189 = vrot.slane %v1962, 2
      %v2190 = vsel %vm1011, %v2185, %v2189
      %v2191 = vrot.slane %v1963, 2
      %v2192 = vrot.slane %v1965, 2
      %v2193 = vsel %vm1011, %v2191, %v2192
      %v2194 = vrot.slane %v1964, 2
      %v2195 = vrot.slane %v1966, 2
      %v2196 = vsel %vm1011, %v2194, %v2195
      %v2197 = vrot.slane %v1967, 2
      %v2198 = vsel %vm1011, %v2192, %v2197
      %v2199 = vrot.slane %v1968, 2
      %v2200 = vsel %vm1011, %v2195, %v2199
      %v2201 = vrot.slane %v1969, 2
      %v2202 = vrot.slane %v1971, 2
      %v2203 = vsel %vm1011, %v2201, %v2202
      %v2204 = vrot.slane %v1970, 2
      %v2205 = vrot.slane %v1972, 2
      %v2206 = vsel %vm1011, %v2204, %v2205
      %v2207 = vrot.slane %v1973, 2
      %v2208 = vsel %vm1011, %v2202, %v2207
      %v2209 = vrot.slane %v1974, 2
      %v2210 = vsel %vm1011, %v2205, %v2209
      %v2211 = vrot.slane %v1975, 2
      %v2212 = vrot.slane %v1977, 2
      %v2213 = vsel %vm1011, %v2211, %v2212
      %v2214 = vrot.slane %v1976, 2
      %v2215 = vrot.slane %v1978, 2
      %v2216 = vsel %vm1011, %v2214, %v2215
      %v2217 = vrot.slane %v1979, 2
      %v2218 = vsel %vm1011, %v2212, %v2217
      %v2219 = vrot.slane %v1980, 2
      %v2220 = vsel %vm1011, %v2215, %v2219
      %v2221 = vrot.slane %v1981, 2
      %v2222 = vrot.slane %v1983, 2
      %v2223 = vsel %vm1011, %v2221, %v2222
      %v2224 = vrot.slane %v1982, 2
      %v2225 = vrot.slane %v1984, 2
      %v2226 = vsel %vm1011, %v2224, %v2225
      %v2227 = vrot.slane %v1985, 2
      %v2228 = vsel %vm1011, %v2222, %v2227
      %v2229 = vrot.slane %v1986, 2
      %v2230 = vsel %vm1011, %v2225, %v2229
      %v2231 = vrot.slane %v1987, 2
      %v2232 = vrot.slane %v1989, 2
      %v2233 = vsel %vm1011, %v2231, %v2232
      %v2234 = vrot.slane %v1988, 2
      %v2235 = vrot.slane %v1990, 2
      %v2236 = vsel %vm1011, %v2234, %v2235
      %v2237 = vrot.slane %v1991, 2
      %v2238 = vsel %vm1011, %v2232, %v2237
      %v2239 = vrot.slane %v1992, 2
      %v2240 = vsel %vm1011, %v2235, %v2239
      %v2241 = vrot.slane %v1993, 2
      %v2242 = vrot.slane %v1995, 2
      %v2243 = vsel %vm1011, %v2241, %v2242
      %v2244 = vrot.slane %v1994, 2
      %v2245 = vrot.slane %v1996, 2
      %v2246 = vsel %vm1011, %v2244, %v2245
      %v2247 = vrot.slane %v1997, 2
      %v2248 = vsel %vm1011, %v2242, %v2247
      %v2249 = vrot.slane %v1998, 2
      %v2250 = vsel %vm1011, %v2245, %v2249
      %v2251 = vrot.slane %v1999, 2
      %v2252 = vrot.slane %v2001, 2
      %v2253 = vsel %vm1011, %v2251, %v2252
      %v2254 = vrot.slane %v2000, 2
      %v2255 = vrot.slane %v2002, 2
      %v2256 = vsel %vm1011, %v2254, %v2255
      %v2257 = vrot.slane %v2003, 2
      %v2258 = vsel %vm1011, %v2252, %v2257
      %v2259 = vrot.slane %v2004, 2
      %v2260 = vsel %vm1011, %v2255, %v2259
      %2325 = vst [vmem:[#allocation2 + $0x50] sm:$0xff] %v2103
      %2326 = vst [vmem:[#allocation2 + $0x58] sm:$0xff] %v2106
      %2327 = vst [vmem:[#allocation2 + $0xe0] sm:$0xff] %v2108
      %2328 = vst [vmem:[#allocation2 + $0xe8] sm:$0xff] %v2110
      %2329 = vst [vmem:[#allocation2 + $0x170] sm:$0xff] %v2113
      %2330 = vst [vmem:[#allocation2 + $0x178] sm:$0xff] %v2116
      %2331 = vst [vmem:[#allocation2 + $0x200] sm:$0xff] %v2118
      %2332 = vst [vmem:[#allocation2 + $0x208] sm:$0xff] %v2120
      %2333 = vst [vmem:[#allocation2 + $0x290] sm:$0xff] %v2123
      %2334 = vst [vmem:[#allocation2 + $0x298] sm:$0xff] %v2126
      %2335 = vst [vmem:[#allocation2 + $0x320] sm:$0xff] %v2128
      %2336 = vst [vmem:[#allocation2 + $0x328] sm:$0xff] %v2130
      %2337 = vst [vmem:[#allocation2 + $0x3b0] sm:$0xff] %v2133
      %2338 = vst [vmem:[#allocation2 + $0x3b8] sm:$0xff] %v2136
      %2339 = vst [vmem:[#allocation2 + $0x440] sm:$0xff] %v2138
      %2340 = vst [vmem:[#allocation2 + $0x448] sm:$0xff] %v2140
      %2341 = vst [vmem:[#allocation2 + $0x4d0] sm:$0xff] %v2143
      %2342 = vst [vmem:[#allocation2 + $0x4d8] sm:$0xff] %v2146
      %2343 = vst [vmem:[#allocation2 + $0x560] sm:$0xff] %v2148
      %2344 = vst [vmem:[#allocation2 + $0x568] sm:$0xff] %v2150
      %2345 = vst [vmem:[#allocation2 + $0x5f0] sm:$0xff] %v2153
      %2346 = vst [vmem:[#allocation2 + $0x5f8] sm:$0xff] %v2156
      %2347 = vst [vmem:[#allocation2 + $0x680] sm:$0xff] %v2158
      %2348 = vst [vmem:[#allocation2 + $0x688] sm:$0xff] %v2160
      %2349 = vst [vmem:[#allocation2 + $0x710] sm:$0xff] %v2163
      %2350 = vst [vmem:[#allocation2 + $0x718] sm:$0xff] %v2166
      %2351 = vst [vmem:[#allocation2 + $0x7a0] sm:$0xff] %v2168
      %2352 = vst [vmem:[#allocation2 + $0x7a8] sm:$0xff] %v2170
      %2353 = vst [vmem:[#allocation2 + $0x830] sm:$0xff] %v2173
      %2354 = vst [vmem:[#allocation2 + $0x838] sm:$0xff] %v2176
      %2355 = vst [vmem:[#allocation2 + $0x8c0] sm:$0xff] %v2178
      %2356 = vst [vmem:[#allocation2 + $0x8c8] sm:$0xff] %v2180
      %2357 = vst [vmem:[#allocation2 + $0x950] sm:$0xff] %v2183
      %2358 = vst [vmem:[#allocation2 + $0x958] sm:$0xff] %v2186
      %2359 = vst [vmem:[#allocation2 + $0x9e0] sm:$0xff] %v2188
      %2360 = vst [vmem:[#allocation2 + $0x9e8] sm:$0xff] %v2190
      %2361 = vst [vmem:[#allocation2 + $0xa70] sm:$0xff] %v2193
      %2362 = vst [vmem:[#allocation2 + $0xa78] sm:$0xff] %v2196
      %2363 = vst [vmem:[#allocation2 + $0xb00] sm:$0xff] %v2198
      %2364 = vst [vmem:[#allocation2 + $0xb08] sm:$0xff] %v2200
      %2365 = vst [vmem:[#allocation2 + $0xb90] sm:$0xff] %v2203
      %2366 = vst [vmem:[#allocation2 + $0xb98] sm:$0xff] %v2206
      %2367 = vst [vmem:[#allocation2 + $0xc20] sm:$0xff] %v2208
      %2368 = vst [vmem:[#allocation2 + $0xc28] sm:$0xff] %v2210
      %2369 = vst [vmem:[#allocation2 + $0xcb0] sm:$0xff] %v2213
      %2370 = vst [vmem:[#allocation2 + $0xcb8] sm:$0xff] %v2216
      %2371 = vst [vmem:[#allocation2 + $0xd40] sm:$0xff] %v2218
      %2372 = vst [vmem:[#allocation2 + $0xd48] sm:$0xff] %v2220
      %2373 = vst [vmem:[#allocation2 + $0xdd0] sm:$0xff] %v2223
      %2374 = vst [vmem:[#allocation2 + $0xdd8] sm:$0xff] %v2226
      %2375 = vst [vmem:[#allocation2 + $0xe60] sm:$0xff] %v2228
      %2376 = vst [vmem:[#allocation2 + $0xe68] sm:$0xff] %v2230
      %2377 = vst [vmem:[#allocation2 + $0xef0] sm:$0xff] %v2233
      %2378 = vst [vmem:[#allocation2 + $0xef8] sm:$0xff] %v2236
      %2379 = vst [vmem:[#allocation2 + $0xf80] sm:$0xff] %v2238
      %2380 = vst [vmem:[#allocation2 + $0xf88] sm:$0xff] %v2240
      %2381 = vst [vmem:[#allocation2 + $0x1010] sm:$0xff] %v2243
      %2382 = vst [vmem:[#allocation2 + $0x1018] sm:$0xff] %v2246
      %2383 = vst [vmem:[#allocation2 + $0x10a0] sm:$0xff] %v2248
      %2384 = vst [vmem:[#allocation2 + $0x10a8] sm:$0xff] %v2250
      %2385 = vst [vmem:[#allocation2 + $0x1130] sm:$0xff] %v2253
      %2386 = vst [vmem:[#allocation2 + $0x1138] sm:$0xff] %v2256
      %2387 = vst [vmem:[#allocation2 + $0x11c0] sm:$0xff] %v2258
      %2388 = vst [vmem:[#allocation2 + $0x11c8] sm:$0xff] %v2260
      %s2389 = scalar_lea.vmem %s198, 96
      %v2390 = vld [vmem:[%s2389] sm:$0xff]
      %v2391 = vld [vmem:[%s2389 + $0x8] sm:$0xff]
      %v2392 = vld [vmem:[%s2389 + $0x10] sm:$0xff]
      %v2393 = vld [vmem:[%s2389 + $0x18] sm:$0xff]
      %v2394 = vld [vmem:[%s2389 + $0x30] sm:$0xff]
      %v2395 = vld [vmem:[%s2389 + $0x38] sm:$0xff]
      %v2396 = vld [vmem:[%s2389 + $0x40] sm:$0xff]
      %v2397 = vld [vmem:[%s2389 + $0x48] sm:$0xff]
      %v2398 = vld [vmem:[%s2389 + $0x60] sm:$0xff]
      %v2399 = vld [vmem:[%s2389 + $0x68] sm:$0xff]
      %v2400 = vld [vmem:[%s2389 + $0x70] sm:$0xff]
      %v2401 = vld [vmem:[%s2389 + $0x78] sm:$0xff]
      %v2402 = vld [vmem:[%s2389 + $0x90] sm:$0xff]
      %v2403 = vld [vmem:[%s2389 + $0x98] sm:$0xff]
      %v2404 = vld [vmem:[%s2389 + $0xa0] sm:$0xff]
      %v2405 = vld [vmem:[%s2389 + $0xa8] sm:$0xff]
      %v2406 = vld [vmem:[%s2389 + $0xc0] sm:$0xff]
      %v2407 = vld [vmem:[%s2389 + $0xc8] sm:$0xff]
      %v2408 = vld [vmem:[%s2389 + $0xd0] sm:$0xff]
      %v2409 = vld [vmem:[%s2389 + $0xd8] sm:$0xff]
      %v2410 = vld [vmem:[%s2389 + $0xf0] sm:$0xff]
      %v2411 = vld [vmem:[%s2389 + $0xf8] sm:$0xff]
      %v2412 = vld [vmem:[%s2389 + $0x100] sm:$0xff]
      %v2413 = vld [vmem:[%s2389 + $0x108] sm:$0xff]
      %v2414 = vld [vmem:[%s2389 + $0x120] sm:$0xff]
      %v2415 = vld [vmem:[%s2389 + $0x128] sm:$0xff]
      %v2416 = vld [vmem:[%s2389 + $0x130] sm:$0xff]
      %v2417 = vld [vmem:[%s2389 + $0x138] sm:$0xff]
      %v2418 = vld [vmem:[%s2389 + $0x150] sm:$0xff]
      %v2419 = vld [vmem:[%s2389 + $0x158] sm:$0xff]
      %v2420 = vld [vmem:[%s2389 + $0x160] sm:$0xff]
      %v2421 = vld [vmem:[%s2389 + $0x168] sm:$0xff]
      %v2422 = vld [vmem:[%s2389 + $0x180] sm:$0xff]
      %v2423 = vld [vmem:[%s2389 + $0x188] sm:$0xff]
      %v2424 = vld [vmem:[%s2389 + $0x190] sm:$0xff]
      %v2425 = vld [vmem:[%s2389 + $0x198] sm:$0xff]
      %v2426 = vld [vmem:[%s2389 + $0x1b0] sm:$0xff]
      %v2427 = vld [vmem:[%s2389 + $0x1b8] sm:$0xff]
      %v2428 = vld [vmem:[%s2389 + $0x1c0] sm:$0xff]
      %v2429 = vld [vmem:[%s2389 + $0x1c8] sm:$0xff]
      %v2430 = vld [vmem:[%s2389 + $0x1e0] sm:$0xff]
      %v2431 = vld [vmem:[%s2389 + $0x1e8] sm:$0xff]
      %v2432 = vld [vmem:[%s2389 + $0x1f0] sm:$0xff]
      %v2433 = vld [vmem:[%s2389 + $0x1f8] sm:$0xff]
      %v2434 = vld [vmem:[%s2389 + $0x210] sm:$0xff]
      %v2435 = vld [vmem:[%s2389 + $0x218] sm:$0xff]
      %v2436 = vld [vmem:[%s2389 + $0x220] sm:$0xff]
      %v2437 = vld [vmem:[%s2389 + $0x228] sm:$0xff]
      %v2438 = vld [vmem:[%s2389 + $0x240] sm:$0xff]
      %v2439 = vld [vmem:[%s2389 + $0x248] sm:$0xff]
      %v2440 = vld [vmem:[%s2389 + $0x250] sm:$0xff]
      %v2441 = vld [vmem:[%s2389 + $0x258] sm:$0xff]
      %v2442 = vld [vmem:[%s2389 + $0x270] sm:$0xff]
      %v2443 = vld [vmem:[%s2389 + $0x278] sm:$0xff]
      %v2444 = vld [vmem:[%s2389 + $0x280] sm:$0xff]
      %v2445 = vld [vmem:[%s2389 + $0x288] sm:$0xff]
      %v2446 = vld [vmem:[%s2389 + $0x2a0] sm:$0xff]
      %v2447 = vld [vmem:[%s2389 + $0x2a8] sm:$0xff]
      %v2448 = vld [vmem:[%s2389 + $0x2b0] sm:$0xff]
      %v2449 = vld [vmem:[%s2389 + $0x2b8] sm:$0xff]
      %v2450 = vld [vmem:[%s2389 + $0x2d0] sm:$0xff]
      %v2451 = vld [vmem:[%s2389 + $0x2d8] sm:$0xff]
      %v2452 = vld [vmem:[%s2389 + $0x2e0] sm:$0xff]
      %v2453 = vld [vmem:[%s2389 + $0x2e8] sm:$0xff]
      %2454 = vst [vmem:[#allocation2 + $0x60] sm:$0xff] %v2390
      %2455 = vst [vmem:[#allocation2 + $0x68] sm:$0xff] %v2391
      %2456 = vst [vmem:[#allocation2 + $0xf0] sm:$0xff] %v2392
      %2457 = vst [vmem:[#allocation2 + $0xf8] sm:$0xff] %v2393
      %2458 = vst [vmem:[#allocation2 + $0x180] sm:$0xff] %v2394
      %2459 = vst [vmem:[#allocation2 + $0x188] sm:$0xff] %v2395
      %2460 = vst [vmem:[#allocation2 + $0x210] sm:$0xff] %v2396
      %2461 = vst [vmem:[#allocation2 + $0x218] sm:$0xff] %v2397
      %2462 = vst [vmem:[#allocation2 + $0x2a0] sm:$0xff] %v2398
      %2463 = vst [vmem:[#allocation2 + $0x2a8] sm:$0xff] %v2399
      %2464 = vst [vmem:[#allocation2 + $0x330] sm:$0xff] %v2400
      %2465 = vst [vmem:[#allocation2 + $0x338] sm:$0xff] %v2401
      %2466 = vst [vmem:[#allocation2 + $0x3c0] sm:$0xff] %v2402
      %2467 = vst [vmem:[#allocation2 + $0x3c8] sm:$0xff] %v2403
      %2468 = vst [vmem:[#allocation2 + $0x450] sm:$0xff] %v2404
      %2469 = vst [vmem:[#allocation2 + $0x458] sm:$0xff] %v2405
      %2470 = vst [vmem:[#allocation2 + $0x4e0] sm:$0xff] %v2406
      %2471 = vst [vmem:[#allocation2 + $0x4e8] sm:$0xff] %v2407
      %2472 = vst [vmem:[#allocation2 + $0x570] sm:$0xff] %v2408
      %2473 = vst [vmem:[#allocation2 + $0x578] sm:$0xff] %v2409
      %2474 = vst [vmem:[#allocation2 + $0x600] sm:$0xff] %v2410
      %2475 = vst [vmem:[#allocation2 + $0x608] sm:$0xff] %v2411
      %2476 = vst [vmem:[#allocation2 + $0x690] sm:$0xff] %v2412
      %2477 = vst [vmem:[#allocation2 + $0x698] sm:$0xff] %v2413
      %2478 = vst [vmem:[#allocation2 + $0x720] sm:$0xff] %v2414
      %2479 = vst [vmem:[#allocation2 + $0x728] sm:$0xff] %v2415
      %2480 = vst [vmem:[#allocation2 + $0x7b0] sm:$0xff] %v2416
      %2481 = vst [vmem:[#allocation2 + $0x7b8] sm:$0xff] %v2417
      %2482 = vst [vmem:[#allocation2 + $0x840] sm:$0xff] %v2418
      %2483 = vst [vmem:[#allocation2 + $0x848] sm:$0xff] %v2419
      %2484 = vst [vmem:[#allocation2 + $0x8d0] sm:$0xff] %v2420
      %2485 = vst [vmem:[#allocation2 + $0x8d8] sm:$0xff] %v2421
      %2486 = vst [vmem:[#allocation2 + $0x960] sm:$0xff] %v2422
      %2487 = vst [vmem:[#allocation2 + $0x968] sm:$0xff] %v2423
      %2488 = vst [vmem:[#allocation2 + $0x9f0] sm:$0xff] %v2424
      %2489 = vst [vmem:[#allocation2 + $0x9f8] sm:$0xff] %v2425
      %2490 = vst [vmem:[#allocation2 + $0xa80] sm:$0xff] %v2426
      %2491 = vst [vmem:[#allocation2 + $0xa88] sm:$0xff] %v2427
      %2492 = vst [vmem:[#allocation2 + $0xb10] sm:$0xff] %v2428
      %2493 = vst [vmem:[#allocation2 + $0xb18] sm:$0xff] %v2429
      %2494 = vst [vmem:[#allocation2 + $0xba0] sm:$0xff] %v2430
      %2495 = vst [vmem:[#allocation2 + $0xba8] sm:$0xff] %v2431
      %2496 = vst [vmem:[#allocation2 + $0xc30] sm:$0xff] %v2432
      %2497 = vst [vmem:[#allocation2 + $0xc38] sm:$0xff] %v2433
      %2498 = vst [vmem:[#allocation2 + $0xcc0] sm:$0xff] %v2434
      %2499 = vst [vmem:[#allocation2 + $0xcc8] sm:$0xff] %v2435
      %2500 = vst [vmem:[#allocation2 + $0xd50] sm:$0xff] %v2436
      %2501 = vst [vmem:[#allocation2 + $0xd58] sm:$0xff] %v2437
      %2502 = vst [vmem:[#allocation2 + $0xde0] sm:$0xff] %v2438
      %2503 = vst [vmem:[#allocation2 + $0xde8] sm:$0xff] %v2439
      %2504 = vst [vmem:[#allocation2 + $0xe70] sm:$0xff] %v2440
      %2505 = vst [vmem:[#allocation2 + $0xe78] sm:$0xff] %v2441
      %2506 = vst [vmem:[#allocation2 + $0xf00] sm:$0xff] %v2442
      %2507 = vst [vmem:[#allocation2 + $0xf08] sm:$0xff] %v2443
      %2508 = vst [vmem:[#allocation2 + $0xf90] sm:$0xff] %v2444
      %2509 = vst [vmem:[#allocation2 + $0xf98] sm:$0xff] %v2445
      %2510 = vst [vmem:[#allocation2 + $0x1020] sm:$0xff] %v2446
      %2511 = vst [vmem:[#allocation2 + $0x1028] sm:$0xff] %v2447
      %2512 = vst [vmem:[#allocation2 + $0x10b0] sm:$0xff] %v2448
      %2513 = vst [vmem:[#allocation2 + $0x10b8] sm:$0xff] %v2449
      %2514 = vst [vmem:[#allocation2 + $0x1140] sm:$0xff] %v2450
      %2515 = vst [vmem:[#allocation2 + $0x1148] sm:$0xff] %v2451
      %2516 = vst [vmem:[#allocation2 + $0x11d0] sm:$0xff] %v2452
      %2517 = vst [vmem:[#allocation2 + $0x11d8] sm:$0xff] %v2453
      %v2518 = vld [vmem:[%s2389] sm:$0xfe]
      %v2519 = vld [vmem:[%s2389 + $0x8] sm:$0xfe]
      %v2520 = vld [vmem:[%s2389 + $0x10] sm:$0xff]
      %v2521 = vld [vmem:[%s2389 + $0x18] sm:$0xff]
      %v2522 = vld [vmem:[%s2389 + $0x20] sm:$0x1]
      %v2523 = vld [vmem:[%s2389 + $0x28] sm:$0x1]
      %v2524 = vld [vmem:[%s2389 + $0x30] sm:$0xfe]
      %v2525 = vld [vmem:[%s2389 + $0x38] sm:$0xfe]
      %v2526 = vld [vmem:[%s2389 + $0x40] sm:$0xff]
      %v2527 = vld [vmem:[%s2389 + $0x48] sm:$0xff]
      %v2528 = vld [vmem:[%s2389 + $0x50] sm:$0x1]
      %v2529 = vld [vmem:[%s2389 + $0x58] sm:$0x1]
      %v2530 = vld [vmem:[%s2389 + $0x60] sm:$0xfe]
      %v2531 = vld [vmem:[%s2389 + $0x68] sm:$0xfe]
      %v2532 = vld [vmem:[%s2389 + $0x70] sm:$0xff]
      %v2533 = vld [vmem:[%s2389 + $0x78] sm:$0xff]
      %v2534 = vld [vmem:[%s2389 + $0x80] sm:$0x1]
      %v2535 = vld [vmem:[%s2389 + $0x88] sm:$0x1]
      %v2536 = vld [vmem:[%s2389 + $0x90] sm:$0xfe]
      %v2537 = vld [vmem:[%s2389 + $0x98] sm:$0xfe]
      %v2538 = vld [vmem:[%s2389 + $0xa0] sm:$0xff]
      %v2539 = vld [vmem:[%s2389 + $0xa8] sm:$0xff]
      %v2540 = vld [vmem:[%s2389 + $0xb0] sm:$0x1]
      %v2541 = vld [vmem:[%s2389 + $0xb8] sm:$0x1]
      %v2542 = vld [vmem:[%s2389 + $0xc0] sm:$0xfe]
      %v2543 = vld [vmem:[%s2389 + $0xc8] sm:$0xfe]
      %v2544 = vld [vmem:[%s2389 + $0xd0] sm:$0xff]
      %v2545 = vld [vmem:[%s2389 + $0xd8] sm:$0xff]
      %v2546 = vld [vmem:[%s2389 + $0xe0] sm:$0x1]
      %v2547 = vld [vmem:[%s2389 + $0xe8] sm:$0x1]
      %v2548 = vld [vmem:[%s2389 + $0xf0] sm:$0xfe]
      %v2549 = vld [vmem:[%s2389 + $0xf8] sm:$0xfe]
      %v2550 = vld [vmem:[%s2389 + $0x100] sm:$0xff]
      %v2551 = vld [vmem:[%s2389 + $0x108] sm:$0xff]
      %v2552 = vld [vmem:[%s2389 + $0x110] sm:$0x1]
      %v2553 = vld [vmem:[%s2389 + $0x118] sm:$0x1]
      %v2554 = vld [vmem:[%s2389 + $0x120] sm:$0xfe]
      %v2555 = vld [vmem:[%s2389 + $0x128] sm:$0xfe]
      %v2556 = vld [vmem:[%s2389 + $0x130] sm:$0xff]
      %v2557 = vld [vmem:[%s2389 + $0x138] sm:$0xff]
      %v2558 = vld [vmem:[%s2389 + $0x140] sm:$0x1]
      %v2559 = vld [vmem:[%s2389 + $0x148] sm:$0x1]
      %v2560 = vld [vmem:[%s2389 + $0x150] sm:$0xfe]
      %v2561 = vld [vmem:[%s2389 + $0x158] sm:$0xfe]
      %v2562 = vld [vmem:[%s2389 + $0x160] sm:$0xff]
      %v2563 = vld [vmem:[%s2389 + $0x168] sm:$0xff]
      %v2564 = vld [vmem:[%s2389 + $0x170] sm:$0x1]
      %v2565 = vld [vmem:[%s2389 + $0x178] sm:$0x1]
      %v2566 = vld [vmem:[%s2389 + $0x180] sm:$0xfe]
      %v2567 = vld [vmem:[%s2389 + $0x188] sm:$0xfe]
      %v2568 = vld [vmem:[%s2389 + $0x190] sm:$0xff]
      %v2569 = vld [vmem:[%s2389 + $0x198] sm:$0xff]
      %v2570 = vld [vmem:[%s2389 + $0x1a0] sm:$0x1]
      %v2571 = vld [vmem:[%s2389 + $0x1a8] sm:$0x1]
      %v2572 = vld [vmem:[%s2389 + $0x1b0] sm:$0xfe]
      %v2573 = vld [vmem:[%s2389 + $0x1b8] sm:$0xfe]
      %v2574 = vld [vmem:[%s2389 + $0x1c0] sm:$0xff]
      %v2575 = vld [vmem:[%s2389 + $0x1c8] sm:$0xff]
      %v2576 = vld [vmem:[%s2389 + $0x1d0] sm:$0x1]
      %v2577 = vld [vmem:[%s2389 + $0x1d8] sm:$0x1]
      %v2578 = vld [vmem:[%s2389 + $0x1e0] sm:$0xfe]
      %v2579 = vld [vmem:[%s2389 + $0x1e8] sm:$0xfe]
      %v2580 = vld [vmem:[%s2389 + $0x1f0] sm:$0xff]
      %v2581 = vld [vmem:[%s2389 + $0x1f8] sm:$0xff]
      %v2582 = vld [vmem:[%s2389 + $0x200] sm:$0x1]
      %v2583 = vld [vmem:[%s2389 + $0x208] sm:$0x1]
      %v2584 = vld [vmem:[%s2389 + $0x210] sm:$0xfe]
      %v2585 = vld [vmem:[%s2389 + $0x218] sm:$0xfe]
      %v2586 = vld [vmem:[%s2389 + $0x220] sm:$0xff]
      %v2587 = vld [vmem:[%s2389 + $0x228] sm:$0xff]
      %v2588 = vld [vmem:[%s2389 + $0x230] sm:$0x1]
      %v2589 = vld [vmem:[%s2389 + $0x238] sm:$0x1]
      %v2590 = vld [vmem:[%s2389 + $0x240] sm:$0xfe]
      %v2591 = vld [vmem:[%s2389 + $0x248] sm:$0xfe]
      %v2592 = vld [vmem:[%s2389 + $0x250] sm:$0xff]
      %v2593 = vld [vmem:[%s2389 + $0x258] sm:$0xff]
      %v2594 = vld [vmem:[%s2389 + $0x260] sm:$0x1]
      %v2595 = vld [vmem:[%s2389 + $0x268] sm:$0x1]
      %v2596 = vld [vmem:[%s2389 + $0x270] sm:$0xfe]
      %v2597 = vld [vmem:[%s2389 + $0x278] sm:$0xfe]
      %v2598 = vld [vmem:[%s2389 + $0x280] sm:$0xff]
      %v2599 = vld [vmem:[%s2389 + $0x288] sm:$0xff]
      %v2600 = vld [vmem:[%s2389 + $0x290] sm:$0x1]
      %v2601 = vld [vmem:[%s2389 + $0x298] sm:$0x1]
      %v2602 = vld [vmem:[%s2389 + $0x2a0] sm:$0xfe]
      %v2603 = vld [vmem:[%s2389 + $0x2a8] sm:$0xfe]
      %v2604 = vld [vmem:[%s2389 + $0x2b0] sm:$0xff]
      %v2605 = vld [vmem:[%s2389 + $0x2b8] sm:$0xff]
      %v2606 = vld [vmem:[%s2389 + $0x2c0] sm:$0x1]
      %v2607 = vld [vmem:[%s2389 + $0x2c8] sm:$0x1]
      %v2608 = vld [vmem:[%s2389 + $0x2d0] sm:$0xfe]
      %v2609 = vld [vmem:[%s2389 + $0x2d8] sm:$0xfe]
      %v2610 = vld [vmem:[%s2389 + $0x2e0] sm:$0xff]
      %v2611 = vld [vmem:[%s2389 + $0x2e8] sm:$0xff]
      %v2612 = vld [vmem:[%s2389 + $0x2f0] sm:$0x1]
      %v2613 = vld [vmem:[%s2389 + $0x2f8] sm:$0x1]
      %v2710 = vrot.slane %v2518, 1
      %v2711 = vrot.slane %v2520, 1
      %v2712 = vsel %vm530, %v2710, %v2711
      %v2713 = vrot.slane %v2519, 1
      %v2714 = vrot.slane %v2521, 1
      %v2715 = vsel %vm530, %v2713, %v2714
      %v2716 = vrot.slane %v2522, 1
      %v2717 = vsel %vm530, %v2711, %v2716
      %v2718 = vrot.slane %v2523, 1
      %v2719 = vsel %vm530, %v2714, %v2718
      %v2720 = vrot.slane %v2524, 1
      %v2721 = vrot.slane %v2526, 1
      %v2722 = vsel %vm530, %v2720, %v2721
      %v2723 = vrot.slane %v2525, 1
      %v2724 = vrot.slane %v2527, 1
      %v2725 = vsel %vm530, %v2723, %v2724
      %v2726 = vrot.slane %v2528, 1
      %v2727 = vsel %vm530, %v2721, %v2726
      %v2728 = vrot.slane %v2529, 1
      %v2729 = vsel %vm530, %v2724, %v2728
      %v2730 = vrot.slane %v2530, 1
      %v2731 = vrot.slane %v2532, 1
      %v2732 = vsel %vm530, %v2730, %v2731
      %v2733 = vrot.slane %v2531, 1
      %v2734 = vrot.slane %v2533, 1
      %v2735 = vsel %vm530, %v2733, %v2734
      %v2736 = vrot.slane %v2534, 1
      %v2737 = vsel %vm530, %v2731, %v2736
      %v2738 = vrot.slane %v2535, 1
      %v2739 = vsel %vm530, %v2734, %v2738
      %v2740 = vrot.slane %v2536, 1
      %v2741 = vrot.slane %v2538, 1
      %v2742 = vsel %vm530, %v2740, %v2741
      %v2743 = vrot.slane %v2537, 1
      %v2744 = vrot.slane %v2539, 1
      %v2745 = vsel %vm530, %v2743, %v2744
      %v2746 = vrot.slane %v2540, 1
      %v2747 = vsel %vm530, %v2741, %v2746
      %v2748 = vrot.slane %v2541, 1
      %v2749 = vsel %vm530, %v2744, %v2748
      %v2750 = vrot.slane %v2542, 1
      %v2751 = vrot.slane %v2544, 1
      %v2752 = vsel %vm530, %v2750, %v2751
      %v2753 = vrot.slane %v2543, 1
      %v2754 = vrot.slane %v2545, 1
      %v2755 = vsel %vm530, %v2753, %v2754
      %v2756 = vrot.slane %v2546, 1
      %v2757 = vsel %vm530, %v2751, %v2756
      %v2758 = vrot.slane %v2547, 1
      %v2759 = vsel %vm530, %v2754, %v2758
      %v2760 = vrot.slane %v2548, 1
      %v2761 = vrot.slane %v2550, 1
      %v2762 = vsel %vm530, %v2760, %v2761
      %v2763 = vrot.slane %v2549, 1
      %v2764 = vrot.slane %v2551, 1
      %v2765 = vsel %vm530, %v2763, %v2764
      %v2766 = vrot.slane %v2552, 1
      %v2767 = vsel %vm530, %v2761, %v2766
      %v2768 = vrot.slane %v2553, 1
      %v2769 = vsel %vm530, %v2764, %v2768
      %v2770 = vrot.slane %v2554, 1
      %v2771 = vrot.slane %v2556, 1
      %v2772 = vsel %vm530, %v2770, %v2771
      %v2773 = vrot.slane %v2555, 1
      %v2774 = vrot.slane %v2557, 1
      %v2775 = vsel %vm530, %v2773, %v2774
      %v2776 = vrot.slane %v2558, 1
      %v2777 = vsel %vm530, %v2771, %v2776
      %v2778 = vrot.slane %v2559, 1
      %v2779 = vsel %vm530, %v2774, %v2778
      %v2780 = vrot.slane %v2560, 1
      %v2781 = vrot.slane %v2562, 1
      %v2782 = vsel %vm530, %v2780, %v2781
      %v2783 = vrot.slane %v2561, 1
      %v2784 = vrot.slane %v2563, 1
      %v2785 = vsel %vm530, %v2783, %v2784
      %v2786 = vrot.slane %v2564, 1
      %v2787 = vsel %vm530, %v2781, %v2786
      %v2788 = vrot.slane %v2565, 1
      %v2789 = vsel %vm530, %v2784, %v2788
      %v2790 = vrot.slane %v2566, 1
      %v2791 = vrot.slane %v2568, 1
      %v2792 = vsel %vm530, %v2790, %v2791
      %v2793 = vrot.slane %v2567, 1
      %v2794 = vrot.slane %v2569, 1
      %v2795 = vsel %vm530, %v2793, %v2794
      %v2796 = vrot.slane %v2570, 1
      %v2797 = vsel %vm530, %v2791, %v2796
      %v2798 = vrot.slane %v2571, 1
      %v2799 = vsel %vm530, %v2794, %v2798
      %v2800 = vrot.slane %v2572, 1
      %v2801 = vrot.slane %v2574, 1
      %v2802 = vsel %vm530, %v2800, %v2801
      %v2803 = vrot.slane %v2573, 1
      %v2804 = vrot.slane %v2575, 1
      %v2805 = vsel %vm530, %v2803, %v2804
      %v2806 = vrot.slane %v2576, 1
      %v2807 = vsel %vm530, %v2801, %v2806
      %v2808 = vrot.slane %v2577, 1
      %v2809 = vsel %vm530, %v2804, %v2808
      %v2810 = vrot.slane %v2578, 1
      %v2811 = vrot.slane %v2580, 1
      %v2812 = vsel %vm530, %v2810, %v2811
      %v2813 = vrot.slane %v2579, 1
      %v2814 = vrot.slane %v2581, 1
      %v2815 = vsel %vm530, %v2813, %v2814
      %v2816 = vrot.slane %v2582, 1
      %v2817 = vsel %vm530, %v2811, %v2816
      %v2818 = vrot.slane %v2583, 1
      %v2819 = vsel %vm530, %v2814, %v2818
      %v2820 = vrot.slane %v2584, 1
      %v2821 = vrot.slane %v2586, 1
      %v2822 = vsel %vm530, %v2820, %v2821
      %v2823 = vrot.slane %v2585, 1
      %v2824 = vrot.slane %v2587, 1
      %v2825 = vsel %vm530, %v2823, %v2824
      %v2826 = vrot.slane %v2588, 1
      %v2827 = vsel %vm530, %v2821, %v2826
      %v2828 = vrot.slane %v2589, 1
      %v2829 = vsel %vm530, %v2824, %v2828
      %v2830 = vrot.slane %v2590, 1
      %v2831 = vrot.slane %v2592, 1
      %v2832 = vsel %vm530, %v2830, %v2831
      %v2833 = vrot.slane %v2591, 1
      %v2834 = vrot.slane %v2593, 1
      %v2835 = vsel %vm530, %v2833, %v2834
      %v2836 = vrot.slane %v2594, 1
      %v2837 = vsel %vm530, %v2831, %v2836
      %v2838 = vrot.slane %v2595, 1
      %v2839 = vsel %vm530, %v2834, %v2838
      %v2840 = vrot.slane %v2596, 1
      %v2841 = vrot.slane %v2598, 1
      %v2842 = vsel %vm530, %v2840, %v2841
      %v2843 = vrot.slane %v2597, 1
      %v2844 = vrot.slane %v2599, 1
      %v2845 = vsel %vm530, %v2843, %v2844
      %v2846 = vrot.slane %v2600, 1
      %v2847 = vsel %vm530, %v2841, %v2846
      %v2848 = vrot.slane %v2601, 1
      %v2849 = vsel %vm530, %v2844, %v2848
      %v2850 = vrot.slane %v2602, 1
      %v2851 = vrot.slane %v2604, 1
      %v2852 = vsel %vm530, %v2850, %v2851
      %v2853 = vrot.slane %v2603, 1
      %v2854 = vrot.slane %v2605, 1
      %v2855 = vsel %vm530, %v2853, %v2854
      %v2856 = vrot.slane %v2606, 1
      %v2857 = vsel %vm530, %v2851, %v2856
      %v2858 = vrot.slane %v2607, 1
      %v2859 = vsel %vm530, %v2854, %v2858
      %v2860 = vrot.slane %v2608, 1
      %v2861 = vrot.slane %v2610, 1
      %v2862 = vsel %vm530, %v2860, %v2861
      %v2863 = vrot.slane %v2609, 1
      %v2864 = vrot.slane %v2611, 1
      %v2865 = vsel %vm530, %v2863, %v2864
      %v2866 = vrot.slane %v2612, 1
      %v2867 = vsel %vm530, %v2861, %v2866
      %v2868 = vrot.slane %v2613, 1
      %v2869 = vsel %vm530, %v2864, %v2868
      %2934 = vst [vmem:[#allocation2 + $0x70] sm:$0xff] %v2712
      %2935 = vst [vmem:[#allocation2 + $0x78] sm:$0xff] %v2715
      %2936 = vst [vmem:[#allocation2 + $0x100] sm:$0xff] %v2717
      %2937 = vst [vmem:[#allocation2 + $0x108] sm:$0xff] %v2719
      %2938 = vst [vmem:[#allocation2 + $0x190] sm:$0xff] %v2722
      %2939 = vst [vmem:[#allocation2 + $0x198] sm:$0xff] %v2725
      %2940 = vst [vmem:[#allocation2 + $0x220] sm:$0xff] %v2727
      %2941 = vst [vmem:[#allocation2 + $0x228] sm:$0xff] %v2729
      %2942 = vst [vmem:[#allocation2 + $0x2b0] sm:$0xff] %v2732
      %2943 = vst [vmem:[#allocation2 + $0x2b8] sm:$0xff] %v2735
      %2944 = vst [vmem:[#allocation2 + $0x340] sm:$0xff] %v2737
      %2945 = vst [vmem:[#allocation2 + $0x348] sm:$0xff] %v2739
      %2946 = vst [vmem:[#allocation2 + $0x3d0] sm:$0xff] %v2742
      %2947 = vst [vmem:[#allocation2 + $0x3d8] sm:$0xff] %v2745
      %2948 = vst [vmem:[#allocation2 + $0x460] sm:$0xff] %v2747
      %2949 = vst [vmem:[#allocation2 + $0x468] sm:$0xff] %v2749
      %2950 = vst [vmem:[#allocation2 + $0x4f0] sm:$0xff] %v2752
      %2951 = vst [vmem:[#allocation2 + $0x4f8] sm:$0xff] %v2755
      %2952 = vst [vmem:[#allocation2 + $0x580] sm:$0xff] %v2757
      %2953 = vst [vmem:[#allocation2 + $0x588] sm:$0xff] %v2759
      %2954 = vst [vmem:[#allocation2 + $0x610] sm:$0xff] %v2762
      %2955 = vst [vmem:[#allocation2 + $0x618] sm:$0xff] %v2765
      %2956 = vst [vmem:[#allocation2 + $0x6a0] sm:$0xff] %v2767
      %2957 = vst [vmem:[#allocation2 + $0x6a8] sm:$0xff] %v2769
      %2958 = vst [vmem:[#allocation2 + $0x730] sm:$0xff] %v2772
      %2959 = vst [vmem:[#allocation2 + $0x738] sm:$0xff] %v2775
      %2960 = vst [vmem:[#allocation2 + $0x7c0] sm:$0xff] %v2777
      %2961 = vst [vmem:[#allocation2 + $0x7c8] sm:$0xff] %v2779
      %2962 = vst [vmem:[#allocation2 + $0x850] sm:$0xff] %v2782
      %2963 = vst [vmem:[#allocation2 + $0x858] sm:$0xff] %v2785
      %2964 = vst [vmem:[#allocation2 + $0x8e0] sm:$0xff] %v2787
      %2965 = vst [vmem:[#allocation2 + $0x8e8] sm:$0xff] %v2789
      %2966 = vst [vmem:[#allocation2 + $0x970] sm:$0xff] %v2792
      %2967 = vst [vmem:[#allocation2 + $0x978] sm:$0xff] %v2795
      %2968 = vst [vmem:[#allocation2 + $0xa00] sm:$0xff] %v2797
      %2969 = vst [vmem:[#allocation2 + $0xa08] sm:$0xff] %v2799
      %2970 = vst [vmem:[#allocation2 + $0xa90] sm:$0xff] %v2802
      %2971 = vst [vmem:[#allocation2 + $0xa98] sm:$0xff] %v2805
      %2972 = vst [vmem:[#allocation2 + $0xb20] sm:$0xff] %v2807
      %2973 = vst [vmem:[#allocation2 + $0xb28] sm:$0xff] %v2809
      %2974 = vst [vmem:[#allocation2 + $0xbb0] sm:$0xff] %v2812
      %2975 = vst [vmem:[#allocation2 + $0xbb8] sm:$0xff] %v2815
      %2976 = vst [vmem:[#allocation2 + $0xc40] sm:$0xff] %v2817
      %2977 = vst [vmem:[#allocation2 + $0xc48] sm:$0xff] %v2819
      %2978 = vst [vmem:[#allocation2 + $0xcd0] sm:$0xff] %v2822
      %2979 = vst [vmem:[#allocation2 + $0xcd8] sm:$0xff] %v2825
      %2980 = vst [vmem:[#allocation2 + $0xd60] sm:$0xff] %v2827
      %2981 = vst [vmem:[#allocation2 + $0xd68] sm:$0xff] %v2829
      %2982 = vst [vmem:[#allocation2 + $0xdf0] sm:$0xff] %v2832
      %2983 = vst [vmem:[#allocation2 + $0xdf8] sm:$0xff] %v2835
      %2984 = vst [vmem:[#allocation2 + $0xe80] sm:$0xff] %v2837
      %2985 = vst [vmem:[#allocation2 + $0xe88] sm:$0xff] %v2839
      %2986 = vst [vmem:[#allocation2 + $0xf10] sm:$0xff] %v2842
      %2987 = vst [vmem:[#allocation2 + $0xf18] sm:$0xff] %v2845
      %2988 = vst [vmem:[#allocation2 + $0xfa0] sm:$0xff] %v2847
      %2989 = vst [vmem:[#allocation2 + $0xfa8] sm:$0xff] %v2849
      %2990 = vst [vmem:[#allocation2 + $0x1030] sm:$0xff] %v2852
      %2991 = vst [vmem:[#allocation2 + $0x1038] sm:$0xff] %v2855
      %2992 = vst [vmem:[#allocation2 + $0x10c0] sm:$0xff] %v2857
      %2993 = vst [vmem:[#allocation2 + $0x10c8] sm:$0xff] %v2859
      %2994 = vst [vmem:[#allocation2 + $0x1150] sm:$0xff] %v2862
      %2995 = vst [vmem:[#allocation2 + $0x1158] sm:$0xff] %v2865
      %2996 = vst [vmem:[#allocation2 + $0x11e0] sm:$0xff] %v2867
      %2997 = vst [vmem:[#allocation2 + $0x11e8] sm:$0xff] %v2869
      %v2998 = vld [vmem:[%s2389] sm:$0xfc]
      %v2999 = vld [vmem:[%s2389 + $0x8] sm:$0xfc]
      %v3000 = vld [vmem:[%s2389 + $0x10] sm:$0xff]
      %v3001 = vld [vmem:[%s2389 + $0x18] sm:$0xff]
      %v3002 = vld [vmem:[%s2389 + $0x20] sm:$0x3]
      %v3003 = vld [vmem:[%s2389 + $0x28] sm:$0x3]
      %v3004 = vld [vmem:[%s2389 + $0x30] sm:$0xfc]
      %v3005 = vld [vmem:[%s2389 + $0x38] sm:$0xfc]
      %v3006 = vld [vmem:[%s2389 + $0x40] sm:$0xff]
      %v3007 = vld [vmem:[%s2389 + $0x48] sm:$0xff]
      %v3008 = vld [vmem:[%s2389 + $0x50] sm:$0x3]
      %v3009 = vld [vmem:[%s2389 + $0x58] sm:$0x3]
      %v3010 = vld [vmem:[%s2389 + $0x60] sm:$0xfc]
      %v3011 = vld [vmem:[%s2389 + $0x68] sm:$0xfc]
      %v3012 = vld [vmem:[%s2389 + $0x70] sm:$0xff]
      %v3013 = vld [vmem:[%s2389 + $0x78] sm:$0xff]
      %v3014 = vld [vmem:[%s2389 + $0x80] sm:$0x3]
      %v3015 = vld [vmem:[%s2389 + $0x88] sm:$0x3]
      %v3016 = vld [vmem:[%s2389 + $0x90] sm:$0xfc]
      %v3017 = vld [vmem:[%s2389 + $0x98] sm:$0xfc]
      %v3018 = vld [vmem:[%s2389 + $0xa0] sm:$0xff]
      %v3019 = vld [vmem:[%s2389 + $0xa8] sm:$0xff]
      %v3020 = vld [vmem:[%s2389 + $0xb0] sm:$0x3]
      %v3021 = vld [vmem:[%s2389 + $0xb8] sm:$0x3]
      %v3022 = vld [vmem:[%s2389 + $0xc0] sm:$0xfc]
      %v3023 = vld [vmem:[%s2389 + $0xc8] sm:$0xfc]
      %v3024 = vld [vmem:[%s2389 + $0xd0] sm:$0xff]
      %v3025 = vld [vmem:[%s2389 + $0xd8] sm:$0xff]
      %v3026 = vld [vmem:[%s2389 + $0xe0] sm:$0x3]
      %v3027 = vld [vmem:[%s2389 + $0xe8] sm:$0x3]
      %v3028 = vld [vmem:[%s2389 + $0xf0] sm:$0xfc]
      %v3029 = vld [vmem:[%s2389 + $0xf8] sm:$0xfc]
      %v3030 = vld [vmem:[%s2389 + $0x100] sm:$0xff]
      %v3031 = vld [vmem:[%s2389 + $0x108] sm:$0xff]
      %v3032 = vld [vmem:[%s2389 + $0x110] sm:$0x3]
      %v3033 = vld [vmem:[%s2389 + $0x118] sm:$0x3]
      %v3034 = vld [vmem:[%s2389 + $0x120] sm:$0xfc]
      %v3035 = vld [vmem:[%s2389 + $0x128] sm:$0xfc]
      %v3036 = vld [vmem:[%s2389 + $0x130] sm:$0xff]
      %v3037 = vld [vmem:[%s2389 + $0x138] sm:$0xff]
      %v3038 = vld [vmem:[%s2389 + $0x140] sm:$0x3]
      %v3039 = vld [vmem:[%s2389 + $0x148] sm:$0x3]
      %v3040 = vld [vmem:[%s2389 + $0x150] sm:$0xfc]
      %v3041 = vld [vmem:[%s2389 + $0x158] sm:$0xfc]
      %v3042 = vld [vmem:[%s2389 + $0x160] sm:$0xff]
      %v3043 = vld [vmem:[%s2389 + $0x168] sm:$0xff]
      %v3044 = vld [vmem:[%s2389 + $0x170] sm:$0x3]
      %v3045 = vld [vmem:[%s2389 + $0x178] sm:$0x3]
      %v3046 = vld [vmem:[%s2389 + $0x180] sm:$0xfc]
      %v3047 = vld [vmem:[%s2389 + $0x188] sm:$0xfc]
      %v3048 = vld [vmem:[%s2389 + $0x190] sm:$0xff]
      %v3049 = vld [vmem:[%s2389 + $0x198] sm:$0xff]
      %v3050 = vld [vmem:[%s2389 + $0x1a0] sm:$0x3]
      %v3051 = vld [vmem:[%s2389 + $0x1a8] sm:$0x3]
      %v3052 = vld [vmem:[%s2389 + $0x1b0] sm:$0xfc]
      %v3053 = vld [vmem:[%s2389 + $0x1b8] sm:$0xfc]
      %v3054 = vld [vmem:[%s2389 + $0x1c0] sm:$0xff]
      %v3055 = vld [vmem:[%s2389 + $0x1c8] sm:$0xff]
      %v3056 = vld [vmem:[%s2389 + $0x1d0] sm:$0x3]
      %v3057 = vld [vmem:[%s2389 + $0x1d8] sm:$0x3]
      %v3058 = vld [vmem:[%s2389 + $0x1e0] sm:$0xfc]
      %v3059 = vld [vmem:[%s2389 + $0x1e8] sm:$0xfc]
      %v3060 = vld [vmem:[%s2389 + $0x1f0] sm:$0xff]
      %v3061 = vld [vmem:[%s2389 + $0x1f8] sm:$0xff]
      %v3062 = vld [vmem:[%s2389 + $0x200] sm:$0x3]
      %v3063 = vld [vmem:[%s2389 + $0x208] sm:$0x3]
      %v3064 = vld [vmem:[%s2389 + $0x210] sm:$0xfc]
      %v3065 = vld [vmem:[%s2389 + $0x218] sm:$0xfc]
      %v3066 = vld [vmem:[%s2389 + $0x220] sm:$0xff]
      %v3067 = vld [vmem:[%s2389 + $0x228] sm:$0xff]
      %v3068 = vld [vmem:[%s2389 + $0x230] sm:$0x3]
      %v3069 = vld [vmem:[%s2389 + $0x238] sm:$0x3]
      %v3070 = vld [vmem:[%s2389 + $0x240] sm:$0xfc]
      %v3071 = vld [vmem:[%s2389 + $0x248] sm:$0xfc]
      %v3072 = vld [vmem:[%s2389 + $0x250] sm:$0xff]
      %v3073 = vld [vmem:[%s2389 + $0x258] sm:$0xff]
      %v3074 = vld [vmem:[%s2389 + $0x260] sm:$0x3]
      %v3075 = vld [vmem:[%s2389 + $0x268] sm:$0x3]
      %v3076 = vld [vmem:[%s2389 + $0x270] sm:$0xfc]
      %v3077 = vld [vmem:[%s2389 + $0x278] sm:$0xfc]
      %v3078 = vld [vmem:[%s2389 + $0x280] sm:$0xff]
      %v3079 = vld [vmem:[%s2389 + $0x288] sm:$0xff]
      %v3080 = vld [vmem:[%s2389 + $0x290] sm:$0x3]
      %v3081 = vld [vmem:[%s2389 + $0x298] sm:$0x3]
      %v3082 = vld [vmem:[%s2389 + $0x2a0] sm:$0xfc]
      %v3083 = vld [vmem:[%s2389 + $0x2a8] sm:$0xfc]
      %v3084 = vld [vmem:[%s2389 + $0x2b0] sm:$0xff]
      %v3085 = vld [vmem:[%s2389 + $0x2b8] sm:$0xff]
      %v3086 = vld [vmem:[%s2389 + $0x2c0] sm:$0x3]
      %v3087 = vld [vmem:[%s2389 + $0x2c8] sm:$0x3]
      %v3088 = vld [vmem:[%s2389 + $0x2d0] sm:$0xfc]
      %v3089 = vld [vmem:[%s2389 + $0x2d8] sm:$0xfc]
      %v3090 = vld [vmem:[%s2389 + $0x2e0] sm:$0xff]
      %v3091 = vld [vmem:[%s2389 + $0x2e8] sm:$0xff]
      %v3092 = vld [vmem:[%s2389 + $0x2f0] sm:$0x3]
      %v3093 = vld [vmem:[%s2389 + $0x2f8] sm:$0x3]
      %v3190 = vrot.slane %v2998, 2
      %v3191 = vrot.slane %v3000, 2
      %v3192 = vsel %vm1011, %v3190, %v3191
      %v3193 = vrot.slane %v2999, 2
      %v3194 = vrot.slane %v3001, 2
      %v3195 = vsel %vm1011, %v3193, %v3194
      %v3196 = vrot.slane %v3002, 2
      %v3197 = vsel %vm1011, %v3191, %v3196
      %v3198 = vrot.slane %v3003, 2
      %v3199 = vsel %vm1011, %v3194, %v3198
      %v3200 = vrot.slane %v3004, 2
      %v3201 = vrot.slane %v3006, 2
      %v3202 = vsel %vm1011, %v3200, %v3201
      %v3203 = vrot.slane %v3005, 2
      %v3204 = vrot.slane %v3007, 2
      %v3205 = vsel %vm1011, %v3203, %v3204
      %v3206 = vrot.slane %v3008, 2
      %v3207 = vsel %vm1011, %v3201, %v3206
      %v3208 = vrot.slane %v3009, 2
      %v3209 = vsel %vm1011, %v3204, %v3208
      %v3210 = vrot.slane %v3010, 2
      %v3211 = vrot.slane %v3012, 2
      %v3212 = vsel %vm1011, %v3210, %v3211
      %v3213 = vrot.slane %v3011, 2
      %v3214 = vrot.slane %v3013, 2
      %v3215 = vsel %vm1011, %v3213, %v3214
      %v3216 = vrot.slane %v3014, 2
      %v3217 = vsel %vm1011, %v3211, %v3216
      %v3218 = vrot.slane %v3015, 2
      %v3219 = vsel %vm1011, %v3214, %v3218
      %v3220 = vrot.slane %v3016, 2
      %v3221 = vrot.slane %v3018, 2
      %v3222 = vsel %vm1011, %v3220, %v3221
      %v3223 = vrot.slane %v3017, 2
      %v3224 = vrot.slane %v3019, 2
      %v3225 = vsel %vm1011, %v3223, %v3224
      %v3226 = vrot.slane %v3020, 2
      %v3227 = vsel %vm1011, %v3221, %v3226
      %v3228 = vrot.slane %v3021, 2
      %v3229 = vsel %vm1011, %v3224, %v3228
      %v3230 = vrot.slane %v3022, 2
      %v3231 = vrot.slane %v3024, 2
      %v3232 = vsel %vm1011, %v3230, %v3231
      %v3233 = vrot.slane %v3023, 2
      %v3234 = vrot.slane %v3025, 2
      %v3235 = vsel %vm1011, %v3233, %v3234
      %v3236 = vrot.slane %v3026, 2
      %v3237 = vsel %vm1011, %v3231, %v3236
      %v3238 = vrot.slane %v3027, 2
      %v3239 = vsel %vm1011, %v3234, %v3238
      %v3240 = vrot.slane %v3028, 2
      %v3241 = vrot.slane %v3030, 2
      %v3242 = vsel %vm1011, %v3240, %v3241
      %v3243 = vrot.slane %v3029, 2
      %v3244 = vrot.slane %v3031, 2
      %v3245 = vsel %vm1011, %v3243, %v3244
      %v3246 = vrot.slane %v3032, 2
      %v3247 = vsel %vm1011, %v3241, %v3246
      %v3248 = vrot.slane %v3033, 2
      %v3249 = vsel %vm1011, %v3244, %v3248
      %v3250 = vrot.slane %v3034, 2
      %v3251 = vrot.slane %v3036, 2
      %v3252 = vsel %vm1011, %v3250, %v3251
      %v3253 = vrot.slane %v3035, 2
      %v3254 = vrot.slane %v3037, 2
      %v3255 = vsel %vm1011, %v3253, %v3254
      %v3256 = vrot.slane %v3038, 2
      %v3257 = vsel %vm1011, %v3251, %v3256
      %v3258 = vrot.slane %v3039, 2
      %v3259 = vsel %vm1011, %v3254, %v3258
      %v3260 = vrot.slane %v3040, 2
      %v3261 = vrot.slane %v3042, 2
      %v3262 = vsel %vm1011, %v3260, %v3261
      %v3263 = vrot.slane %v3041, 2
      %v3264 = vrot.slane %v3043, 2
      %v3265 = vsel %vm1011, %v3263, %v3264
      %v3266 = vrot.slane %v3044, 2
      %v3267 = vsel %vm1011, %v3261, %v3266
      %v3268 = vrot.slane %v3045, 2
      %v3269 = vsel %vm1011, %v3264, %v3268
      %v3270 = vrot.slane %v3046, 2
      %v3271 = vrot.slane %v3048, 2
      %v3272 = vsel %vm1011, %v3270, %v3271
      %v3273 = vrot.slane %v3047, 2
      %v3274 = vrot.slane %v3049, 2
      %v3275 = vsel %vm1011, %v3273, %v3274
      %v3276 = vrot.slane %v3050, 2
      %v3277 = vsel %vm1011, %v3271, %v3276
      %v3278 = vrot.slane %v3051, 2
      %v3279 = vsel %vm1011, %v3274, %v3278
      %v3280 = vrot.slane %v3052, 2
      %v3281 = vrot.slane %v3054, 2
      %v3282 = vsel %vm1011, %v3280, %v3281
      %v3283 = vrot.slane %v3053, 2
      %v3284 = vrot.slane %v3055, 2
      %v3285 = vsel %vm1011, %v3283, %v3284
      %v3286 = vrot.slane %v3056, 2
      %v3287 = vsel %vm1011, %v3281, %v3286
      %v3288 = vrot.slane %v3057, 2
      %v3289 = vsel %vm1011, %v3284, %v3288
      %v3290 = vrot.slane %v3058, 2
      %v3291 = vrot.slane %v3060, 2
      %v3292 = vsel %vm1011, %v3290, %v3291
      %v3293 = vrot.slane %v3059, 2
      %v3294 = vrot.slane %v3061, 2
      %v3295 = vsel %vm1011, %v3293, %v3294
      %v3296 = vrot.slane %v3062, 2
      %v3297 = vsel %vm1011, %v3291, %v3296
      %v3298 = vrot.slane %v3063, 2
      %v3299 = vsel %vm1011, %v3294, %v3298
      %v3300 = vrot.slane %v3064, 2
      %v3301 = vrot.slane %v3066, 2
      %v3302 = vsel %vm1011, %v3300, %v3301
      %v3303 = vrot.slane %v3065, 2
      %v3304 = vrot.slane %v3067, 2
      %v3305 = vsel %vm1011, %v3303, %v3304
      %v3306 = vrot.slane %v3068, 2
      %v3307 = vsel %vm1011, %v3301, %v3306
      %v3308 = vrot.slane %v3069, 2
      %v3309 = vsel %vm1011, %v3304, %v3308
      %v3310 = vrot.slane %v3070, 2
      %v3311 = vrot.slane %v3072, 2
      %v3312 = vsel %vm1011, %v3310, %v3311
      %v3313 = vrot.slane %v3071, 2
      %v3314 = vrot.slane %v3073, 2
      %v3315 = vsel %vm1011, %v3313, %v3314
      %v3316 = vrot.slane %v3074, 2
      %v3317 = vsel %vm1011, %v3311, %v3316
      %v3318 = vrot.slane %v3075, 2
      %v3319 = vsel %vm1011, %v3314, %v3318
      %v3320 = vrot.slane %v3076, 2
      %v3321 = vrot.slane %v3078, 2
      %v3322 = vsel %vm1011, %v3320, %v3321
      %v3323 = vrot.slane %v3077, 2
      %v3324 = vrot.slane %v3079, 2
      %v3325 = vsel %vm1011, %v3323, %v3324
      %v3326 = vrot.slane %v3080, 2
      %v3327 = vsel %vm1011, %v3321, %v3326
      %v3328 = vrot.slane %v3081, 2
      %v3329 = vsel %vm1011, %v3324, %v3328
      %v3330 = vrot.slane %v3082, 2
      %v3331 = vrot.slane %v3084, 2
      %v3332 = vsel %vm1011, %v3330, %v3331
      %v3333 = vrot.slane %v3083, 2
      %v3334 = vrot.slane %v3085, 2
      %v3335 = vsel %vm1011, %v3333, %v3334
      %v3336 = vrot.slane %v3086, 2
      %v3337 = vsel %vm1011, %v3331, %v3336
      %v3338 = vrot.slane %v3087, 2
      %v3339 = vsel %vm1011, %v3334, %v3338
      %v3340 = vrot.slane %v3088, 2
      %v3341 = vrot.slane %v3090, 2
      %v3342 = vsel %vm1011, %v3340, %v3341
      %v3343 = vrot.slane %v3089, 2
      %v3344 = vrot.slane %v3091, 2
      %v3345 = vsel %vm1011, %v3343, %v3344
      %v3346 = vrot.slane %v3092, 2
      %v3347 = vsel %vm1011, %v3341, %v3346
      %v3348 = vrot.slane %v3093, 2
      %v3349 = vsel %vm1011, %v3344, %v3348
      %3414 = vst [vmem:[#allocation2 + $0x80] sm:$0xff] %v3192
      %3415 = vst [vmem:[#allocation2 + $0x88] sm:$0xff] %v3195
      %3416 = vst [vmem:[#allocation2 + $0x110] sm:$0xff] %v3197
      %3417 = vst [vmem:[#allocation2 + $0x118] sm:$0xff] %v3199
      %3418 = vst [vmem:[#allocation2 + $0x1a0] sm:$0xff] %v3202
      %3419 = vst [vmem:[#allocation2 + $0x1a8] sm:$0xff] %v3205
      %3420 = vst [vmem:[#allocation2 + $0x230] sm:$0xff] %v3207
      %3421 = vst [vmem:[#allocation2 + $0x238] sm:$0xff] %v3209
      %3422 = vst [vmem:[#allocation2 + $0x2c0] sm:$0xff] %v3212
      %3423 = vst [vmem:[#allocation2 + $0x2c8] sm:$0xff] %v3215
      %3424 = vst [vmem:[#allocation2 + $0x350] sm:$0xff] %v3217
      %3425 = vst [vmem:[#allocation2 + $0x358] sm:$0xff] %v3219
      %3426 = vst [vmem:[#allocation2 + $0x3e0] sm:$0xff] %v3222
      %3427 = vst [vmem:[#allocation2 + $0x3e8] sm:$0xff] %v3225
      %3428 = vst [vmem:[#allocation2 + $0x470] sm:$0xff] %v3227
      %3429 = vst [vmem:[#allocation2 + $0x478] sm:$0xff] %v3229
      %3430 = vst [vmem:[#allocation2 + $0x500] sm:$0xff] %v3232
      %3431 = vst [vmem:[#allocation2 + $0x508] sm:$0xff] %v3235
      %3432 = vst [vmem:[#allocation2 + $0x590] sm:$0xff] %v3237
      %3433 = vst [vmem:[#allocation2 + $0x598] sm:$0xff] %v3239
      %3434 = vst [vmem:[#allocation2 + $0x620] sm:$0xff] %v3242
      %3435 = vst [vmem:[#allocation2 + $0x628] sm:$0xff] %v3245
      %3436 = vst [vmem:[#allocation2 + $0x6b0] sm:$0xff] %v3247
      %3437 = vst [vmem:[#allocation2 + $0x6b8] sm:$0xff] %v3249
      %3438 = vst [vmem:[#allocation2 + $0x740] sm:$0xff] %v3252
      %3439 = vst [vmem:[#allocation2 + $0x748] sm:$0xff] %v3255
      %3440 = vst [vmem:[#allocation2 + $0x7d0] sm:$0xff] %v3257
      %3441 = vst [vmem:[#allocation2 + $0x7d8] sm:$0xff] %v3259
      %3442 = vst [vmem:[#allocation2 + $0x860] sm:$0xff] %v3262
      %3443 = vst [vmem:[#allocation2 + $0x868] sm:$0xff] %v3265
      %3444 = vst [vmem:[#allocation2 + $0x8f0] sm:$0xff] %v3267
      %3445 = vst [vmem:[#allocation2 + $0x8f8] sm:$0xff] %v3269
      %3446 = vst [vmem:[#allocation2 + $0x980] sm:$0xff] %v3272
      %3447 = vst [vmem:[#allocation2 + $0x988] sm:$0xff] %v3275
      %3448 = vst [vmem:[#allocation2 + $0xa10] sm:$0xff] %v3277
      %3449 = vst [vmem:[#allocation2 + $0xa18] sm:$0xff] %v3279
      %3450 = vst [vmem:[#allocation2 + $0xaa0] sm:$0xff] %v3282
      %3451 = vst [vmem:[#allocation2 + $0xaa8] sm:$0xff] %v3285
      %3452 = vst [vmem:[#allocation2 + $0xb30] sm:$0xff] %v3287
      %3453 = vst [vmem:[#allocation2 + $0xb38] sm:$0xff] %v3289
      %3454 = vst [vmem:[#allocation2 + $0xbc0] sm:$0xff] %v3292
      %3455 = vst [vmem:[#allocation2 + $0xbc8] sm:$0xff] %v3295
      %3456 = vst [vmem:[#allocation2 + $0xc50] sm:$0xff] %v3297
      %3457 = vst [vmem:[#allocation2 + $0xc58] sm:$0xff] %v3299
      %3458 = vst [vmem:[#allocation2 + $0xce0] sm:$0xff] %v3302
      %3459 = vst [vmem:[#allocation2 + $0xce8] sm:$0xff] %v3305
      %3460 = vst [vmem:[#allocation2 + $0xd70] sm:$0xff] %v3307
      %3461 = vst [vmem:[#allocation2 + $0xd78] sm:$0xff] %v3309
      %3462 = vst [vmem:[#allocation2 + $0xe00] sm:$0xff] %v3312
      %3463 = vst [vmem:[#allocation2 + $0xe08] sm:$0xff] %v3315
      %3464 = vst [vmem:[#allocation2 + $0xe90] sm:$0xff] %v3317
      %3465 = vst [vmem:[#allocation2 + $0xe98] sm:$0xff] %v3319
      %3466 = vst [vmem:[#allocation2 + $0xf20] sm:$0xff] %v3322
      %3467 = vst [vmem:[#allocation2 + $0xf28] sm:$0xff] %v3325
      %3468 = vst [vmem:[#allocation2 + $0xfb0] sm:$0xff] %v3327
      %3469 = vst [vmem:[#allocation2 + $0xfb8] sm:$0xff] %v3329
      %3470 = vst [vmem:[#allocation2 + $0x1040] sm:$0xff] %v3332
      %3471 = vst [vmem:[#allocation2 + $0x1048] sm:$0xff] %v3335
      %3472 = vst [vmem:[#allocation2 + $0x10d0] sm:$0xff] %v3337
      %3473 = vst [vmem:[#allocation2 + $0x10d8] sm:$0xff] %v3339
      %3474 = vst [vmem:[#allocation2 + $0x1160] sm:$0xff] %v3342
      %3475 = vst [vmem:[#allocation2 + $0x1168] sm:$0xff] %v3345
      %3476 = vst [vmem:[#allocation2 + $0x11f0] sm:$0xff] %v3347
      %3477 = vst [vmem:[#allocation2 + $0x11f8] sm:$0xff] %v3349
      %v3478 = vld [vmem:[#allocation2] sm:$0xff]
      %v3479 = vld [vmem:[#allocation2 + $0x8] sm:$0xff]
      %v3480 = vld [vmem:[#allocation2 + $0x10] sm:$0xff]
      %v3481 = vld [vmem:[#allocation2 + $0x18] sm:$0xff]
      %v3482 = vld [vmem:[#allocation2 + $0x20] sm:$0xff]
      %v3483 = vld [vmem:[#allocation2 + $0x28] sm:$0xff]
      %v3484 = vld [vmem:[#allocation2 + $0x30] sm:$0xff]
      %v3485 = vld [vmem:[#allocation2 + $0x38] sm:$0xff]
      %v3486 = vld [vmem:[#allocation2 + $0x40] sm:$0xff]
      %v3487 = vld [vmem:[#allocation2 + $0x48] sm:$0xff]
      %v3488 = vld [vmem:[#allocation2 + $0x50] sm:$0xff]
      %v3489 = vld [vmem:[#allocation2 + $0x58] sm:$0xff]
      %v3490 = vld [vmem:[#allocation2 + $0x60] sm:$0xff]
      %v3491 = vld [vmem:[#allocation2 + $0x68] sm:$0xff]
      %v3492 = vld [vmem:[#allocation2 + $0x70] sm:$0xff]
      %v3493 = vld [vmem:[#allocation2 + $0x78] sm:$0xff]
      %v3494 = vld [vmem:[#allocation2 + $0x80] sm:$0xff]
      %v3495 = vld [vmem:[#allocation2 + $0x88] sm:$0xff]
      %v3496 = vld [vmem:[#allocation2 + $0x90] sm:$0xff]
      %v3497 = vld [vmem:[#allocation2 + $0x98] sm:$0xff]
      %v3498 = vld [vmem:[#allocation2 + $0xa0] sm:$0xff]
      %v3499 = vld [vmem:[#allocation2 + $0xa8] sm:$0xff]
      %v3500 = vld [vmem:[#allocation2 + $0xb0] sm:$0xff]
      %v3501 = vld [vmem:[#allocation2 + $0xb8] sm:$0xff]
      %v3502 = vld [vmem:[#allocation2 + $0xc0] sm:$0xff]
      %v3503 = vld [vmem:[#allocation2 + $0xc8] sm:$0xff]
      %v3504 = vld [vmem:[#allocation2 + $0xd0] sm:$0xff]
      %v3505 = vld [vmem:[#allocation2 + $0xd8] sm:$0xff]
      %v3506 = vld [vmem:[#allocation2 + $0xe0] sm:$0xff]
      %v3507 = vld [vmem:[#allocation2 + $0xe8] sm:$0xff]
      %v3508 = vld [vmem:[#allocation2 + $0xf0] sm:$0xff]
      %v3509 = vld [vmem:[#allocation2 + $0xf8] sm:$0xff]
      %v3510 = vld [vmem:[#allocation2 + $0x100] sm:$0xff]
      %v3511 = vld [vmem:[#allocation2 + $0x108] sm:$0xff]
      %v3512 = vld [vmem:[#allocation2 + $0x110] sm:$0xff]
      %v3513 = vld [vmem:[#allocation2 + $0x118] sm:$0xff]
      %v3514 = vld [vmem:[#allocation2 + $0x120] sm:$0xff]
      %v3515 = vld [vmem:[#allocation2 + $0x128] sm:$0xff]
      %v3516 = vld [vmem:[#allocation2 + $0x130] sm:$0xff]
      %v3517 = vld [vmem:[#allocation2 + $0x138] sm:$0xff]
      %v3518 = vld [vmem:[#allocation2 + $0x140] sm:$0xff]
      %v3519 = vld [vmem:[#allocation2 + $0x148] sm:$0xff]
      %v3520 = vld [vmem:[#allocation2 + $0x150] sm:$0xff]
      %v3521 = vld [vmem:[#allocation2 + $0x158] sm:$0xff]
      %v3522 = vld [vmem:[#allocation2 + $0x160] sm:$0xff]
      %v3523 = vld [vmem:[#allocation2 + $0x168] sm:$0xff]
      %v3524 = vld [vmem:[#allocation2 + $0x170] sm:$0xff]
      %v3525 = vld [vmem:[#allocation2 + $0x178] sm:$0xff]
      %v3526 = vld [vmem:[#allocation2 + $0x180] sm:$0xff]
      %v3527 = vld [vmem:[#allocation2 + $0x188] sm:$0xff]
      %v3528 = vld [vmem:[#allocation2 + $0x190] sm:$0xff]
      %v3529 = vld [vmem:[#allocation2 + $0x198] sm:$0xff]
      %v3530 = vld [vmem:[#allocation2 + $0x1a0] sm:$0xff]
      %v3531 = vld [vmem:[#allocation2 + $0x1a8] sm:$0xff]
      %v3532 = vld [vmem:[#allocation2 + $0x1b0] sm:$0xff]
      %v3533 = vld [vmem:[#allocation2 + $0x1b8] sm:$0xff]
      %v3534 = vld [vmem:[#allocation2 + $0x1c0] sm:$0xff]
      %v3535 = vld [vmem:[#allocation2 + $0x1c8] sm:$0xff]
      %v3536 = vld [vmem:[#allocation2 + $0x1d0] sm:$0xff]
      %v3537 = vld [vmem:[#allocation2 + $0x1d8] sm:$0xff]
      %v3538 = vld [vmem:[#allocation2 + $0x1e0] sm:$0xff]
      %v3539 = vld [vmem:[#allocation2 + $0x1e8] sm:$0xff]
      %v3540 = vld [vmem:[#allocation2 + $0x1f0] sm:$0xff]
      %v3541 = vld [vmem:[#allocation2 + $0x1f8] sm:$0xff]
      %v3542 = vld [vmem:[#allocation2 + $0x200] sm:$0xff]
      %v3543 = vld [vmem:[#allocation2 + $0x208] sm:$0xff]
      %v3544 = vld [vmem:[#allocation2 + $0x210] sm:$0xff]
      %v3545 = vld [vmem:[#allocation2 + $0x218] sm:$0xff]
      %v3546 = vld [vmem:[#allocation2 + $0x220] sm:$0xff]
      %v3547 = vld [vmem:[#allocation2 + $0x228] sm:$0xff]
      %v3548 = vld [vmem:[#allocation2 + $0x230] sm:$0xff]
      %v3549 = vld [vmem:[#allocation2 + $0x238] sm:$0xff]
      %v3550 = vld [vmem:[#allocation2 + $0x240] sm:$0xff]
      %v3551 = vld [vmem:[#allocation2 + $0x248] sm:$0xff]
      %v3552 = vld [vmem:[#allocation2 + $0x250] sm:$0xff]
      %v3553 = vld [vmem:[#allocation2 + $0x258] sm:$0xff]
      %v3554 = vld [vmem:[#allocation2 + $0x260] sm:$0xff]
      %v3555 = vld [vmem:[#allocation2 + $0x268] sm:$0xff]
      %v3556 = vld [vmem:[#allocation2 + $0x270] sm:$0xff]
      %v3557 = vld [vmem:[#allocation2 + $0x278] sm:$0xff]
      %v3558 = vld [vmem:[#allocation2 + $0x280] sm:$0xff]
      %v3559 = vld [vmem:[#allocation2 + $0x288] sm:$0xff]
      %v3560 = vld [vmem:[#allocation2 + $0x290] sm:$0xff]
      %v3561 = vld [vmem:[#allocation2 + $0x298] sm:$0xff]
      %v3562 = vld [vmem:[#allocation2 + $0x2a0] sm:$0xff]
      %v3563 = vld [vmem:[#allocation2 + $0x2a8] sm:$0xff]
      %v3564 = vld [vmem:[#allocation2 + $0x2b0] sm:$0xff]
      %v3565 = vld [vmem:[#allocation2 + $0x2b8] sm:$0xff]
      %v3566 = vld [vmem:[#allocation2 + $0x2c0] sm:$0xff]
      %v3567 = vld [vmem:[#allocation2 + $0x2c8] sm:$0xff]
      %v3568 = vld [vmem:[#allocation2 + $0x2d0] sm:$0xff]
      %v3569 = vld [vmem:[#allocation2 + $0x2d8] sm:$0xff]
      %v3570 = vld [vmem:[#allocation2 + $0x2e0] sm:$0xff]
      %v3571 = vld [vmem:[#allocation2 + $0x2e8] sm:$0xff]
      %v3572 = vld [vmem:[#allocation2 + $0x2f0] sm:$0xff]
      %v3573 = vld [vmem:[#allocation2 + $0x2f8] sm:$0xff]
      %v3574 = vld [vmem:[#allocation2 + $0x300] sm:$0xff]
      %v3575 = vld [vmem:[#allocation2 + $0x308] sm:$0xff]
      %v3576 = vld [vmem:[#allocation2 + $0x310] sm:$0xff]
      %v3577 = vld [vmem:[#allocation2 + $0x318] sm:$0xff]
      %v3578 = vld [vmem:[#allocation2 + $0x320] sm:$0xff]
      %v3579 = vld [vmem:[#allocation2 + $0x328] sm:$0xff]
      %v3580 = vld [vmem:[#allocation2 + $0x330] sm:$0xff]
      %v3581 = vld [vmem:[#allocation2 + $0x338] sm:$0xff]
      %v3582 = vld [vmem:[#allocation2 + $0x340] sm:$0xff]
      %v3583 = vld [vmem:[#allocation2 + $0x348] sm:$0xff]
      %v3584 = vld [vmem:[#allocation2 + $0x350] sm:$0xff]
      %v3585 = vld [vmem:[#allocation2 + $0x358] sm:$0xff]
      %v3586 = vld [vmem:[#allocation2 + $0x360] sm:$0xff]
      %v3587 = vld [vmem:[#allocation2 + $0x368] sm:$0xff]
      %v3588 = vld [vmem:[#allocation2 + $0x370] sm:$0xff]
      %v3589 = vld [vmem:[#allocation2 + $0x378] sm:$0xff]
      %v3590 = vld [vmem:[#allocation2 + $0x380] sm:$0xff]
      %v3591 = vld [vmem:[#allocation2 + $0x388] sm:$0xff]
      %v3592 = vld [vmem:[#allocation2 + $0x390] sm:$0xff]
      %v3593 = vld [vmem:[#allocation2 + $0x398] sm:$0xff]
      %v3594 = vld [vmem:[#allocation2 + $0x3a0] sm:$0xff]
      %v3595 = vld [vmem:[#allocation2 + $0x3a8] sm:$0xff]
      %v3596 = vld [vmem:[#allocation2 + $0x3b0] sm:$0xff]
      %v3597 = vld [vmem:[#allocation2 + $0x3b8] sm:$0xff]
      %v3598 = vld [vmem:[#allocation2 + $0x3c0] sm:$0xff]
      %v3599 = vld [vmem:[#allocation2 + $0x3c8] sm:$0xff]
      %v3600 = vld [vmem:[#allocation2 + $0x3d0] sm:$0xff]
      %v3601 = vld [vmem:[#allocation2 + $0x3d8] sm:$0xff]
      %v3602 = vld [vmem:[#allocation2 + $0x3e0] sm:$0xff]
      %v3603 = vld [vmem:[#allocation2 + $0x3e8] sm:$0xff]
      %v3604 = vld [vmem:[#allocation2 + $0x3f0] sm:$0xff]
      %v3605 = vld [vmem:[#allocation2 + $0x3f8] sm:$0xff]
      %v3606 = vld [vmem:[#allocation2 + $0x400] sm:$0xff]
      %v3607 = vld [vmem:[#allocation2 + $0x408] sm:$0xff]
      %v3608 = vld [vmem:[#allocation2 + $0x410] sm:$0xff]
      %v3609 = vld [vmem:[#allocation2 + $0x418] sm:$0xff]
      %v3610 = vld [vmem:[#allocation2 + $0x420] sm:$0xff]
      %v3611 = vld [vmem:[#allocation2 + $0x428] sm:$0xff]
      %v3612 = vld [vmem:[#allocation2 + $0x430] sm:$0xff]
      %v3613 = vld [vmem:[#allocation2 + $0x438] sm:$0xff]
      %v3614 = vld [vmem:[#allocation2 + $0x440] sm:$0xff]
      %v3615 = vld [vmem:[#allocation2 + $0x448] sm:$0xff]
      %v3616 = vld [vmem:[#allocation2 + $0x450] sm:$0xff]
      %v3617 = vld [vmem:[#allocation2 + $0x458] sm:$0xff]
      %v3618 = vld [vmem:[#allocation2 + $0x460] sm:$0xff]
      %v3619 = vld [vmem:[#allocation2 + $0x468] sm:$0xff]
      %v3620 = vld [vmem:[#allocation2 + $0x470] sm:$0xff]
      %v3621 = vld [vmem:[#allocation2 + $0x478] sm:$0xff]
      %v3622 = vld [vmem:[#allocation2 + $0x480] sm:$0xff]
      %v3623 = vld [vmem:[#allocation2 + $0x488] sm:$0xff]
      %v3624 = vld [vmem:[#allocation2 + $0x490] sm:$0xff]
      %v3625 = vld [vmem:[#allocation2 + $0x498] sm:$0xff]
      %v3626 = vld [vmem:[#allocation2 + $0x4a0] sm:$0xff]
      %v3627 = vld [vmem:[#allocation2 + $0x4a8] sm:$0xff]
      %v3628 = vld [vmem:[#allocation2 + $0x4b0] sm:$0xff]
      %v3629 = vld [vmem:[#allocation2 + $0x4b8] sm:$0xff]
      %v3630 = vld [vmem:[#allocation2 + $0x4c0] sm:$0xff]
      %v3631 = vld [vmem:[#allocation2 + $0x4c8] sm:$0xff]
      %v3632 = vld [vmem:[#allocation2 + $0x4d0] sm:$0xff]
      %v3633 = vld [vmem:[#allocation2 + $0x4d8] sm:$0xff]
      %v3634 = vld [vmem:[#allocation2 + $0x4e0] sm:$0xff]
      %v3635 = vld [vmem:[#allocation2 + $0x4e8] sm:$0xff]
      %v3636 = vld [vmem:[#allocation2 + $0x4f0] sm:$0xff]
      %v3637 = vld [vmem:[#allocation2 + $0x4f8] sm:$0xff]
      %v3638 = vld [vmem:[#allocation2 + $0x500] sm:$0xff]
      %v3639 = vld [vmem:[#allocation2 + $0x508] sm:$0xff]
      %v3640 = vld [vmem:[#allocation2 + $0x510] sm:$0xff]
      %v3641 = vld [vmem:[#allocation2 + $0x518] sm:$0xff]
      %v3642 = vld [vmem:[#allocation2 + $0x520] sm:$0xff]
      %v3643 = vld [vmem:[#allocation2 + $0x528] sm:$0xff]
      %v3644 = vld [vmem:[#allocation2 + $0x530] sm:$0xff]
      %v3645 = vld [vmem:[#allocation2 + $0x538] sm:$0xff]
      %v3646 = vld [vmem:[#allocation2 + $0x540] sm:$0xff]
      %v3647 = vld [vmem:[#allocation2 + $0x548] sm:$0xff]
      %v3648 = vld [vmem:[#allocation2 + $0x550] sm:$0xff]
      %v3649 = vld [vmem:[#allocation2 + $0x558] sm:$0xff]
      %v3650 = vld [vmem:[#allocation2 + $0x560] sm:$0xff]
      %v3651 = vld [vmem:[#allocation2 + $0x568] sm:$0xff]
      %v3652 = vld [vmem:[#allocation2 + $0x570] sm:$0xff]
      %v3653 = vld [vmem:[#allocation2 + $0x578] sm:$0xff]
      %v3654 = vld [vmem:[#allocation2 + $0x580] sm:$0xff]
      %v3655 = vld [vmem:[#allocation2 + $0x588] sm:$0xff]
      %v3656 = vld [vmem:[#allocation2 + $0x590] sm:$0xff]
      %v3657 = vld [vmem:[#allocation2 + $0x598] sm:$0xff]
      %v3658 = vld [vmem:[#allocation2 + $0x5a0] sm:$0xff]
      %v3659 = vld [vmem:[#allocation2 + $0x5a8] sm:$0xff]
      %v3660 = vld [vmem:[#allocation2 + $0x5b0] sm:$0xff]
      %v3661 = vld [vmem:[#allocation2 + $0x5b8] sm:$0xff]
      %v3662 = vld [vmem:[#allocation2 + $0x5c0] sm:$0xff]
      %v3663 = vld [vmem:[#allocation2 + $0x5c8] sm:$0xff]
      %v3664 = vld [vmem:[#allocation2 + $0x5d0] sm:$0xff]
      %v3665 = vld [vmem:[#allocation2 + $0x5d8] sm:$0xff]
      %v3666 = vld [vmem:[#allocation2 + $0x5e0] sm:$0xff]
      %v3667 = vld [vmem:[#allocation2 + $0x5e8] sm:$0xff]
      %v3668 = vld [vmem:[#allocation2 + $0x5f0] sm:$0xff]
      %v3669 = vld [vmem:[#allocation2 + $0x5f8] sm:$0xff]
      %v3670 = vld [vmem:[#allocation2 + $0x600] sm:$0xff]
      %v3671 = vld [vmem:[#allocation2 + $0x608] sm:$0xff]
      %v3672 = vld [vmem:[#allocation2 + $0x610] sm:$0xff]
      %v3673 = vld [vmem:[#allocation2 + $0x618] sm:$0xff]
      %v3674 = vld [vmem:[#allocation2 + $0x620] sm:$0xff]
      %v3675 = vld [vmem:[#allocation2 + $0x628] sm:$0xff]
      %v3676 = vld [vmem:[#allocation2 + $0x630] sm:$0xff]
      %v3677 = vld [vmem:[#allocation2 + $0x638] sm:$0xff]
      %v3678 = vld [vmem:[#allocation2 + $0x640] sm:$0xff]
      %v3679 = vld [vmem:[#allocation2 + $0x648] sm:$0xff]
      %v3680 = vld [vmem:[#allocation2 + $0x650] sm:$0xff]
      %v3681 = vld [vmem:[#allocation2 + $0x658] sm:$0xff]
      %v3682 = vld [vmem:[#allocation2 + $0x660] sm:$0xff]
      %v3683 = vld [vmem:[#allocation2 + $0x668] sm:$0xff]
      %v3684 = vld [vmem:[#allocation2 + $0x670] sm:$0xff]
      %v3685 = vld [vmem:[#allocation2 + $0x678] sm:$0xff]
      %v3686 = vld [vmem:[#allocation2 + $0x680] sm:$0xff]
      %v3687 = vld [vmem:[#allocation2 + $0x688] sm:$0xff]
      %v3688 = vld [vmem:[#allocation2 + $0x690] sm:$0xff]
      %v3689 = vld [vmem:[#allocation2 + $0x698] sm:$0xff]
      %v3690 = vld [vmem:[#allocation2 + $0x6a0] sm:$0xff]
      %v3691 = vld [vmem:[#allocation2 + $0x6a8] sm:$0xff]
      %v3692 = vld [vmem:[#allocation2 + $0x6b0] sm:$0xff]
      %v3693 = vld [vmem:[#allocation2 + $0x6b8] sm:$0xff]
      %v3694 = vld [vmem:[#allocation2 + $0x6c0] sm:$0xff]
      %v3695 = vld [vmem:[#allocation2 + $0x6c8] sm:$0xff]
      %v3696 = vld [vmem:[#allocation2 + $0x6d0] sm:$0xff]
      %v3697 = vld [vmem:[#allocation2 + $0x6d8] sm:$0xff]
      %v3698 = vld [vmem:[#allocation2 + $0x6e0] sm:$0xff]
      %v3699 = vld [vmem:[#allocation2 + $0x6e8] sm:$0xff]
      %v3700 = vld [vmem:[#allocation2 + $0x6f0] sm:$0xff]
      %v3701 = vld [vmem:[#allocation2 + $0x6f8] sm:$0xff]
      %v3702 = vld [vmem:[#allocation2 + $0x700] sm:$0xff]
      %v3703 = vld [vmem:[#allocation2 + $0x708] sm:$0xff]
      %v3704 = vld [vmem:[#allocation2 + $0x710] sm:$0xff]
      %v3705 = vld [vmem:[#allocation2 + $0x718] sm:$0xff]
      %v3706 = vld [vmem:[#allocation2 + $0x720] sm:$0xff]
      %v3707 = vld [vmem:[#allocation2 + $0x728] sm:$0xff]
      %v3708 = vld [vmem:[#allocation2 + $0x730] sm:$0xff]
      %v3709 = vld [vmem:[#allocation2 + $0x738] sm:$0xff]
      %v3710 = vld [vmem:[#allocation2 + $0x740] sm:$0xff]
      %v3711 = vld [vmem:[#allocation2 + $0x748] sm:$0xff]
      %v3712 = vld [vmem:[#allocation2 + $0x750] sm:$0xff]
      %v3713 = vld [vmem:[#allocation2 + $0x758] sm:$0xff]
      %v3714 = vld [vmem:[#allocation2 + $0x760] sm:$0xff]
      %v3715 = vld [vmem:[#allocation2 + $0x768] sm:$0xff]
      %v3716 = vld [vmem:[#allocation2 + $0x770] sm:$0xff]
      %v3717 = vld [vmem:[#allocation2 + $0x778] sm:$0xff]
      %v3718 = vld [vmem:[#allocation2 + $0x780] sm:$0xff]
      %v3719 = vld [vmem:[#allocation2 + $0x788] sm:$0xff]
      %v3720 = vld [vmem:[#allocation2 + $0x790] sm:$0xff]
      %v3721 = vld [vmem:[#allocation2 + $0x798] sm:$0xff]
      %v3722 = vld [vmem:[#allocation2 + $0x7a0] sm:$0xff]
      %v3723 = vld [vmem:[#allocation2 + $0x7a8] sm:$0xff]
      %v3724 = vld [vmem:[#allocation2 + $0x7b0] sm:$0xff]
      %v3725 = vld [vmem:[#allocation2 + $0x7b8] sm:$0xff]
      %v3726 = vld [vmem:[#allocation2 + $0x7c0] sm:$0xff]
      %v3727 = vld [vmem:[#allocation2 + $0x7c8] sm:$0xff]
      %v3728 = vld [vmem:[#allocation2 + $0x7d0] sm:$0xff]
      %v3729 = vld [vmem:[#allocation2 + $0x7d8] sm:$0xff]
      %v3730 = vld [vmem:[#allocation2 + $0x7e0] sm:$0xff]
      %v3731 = vld [vmem:[#allocation2 + $0x7e8] sm:$0xff]
      %v3732 = vld [vmem:[#allocation2 + $0x7f0] sm:$0xff]
      %v3733 = vld [vmem:[#allocation2 + $0x7f8] sm:$0xff]
      %v3734 = vld [vmem:[#allocation2 + $0x800] sm:$0xff]
      %v3735 = vld [vmem:[#allocation2 + $0x808] sm:$0xff]
      %v3736 = vld [vmem:[#allocation2 + $0x810] sm:$0xff]
      %v3737 = vld [vmem:[#allocation2 + $0x818] sm:$0xff]
      %v3738 = vld [vmem:[#allocation2 + $0x820] sm:$0xff]
      %v3739 = vld [vmem:[#allocation2 + $0x828] sm:$0xff]
      %v3740 = vld [vmem:[#allocation2 + $0x830] sm:$0xff]
      %v3741 = vld [vmem:[#allocation2 + $0x838] sm:$0xff]
      %v3742 = vld [vmem:[#allocation2 + $0x840] sm:$0xff]
      %v3743 = vld [vmem:[#allocation2 + $0x848] sm:$0xff]
      %v3744 = vld [vmem:[#allocation2 + $0x850] sm:$0xff]
      %v3745 = vld [vmem:[#allocation2 + $0x858] sm:$0xff]
      %v3746 = vld [vmem:[#allocation2 + $0x860] sm:$0xff]
      %v3747 = vld [vmem:[#allocation2 + $0x868] sm:$0xff]
      %v3748 = vld [vmem:[#allocation2 + $0x870] sm:$0xff]
      %v3749 = vld [vmem:[#allocation2 + $0x878] sm:$0xff]
      %v3750 = vld [vmem:[#allocation2 + $0x880] sm:$0xff]
      %v3751 = vld [vmem:[#allocation2 + $0x888] sm:$0xff]
      %v3752 = vld [vmem:[#allocation2 + $0x890] sm:$0xff]
      %v3753 = vld [vmem:[#allocation2 + $0x898] sm:$0xff]
      %v3754 = vld [vmem:[#allocation2 + $0x8a0] sm:$0xff]
      %v3755 = vld [vmem:[#allocation2 + $0x8a8] sm:$0xff]
      %v3756 = vld [vmem:[#allocation2 + $0x8b0] sm:$0xff]
      %v3757 = vld [vmem:[#allocation2 + $0x8b8] sm:$0xff]
      %v3758 = vld [vmem:[#allocation2 + $0x8c0] sm:$0xff]
      %v3759 = vld [vmem:[#allocation2 + $0x8c8] sm:$0xff]
      %v3760 = vld [vmem:[#allocation2 + $0x8d0] sm:$0xff]
      %v3761 = vld [vmem:[#allocation2 + $0x8d8] sm:$0xff]
      %v3762 = vld [vmem:[#allocation2 + $0x8e0] sm:$0xff]
      %v3763 = vld [vmem:[#allocation2 + $0x8e8] sm:$0xff]
      %v3764 = vld [vmem:[#allocation2 + $0x8f0] sm:$0xff]
      %v3765 = vld [vmem:[#allocation2 + $0x8f8] sm:$0xff]
      %v3766 = vld [vmem:[#allocation2 + $0x900] sm:$0xff]
      %v3767 = vld [vmem:[#allocation2 + $0x908] sm:$0xff]
      %v3768 = vld [vmem:[#allocation2 + $0x910] sm:$0xff]
      %v3769 = vld [vmem:[#allocation2 + $0x918] sm:$0xff]
      %v3770 = vld [vmem:[#allocation2 + $0x920] sm:$0xff]
      %v3771 = vld [vmem:[#allocation2 + $0x928] sm:$0xff]
      %v3772 = vld [vmem:[#allocation2 + $0x930] sm:$0xff]
      %v3773 = vld [vmem:[#allocation2 + $0x938] sm:$0xff]
      %v3774 = vld [vmem:[#allocation2 + $0x940] sm:$0xff]
      %v3775 = vld [vmem:[#allocation2 + $0x948] sm:$0xff]
      %v3776 = vld [vmem:[#allocation2 + $0x950] sm:$0xff]
      %v3777 = vld [vmem:[#allocation2 + $0x958] sm:$0xff]
      %v3778 = vld [vmem:[#allocation2 + $0x960] sm:$0xff]
      %v3779 = vld [vmem:[#allocation2 + $0x968] sm:$0xff]
      %v3780 = vld [vmem:[#allocation2 + $0x970] sm:$0xff]
      %v3781 = vld [vmem:[#allocation2 + $0x978] sm:$0xff]
      %v3782 = vld [vmem:[#allocation2 + $0x980] sm:$0xff]
      %v3783 = vld [vmem:[#allocation2 + $0x988] sm:$0xff]
      %v3784 = vld [vmem:[#allocation2 + $0x990] sm:$0xff]
      %v3785 = vld [vmem:[#allocation2 + $0x998] sm:$0xff]
      %v3786 = vld [vmem:[#allocation2 + $0x9a0] sm:$0xff]
      %v3787 = vld [vmem:[#allocation2 + $0x9a8] sm:$0xff]
      %v3788 = vld [vmem:[#allocation2 + $0x9b0] sm:$0xff]
      %v3789 = vld [vmem:[#allocation2 + $0x9b8] sm:$0xff]
      %v3790 = vld [vmem:[#allocation2 + $0x9c0] sm:$0xff]
      %v3791 = vld [vmem:[#allocation2 + $0x9c8] sm:$0xff]
      %v3792 = vld [vmem:[#allocation2 + $0x9d0] sm:$0xff]
      %v3793 = vld [vmem:[#allocation2 + $0x9d8] sm:$0xff]
      %v3794 = vld [vmem:[#allocation2 + $0x9e0] sm:$0xff]
      %v3795 = vld [vmem:[#allocation2 + $0x9e8] sm:$0xff]
      %v3796 = vld [vmem:[#allocation2 + $0x9f0] sm:$0xff]
      %v3797 = vld [vmem:[#allocation2 + $0x9f8] sm:$0xff]
      %v3798 = vld [vmem:[#allocation2 + $0xa00] sm:$0xff]
      %v3799 = vld [vmem:[#allocation2 + $0xa08] sm:$0xff]
      %v3800 = vld [vmem:[#allocation2 + $0xa10] sm:$0xff]
      %v3801 = vld [vmem:[#allocation2 + $0xa18] sm:$0xff]
      %v3802 = vld [vmem:[#allocation2 + $0xa20] sm:$0xff]
      %v3803 = vld [vmem:[#allocation2 + $0xa28] sm:$0xff]
      %v3804 = vld [vmem:[#allocation2 + $0xa30] sm:$0xff]
      %v3805 = vld [vmem:[#allocation2 + $0xa38] sm:$0xff]
      %v3806 = vld [vmem:[#allocation2 + $0xa40] sm:$0xff]
      %v3807 = vld [vmem:[#allocation2 + $0xa48] sm:$0xff]
      %v3808 = vld [vmem:[#allocation2 + $0xa50] sm:$0xff]
      %v3809 = vld [vmem:[#allocation2 + $0xa58] sm:$0xff]
      %v3810 = vld [vmem:[#allocation2 + $0xa60] sm:$0xff]
      %v3811 = vld [vmem:[#allocation2 + $0xa68] sm:$0xff]
      %v3812 = vld [vmem:[#allocation2 + $0xa70] sm:$0xff]
      %v3813 = vld [vmem:[#allocation2 + $0xa78] sm:$0xff]
      %v3814 = vld [vmem:[#allocation2 + $0xa80] sm:$0xff]
      %v3815 = vld [vmem:[#allocation2 + $0xa88] sm:$0xff]
      %v3816 = vld [vmem:[#allocation2 + $0xa90] sm:$0xff]
      %v3817 = vld [vmem:[#allocation2 + $0xa98] sm:$0xff]
      %v3818 = vld [vmem:[#allocation2 + $0xaa0] sm:$0xff]
      %v3819 = vld [vmem:[#allocation2 + $0xaa8] sm:$0xff]
      %v3820 = vld [vmem:[#allocation2 + $0xab0] sm:$0xff]
      %v3821 = vld [vmem:[#allocation2 + $0xab8] sm:$0xff]
      %v3822 = vld [vmem:[#allocation2 + $0xac0] sm:$0xff]
      %v3823 = vld [vmem:[#allocation2 + $0xac8] sm:$0xff]
      %v3824 = vld [vmem:[#allocation2 + $0xad0] sm:$0xff]
      %v3825 = vld [vmem:[#allocation2 + $0xad8] sm:$0xff]
      %v3826 = vld [vmem:[#allocation2 + $0xae0] sm:$0xff]
      %v3827 = vld [vmem:[#allocation2 + $0xae8] sm:$0xff]
      %v3828 = vld [vmem:[#allocation2 + $0xaf0] sm:$0xff]
      %v3829 = vld [vmem:[#allocation2 + $0xaf8] sm:$0xff]
      %v3830 = vld [vmem:[#allocation2 + $0xb00] sm:$0xff]
      %v3831 = vld [vmem:[#allocation2 + $0xb08] sm:$0xff]
      %v3832 = vld [vmem:[#allocation2 + $0xb10] sm:$0xff]
      %v3833 = vld [vmem:[#allocation2 + $0xb18] sm:$0xff]
      %v3834 = vld [vmem:[#allocation2 + $0xb20] sm:$0xff]
      %v3835 = vld [vmem:[#allocation2 + $0xb28] sm:$0xff]
      %v3836 = vld [vmem:[#allocation2 + $0xb30] sm:$0xff]
      %v3837 = vld [vmem:[#allocation2 + $0xb38] sm:$0xff]
      %v3838 = vld [vmem:[#allocation2 + $0xb40] sm:$0xff]
      %v3839 = vld [vmem:[#allocation2 + $0xb48] sm:$0xff]
      %v3840 = vld [vmem:[#allocation2 + $0xb50] sm:$0xff]
      %v3841 = vld [vmem:[#allocation2 + $0xb58] sm:$0xff]
      %v3842 = vld [vmem:[#allocation2 + $0xb60] sm:$0xff]
      %v3843 = vld [vmem:[#allocation2 + $0xb68] sm:$0xff]
      %v3844 = vld [vmem:[#allocation2 + $0xb70] sm:$0xff]
      %v3845 = vld [vmem:[#allocation2 + $0xb78] sm:$0xff]
      %v3846 = vld [vmem:[#allocation2 + $0xb80] sm:$0xff]
      %v3847 = vld [vmem:[#allocation2 + $0xb88] sm:$0xff]
      %v3848 = vld [vmem:[#allocation2 + $0xb90] sm:$0xff]
      %v3849 = vld [vmem:[#allocation2 + $0xb98] sm:$0xff]
      %v3850 = vld [vmem:[#allocation2 + $0xba0] sm:$0xff]
      %v3851 = vld [vmem:[#allocation2 + $0xba8] sm:$0xff]
      %v3852 = vld [vmem:[#allocation2 + $0xbb0] sm:$0xff]
      %v3853 = vld [vmem:[#allocation2 + $0xbb8] sm:$0xff]
      %v3854 = vld [vmem:[#allocation2 + $0xbc0] sm:$0xff]
      %v3855 = vld [vmem:[#allocation2 + $0xbc8] sm:$0xff]
      %v3856 = vld [vmem:[#allocation2 + $0xbd0] sm:$0xff]
      %v3857 = vld [vmem:[#allocation2 + $0xbd8] sm:$0xff]
      %v3858 = vld [vmem:[#allocation2 + $0xbe0] sm:$0xff]
      %v3859 = vld [vmem:[#allocation2 + $0xbe8] sm:$0xff]
      %v3860 = vld [vmem:[#allocation2 + $0xbf0] sm:$0xff]
      %v3861 = vld [vmem:[#allocation2 + $0xbf8] sm:$0xff]
      %v3862 = vld [vmem:[#allocation2 + $0xc00] sm:$0xff]
      %v3863 = vld [vmem:[#allocation2 + $0xc08] sm:$0xff]
      %v3864 = vld [vmem:[#allocation2 + $0xc10] sm:$0xff]
      %v3865 = vld [vmem:[#allocation2 + $0xc18] sm:$0xff]
      %v3866 = vld [vmem:[#allocation2 + $0xc20] sm:$0xff]
      %v3867 = vld [vmem:[#allocation2 + $0xc28] sm:$0xff]
      %v3868 = vld [vmem:[#allocation2 + $0xc30] sm:$0xff]
      %v3869 = vld [vmem:[#allocation2 + $0xc38] sm:$0xff]
      %v3870 = vld [vmem:[#allocation2 + $0xc40] sm:$0xff]
      %v3871 = vld [vmem:[#allocation2 + $0xc48] sm:$0xff]
      %v3872 = vld [vmem:[#allocation2 + $0xc50] sm:$0xff]
      %v3873 = vld [vmem:[#allocation2 + $0xc58] sm:$0xff]
      %v3874 = vld [vmem:[#allocation2 + $0xc60] sm:$0xff]
      %v3875 = vld [vmem:[#allocation2 + $0xc68] sm:$0xff]
      %v3876 = vld [vmem:[#allocation2 + $0xc70] sm:$0xff]
      %v3877 = vld [vmem:[#allocation2 + $0xc78] sm:$0xff]
      %v3878 = vld [vmem:[#allocation2 + $0xc80] sm:$0xff]
      %v3879 = vld [vmem:[#allocation2 + $0xc88] sm:$0xff]
      %v3880 = vld [vmem:[#allocation2 + $0xc90] sm:$0xff]
      %v3881 = vld [vmem:[#allocation2 + $0xc98] sm:$0xff]
      %v3882 = vld [vmem:[#allocation2 + $0xca0] sm:$0xff]
      %v3883 = vld [vmem:[#allocation2 + $0xca8] sm:$0xff]
      %v3884 = vld [vmem:[#allocation2 + $0xcb0] sm:$0xff]
      %v3885 = vld [vmem:[#allocation2 + $0xcb8] sm:$0xff]
      %v3886 = vld [vmem:[#allocation2 + $0xcc0] sm:$0xff]
      %v3887 = vld [vmem:[#allocation2 + $0xcc8] sm:$0xff]
      %v3888 = vld [vmem:[#allocation2 + $0xcd0] sm:$0xff]
      %v3889 = vld [vmem:[#allocation2 + $0xcd8] sm:$0xff]
      %v3890 = vld [vmem:[#allocation2 + $0xce0] sm:$0xff]
      %v3891 = vld [vmem:[#allocation2 + $0xce8] sm:$0xff]
      %v3892 = vld [vmem:[#allocation2 + $0xcf0] sm:$0xff]
      %v3893 = vld [vmem:[#allocation2 + $0xcf8] sm:$0xff]
      %v3894 = vld [vmem:[#allocation2 + $0xd00] sm:$0xff]
      %v3895 = vld [vmem:[#allocation2 + $0xd08] sm:$0xff]
      %v3896 = vld [vmem:[#allocation2 + $0xd10] sm:$0xff]
      %v3897 = vld [vmem:[#allocation2 + $0xd18] sm:$0xff]
      %v3898 = vld [vmem:[#allocation2 + $0xd20] sm:$0xff]
      %v3899 = vld [vmem:[#allocation2 + $0xd28] sm:$0xff]
      %v3900 = vld [vmem:[#allocation2 + $0xd30] sm:$0xff]
      %v3901 = vld [vmem:[#allocation2 + $0xd38] sm:$0xff]
      %v3902 = vld [vmem:[#allocation2 + $0xd40] sm:$0xff]
      %v3903 = vld [vmem:[#allocation2 + $0xd48] sm:$0xff]
      %v3904 = vld [vmem:[#allocation2 + $0xd50] sm:$0xff]
      %v3905 = vld [vmem:[#allocation2 + $0xd58] sm:$0xff]
      %v3906 = vld [vmem:[#allocation2 + $0xd60] sm:$0xff]
      %v3907 = vld [vmem:[#allocation2 + $0xd68] sm:$0xff]
      %v3908 = vld [vmem:[#allocation2 + $0xd70] sm:$0xff]
      %v3909 = vld [vmem:[#allocation2 + $0xd78] sm:$0xff]
      %v3910 = vld [vmem:[#allocation2 + $0xd80] sm:$0xff]
      %v3911 = vld [vmem:[#allocation2 + $0xd88] sm:$0xff]
      %v3912 = vld [vmem:[#allocation2 + $0xd90] sm:$0xff]
      %v3913 = vld [vmem:[#allocation2 + $0xd98] sm:$0xff]
      %v3914 = vld [vmem:[#allocation2 + $0xda0] sm:$0xff]
      %v3915 = vld [vmem:[#allocation2 + $0xda8] sm:$0xff]
      %v3916 = vld [vmem:[#allocation2 + $0xdb0] sm:$0xff]
      %v3917 = vld [vmem:[#allocation2 + $0xdb8] sm:$0xff]
      %v3918 = vld [vmem:[#allocation2 + $0xdc0] sm:$0xff]
      %v3919 = vld [vmem:[#allocation2 + $0xdc8] sm:$0xff]
      %v3920 = vld [vmem:[#allocation2 + $0xdd0] sm:$0xff]
      %v3921 = vld [vmem:[#allocation2 + $0xdd8] sm:$0xff]
      %v3922 = vld [vmem:[#allocation2 + $0xde0] sm:$0xff]
      %v3923 = vld [vmem:[#allocation2 + $0xde8] sm:$0xff]
      %v3924 = vld [vmem:[#allocation2 + $0xdf0] sm:$0xff]
      %v3925 = vld [vmem:[#allocation2 + $0xdf8] sm:$0xff]
      %v3926 = vld [vmem:[#allocation2 + $0xe00] sm:$0xff]
      %v3927 = vld [vmem:[#allocation2 + $0xe08] sm:$0xff]
      %v3928 = vld [vmem:[#allocation2 + $0xe10] sm:$0xff]
      %v3929 = vld [vmem:[#allocation2 + $0xe18] sm:$0xff]
      %v3930 = vld [vmem:[#allocation2 + $0xe20] sm:$0xff]
      %v3931 = vld [vmem:[#allocation2 + $0xe28] sm:$0xff]
      %v3932 = vld [vmem:[#allocation2 + $0xe30] sm:$0xff]
      %v3933 = vld [vmem:[#allocation2 + $0xe38] sm:$0xff]
      %v3934 = vld [vmem:[#allocation2 + $0xe40] sm:$0xff]
      %v3935 = vld [vmem:[#allocation2 + $0xe48] sm:$0xff]
      %v3936 = vld [vmem:[#allocation2 + $0xe50] sm:$0xff]
      %v3937 = vld [vmem:[#allocation2 + $0xe58] sm:$0xff]
      %v3938 = vld [vmem:[#allocation2 + $0xe60] sm:$0xff]
      %v3939 = vld [vmem:[#allocation2 + $0xe68] sm:$0xff]
      %v3940 = vld [vmem:[#allocation2 + $0xe70] sm:$0xff]
      %v3941 = vld [vmem:[#allocation2 + $0xe78] sm:$0xff]
      %v3942 = vld [vmem:[#allocation2 + $0xe80] sm:$0xff]
      %v3943 = vld [vmem:[#allocation2 + $0xe88] sm:$0xff]
      %v3944 = vld [vmem:[#allocation2 + $0xe90] sm:$0xff]
      %v3945 = vld [vmem:[#allocation2 + $0xe98] sm:$0xff]
      %v3946 = vld [vmem:[#allocation2 + $0xea0] sm:$0xff]
      %v3947 = vld [vmem:[#allocation2 + $0xea8] sm:$0xff]
      %v3948 = vld [vmem:[#allocation2 + $0xeb0] sm:$0xff]
      %v3949 = vld [vmem:[#allocation2 + $0xeb8] sm:$0xff]
      %v3950 = vld [vmem:[#allocation2 + $0xec0] sm:$0xff]
      %v3951 = vld [vmem:[#allocation2 + $0xec8] sm:$0xff]
      %v3952 = vld [vmem:[#allocation2 + $0xed0] sm:$0xff]
      %v3953 = vld [vmem:[#allocation2 + $0xed8] sm:$0xff]
      %v3954 = vld [vmem:[#allocation2 + $0xee0] sm:$0xff]
      %v3955 = vld [vmem:[#allocation2 + $0xee8] sm:$0xff]
      %v3956 = vld [vmem:[#allocation2 + $0xef0] sm:$0xff]
      %v3957 = vld [vmem:[#allocation2 + $0xef8] sm:$0xff]
      %v3958 = vld [vmem:[#allocation2 + $0xf00] sm:$0xff]
      %v3959 = vld [vmem:[#allocation2 + $0xf08] sm:$0xff]
      %v3960 = vld [vmem:[#allocation2 + $0xf10] sm:$0xff]
      %v3961 = vld [vmem:[#allocation2 + $0xf18] sm:$0xff]
      %v3962 = vld [vmem:[#allocation2 + $0xf20] sm:$0xff]
      %v3963 = vld [vmem:[#allocation2 + $0xf28] sm:$0xff]
      %v3964 = vld [vmem:[#allocation2 + $0xf30] sm:$0xff]
      %v3965 = vld [vmem:[#allocation2 + $0xf38] sm:$0xff]
      %v3966 = vld [vmem:[#allocation2 + $0xf40] sm:$0xff]
      %v3967 = vld [vmem:[#allocation2 + $0xf48] sm:$0xff]
      %v3968 = vld [vmem:[#allocation2 + $0xf50] sm:$0xff]
      %v3969 = vld [vmem:[#allocation2 + $0xf58] sm:$0xff]
      %v3970 = vld [vmem:[#allocation2 + $0xf60] sm:$0xff]
      %v3971 = vld [vmem:[#allocation2 + $0xf68] sm:$0xff]
      %v3972 = vld [vmem:[#allocation2 + $0xf70] sm:$0xff]
      %v3973 = vld [vmem:[#allocation2 + $0xf78] sm:$0xff]
      %v3974 = vld [vmem:[#allocation2 + $0xf80] sm:$0xff]
      %v3975 = vld [vmem:[#allocation2 + $0xf88] sm:$0xff]
      %v3976 = vld [vmem:[#allocation2 + $0xf90] sm:$0xff]
      %v3977 = vld [vmem:[#allocation2 + $0xf98] sm:$0xff]
      %v3978 = vld [vmem:[#allocation2 + $0xfa0] sm:$0xff]
      %v3979 = vld [vmem:[#allocation2 + $0xfa8] sm:$0xff]
      %v3980 = vld [vmem:[#allocation2 + $0xfb0] sm:$0xff]
      %v3981 = vld [vmem:[#allocation2 + $0xfb8] sm:$0xff]
      %v3982 = vld [vmem:[#allocation2 + $0xfc0] sm:$0xff]
      %v3983 = vld [vmem:[#allocation2 + $0xfc8] sm:$0xff]
      %v3984 = vld [vmem:[#allocation2 + $0xfd0] sm:$0xff]
      %v3985 = vld [vmem:[#allocation2 + $0xfd8] sm:$0xff]
      %v3986 = vld [vmem:[#allocation2 + $0xfe0] sm:$0xff]
      %v3987 = vld [vmem:[#allocation2 + $0xfe8] sm:$0xff]
      %v3988 = vld [vmem:[#allocation2 + $0xff0] sm:$0xff]
      %v3989 = vld [vmem:[#allocation2 + $0xff8] sm:$0xff]
      %v3990 = vld [vmem:[#allocation2 + $0x1000] sm:$0xff]
      %v3991 = vld [vmem:[#allocation2 + $0x1008] sm:$0xff]
      %v3992 = vld [vmem:[#allocation2 + $0x1010] sm:$0xff]
      %v3993 = vld [vmem:[#allocation2 + $0x1018] sm:$0xff]
      %v3994 = vld [vmem:[#allocation2 + $0x1020] sm:$0xff]
      %v3995 = vld [vmem:[#allocation2 + $0x1028] sm:$0xff]
      %v3996 = vld [vmem:[#allocation2 + $0x1030] sm:$0xff]
      %v3997 = vld [vmem:[#allocation2 + $0x1038] sm:$0xff]
      %v3998 = vld [vmem:[#allocation2 + $0x1040] sm:$0xff]
      %v3999 = vld [vmem:[#allocation2 + $0x1048] sm:$0xff]
      %v4000 = vld [vmem:[#allocation2 + $0x1050] sm:$0xff]
      %v4001 = vld [vmem:[#allocation2 + $0x1058] sm:$0xff]
      %v4002 = vld [vmem:[#allocation2 + $0x1060] sm:$0xff]
      %v4003 = vld [vmem:[#allocation2 + $0x1068] sm:$0xff]
      %v4004 = vld [vmem:[#allocation2 + $0x1070] sm:$0xff]
      %v4005 = vld [vmem:[#allocation2 + $0x1078] sm:$0xff]
      %v4006 = vld [vmem:[#allocation2 + $0x1080] sm:$0xff]
      %v4007 = vld [vmem:[#allocation2 + $0x1088] sm:$0xff]
      %v4008 = vld [vmem:[#allocation2 + $0x1090] sm:$0xff]
      %v4009 = vld [vmem:[#allocation2 + $0x1098] sm:$0xff]
      %v4010 = vld [vmem:[#allocation2 + $0x10a0] sm:$0xff]
      %v4011 = vld [vmem:[#allocation2 + $0x10a8] sm:$0xff]
      %v4012 = vld [vmem:[#allocation2 + $0x10b0] sm:$0xff]
      %v4013 = vld [vmem:[#allocation2 + $0x10b8] sm:$0xff]
      %v4014 = vld [vmem:[#allocation2 + $0x10c0] sm:$0xff]
      %v4015 = vld [vmem:[#allocation2 + $0x10c8] sm:$0xff]
      %v4016 = vld [vmem:[#allocation2 + $0x10d0] sm:$0xff]
      %v4017 = vld [vmem:[#allocation2 + $0x10d8] sm:$0xff]
      %v4018 = vld [vmem:[#allocation2 + $0x10e0] sm:$0xff]
      %v4019 = vld [vmem:[#allocation2 + $0x10e8] sm:$0xff]
      %v4020 = vld [vmem:[#allocation2 + $0x10f0] sm:$0xff]
      %v4021 = vld [vmem:[#allocation2 + $0x10f8] sm:$0xff]
      %v4022 = vld [vmem:[#allocation2 + $0x1100] sm:$0xff]
      %v4023 = vld [vmem:[#allocation2 + $0x1108] sm:$0xff]
      %v4024 = vld [vmem:[#allocation2 + $0x1110] sm:$0xff]
      %v4025 = vld [vmem:[#allocation2 + $0x1118] sm:$0xff]
      %v4026 = vld [vmem:[#allocation2 + $0x1120] sm:$0xff]
      %v4027 = vld [vmem:[#allocation2 + $0x1128] sm:$0xff]
      %v4028 = vld [vmem:[#allocation2 + $0x1130] sm:$0xff]
      %v4029 = vld [vmem:[#allocation2 + $0x1138] sm:$0xff]
      %v4030 = vld [vmem:[#allocation2 + $0x1140] sm:$0xff]
      %v4031 = vld [vmem:[#allocation2 + $0x1148] sm:$0xff]
      %v4032 = vld [vmem:[#allocation2 + $0x1150] sm:$0xff]
      %v4033 = vld [vmem:[#allocation2 + $0x1158] sm:$0xff]
      %v4034 = vld [vmem:[#allocation2 + $0x1160] sm:$0xff]
      %v4035 = vld [vmem:[#allocation2 + $0x1168] sm:$0xff]
      %v4036 = vld [vmem:[#allocation2 + $0x1170] sm:$0xff]
      %v4037 = vld [vmem:[#allocation2 + $0x1178] sm:$0xff]
      %v4038 = vld [vmem:[#allocation2 + $0x1180] sm:$0xff]
      %v4039 = vld [vmem:[#allocation2 + $0x1188] sm:$0xff]
      %v4040 = vld [vmem:[#allocation2 + $0x1190] sm:$0xff]
      %v4041 = vld [vmem:[#allocation2 + $0x1198] sm:$0xff]
      %v4042 = vld [vmem:[#allocation2 + $0x11a0] sm:$0xff]
      %v4043 = vld [vmem:[#allocation2 + $0x11a8] sm:$0xff]
      %v4044 = vld [vmem:[#allocation2 + $0x11b0] sm:$0xff]
      %v4045 = vld [vmem:[#allocation2 + $0x11b8] sm:$0xff]
      %v4046 = vld [vmem:[#allocation2 + $0x11c0] sm:$0xff]
      %v4047 = vld [vmem:[#allocation2 + $0x11c8] sm:$0xff]
      %v4048 = vld [vmem:[#allocation2 + $0x11d0] sm:$0xff]
      %v4049 = vld [vmem:[#allocation2 + $0x11d8] sm:$0xff]
      %v4050 = vld [vmem:[#allocation2 + $0x11e0] sm:$0xff]
      %v4051 = vld [vmem:[#allocation2 + $0x11e8] sm:$0xff]
      %v4052 = vld [vmem:[#allocation2 + $0x11f0] sm:$0xff]
      %v4053 = vld [vmem:[#allocation2 + $0x11f8] sm:$0xff]
      %v4054 = vld [vmem:[%s1] sm:$0xff]
      %v4055 = vld [vmem:[%s1 + $0x8] sm:$0xff]
      %v4056 = vld [vmem:[%s1 + $0x10] sm:$0xff]
      %v4057 = vld [vmem:[%s1 + $0x18] sm:$0xff]
      %v4058 = vld [vmem:[%s1 + $0x20] sm:$0xff]
      %v4059 = vld [vmem:[%s1 + $0x28] sm:$0xff]
      %v4060 = vld [vmem:[%s1 + $0x30] sm:$0xff]
      %v4061 = vld [vmem:[%s1 + $0x38] sm:$0xff]
      %v4062 = vld [vmem:[%s1 + $0x40] sm:$0xff]
      %v4063 = vld [vmem:[%s1 + $0x48] sm:$0xff]
      %v4064 = vld [vmem:[%s1 + $0x50] sm:$0xff]
      %v4065 = vld [vmem:[%s1 + $0x58] sm:$0xff]
      %v4066 = vld [vmem:[%s1 + $0x60] sm:$0xff]
      %v4067 = vld [vmem:[%s1 + $0x68] sm:$0xff]
      %v4068 = vld [vmem:[%s1 + $0x70] sm:$0xff]
      %v4069 = vld [vmem:[%s1 + $0x78] sm:$0xff]
      %v4070 = vld [vmem:[%s1 + $0x80] sm:$0xff]
      %v4071 = vld [vmem:[%s1 + $0x88] sm:$0xff]
      %v4072 = vld [vmem:[%s1 + $0x90] sm:$0xff]
      %v4073 = vld [vmem:[%s1 + $0x98] sm:$0xff]
      %v4074 = vld [vmem:[%s1 + $0xa0] sm:$0xff]
      %v4075 = vld [vmem:[%s1 + $0xa8] sm:$0xff]
      %v4076 = vld [vmem:[%s1 + $0xb0] sm:$0xff]
      %v4077 = vld [vmem:[%s1 + $0xb8] sm:$0xff]
      %v4078 = vld [vmem:[%s1 + $0xc0] sm:$0xff]
      %v4079 = vld [vmem:[%s1 + $0xc8] sm:$0xff]
      %v4080 = vld [vmem:[%s1 + $0xd0] sm:$0xff]
      %v4081 = vld [vmem:[%s1 + $0xd8] sm:$0xff]
      %v4082 = vld [vmem:[%s1 + $0xe0] sm:$0xff]
      %v4083 = vld [vmem:[%s1 + $0xe8] sm:$0xff]
      %v4084 = vld [vmem:[%s1 + $0xf0] sm:$0xff]
      %v4085 = vld [vmem:[%s1 + $0xf8] sm:$0xff]
      %v4086 = vld [vmem:[%s1 + $0x100] sm:$0xff]
      %v4087 = vld [vmem:[%s1 + $0x108] sm:$0xff]
      %v4088 = vld [vmem:[%s1 + $0x110] sm:$0xff]
      %v4089 = vld [vmem:[%s1 + $0x118] sm:$0xff]
      %v4090 = vld [vmem:[%s1 + $0x120] sm:$0xff]
      %v4091 = vld [vmem:[%s1 + $0x128] sm:$0xff]
      %v4092 = vld [vmem:[%s1 + $0x130] sm:$0xff]
      %v4093 = vld [vmem:[%s1 + $0x138] sm:$0xff]
      %v4094 = vld [vmem:[%s1 + $0x140] sm:$0xff]
      %v4095 = vld [vmem:[%s1 + $0x148] sm:$0xff]
      %v4096 = vld [vmem:[%s1 + $0x150] sm:$0xff]
      %v4097 = vld [vmem:[%s1 + $0x158] sm:$0xff]
      %v4098 = vld [vmem:[%s1 + $0x160] sm:$0xff]
      %v4099 = vld [vmem:[%s1 + $0x168] sm:$0xff]
      %v4100 = vld [vmem:[%s1 + $0x170] sm:$0xff]
      %v4101 = vld [vmem:[%s1 + $0x178] sm:$0xff]
      %v4102 = vld [vmem:[%s1 + $0x180] sm:$0xff]
      %v4103 = vld [vmem:[%s1 + $0x188] sm:$0xff]
      %v4104 = vld [vmem:[%s1 + $0x190] sm:$0xff]
      %v4105 = vld [vmem:[%s1 + $0x198] sm:$0xff]
      %v4106 = vld [vmem:[%s1 + $0x1a0] sm:$0xff]
      %v4107 = vld [vmem:[%s1 + $0x1a8] sm:$0xff]
      %v4108 = vld [vmem:[%s1 + $0x1b0] sm:$0xff]
      %v4109 = vld [vmem:[%s1 + $0x1b8] sm:$0xff]
      %v4110 = vld [vmem:[%s1 + $0x1c0] sm:$0xff]
      %v4111 = vld [vmem:[%s1 + $0x1c8] sm:$0xff]
      %v4112 = vld [vmem:[%s1 + $0x1d0] sm:$0xff]
      %v4113 = vld [vmem:[%s1 + $0x1d8] sm:$0xff]
      %v4114 = vld [vmem:[%s1 + $0x1e0] sm:$0xff]
      %v4115 = vld [vmem:[%s1 + $0x1e8] sm:$0xff]
      %v4116 = vld [vmem:[%s1 + $0x1f0] sm:$0xff]
      %v4117 = vld [vmem:[%s1 + $0x1f8] sm:$0xff]
      %v4118 = vld [vmem:[%s1 + $0x200] sm:$0xff]
      %v4119 = vld [vmem:[%s1 + $0x208] sm:$0xff]
      %v4120 = vld [vmem:[%s1 + $0x210] sm:$0xff]
      %v4121 = vld [vmem:[%s1 + $0x218] sm:$0xff]
      %v4122 = vld [vmem:[%s1 + $0x220] sm:$0xff]
      %v4123 = vld [vmem:[%s1 + $0x228] sm:$0xff]
      %v4124 = vld [vmem:[%s1 + $0x230] sm:$0xff]
      %v4125 = vld [vmem:[%s1 + $0x238] sm:$0xff]
      %v4126 = vld [vmem:[%s1 + $0x240] sm:$0xff]
      %v4127 = vld [vmem:[%s1 + $0x248] sm:$0xff]
      %v4128 = vld [vmem:[%s1 + $0x250] sm:$0xff]
      %v4129 = vld [vmem:[%s1 + $0x258] sm:$0xff]
      %v4130 = vld [vmem:[%s1 + $0x260] sm:$0xff]
      %v4131 = vld [vmem:[%s1 + $0x268] sm:$0xff]
      %v4132 = vld [vmem:[%s1 + $0x270] sm:$0xff]
      %v4133 = vld [vmem:[%s1 + $0x278] sm:$0xff]
      %v4134 = vld [vmem:[%s1 + $0x280] sm:$0xff]
      %v4135 = vld [vmem:[%s1 + $0x288] sm:$0xff]
      %v4136 = vld [vmem:[%s1 + $0x290] sm:$0xff]
      %v4137 = vld [vmem:[%s1 + $0x298] sm:$0xff]
      %v4138 = vld [vmem:[%s1 + $0x2a0] sm:$0xff]
      %v4139 = vld [vmem:[%s1 + $0x2a8] sm:$0xff]
      %v4140 = vld [vmem:[%s1 + $0x2b0] sm:$0xff]
      %v4141 = vld [vmem:[%s1 + $0x2b8] sm:$0xff]
      %v4142 = vld [vmem:[%s1 + $0x2c0] sm:$0xff]
      %v4143 = vld [vmem:[%s1 + $0x2c8] sm:$0xff]
      %v4144 = vld [vmem:[%s1 + $0x2d0] sm:$0xff]
      %v4145 = vld [vmem:[%s1 + $0x2d8] sm:$0xff]
      %v4146 = vld [vmem:[%s1 + $0x2e0] sm:$0xff]
      %v4147 = vld [vmem:[%s1 + $0x2e8] sm:$0xff]
      %v4148 = vld [vmem:[%s1 + $0x2f0] sm:$0xff]
      %v4149 = vld [vmem:[%s1 + $0x2f8] sm:$0xff]
      %v4150 = vld [vmem:[%s1 + $0x300] sm:$0xff]
      %v4151 = vld [vmem:[%s1 + $0x308] sm:$0xff]
      %v4152 = vld [vmem:[%s1 + $0x310] sm:$0xff]
      %v4153 = vld [vmem:[%s1 + $0x318] sm:$0xff]
      %v4154 = vld [vmem:[%s1 + $0x320] sm:$0xff]
      %v4155 = vld [vmem:[%s1 + $0x328] sm:$0xff]
      %v4156 = vld [vmem:[%s1 + $0x330] sm:$0xff]
      %v4157 = vld [vmem:[%s1 + $0x338] sm:$0xff]
      %v4158 = vld [vmem:[%s1 + $0x340] sm:$0xff]
      %v4159 = vld [vmem:[%s1 + $0x348] sm:$0xff]
      %v4160 = vld [vmem:[%s1 + $0x350] sm:$0xff]
      %v4161 = vld [vmem:[%s1 + $0x358] sm:$0xff]
      %v4162 = vld [vmem:[%s1 + $0x360] sm:$0xff]
      %v4163 = vld [vmem:[%s1 + $0x368] sm:$0xff]
      %v4164 = vld [vmem:[%s1 + $0x370] sm:$0xff]
      %v4165 = vld [vmem:[%s1 + $0x378] sm:$0xff]
      %v4166 = vld [vmem:[%s1 + $0x380] sm:$0xff]
      %v4167 = vld [vmem:[%s1 + $0x388] sm:$0xff]
      %v4168 = vld [vmem:[%s1 + $0x390] sm:$0xff]
      %v4169 = vld [vmem:[%s1 + $0x398] sm:$0xff]
      %v4170 = vld [vmem:[%s1 + $0x3a0] sm:$0xff]
      %v4171 = vld [vmem:[%s1 + $0x3a8] sm:$0xff]
      %v4172 = vld [vmem:[%s1 + $0x3b0] sm:$0xff]
      %v4173 = vld [vmem:[%s1 + $0x3b8] sm:$0xff]
      %v4174 = vld [vmem:[%s1 + $0x3c0] sm:$0xff]
      %v4175 = vld [vmem:[%s1 + $0x3c8] sm:$0xff]
      %v4176 = vld [vmem:[%s1 + $0x3d0] sm:$0xff]
      %v4177 = vld [vmem:[%s1 + $0x3d8] sm:$0xff]
      %v4178 = vld [vmem:[%s1 + $0x3e0] sm:$0xff]
      %v4179 = vld [vmem:[%s1 + $0x3e8] sm:$0xff]
      %v4180 = vld [vmem:[%s1 + $0x3f0] sm:$0xff]
      %v4181 = vld [vmem:[%s1 + $0x3f8] sm:$0xff]
      %v4182 = vld [vmem:[%s1 + $0x400] sm:$0xff]
      %v4183 = vld [vmem:[%s1 + $0x408] sm:$0xff]
      %v4184 = vld [vmem:[%s1 + $0x410] sm:$0xff]
      %v4185 = vld [vmem:[%s1 + $0x418] sm:$0xff]
      %v4186 = vld [vmem:[%s1 + $0x420] sm:$0xff]
      %v4187 = vld [vmem:[%s1 + $0x428] sm:$0xff]
      %v4188 = vld [vmem:[%s1 + $0x430] sm:$0xff]
      %v4189 = vld [vmem:[%s1 + $0x438] sm:$0xff]
      %v4190 = vld [vmem:[%s1 + $0x440] sm:$0xff]
      %v4191 = vld [vmem:[%s1 + $0x448] sm:$0xff]
      %v4192 = vld [vmem:[%s1 + $0x450] sm:$0xff]
      %v4193 = vld [vmem:[%s1 + $0x458] sm:$0xff]
      %v4194 = vld [vmem:[%s1 + $0x460] sm:$0xff]
      %v4195 = vld [vmem:[%s1 + $0x468] sm:$0xff]
      %v4196 = vld [vmem:[%s1 + $0x470] sm:$0xff]
      %v4197 = vld [vmem:[%s1 + $0x478] sm:$0xff]
      %v4198 = vld [vmem:[%s1 + $0x480] sm:$0xff]
      %v4199 = vld [vmem:[%s1 + $0x488] sm:$0xff]
      %v4200 = vld [vmem:[%s1 + $0x490] sm:$0xff]
      %v4201 = vld [vmem:[%s1 + $0x498] sm:$0xff]
      %v4202 = vld [vmem:[%s1 + $0x4a0] sm:$0xff]
      %v4203 = vld [vmem:[%s1 + $0x4a8] sm:$0xff]
      %v4204 = vld [vmem:[%s1 + $0x4b0] sm:$0xff]
      %v4205 = vld [vmem:[%s1 + $0x4b8] sm:$0xff]
      %v4206 = vld [vmem:[%s1 + $0x4c0] sm:$0xff]
      %v4207 = vld [vmem:[%s1 + $0x4c8] sm:$0xff]
      %v4208 = vld [vmem:[%s1 + $0x4d0] sm:$0xff]
      %v4209 = vld [vmem:[%s1 + $0x4d8] sm:$0xff]
      %v4210 = vld [vmem:[%s1 + $0x4e0] sm:$0xff]
      %v4211 = vld [vmem:[%s1 + $0x4e8] sm:$0xff]
      %v4212 = vld [vmem:[%s1 + $0x4f0] sm:$0xff]
      %v4213 = vld [vmem:[%s1 + $0x4f8] sm:$0xff]
      %v4214 = vld [vmem:[%s1 + $0x500] sm:$0xff]
      %v4215 = vld [vmem:[%s1 + $0x508] sm:$0xff]
      %v4216 = vld [vmem:[%s1 + $0x510] sm:$0xff]
      %v4217 = vld [vmem:[%s1 + $0x518] sm:$0xff]
      %v4218 = vld [vmem:[%s1 + $0x520] sm:$0xff]
      %v4219 = vld [vmem:[%s1 + $0x528] sm:$0xff]
      %v4220 = vld [vmem:[%s1 + $0x530] sm:$0xff]
      %v4221 = vld [vmem:[%s1 + $0x538] sm:$0xff]
      %v4222 = vld [vmem:[%s1 + $0x540] sm:$0xff]
      %v4223 = vld [vmem:[%s1 + $0x548] sm:$0xff]
      %v4224 = vld [vmem:[%s1 + $0x550] sm:$0xff]
      %v4225 = vld [vmem:[%s1 + $0x558] sm:$0xff]
      %v4226 = vld [vmem:[%s1 + $0x560] sm:$0xff]
      %v4227 = vld [vmem:[%s1 + $0x568] sm:$0xff]
      %v4228 = vld [vmem:[%s1 + $0x570] sm:$0xff]
      %v4229 = vld [vmem:[%s1 + $0x578] sm:$0xff]
      %v4230 = vld [vmem:[%s1 + $0x580] sm:$0xff]
      %v4231 = vld [vmem:[%s1 + $0x588] sm:$0xff]
      %v4232 = vld [vmem:[%s1 + $0x590] sm:$0xff]
      %v4233 = vld [vmem:[%s1 + $0x598] sm:$0xff]
      %v4234 = vld [vmem:[%s1 + $0x5a0] sm:$0xff]
      %v4235 = vld [vmem:[%s1 + $0x5a8] sm:$0xff]
      %v4236 = vld [vmem:[%s1 + $0x5b0] sm:$0xff]
      %v4237 = vld [vmem:[%s1 + $0x5b8] sm:$0xff]
      %v4238 = vld [vmem:[%s1 + $0x5c0] sm:$0xff]
      %v4239 = vld [vmem:[%s1 + $0x5c8] sm:$0xff]
      %v4240 = vld [vmem:[%s1 + $0x5d0] sm:$0xff]
      %v4241 = vld [vmem:[%s1 + $0x5d8] sm:$0xff]
      %v4242 = vld [vmem:[%s1 + $0x5e0] sm:$0xff]
      %v4243 = vld [vmem:[%s1 + $0x5e8] sm:$0xff]
      %v4244 = vld [vmem:[%s1 + $0x5f0] sm:$0xff]
      %v4245 = vld [vmem:[%s1 + $0x5f8] sm:$0xff]
      %v4246 = vld [vmem:[%s1 + $0x600] sm:$0xff]
      %v4247 = vld [vmem:[%s1 + $0x608] sm:$0xff]
      %v4248 = vld [vmem:[%s1 + $0x610] sm:$0xff]
      %v4249 = vld [vmem:[%s1 + $0x618] sm:$0xff]
      %v4250 = vld [vmem:[%s1 + $0x620] sm:$0xff]
      %v4251 = vld [vmem:[%s1 + $0x628] sm:$0xff]
      %v4252 = vld [vmem:[%s1 + $0x630] sm:$0xff]
      %v4253 = vld [vmem:[%s1 + $0x638] sm:$0xff]
      %v4254 = vld [vmem:[%s1 + $0x640] sm:$0xff]
      %v4255 = vld [vmem:[%s1 + $0x648] sm:$0xff]
      %v4256 = vld [vmem:[%s1 + $0x650] sm:$0xff]
      %v4257 = vld [vmem:[%s1 + $0x658] sm:$0xff]
      %v4258 = vld [vmem:[%s1 + $0x660] sm:$0xff]
      %v4259 = vld [vmem:[%s1 + $0x668] sm:$0xff]
      %v4260 = vld [vmem:[%s1 + $0x670] sm:$0xff]
      %v4261 = vld [vmem:[%s1 + $0x678] sm:$0xff]
      %v4262 = vld [vmem:[%s1 + $0x680] sm:$0xff]
      %v4263 = vld [vmem:[%s1 + $0x688] sm:$0xff]
      %v4264 = vld [vmem:[%s1 + $0x690] sm:$0xff]
      %v4265 = vld [vmem:[%s1 + $0x698] sm:$0xff]
      %v4266 = vld [vmem:[%s1 + $0x6a0] sm:$0xff]
      %v4267 = vld [vmem:[%s1 + $0x6a8] sm:$0xff]
      %v4268 = vld [vmem:[%s1 + $0x6b0] sm:$0xff]
      %v4269 = vld [vmem:[%s1 + $0x6b8] sm:$0xff]
      %v4270 = vld [vmem:[%s1 + $0x6c0] sm:$0xff]
      %v4271 = vld [vmem:[%s1 + $0x6c8] sm:$0xff]
      %v4272 = vld [vmem:[%s1 + $0x6d0] sm:$0xff]
      %v4273 = vld [vmem:[%s1 + $0x6d8] sm:$0xff]
      %v4274 = vld [vmem:[%s1 + $0x6e0] sm:$0xff]
      %v4275 = vld [vmem:[%s1 + $0x6e8] sm:$0xff]
      %v4276 = vld [vmem:[%s1 + $0x6f0] sm:$0xff]
      %v4277 = vld [vmem:[%s1 + $0x6f8] sm:$0xff]
      %v4278 = vld [vmem:[%s1 + $0x700] sm:$0xff]
      %v4279 = vld [vmem:[%s1 + $0x708] sm:$0xff]
      %v4280 = vld [vmem:[%s1 + $0x710] sm:$0xff]
      %v4281 = vld [vmem:[%s1 + $0x718] sm:$0xff]
      %v4282 = vld [vmem:[%s1 + $0x720] sm:$0xff]
      %v4283 = vld [vmem:[%s1 + $0x728] sm:$0xff]
      %v4284 = vld [vmem:[%s1 + $0x730] sm:$0xff]
      %v4285 = vld [vmem:[%s1 + $0x738] sm:$0xff]
      %v4286 = vld [vmem:[%s1 + $0x740] sm:$0xff]
      %v4287 = vld [vmem:[%s1 + $0x748] sm:$0xff]
      %v4288 = vld [vmem:[%s1 + $0x750] sm:$0xff]
      %v4289 = vld [vmem:[%s1 + $0x758] sm:$0xff]
      %v4290 = vld [vmem:[%s1 + $0x760] sm:$0xff]
      %v4291 = vld [vmem:[%s1 + $0x768] sm:$0xff]
      %v4292 = vld [vmem:[%s1 + $0x770] sm:$0xff]
      %v4293 = vld [vmem:[%s1 + $0x778] sm:$0xff]
      %v4294 = vld [vmem:[%s1 + $0x780] sm:$0xff]
      %v4295 = vld [vmem:[%s1 + $0x788] sm:$0xff]
      %v4296 = vld [vmem:[%s1 + $0x790] sm:$0xff]
      %v4297 = vld [vmem:[%s1 + $0x798] sm:$0xff]
      %v4298 = vld [vmem:[%s1 + $0x7a0] sm:$0xff]
      %v4299 = vld [vmem:[%s1 + $0x7a8] sm:$0xff]
      %v4300 = vld [vmem:[%s1 + $0x7b0] sm:$0xff]
      %v4301 = vld [vmem:[%s1 + $0x7b8] sm:$0xff]
      %v4302 = vld [vmem:[%s1 + $0x7c0] sm:$0xff]
      %v4303 = vld [vmem:[%s1 + $0x7c8] sm:$0xff]
      %v4304 = vld [vmem:[%s1 + $0x7d0] sm:$0xff]
      %v4305 = vld [vmem:[%s1 + $0x7d8] sm:$0xff]
      %v4306 = vld [vmem:[%s1 + $0x7e0] sm:$0xff]
      %v4307 = vld [vmem:[%s1 + $0x7e8] sm:$0xff]
      %v4308 = vld [vmem:[%s1 + $0x7f0] sm:$0xff]
      %v4309 = vld [vmem:[%s1 + $0x7f8] sm:$0xff]
      %v4310 = vld [vmem:[%s1 + $0x800] sm:$0xff]
      %v4311 = vld [vmem:[%s1 + $0x808] sm:$0xff]
      %v4312 = vld [vmem:[%s1 + $0x810] sm:$0xff]
      %v4313 = vld [vmem:[%s1 + $0x818] sm:$0xff]
      %v4314 = vld [vmem:[%s1 + $0x820] sm:$0xff]
      %v4315 = vld [vmem:[%s1 + $0x828] sm:$0xff]
      %v4316 = vld [vmem:[%s1 + $0x830] sm:$0xff]
      %v4317 = vld [vmem:[%s1 + $0x838] sm:$0xff]
      %v4318 = vld [vmem:[%s1 + $0x840] sm:$0xff]
      %v4319 = vld [vmem:[%s1 + $0x848] sm:$0xff]
      %v4320 = vld [vmem:[%s1 + $0x850] sm:$0xff]
      %v4321 = vld [vmem:[%s1 + $0x858] sm:$0xff]
      %v4322 = vld [vmem:[%s1 + $0x860] sm:$0xff]
      %v4323 = vld [vmem:[%s1 + $0x868] sm:$0xff]
      %v4324 = vld [vmem:[%s1 + $0x870] sm:$0xff]
      %v4325 = vld [vmem:[%s1 + $0x878] sm:$0xff]
      %v4326 = vld [vmem:[%s1 + $0x880] sm:$0xff]
      %v4327 = vld [vmem:[%s1 + $0x888] sm:$0xff]
      %v4328 = vld [vmem:[%s1 + $0x890] sm:$0xff]
      %v4329 = vld [vmem:[%s1 + $0x898] sm:$0xff]
      %v4330 = vld [vmem:[%s1 + $0x8a0] sm:$0xff]
      %v4331 = vld [vmem:[%s1 + $0x8a8] sm:$0xff]
      %v4332 = vld [vmem:[%s1 + $0x8b0] sm:$0xff]
      %v4333 = vld [vmem:[%s1 + $0x8b8] sm:$0xff]
      %v4334 = vld [vmem:[%s1 + $0x8c0] sm:$0xff]
      %v4335 = vld [vmem:[%s1 + $0x8c8] sm:$0xff]
      %v4336 = vld [vmem:[%s1 + $0x8d0] sm:$0xff]
      %v4337 = vld [vmem:[%s1 + $0x8d8] sm:$0xff]
      %v4338 = vld [vmem:[%s1 + $0x8e0] sm:$0xff]
      %v4339 = vld [vmem:[%s1 + $0x8e8] sm:$0xff]
      %v4340 = vld [vmem:[%s1 + $0x8f0] sm:$0xff]
      %v4341 = vld [vmem:[%s1 + $0x8f8] sm:$0xff]
      %v4342 = vld [vmem:[%s2] sm:$0x1]
      %v4344 = vlaneseq
      %v4345 = vshrl.u32 %v4344, 7
      %v4346 = vsub.s32 0, %v4345
      %v4347 = vrot.slane %v4342, %v4346
      %4349 = vmatprep.subr.mxu0 0.0
      %4350 = vmatpush1.msra.mxu0 %v4054
      %4351 = vmatprep.subr.mxu0 0.0
      %4352 = vmatpush1.msra.mxu0 %v4055
      %4353 = vmatprep.subr.mxu0 0.0
      %4354 = vmatpush1.msra.mxu0 %v4056
      %4355 = vmatprep.subr.mxu0 0.0
      %4356 = vmatpush1.msra.mxu0 %v4057
      %4357 = vmatprep.subr.mxu0 0.0
      %4358 = vmatpush1.msra.mxu0 %v4058
      %4359 = vmatprep.subr.mxu0 0.0
      %4360 = vmatpush1.msra.mxu0 %v4059
      %4361 = vmatprep.subr.mxu0 0.0
      %4362 = vmatpush1.msra.mxu0 %v4060
      %4363 = vmatprep.subr.mxu0 0.0
      %4364 = vmatpush1.msra.mxu0 %v4061
      %4365 = vmatprep.subr.mxu0 0.0
      %4366 = vmatpush1.msra.mxu0 %v4062
      %4367 = vmatprep.subr.mxu0 0.0
      %4368 = vmatpush1.msra.mxu0 %v4063
      %4369 = vmatprep.subr.mxu0 0.0
      %4370 = vmatpush1.msra.mxu0 %v4064
      %4371 = vmatprep.subr.mxu0 0.0
      %4372 = vmatpush1.msra.mxu0 %v4065
      %4373 = vmatprep.subr.mxu0 0.0
      %4374 = vmatpush1.msra.mxu0 %v4066
      %4375 = vmatprep.subr.mxu0 0.0
      %4376 = vmatpush1.msra.mxu0 %v4067
      %4377 = vmatprep.subr.mxu0 0.0
      %4378 = vmatpush1.msra.mxu0 %v4068
      %4379 = vmatprep.subr.mxu0 0.0
      %4380 = vmatpush1.msra.mxu0 %v4069
      %4381 = vmatprep.subr.mxu0 0.0
      %4382 = vmatpush1.msra.mxu0 %v4070
      %4383 = vmatprep.subr.mxu0 0.0
      %4384 = vmatpush1.msra.mxu0 %v4071
      %4385 = vmatprep.subr.mxu0 0.0
      %4386 = vmatpush1.msra.mxu0 %v4072
      %4387 = vmatprep.subr.mxu0 0.0
      %4388 = vmatpush1.msra.mxu0 %v4073
      %4389 = vmatprep.subr.mxu0 0.0
      %4390 = vmatpush1.msra.mxu0 %v4074
      %4391 = vmatprep.subr.mxu0 0.0
      %4392 = vmatpush1.msra.mxu0 %v4075
      %4393 = vmatprep.subr.mxu0 0.0
      %4394 = vmatpush1.msra.mxu0 %v4076
      %4395 = vmatprep.subr.mxu0 0.0
      %4396 = vmatpush1.msra.mxu0 %v4077
      %4397 = vmatprep.subr.mxu0 0.0
      %4398 = vmatpush1.msra.mxu0 %v4078
      %4399 = vmatprep.subr.mxu0 0.0
      %4400 = vmatpush1.msra.mxu0 %v4079
      %4401 = vmatprep.subr.mxu0 0.0
      %4402 = vmatpush1.msra.mxu0 %v4080
      %4403 = vmatprep.subr.mxu0 0.0
      %4404 = vmatpush1.msra.mxu0 %v4081
      %4405 = vmatprep.subr.mxu0 0.0
      %4406 = vmatpush1.msra.mxu0 %v4082
      %4407 = vmatprep.subr.mxu0 0.0
      %4408 = vmatpush1.msra.mxu0 %v4083
      %4409 = vmatprep.subr.mxu0 0.0
      %4410 = vmatpush1.msra.mxu0 %v4084
      %4411 = vmatprep.subr.mxu0 0.0
      %4412 = vmatpush1.msra.mxu0 %v4085
      %4413 = vmatprep.mubr.f32.mxu0 %v3479
      %4414 = vmatmul.mubr.f32.gmra.mrb[0].mxu0 %v3478
      %v4415 = vpop.f32.mrb[0].mxu0
      %v4416 = vadd.f32 %v4347, %v4415
      %v4417 = vpop.f32.mrb[0].mxu0
      %4418 = vmatprep.mubr.f32.mxu0 %v3497
      %4419 = vmatmul.mubr.f32.gmra.mrb[0].mxu0 %v3496
      %v4420 = vpop.f32.mrb[0].mxu0
      %v4421 = vadd.f32 %v4347, %v4420
      %v4422 = vpop.f32.mrb[0].mxu0
      %4423 = vmatprep.mubr.f32.mxu0 %v3515
      %4424 = vmatmul.mubr.f32.gmra.mrb[0].mxu0 %v3514
      %v4425 = vpop.f32.mrb[0].mxu0
      %v4426 = vadd.f32 %v4347, %v4425
      %v4427 = vpop.f32.mrb[0].mxu0
      %4428 = vmatprep.mubr.f32.mxu0 %v3533
      %4429 = vmatmul.mubr.f32.gmra.mrb[0].mxu0 %v3532
      %v4430 = vpop.f32.mrb[0].mxu0
      %v4431 = vadd.f32 %v4347, %v4430
      %v4432 = vpop.f32.mrb[0].mxu0
      %4433 = vmatprep.mubr.f32.mxu0 %v3551
      %4434 = vmatmul.mubr.f32.gmra.mrb[0].mxu0 %v3550
      %v4435 = vpop.f32.mrb[0].mxu0
      %v4436 = vadd.f32 %v4347, %v4435
      %v4437 = vpop.f32.mrb[0].mxu0
      %4438 = vmatprep.mubr.f32.mxu0 %v3569
      %4439 = vmatmul.mubr.f32.gmra.mrb[0].mxu0 %v3568
      %v4440 = vpop.f32.mrb[0].mxu0
      %v4441 = vadd.f32 %v4347, %v4440
      %v4442 = vpop.f32.mrb[0].mxu0
      %4443 = vmatprep.mubr.f32.mxu0 %v3587
      %4444 = vmatmul.mubr.f32.gmra.mrb[0].mxu0 %v3586
      %v4445 = vpop.f32.mrb[0].mxu0
      %v4446 = vadd.f32 %v4347, %v4445
      %v4447 = vpop.f32.mrb[0].mxu0
      %4448 = vmatprep.mubr.f32.mxu0 %v3605
      %4449 = vmatmul.mubr.f32.gmra.mrb[0].mxu0 %v3604
      %v4450 = vpop.f32.mrb[0].mxu0
      %v4451 = vadd.f32 %v4347, %v4450
      %v4452 = vpop.f32.mrb[0].mxu0
      %4453 = vmatprep.mubr.f32.mxu0 %v3623
      %4454 = vmatmul.mubr.f32.gmra.mrb[0].mxu0 %v3622
      %v4455 = vpop.f32.mrb[0].mxu0
      %v4456 = vadd.f32 %v4347, %v4455
      %v4457 = vpop.f32.mrb[0].mxu0
      %4458 = vmatprep.mubr.f32.mxu0 %v3641
      %4459 = vmatmul.mubr.f32.gmra.mrb[0].mxu0 %v3640
      %v4460 = vpop.f32.mrb[0].mxu0
      %v4461 = vadd.f32 %v4347, %v4460
      %v4462 = vpop.f32.mrb[0].mxu0
      %4463 = vmatprep.mubr.f32.mxu0 %v3659
      %4464 = vmatmul.mubr.f32.gmra.mrb[0].mxu0 %v3658
      %v4465 = vpop.f32.mrb[0].mxu0
      %v4466 = vadd.f32 %v4347, %v4465
      %v4467 = vpop.f32.mrb[0].mxu0
      %4468 = vmatprep.mubr.f32.mxu0 %v3677
      %4469 = vmatmul.mubr.f32.gmra.mrb[0].mxu0 %v3676
      %v4470 = vpop.f32.mrb[0].mxu0
      %v4471 = vadd.f32 %v4347, %v4470
      %v4472 = vpop.f32.mrb[0].mxu0
      %4473 = vmatprep.mubr.f32.mxu0 %v3695
      %4474 = vmatmul.mubr.f32.gmra.mrb[0].mxu0 %v3694
      %v4475 = vpop.f32.mrb[0].mxu0
      %v4476 = vadd.f32 %v4347, %v4475
      %v4477 = vpop.f32.mrb[0].mxu0
      %4478 = vmatprep.mubr.f32.mxu0 %v3713
      %4479 = vmatmul.mubr.f32.gmra.mrb[0].mxu0 %v3712
      %v4480 = vpop.f32.mrb[0].mxu0
      %v4481 = vadd.f32 %v4347, %v4480
      %v4482 = vpop.f32.mrb[0].mxu0
      %4483 = vmatprep.mubr.f32.mxu0 %v3731
      %4484 = vmatmul.mubr.f32.gmra.mrb[0].mxu0 %v3730
      %v4485 = vpop.f32.mrb[0].mxu0
      %v4486 = vadd.f32 %v4347, %v4485
      %v4487 = vpop.f32.mrb[0].mxu0
      %4488 = vmatprep.mubr.f32.mxu0 %v3749
      %4489 = vmatmul.mubr.f32.gmra.mrb[0].mxu0 %v3748
      %v4490 = vpop.f32.mrb[0].mxu0
      %v4491 = vadd.f32 %v4347, %v4490
      %v4492 = vpop.f32.mrb[0].mxu0
      %4493 = vmatprep.mubr.f32.mxu0 %v3767
      %4494 = vmatmul.mubr.f32.gmra.mrb[0].mxu0 %v3766
      %v4495 = vpop.f32.mrb[0].mxu0
      %v4496 = vadd.f32 %v4347, %v4495
      %v4497 = vpop.f32.mrb[0].mxu0
      %4498 = vmatprep.mubr.f32.mxu0 %v3785
      %4499 = vmatmul.mubr.f32.gmra.mrb[0].mxu0 %v3784
      %v4500 = vpop.f32.mrb[0].mxu0
      %v4501 = vadd.f32 %v4347, %v4500
      %v4502 = vpop.f32.mrb[0].mxu0
      %4503 = vmatprep.mubr.f32.mxu0 %v3803
      %4504 = vmatmul.mubr.f32.gmra.mrb[0].mxu0 %v3802
      %v4505 = vpop.f32.mrb[0].mxu0
      %v4506 = vadd.f32 %v4347, %v4505
      %v4507 = vpop.f32.mrb[0].mxu0
      %4508 = vmatprep.mubr.f32.mxu0 %v3821
      %4509 = vmatmul.mubr.f32.gmra.mrb[0].mxu0 %v3820
      %v4510 = vpop.f32.mrb[0].mxu0
      %v4511 = vadd.f32 %v4347, %v4510
      %v4512 = vpop.f32.mrb[0].mxu0
      %4513 = vmatprep.mubr.f32.mxu0 %v3839
      %4514 = vmatmul.mubr.f32.gmra.mrb[0].mxu0 %v3838
      %v4515 = vpop.f32.mrb[0].mxu0
      %v4516 = vadd.f32 %v4347, %v4515
      %v4517 = vpop.f32.mrb[0].mxu0
      %4518 = vmatprep.mubr.f32.mxu0 %v3857
      %4519 = vmatmul.mubr.f32.gmra.mrb[0].mxu0 %v3856
      %v4520 = vpop.f32.mrb[0].mxu0
      %v4521 = vadd.f32 %v4347, %v4520
      %v4522 = vpop.f32.mrb[0].mxu0
      %4523 = vmatprep.mubr.f32.mxu0 %v3875
      %4524 = vmatmul.mubr.f32.gmra.mrb[0].mxu0 %v3874
      %v4525 = vpop.f32.mrb[0].mxu0
      %v4526 = vadd.f32 %v4347, %v4525
      %v4527 = vpop.f32.mrb[0].mxu0
      %4528 = vmatprep.mubr.f32.mxu0 %v3893
      %4529 = vmatmul.mubr.f32.gmra.mrb[0].mxu0 %v3892
      %v4530 = vpop.f32.mrb[0].mxu0
      %v4531 = vadd.f32 %v4347, %v4530
      %v4532 = vpop.f32.mrb[0].mxu0
      %4533 = vmatprep.mubr.f32.mxu0 %v3911
      %4534 = vmatmul.mubr.f32.gmra.mrb[0].mxu0 %v3910
      %v4535 = vpop.f32.mrb[0].mxu0
      %v4536 = vadd.f32 %v4347, %v4535
      %v4537 = vpop.f32.mrb[0].mxu0
      %4538 = vmatprep.mubr.f32.mxu0 %v3929
      %4539 = vmatmul.mubr.f32.gmra.mrb[0].mxu0 %v3928
      %v4540 = vpop.f32.mrb[0].mxu0
      %v4541 = vadd.f32 %v4347, %v4540
      %v4542 = vpop.f32.mrb[0].mxu0
      %4543 = vmatprep.mubr.f32.mxu0 %v3947
      %4544 = vmatmul.mubr.f32.gmra.mrb[0].mxu0 %v3946
      %v4545 = vpop.f32.mrb[0].mxu0
      %v4546 = vadd.f32 %v4347, %v4545
      %v4547 = vpop.f32.mrb[0].mxu0
      %4548 = vmatprep.mubr.f32.mxu0 %v3965
      %4549 = vmatmul.mubr.f32.gmra.mrb[0].mxu0 %v3964
      %v4550 = vpop.f32.mrb[0].mxu0
      %v4551 = vadd.f32 %v4347, %v4550
      %v4552 = vpop.f32.mrb[0].mxu0
      %4553 = vmatprep.mubr.f32.mxu0 %v3983
      %4554 = vmatmul.mubr.f32.gmra.mrb[0].mxu0 %v3982
      %v4555 = vpop.f32.mrb[0].mxu0
      %v4556 = vadd.f32 %v4347, %v4555
      %v4557 = vpop.f32.mrb[0].mxu0
      %4558 = vmatprep.mubr.f32.mxu0 %v4001
      %4559 = vmatmul.mubr.f32.gmra.mrb[0].mxu0 %v4000
      %v4560 = vpop.f32.mrb[0].mxu0
      %v4561 = vadd.f32 %v4347, %v4560
      %v4562 = vpop.f32.mrb[0].mxu0
      %4563 = vmatprep.mubr.f32.mxu0 %v4019
      %4564 = vmatmul.mubr.f32.gmra.mrb[0].mxu0 %v4018
      %v4565 = vpop.f32.mrb[0].mxu0
      %v4566 = vadd.f32 %v4347, %v4565
      %v4567 = vpop.f32.mrb[0].mxu0
      %4568 = vmatprep.mubr.f32.mxu0 %v4037
      %4569 = vmatmul.mubr.f32.gmra.mrb[0].mxu0 %v4036
      %v4570 = vpop.f32.mrb[0].mxu0
      %v4571 = vadd.f32 %v4347, %v4570
      %v4572 = vpop.f32.mrb[0].mxu0
      %4573 = vdwg.mxu0
      %4574 = vmatprep.subr.mxu0 0.0
      %4575 = vmatpush1.msra.mxu0 %v4086
      %4576 = vmatprep.subr.mxu0 0.0
      %4577 = vmatpush1.msra.mxu0 %v4087
      %4578 = vmatprep.subr.mxu0 0.0
      %4579 = vmatpush1.msra.mxu0 %v4088
      %4580 = vmatprep.subr.mxu0 0.0
      %4581 = vmatpush1.msra.mxu0 %v4089
      %4582 = vmatprep.subr.mxu0 0.0
      %4583 = vmatpush1.msra.mxu0 %v4090
      %4584 = vmatprep.subr.mxu0 0.0
      %4585 = vmatpush1.msra.mxu0 %v4091
      %4586 = vmatprep.subr.mxu0 0.0
      %4587 = vmatpush1.msra.mxu0 %v4092
      %4588 = vmatprep.subr.mxu0 0.0
      %4589 = vmatpush1.msra.mxu0 %v4093
      %4590 = vmatprep.subr.mxu0 0.0
      %4591 = vmatpush1.msra.mxu0 %v4094
      %4592 = vmatprep.subr.mxu0 0.0
      %4593 = vmatpush1.msra.mxu0 %v4095
      %4594 = vmatprep.subr.mxu0 0.0
      %4595 = vmatpush1.msra.mxu0 %v4096
      %4596 = vmatprep.subr.mxu0 0.0
      %4597 = vmatpush1.msra.mxu0 %v4097
      %4598 = vmatprep.subr.mxu0 0.0
      %4599 = vmatpush1.msra.mxu0 %v4098
      %4600 = vmatprep.subr.mxu0 0.0
      %4601 = vmatpush1.msra.mxu0 %v4099
      %4602 = vmatprep.subr.mxu0 0.0
      %4603 = vmatpush1.msra.mxu0 %v4100
      %4604 = vmatprep.subr.mxu0 0.0
      %4605 = vmatpush1.msra.mxu0 %v4101
      %4606 = vmatprep.subr.mxu0 0.0
      %4607 = vmatpush1.msra.mxu0 %v4102
      %4608 = vmatprep.subr.mxu0 0.0
      %4609 = vmatpush1.msra.mxu0 %v4103
      %4610 = vmatprep.subr.mxu0 0.0
      %4611 = vmatpush1.msra.mxu0 %v4104
      %4612 = vmatprep.subr.mxu0 0.0
      %4613 = vmatpush1.msra.mxu0 %v4105
      %4614 = vmatprep.subr.mxu0 0.0
      %4615 = vmatpush1.msra.mxu0 %v4106
      %4616 = vmatprep.subr.mxu0 0.0
      %4617 = vmatpush1.msra.mxu0 %v4107
      %4618 = vmatprep.subr.mxu0 0.0
      %4619 = vmatpush1.msra.mxu0 %v4108
      %4620 = vmatprep.subr.mxu0 0.0
      %4621 = vmatpush1.msra.mxu0 %v4109
      %4622 = vmatprep.subr.mxu0 0.0
      %4623 = vmatpush1.msra.mxu0 %v4110
      %4624 = vmatprep.subr.mxu0 0.0
      %4625 = vmatpush1.msra.mxu0 %v4111
      %4626 = vmatprep.subr.mxu0 0.0
      %4627 = vmatpush1.msra.mxu0 %v4112
      %4628 = vmatprep.subr.mxu0 0.0
      %4629 = vmatpush1.msra.mxu0 %v4113
      %4630 = vmatprep.subr.mxu0 0.0
      %4631 = vmatpush1.msra.mxu0 %v4114
      %4632 = vmatprep.subr.mxu0 0.0
      %4633 = vmatpush1.msra.mxu0 %v4115
      %4634 = vmatprep.subr.mxu0 0.0
      %4635 = vmatpush1.msra.mxu0 %v4116
      %4636 = vmatprep.subr.mxu0 0.0
      %4637 = vmatpush1.msra.mxu0 %v4117
      %4638 = vmatprep.mubr.f32.mxu0 %v3481
      %4639 = vmatmul.mubr.f32.gmra.mrb[0].mxu0 %v3480
      %v4640 = vpop.f32.mrb[0].mxu0
      %v4641 = vadd.f32 %v4416, %v4640
      %v4642 = vpop.f32.mrb[0].mxu0
      %4643 = vmatprep.mubr.f32.mxu0 %v3499
      %4644 = vmatmul.mubr.f32.gmra.mrb[0].mxu0 %v3498
      %v4645 = vpop.f32.mrb[0].mxu0
      %v4646 = vadd.f32 %v4421, %v4645
      %v4647 = vpop.f32.mrb[0].mxu0
      %4648 = vmatprep.mubr.f32.mxu0 %v3517
      %4649 = vmatmul.mubr.f32.gmra.mrb[0].mxu0 %v3516
      %v4650 = vpop.f32.mrb[0].mxu0
      %v4651 = vadd.f32 %v4426, %v4650
      %v4652 = vpop.f32.mrb[0].mxu0
      %4653 = vmatprep.mubr.f32.mxu0 %v3535
      %4654 = vmatmul.mubr.f32.gmra.mrb[0].mxu0 %v3534
      %v4655 = vpop.f32.mrb[0].mxu0
      %v4656 = vadd.f32 %v4431, %v4655
      %v4657 = vpop.f32.mrb[0].mxu0
      %4658 = vmatprep.mubr.f32.mxu0 %v3553
      %4659 = vmatmul.mubr.f32.gmra.mrb[0].mxu0 %v3552
      %v4660 = vpop.f32.mrb[0].mxu0
      %v4661 = vadd.f32 %v4436, %v4660
      %v4662 = vpop.f32.mrb[0].mxu0
      %4663 = vmatprep.mubr.f32.mxu0 %v3571
      %4664 = vmatmul.mubr.f32.gmra.mrb[0].mxu0 %v3570
      %v4665 = vpop.f32.mrb[0].mxu0
      %v4666 = vadd.f32 %v4441, %v4665
      %v4667 = vpop.f32.mrb[0].mxu0
      %4668 = vmatprep.mubr.f32.mxu0 %v3589
      %4669 = vmatmul.mubr.f32.gmra.mrb[0].mxu0 %v3588
      %v4670 = vpop.f32.mrb[0].mxu0
      %v4671 = vadd.f32 %v4446, %v4670
      %v4672 = vpop.f32.mrb[0].mxu0
      %4673 = vmatprep.mubr.f32.mxu0 %v3607
      %4674 = vmatmul.mubr.f32.gmra.mrb[0].mxu0 %v3606
      %v4675 = vpop.f32.mrb[0].mxu0
      %v4676 = vadd.f32 %v4451, %v4675
      %v4677 = vpop.f32.mrb[0].mxu0
      %4678 = vmatprep.mubr.f32.mxu0 %v3625
      %4679 = vmatmul.mubr.f32.gmra.mrb[0].mxu0 %v3624
      %v4680 = vpop.f32.mrb[0].mxu0
      %v4681 = vadd.f32 %v4456, %v4680
      %v4682 = vpop.f32.mrb[0].mxu0
      %4683 = vmatprep.mubr.f32.mxu0 %v3643
      %4684 = vmatmul.mubr.f32.gmra.mrb[0].mxu0 %v3642
      %v4685 = vpop.f32.mrb[0].mxu0
      %v4686 = vadd.f32 %v4461, %v4685
      %v4687 = vpop.f32.mrb[0].mxu0
      %4688 = vmatprep.mubr.f32.mxu0 %v3661
      %4689 = vmatmul.mubr.f32.gmra.mrb[0].mxu0 %v3660
      %v4690 = vpop.f32.mrb[0].mxu0
      %v4691 = vadd.f32 %v4466, %v4690
      %v4692 = vpop.f32.mrb[0].mxu0
      %4693 = vmatprep.mubr.f32.mxu0 %v3679
      %4694 = vmatmul.mubr.f32.gmra.mrb[0].mxu0 %v3678
      %v4695 = vpop.f32.mrb[0].mxu0
      %v4696 = vadd.f32 %v4471, %v4695
      %v4697 = vpop.f32.mrb[0].mxu0
      %4698 = vmatprep.mubr.f32.mxu0 %v3697
      %4699 = vmatmul.mubr.f32.gmra.mrb[0].mxu0 %v3696
      %v4700 = vpop.f32.mrb[0].mxu0
      %v4701 = vadd.f32 %v4476, %v4700
      %v4702 = vpop.f32.mrb[0].mxu0
      %4703 = vmatprep.mubr.f32.mxu0 %v3715
      %4704 = vmatmul.mubr.f32.gmra.mrb[0].mxu0 %v3714
      %v4705 = vpop.f32.mrb[0].mxu0
      %v4706 = vadd.f32 %v4481, %v4705
      %v4707 = vpop.f32.mrb[0].mxu0
      %4708 = vmatprep.mubr.f32.mxu0 %v3733
      %4709 = vmatmul.mubr.f32.gmra.mrb[0].mxu0 %v3732
      %v4710 = vpop.f32.mrb[0].mxu0
      %v4711 = vadd.f32 %v4486, %v4710
      %v4712 = vpop.f32.mrb[0].mxu0
      %4713 = vmatprep.mubr.f32.mxu0 %v3751
      %4714 = vmatmul.mubr.f32.gmra.mrb[0].mxu0 %v3750
      %v4715 = vpop.f32.mrb[0].mxu0
      %v4716 = vadd.f32 %v4491, %v4715
      %v4717 = vpop.f32.mrb[0].mxu0
      %4718 = vmatprep.mubr.f32.mxu0 %v3769
      %4719 = vmatmul.mubr.f32.gmra.mrb[0].mxu0 %v3768
      %v4720 = vpop.f32.mrb[0].mxu0
      %v4721 = vadd.f32 %v4496, %v4720
      %v4722 = vpop.f32.mrb[0].mxu0
      %4723 = vmatprep.mubr.f32.mxu0 %v3787
      %4724 = vmatmul.mubr.f32.gmra.mrb[0].mxu0 %v3786
      %v4725 = vpop.f32.mrb[0].mxu0
      %v4726 = vadd.f32 %v4501, %v4725
      %v4727 = vpop.f32.mrb[0].mxu0
      %4728 = vmatprep.mubr.f32.mxu0 %v3805
      %4729 = vmatmul.mubr.f32.gmra.mrb[0].mxu0 %v3804
      %v4730 = vpop.f32.mrb[0].mxu0
      %v4731 = vadd.f32 %v4506, %v4730
      %v4732 = vpop.f32.mrb[0].mxu0
      %4733 = vmatprep.mubr.f32.mxu0 %v3823
      %4734 = vmatmul.mubr.f32.gmra.mrb[0].mxu0 %v3822
      %v4735 = vpop.f32.mrb[0].mxu0
      %v4736 = vadd.f32 %v4511, %v4735
      %v4737 = vpop.f32.mrb[0].mxu0
      %4738 = vmatprep.mubr.f32.mxu0 %v3841
      %4739 = vmatmul.mubr.f32.gmra.mrb[0].mxu0 %v3840
      %v4740 = vpop.f32.mrb[0].mxu0
      %v4741 = vadd.f32 %v4516, %v4740
      %v4742 = vpop.f32.mrb[0].mxu0
      %4743 = vmatprep.mubr.f32.mxu0 %v3859
      %4744 = vmatmul.mubr.f32.gmra.mrb[0].mxu0 %v3858
      %v4745 = vpop.f32.mrb[0].mxu0
      %v4746 = vadd.f32 %v4521, %v4745
      %v4747 = vpop.f32.mrb[0].mxu0
      %4748 = vmatprep.mubr.f32.mxu0 %v3877
      %4749 = vmatmul.mubr.f32.gmra.mrb[0].mxu0 %v3876
      %v4750 = vpop.f32.mrb[0].mxu0
      %v4751 = vadd.f32 %v4526, %v4750
      %v4752 = vpop.f32.mrb[0].mxu0
      %4753 = vmatprep.mubr.f32.mxu0 %v3895
      %4754 = vmatmul.mubr.f32.gmra.mrb[0].mxu0 %v3894
      %v4755 = vpop.f32.mrb[0].mxu0
      %v4756 = vadd.f32 %v4531, %v4755
      %v4757 = vpop.f32.mrb[0].mxu0
      %4758 = vmatprep.mubr.f32.mxu0 %v3913
      %4759 = vmatmul.mubr.f32.gmra.mrb[0].mxu0 %v3912
      %v4760 = vpop.f32.mrb[0].mxu0
      %v4761 = vadd.f32 %v4536, %v4760
      %v4762 = vpop.f32.mrb[0].mxu0
      %4763 = vmatprep.mubr.f32.mxu0 %v3931
      %4764 = vmatmul.mubr.f32.gmra.mrb[0].mxu0 %v3930
      %v4765 = vpop.f32.mrb[0].mxu0
      %v4766 = vadd.f32 %v4541, %v4765
      %v4767 = vpop.f32.mrb[0].mxu0
      %4768 = vmatprep.mubr.f32.mxu0 %v3949
      %4769 = vmatmul.mubr.f32.gmra.mrb[0].mxu0 %v3948
      %v4770 = vpop.f32.mrb[0].mxu0
      %v4771 = vadd.f32 %v4546, %v4770
      %v4772 = vpop.f32.mrb[0].mxu0
      %4773 = vmatprep.mubr.f32.mxu0 %v3967
      %4774 = vmatmul.mubr.f32.gmra.mrb[0].mxu0 %v3966
      %v4775 = vpop.f32.mrb[0].mxu0
      %v4776 = vadd.f32 %v4551, %v4775
      %v4777 = vpop.f32.mrb[0].mxu0
      %4778 = vmatprep.mubr.f32.mxu0 %v3985
      %4779 = vmatmul.mubr.f32.gmra.mrb[0].mxu0 %v3984
      %v4780 = vpop.f32.mrb[0].mxu0
      %v4781 = vadd.f32 %v4556, %v4780
      %v4782 = vpop.f32.mrb[0].mxu0
      %4783 = vmatprep.mubr.f32.mxu0 %v4003
      %4784 = vmatmul.mubr.f32.gmra.mrb[0].mxu0 %v4002
      %v4785 = vpop.f32.mrb[0].mxu0
      %v4786 = vadd.f32 %v4561, %v4785
      %v4787 = vpop.f32.mrb[0].mxu0
      %4788 = vmatprep.mubr.f32.mxu0 %v4021
      %4789 = vmatmul.mubr.f32.gmra.mrb[0].mxu0 %v4020
      %v4790 = vpop.f32.mrb[0].mxu0
      %v4791 = vadd.f32 %v4566, %v4790
      %v4792 = vpop.f32.mrb[0].mxu0
      %4793 = vmatprep.mubr.f32.mxu0 %v4039
      %4794 = vmatmul.mubr.f32.gmra.mrb[0].mxu0 %v4038
      %v4795 = vpop.f32.mrb[0].mxu0
      %v4796 = vadd.f32 %v4571, %v4795
      %v4797 = vpop.f32.mrb[0].mxu0
      %4798 = vdwg.mxu0
      %4799 = vmatprep.subr.mxu0 0.0
      %4800 = vmatpush1.msra.mxu0 %v4118
      %4801 = vmatprep.subr.mxu0 0.0
      %4802 = vmatpush1.msra.mxu0 %v4119
      %4803 = vmatprep.subr.mxu0 0.0
      %4804 = vmatpush1.msra.mxu0 %v4120
      %4805 = vmatprep.subr.mxu0 0.0
      %4806 = vmatpush1.msra.mxu0 %v4121
      %4807 = vmatprep.subr.mxu0 0.0
      %4808 = vmatpush1.msra.mxu0 %v4122
      %4809 = vmatprep.subr.mxu0 0.0
      %4810 = vmatpush1.msra.mxu0 %v4123
      %4811 = vmatprep.subr.mxu0 0.0
      %4812 = vmatpush1.msra.mxu0 %v4124
      %4813 = vmatprep.subr.mxu0 0.0
      %4814 = vmatpush1.msra.mxu0 %v4125
      %4815 = vmatprep.subr.mxu0 0.0
      %4816 = vmatpush1.msra.mxu0 %v4126
      %4817 = vmatprep.subr.mxu0 0.0
      %4818 = vmatpush1.msra.mxu0 %v4127
      %4819 = vmatprep.subr.mxu0 0.0
      %4820 = vmatpush1.msra.mxu0 %v4128
      %4821 = vmatprep.subr.mxu0 0.0
      %4822 = vmatpush1.msra.mxu0 %v4129
      %4823 = vmatprep.subr.mxu0 0.0
      %4824 = vmatpush1.msra.mxu0 %v4130
      %4825 = vmatprep.subr.mxu0 0.0
      %4826 = vmatpush1.msra.mxu0 %v4131
      %4827 = vmatprep.subr.mxu0 0.0
      %4828 = vmatpush1.msra.mxu0 %v4132
      %4829 = vmatprep.subr.mxu0 0.0
      %4830 = vmatpush1.msra.mxu0 %v4133
      %4831 = vmatprep.subr.mxu0 0.0
      %4832 = vmatpush1.msra.mxu0 %v4134
      %4833 = vmatprep.subr.mxu0 0.0
      %4834 = vmatpush1.msra.mxu0 %v4135
      %4835 = vmatprep.subr.mxu0 0.0
      %4836 = vmatpush1.msra.mxu0 %v4136
      %4837 = vmatprep.subr.mxu0 0.0
      %4838 = vmatpush1.msra.mxu0 %v4137
      %4839 = vmatprep.subr.mxu0 0.0
      %4840 = vmatpush1.msra.mxu0 %v4138
      %4841 = vmatprep.subr.mxu0 0.0
      %4842 = vmatpush1.msra.mxu0 %v4139
      %4843 = vmatprep.subr.mxu0 0.0
      %4844 = vmatpush1.msra.mxu0 %v4140
      %4845 = vmatprep.subr.mxu0 0.0
      %4846 = vmatpush1.msra.mxu0 %v4141
      %4847 = vmatprep.subr.mxu0 0.0
      %4848 = vmatpush1.msra.mxu0 %v4142
      %4849 = vmatprep.subr.mxu0 0.0
      %4850 = vmatpush1.msra.mxu0 %v4143
      %4851 = vmatprep.subr.mxu0 0.0
      %4852 = vmatpush1.msra.mxu0 %v4144
      %4853 = vmatprep.subr.mxu0 0.0
      %4854 = vmatpush1.msra.mxu0 %v4145
      %4855 = vmatprep.subr.mxu0 0.0
      %4856 = vmatpush1.msra.mxu0 %v4146
      %4857 = vmatprep.subr.mxu0 0.0
      %4858 = vmatpush1.msra.mxu0 %v4147
      %4859 = vmatprep.subr.mxu0 0.0
      %4860 = vmatpush1.msra.mxu0 %v4148
      %4861 = vmatprep.subr.mxu0 0.0
      %4862 = vmatpush1.msra.mxu0 %v4149
      %4863 = vmatprep.mubr.f32.mxu0 %v3483
      %4864 = vmatmul.mubr.f32.gmra.mrb[0].mxu0 %v3482
      %v4865 = vpop.f32.mrb[0].mxu0
      %v4866 = vadd.f32 %v4641, %v4865
      %v4867 = vpop.f32.mrb[0].mxu0
      %4868 = vmatprep.mubr.f32.mxu0 %v3501
      %4869 = vmatmul.mubr.f32.gmra.mrb[0].mxu0 %v3500
      %v4870 = vpop.f32.mrb[0].mxu0
      %v4871 = vadd.f32 %v4646, %v4870
      %v4872 = vpop.f32.mrb[0].mxu0
      %4873 = vmatprep.mubr.f32.mxu0 %v3519
      %4874 = vmatmul.mubr.f32.gmra.mrb[0].mxu0 %v3518
      %v4875 = vpop.f32.mrb[0].mxu0
      %v4876 = vadd.f32 %v4651, %v4875
      %v4877 = vpop.f32.mrb[0].mxu0
      %4878 = vmatprep.mubr.f32.mxu0 %v3537
      %4879 = vmatmul.mubr.f32.gmra.mrb[0].mxu0 %v3536
      %v4880 = vpop.f32.mrb[0].mxu0
      %v4881 = vadd.f32 %v4656, %v4880
      %v4882 = vpop.f32.mrb[0].mxu0
      %4883 = vmatprep.mubr.f32.mxu0 %v3555
      %4884 = vmatmul.mubr.f32.gmra.mrb[0].mxu0 %v3554
      %v4885 = vpop.f32.mrb[0].mxu0
      %v4886 = vadd.f32 %v4661, %v4885
      %v4887 = vpop.f32.mrb[0].mxu0
      %4888 = vmatprep.mubr.f32.mxu0 %v3573
      %4889 = vmatmul.mubr.f32.gmra.mrb[0].mxu0 %v3572
      %v4890 = vpop.f32.mrb[0].mxu0
      %v4891 = vadd.f32 %v4666, %v4890
      %v4892 = vpop.f32.mrb[0].mxu0
      %4893 = vmatprep.mubr.f32.mxu0 %v3591
      %4894 = vmatmul.mubr.f32.gmra.mrb[0].mxu0 %v3590
      %v4895 = vpop.f32.mrb[0].mxu0
      %v4896 = vadd.f32 %v4671, %v4895
      %v4897 = vpop.f32.mrb[0].mxu0
      %4898 = vmatprep.mubr.f32.mxu0 %v3609
      %4899 = vmatmul.mubr.f32.gmra.mrb[0].mxu0 %v3608
      %v4900 = vpop.f32.mrb[0].mxu0
      %v4901 = vadd.f32 %v4676, %v4900
      %v4902 = vpop.f32.mrb[0].mxu0
      %4903 = vmatprep.mubr.f32.mxu0 %v3627
      %4904 = vmatmul.mubr.f32.gmra.mrb[0].mxu0 %v3626
      %v4905 = vpop.f32.mrb[0].mxu0
      %v4906 = vadd.f32 %v4681, %v4905
      %v4907 = vpop.f32.mrb[0].mxu0
      %4908 = vmatprep.mubr.f32.mxu0 %v3645
      %4909 = vmatmul.mubr.f32.gmra.mrb[0].mxu0 %v3644
      %v4910 = vpop.f32.mrb[0].mxu0
      %v4911 = vadd.f32 %v4686, %v4910
      %v4912 = vpop.f32.mrb[0].mxu0
      %4913 = vmatprep.mubr.f32.mxu0 %v3663
      %4914 = vmatmul.mubr.f32.gmra.mrb[0].mxu0 %v3662
      %v4915 = vpop.f32.mrb[0].mxu0
      %v4916 = vadd.f32 %v4691, %v4915
      %v4917 = vpop.f32.mrb[0].mxu0
      %4918 = vmatprep.mubr.f32.mxu0 %v3681
      %4919 = vmatmul.mubr.f32.gmra.mrb[0].mxu0 %v3680
      %v4920 = vpop.f32.mrb[0].mxu0
      %v4921 = vadd.f32 %v4696, %v4920
      %v4922 = vpop.f32.mrb[0].mxu0
      %4923 = vmatprep.mubr.f32.mxu0 %v3699
      %4924 = vmatmul.mubr.f32.gmra.mrb[0].mxu0 %v3698
      %v4925 = vpop.f32.mrb[0].mxu0
      %v4926 = vadd.f32 %v4701, %v4925
      %v4927 = vpop.f32.mrb[0].mxu0
      %4928 = vmatprep.mubr.f32.mxu0 %v3717
      %4929 = vmatmul.mubr.f32.gmra.mrb[0].mxu0 %v3716
      %v4930 = vpop.f32.mrb[0].mxu0
      %v4931 = vadd.f32 %v4706, %v4930
      %v4932 = vpop.f32.mrb[0].mxu0
      %4933 = vmatprep.mubr.f32.mxu0 %v3735
      %4934 = vmatmul.mubr.f32.gmra.mrb[0].mxu0 %v3734
      %v4935 = vpop.f32.mrb[0].mxu0
      %v4936 = vadd.f32 %v4711, %v4935
      %v4937 = vpop.f32.mrb[0].mxu0
      %4938 = vmatprep.mubr.f32.mxu0 %v3753
      %4939 = vmatmul.mubr.f32.gmra.mrb[0].mxu0 %v3752
      %v4940 = vpop.f32.mrb[0].mxu0
      %v4941 = vadd.f32 %v4716, %v4940
      %v4942 = vpop.f32.mrb[0].mxu0
      %4943 = vmatprep.mubr.f32.mxu0 %v3771
      %4944 = vmatmul.mubr.f32.gmra.mrb[0].mxu0 %v3770
      %v4945 = vpop.f32.mrb[0].mxu0
      %v4946 = vadd.f32 %v4721, %v4945
      %v4947 = vpop.f32.mrb[0].mxu0
      %4948 = vmatprep.mubr.f32.mxu0 %v3789
      %4949 = vmatmul.mubr.f32.gmra.mrb[0].mxu0 %v3788
      %v4950 = vpop.f32.mrb[0].mxu0
      %v4951 = vadd.f32 %v4726, %v4950
      %v4952 = vpop.f32.mrb[0].mxu0
      %4953 = vmatprep.mubr.f32.mxu0 %v3807
      %4954 = vmatmul.mubr.f32.gmra.mrb[0].mxu0 %v3806
      %v4955 = vpop.f32.mrb[0].mxu0
      %v4956 = vadd.f32 %v4731, %v4955
      %v4957 = vpop.f32.mrb[0].mxu0
      %4958 = vmatprep.mubr.f32.mxu0 %v3825
      %4959 = vmatmul.mubr.f32.gmra.mrb[0].mxu0 %v3824
      %v4960 = vpop.f32.mrb[0].mxu0
      %v4961 = vadd.f32 %v4736, %v4960
      %v4962 = vpop.f32.mrb[0].mxu0
      %4963 = vmatprep.mubr.f32.mxu0 %v3843
      %4964 = vmatmul.mubr.f32.gmra.mrb[0].mxu0 %v3842
      %v4965 = vpop.f32.mrb[0].mxu0
      %v4966 = vadd.f32 %v4741, %v4965
      %v4967 = vpop.f32.mrb[0].mxu0
      %4968 = vmatprep.mubr.f32.mxu0 %v3861
      %4969 = vmatmul.mubr.f32.gmra.mrb[0].mxu0 %v3860
      %v4970 = vpop.f32.mrb[0].mxu0
      %v4971 = vadd.f32 %v4746, %v4970
      %v4972 = vpop.f32.mrb[0].mxu0
      %4973 = vmatprep.mubr.f32.mxu0 %v3879
      %4974 = vmatmul.mubr.f32.gmra.mrb[0].mxu0 %v3878
      %v4975 = vpop.f32.mrb[0].mxu0
      %v4976 = vadd.f32 %v4751, %v4975
      %v4977 = vpop.f32.mrb[0].mxu0
      %4978 = vmatprep.mubr.f32.mxu0 %v3897
      %4979 = vmatmul.mubr.f32.gmra.mrb[0].mxu0 %v3896
      %v4980 = vpop.f32.mrb[0].mxu0
      %v4981 = vadd.f32 %v4756, %v4980
      %v4982 = vpop.f32.mrb[0].mxu0
      %4983 = vmatprep.mubr.f32.mxu0 %v3915
      %4984 = vmatmul.mubr.f32.gmra.mrb[0].mxu0 %v3914
      %v4985 = vpop.f32.mrb[0].mxu0
      %v4986 = vadd.f32 %v4761, %v4985
      %v4987 = vpop.f32.mrb[0].mxu0
      %4988 = vmatprep.mubr.f32.mxu0 %v3933
      %4989 = vmatmul.mubr.f32.gmra.mrb[0].mxu0 %v3932
      %v4990 = vpop.f32.mrb[0].mxu0
      %v4991 = vadd.f32 %v4766, %v4990
      %v4992 = vpop.f32.mrb[0].mxu0
      %4993 = vmatprep.mubr.f32.mxu0 %v3951
      %4994 = vmatmul.mubr.f32.gmra.mrb[0].mxu0 %v3950
      %v4995 = vpop.f32.mrb[0].mxu0
      %v4996 = vadd.f32 %v4771, %v4995
      %v4997 = vpop.f32.mrb[0].mxu0
      %4998 = vmatprep.mubr.f32.mxu0 %v3969
      %4999 = vmatmul.mubr.f32.gmra.mrb[0].mxu0 %v3968
      %v5000 = vpop.f32.mrb[0].mxu0
      %v5001 = vadd.f32 %v4776, %v5000
      %v5002 = vpop.f32.mrb[0].mxu0
      %5003 = vmatprep.mubr.f32.mxu0 %v3987
      %5004 = vmatmul.mubr.f32.gmra.mrb[0].mxu0 %v3986
      %v5005 = vpop.f32.mrb[0].mxu0
      %v5006 = vadd.f32 %v4781, %v5005
      %v5007 = vpop.f32.mrb[0].mxu0
      %5008 = vmatprep.mubr.f32.mxu0 %v4005
      %5009 = vmatmul.mubr.f32.gmra.mrb[0].mxu0 %v4004
      %v5010 = vpop.f32.mrb[0].mxu0
      %v5011 = vadd.f32 %v4786, %v5010
      %v5012 = vpop.f32.mrb[0].mxu0
      %5013 = vmatprep.mubr.f32.mxu0 %v4023
      %5014 = vmatmul.mubr.f32.gmra.mrb[0].mxu0 %v4022
      %v5015 = vpop.f32.mrb[0].mxu0
      %v5016 = vadd.f32 %v4791, %v5015
      %v5017 = vpop.f32.mrb[0].mxu0
      %5018 = vmatprep.mubr.f32.mxu0 %v4041
      %5019 = vmatmul.mubr.f32.gmra.mrb[0].mxu0 %v4040
      %v5020 = vpop.f32.mrb[0].mxu0
      %v5021 = vadd.f32 %v4796, %v5020
      %v5022 = vpop.f32.mrb[0].mxu0
      %5023 = vdwg.mxu0
      %5024 = vmatprep.subr.mxu0 0.0
      %5025 = vmatpush1.msra.mxu0 %v4150
      %5026 = vmatprep.subr.mxu0 0.0
      %5027 = vmatpush1.msra.mxu0 %v4151
      %5028 = vmatprep.subr.mxu0 0.0
      %5029 = vmatpush1.msra.mxu0 %v4152
      %5030 = vmatprep.subr.mxu0 0.0
      %5031 = vmatpush1.msra.mxu0 %v4153
      %5032 = vmatprep.subr.mxu0 0.0
      %5033 = vmatpush1.msra.mxu0 %v4154
      %5034 = vmatprep.subr.mxu0 0.0
      %5035 = vmatpush1.msra.mxu0 %v4155
      %5036 = vmatprep.subr.mxu0 0.0
      %5037 = vmatpush1.msra.mxu0 %v4156
      %5038 = vmatprep.subr.mxu0 0.0
      %5039 = vmatpush1.msra.mxu0 %v4157
      %5040 = vmatprep.subr.mxu0 0.0
      %5041 = vmatpush1.msra.mxu0 %v4158
      %5042 = vmatprep.subr.mxu0 0.0
      %5043 = vmatpush1.msra.mxu0 %v4159
      %5044 = vmatprep.subr.mxu0 0.0
      %5045 = vmatpush1.msra.mxu0 %v4160
      %5046 = vmatprep.subr.mxu0 0.0
      %5047 = vmatpush1.msra.mxu0 %v4161
      %5048 = vmatprep.subr.mxu0 0.0
      %5049 = vmatpush1.msra.mxu0 %v4162
      %5050 = vmatprep.subr.mxu0 0.0
      %5051 = vmatpush1.msra.mxu0 %v4163
      %5052 = vmatprep.subr.mxu0 0.0
      %5053 = vmatpush1.msra.mxu0 %v4164
      %5054 = vmatprep.subr.mxu0 0.0
      %5055 = vmatpush1.msra.mxu0 %v4165
      %5056 = vmatprep.subr.mxu0 0.0
      %5057 = vmatpush1.msra.mxu0 %v4166
      %5058 = vmatprep.subr.mxu0 0.0
      %5059 = vmatpush1.msra.mxu0 %v4167
      %5060 = vmatprep.subr.mxu0 0.0
      %5061 = vmatpush1.msra.mxu0 %v4168
      %5062 = vmatprep.subr.mxu0 0.0
      %5063 = vmatpush1.msra.mxu0 %v4169
      %5064 = vmatprep.subr.mxu0 0.0
      %5065 = vmatpush1.msra.mxu0 %v4170
      %5066 = vmatprep.subr.mxu0 0.0
      %5067 = vmatpush1.msra.mxu0 %v4171
      %5068 = vmatprep.subr.mxu0 0.0
      %5069 = vmatpush1.msra.mxu0 %v4172
      %5070 = vmatprep.subr.mxu0 0.0
      %5071 = vmatpush1.msra.mxu0 %v4173
      %5072 = vmatprep.subr.mxu0 0.0
      %5073 = vmatpush1.msra.mxu0 %v4174
      %5074 = vmatprep.subr.mxu0 0.0
      %5075 = vmatpush1.msra.mxu0 %v4175
      %5076 = vmatprep.subr.mxu0 0.0
      %5077 = vmatpush1.msra.mxu0 %v4176
      %5078 = vmatprep.subr.mxu0 0.0
      %5079 = vmatpush1.msra.mxu0 %v4177
      %5080 = vmatprep.subr.mxu0 0.0
      %5081 = vmatpush1.msra.mxu0 %v4178
      %5082 = vmatprep.subr.mxu0 0.0
      %5083 = vmatpush1.msra.mxu0 %v4179
      %5084 = vmatprep.subr.mxu0 0.0
      %5085 = vmatpush1.msra.mxu0 %v4180
      %5086 = vmatprep.subr.mxu0 0.0
      %5087 = vmatpush1.msra.mxu0 %v4181
      %5088 = vmatprep.mubr.f32.mxu0 %v3485
      %5089 = vmatmul.mubr.f32.gmra.mrb[0].mxu0 %v3484
      %v5090 = vpop.f32.mrb[0].mxu0
      %v5091 = vadd.f32 %v4866, %v5090
      %v5092 = vpop.f32.mrb[0].mxu0
      %5093 = vmatprep.mubr.f32.mxu0 %v3503
      %5094 = vmatmul.mubr.f32.gmra.mrb[0].mxu0 %v3502
      %v5095 = vpop.f32.mrb[0].mxu0
      %v5096 = vadd.f32 %v4871, %v5095
      %v5097 = vpop.f32.mrb[0].mxu0
      %5098 = vmatprep.mubr.f32.mxu0 %v3521
      %5099 = vmatmul.mubr.f32.gmra.mrb[0].mxu0 %v3520
      %v5100 = vpop.f32.mrb[0].mxu0
      %v5101 = vadd.f32 %v4876, %v5100
      %v5102 = vpop.f32.mrb[0].mxu0
      %5103 = vmatprep.mubr.f32.mxu0 %v3539
      %5104 = vmatmul.mubr.f32.gmra.mrb[0].mxu0 %v3538
      %v5105 = vpop.f32.mrb[0].mxu0
      %v5106 = vadd.f32 %v4881, %v5105
      %v5107 = vpop.f32.mrb[0].mxu0
      %5108 = vmatprep.mubr.f32.mxu0 %v3557
      %5109 = vmatmul.mubr.f32.gmra.mrb[0].mxu0 %v3556
      %v5110 = vpop.f32.mrb[0].mxu0
      %v5111 = vadd.f32 %v4886, %v5110
      %v5112 = vpop.f32.mrb[0].mxu0
      %5113 = vmatprep.mubr.f32.mxu0 %v3575
      %5114 = vmatmul.mubr.f32.gmra.mrb[0].mxu0 %v3574
      %v5115 = vpop.f32.mrb[0].mxu0
      %v5116 = vadd.f32 %v4891, %v5115
      %v5117 = vpop.f32.mrb[0].mxu0
      %5118 = vmatprep.mubr.f32.mxu0 %v3593
      %5119 = vmatmul.mubr.f32.gmra.mrb[0].mxu0 %v3592
      %v5120 = vpop.f32.mrb[0].mxu0
      %v5121 = vadd.f32 %v4896, %v5120
      %v5122 = vpop.f32.mrb[0].mxu0
      %5123 = vmatprep.mubr.f32.mxu0 %v3611
      %5124 = vmatmul.mubr.f32.gmra.mrb[0].mxu0 %v3610
      %v5125 = vpop.f32.mrb[0].mxu0
      %v5126 = vadd.f32 %v4901, %v5125
      %v5127 = vpop.f32.mrb[0].mxu0
      %5128 = vmatprep.mubr.f32.mxu0 %v3629
      %5129 = vmatmul.mubr.f32.gmra.mrb[0].mxu0 %v3628
      %v5130 = vpop.f32.mrb[0].mxu0
      %v5131 = vadd.f32 %v4906, %v5130
      %v5132 = vpop.f32.mrb[0].mxu0
      %5133 = vmatprep.mubr.f32.mxu0 %v3647
      %5134 = vmatmul.mubr.f32.gmra.mrb[0].mxu0 %v3646
      %v5135 = vpop.f32.mrb[0].mxu0
      %v5136 = vadd.f32 %v4911, %v5135
      %v5137 = vpop.f32.mrb[0].mxu0
      %5138 = vmatprep.mubr.f32.mxu0 %v3665
      %5139 = vmatmul.mubr.f32.gmra.mrb[0].mxu0 %v3664
      %v5140 = vpop.f32.mrb[0].mxu0
      %v5141 = vadd.f32 %v4916, %v5140
      %v5142 = vpop.f32.mrb[0].mxu0
      %5143 = vmatprep.mubr.f32.mxu0 %v3683
      %5144 = vmatmul.mubr.f32.gmra.mrb[0].mxu0 %v3682
      %v5145 = vpop.f32.mrb[0].mxu0
      %v5146 = vadd.f32 %v4921, %v5145
      %v5147 = vpop.f32.mrb[0].mxu0
      %5148 = vmatprep.mubr.f32.mxu0 %v3701
      %5149 = vmatmul.mubr.f32.gmra.mrb[0].mxu0 %v3700
      %v5150 = vpop.f32.mrb[0].mxu0
      %v5151 = vadd.f32 %v4926, %v5150
      %v5152 = vpop.f32.mrb[0].mxu0
      %5153 = vmatprep.mubr.f32.mxu0 %v3719
      %5154 = vmatmul.mubr.f32.gmra.mrb[0].mxu0 %v3718
      %v5155 = vpop.f32.mrb[0].mxu0
      %v5156 = vadd.f32 %v4931, %v5155
      %v5157 = vpop.f32.mrb[0].mxu0
      %5158 = vmatprep.mubr.f32.mxu0 %v3737
      %5159 = vmatmul.mubr.f32.gmra.mrb[0].mxu0 %v3736
      %v5160 = vpop.f32.mrb[0].mxu0
      %v5161 = vadd.f32 %v4936, %v5160
      %v5162 = vpop.f32.mrb[0].mxu0
      %5163 = vmatprep.mubr.f32.mxu0 %v3755
      %5164 = vmatmul.mubr.f32.gmra.mrb[0].mxu0 %v3754
      %v5165 = vpop.f32.mrb[0].mxu0
      %v5166 = vadd.f32 %v4941, %v5165
      %v5167 = vpop.f32.mrb[0].mxu0
      %5168 = vmatprep.mubr.f32.mxu0 %v3773
      %5169 = vmatmul.mubr.f32.gmra.mrb[0].mxu0 %v3772
      %v5170 = vpop.f32.mrb[0].mxu0
      %v5171 = vadd.f32 %v4946, %v5170
      %v5172 = vpop.f32.mrb[0].mxu0
      %5173 = vmatprep.mubr.f32.mxu0 %v3791
      %5174 = vmatmul.mubr.f32.gmra.mrb[0].mxu0 %v3790
      %v5175 = vpop.f32.mrb[0].mxu0
      %v5176 = vadd.f32 %v4951, %v5175
      %v5177 = vpop.f32.mrb[0].mxu0
      %5178 = vmatprep.mubr.f32.mxu0 %v3809
      %5179 = vmatmul.mubr.f32.gmra.mrb[0].mxu0 %v3808
      %v5180 = vpop.f32.mrb[0].mxu0
      %v5181 = vadd.f32 %v4956, %v5180
      %v5182 = vpop.f32.mrb[0].mxu0
      %5183 = vmatprep.mubr.f32.mxu0 %v3827
      %5184 = vmatmul.mubr.f32.gmra.mrb[0].mxu0 %v3826
      %v5185 = vpop.f32.mrb[0].mxu0
      %v5186 = vadd.f32 %v4961, %v5185
      %v5187 = vpop.f32.mrb[0].mxu0
      %5188 = vmatprep.mubr.f32.mxu0 %v3845
      %5189 = vmatmul.mubr.f32.gmra.mrb[0].mxu0 %v3844
      %v5190 = vpop.f32.mrb[0].mxu0
      %v5191 = vadd.f32 %v4966, %v5190
      %v5192 = vpop.f32.mrb[0].mxu0
      %5193 = vmatprep.mubr.f32.mxu0 %v3863
      %5194 = vmatmul.mubr.f32.gmra.mrb[0].mxu0 %v3862
      %v5195 = vpop.f32.mrb[0].mxu0
      %v5196 = vadd.f32 %v4971, %v5195
      %v5197 = vpop.f32.mrb[0].mxu0
      %5198 = vmatprep.mubr.f32.mxu0 %v3881
      %5199 = vmatmul.mubr.f32.gmra.mrb[0].mxu0 %v3880
      %v5200 = vpop.f32.mrb[0].mxu0
      %v5201 = vadd.f32 %v4976, %v5200
      %v5202 = vpop.f32.mrb[0].mxu0
      %5203 = vmatprep.mubr.f32.mxu0 %v3899
      %5204 = vmatmul.mubr.f32.gmra.mrb[0].mxu0 %v3898
      %v5205 = vpop.f32.mrb[0].mxu0
      %v5206 = vadd.f32 %v4981, %v5205
      %v5207 = vpop.f32.mrb[0].mxu0
      %5208 = vmatprep.mubr.f32.mxu0 %v3917
      %5209 = vmatmul.mubr.f32.gmra.mrb[0].mxu0 %v3916
      %v5210 = vpop.f32.mrb[0].mxu0
      %v5211 = vadd.f32 %v4986, %v5210
      %v5212 = vpop.f32.mrb[0].mxu0
      %5213 = vmatprep.mubr.f32.mxu0 %v3935
      %5214 = vmatmul.mubr.f32.gmra.mrb[0].mxu0 %v3934
      %v5215 = vpop.f32.mrb[0].mxu0
      %v5216 = vadd.f32 %v4991, %v5215
      %v5217 = vpop.f32.mrb[0].mxu0
      %5218 = vmatprep.mubr.f32.mxu0 %v3953
      %5219 = vmatmul.mubr.f32.gmra.mrb[0].mxu0 %v3952
      %v5220 = vpop.f32.mrb[0].mxu0
      %v5221 = vadd.f32 %v4996, %v5220
      %v5222 = vpop.f32.mrb[0].mxu0
      %5223 = vmatprep.mubr.f32.mxu0 %v3971
      %5224 = vmatmul.mubr.f32.gmra.mrb[0].mxu0 %v3970
      %v5225 = vpop.f32.mrb[0].mxu0
      %v5226 = vadd.f32 %v5001, %v5225
      %v5227 = vpop.f32.mrb[0].mxu0
      %5228 = vmatprep.mubr.f32.mxu0 %v3989
      %5229 = vmatmul.mubr.f32.gmra.mrb[0].mxu0 %v3988
      %v5230 = vpop.f32.mrb[0].mxu0
      %v5231 = vadd.f32 %v5006, %v5230
      %v5232 = vpop.f32.mrb[0].mxu0
      %5233 = vmatprep.mubr.f32.mxu0 %v4007
      %5234 = vmatmul.mubr.f32.gmra.mrb[0].mxu0 %v4006
      %v5235 = vpop.f32.mrb[0].mxu0
      %v5236 = vadd.f32 %v5011, %v5235
      %v5237 = vpop.f32.mrb[0].mxu0
      %5238 = vmatprep.mubr.f32.mxu0 %v4025
      %5239 = vmatmul.mubr.f32.gmra.mrb[0].mxu0 %v4024
      %v5240 = vpop.f32.mrb[0].mxu0
      %v5241 = vadd.f32 %v5016, %v5240
      %v5242 = vpop.f32.mrb[0].mxu0
      %5243 = vmatprep.mubr.f32.mxu0 %v4043
      %5244 = vmatmul.mubr.f32.gmra.mrb[0].mxu0 %v4042
      %v5245 = vpop.f32.mrb[0].mxu0
      %v5246 = vadd.f32 %v5021, %v5245
      %v5247 = vpop.f32.mrb[0].mxu0
      %5248 = vdwg.mxu0
      %5249 = vmatprep.subr.mxu0 0.0
      %5250 = vmatpush1.msra.mxu0 %v4182
      %5251 = vmatprep.subr.mxu0 0.0
      %5252 = vmatpush1.msra.mxu0 %v4183
      %5253 = vmatprep.subr.mxu0 0.0
      %5254 = vmatpush1.msra.mxu0 %v4184
      %5255 = vmatprep.subr.mxu0 0.0
      %5256 = vmatpush1.msra.mxu0 %v4185
      %5257 = vmatprep.subr.mxu0 0.0
      %5258 = vmatpush1.msra.mxu0 %v4186
      %5259 = vmatprep.subr.mxu0 0.0
      %5260 = vmatpush1.msra.mxu0 %v4187
      %5261 = vmatprep.subr.mxu0 0.0
      %5262 = vmatpush1.msra.mxu0 %v4188
      %5263 = vmatprep.subr.mxu0 0.0
      %5264 = vmatpush1.msra.mxu0 %v4189
      %5265 = vmatprep.subr.mxu0 0.0
      %5266 = vmatpush1.msra.mxu0 %v4190
      %5267 = vmatprep.subr.mxu0 0.0
      %5268 = vmatpush1.msra.mxu0 %v4191
      %5269 = vmatprep.subr.mxu0 0.0
      %5270 = vmatpush1.msra.mxu0 %v4192
      %5271 = vmatprep.subr.mxu0 0.0
      %5272 = vmatpush1.msra.mxu0 %v4193
      %5273 = vmatprep.subr.mxu0 0.0
      %5274 = vmatpush1.msra.mxu0 %v4194
      %5275 = vmatprep.subr.mxu0 0.0
      %5276 = vmatpush1.msra.mxu0 %v4195
      %5277 = vmatprep.subr.mxu0 0.0
      %5278 = vmatpush1.msra.mxu0 %v4196
      %5279 = vmatprep.subr.mxu0 0.0
      %5280 = vmatpush1.msra.mxu0 %v4197
      %5281 = vmatprep.subr.mxu0 0.0
      %5282 = vmatpush1.msra.mxu0 %v4198
      %5283 = vmatprep.subr.mxu0 0.0
      %5284 = vmatpush1.msra.mxu0 %v4199
      %5285 = vmatprep.subr.mxu0 0.0
      %5286 = vmatpush1.msra.mxu0 %v4200
      %5287 = vmatprep.subr.mxu0 0.0
      %5288 = vmatpush1.msra.mxu0 %v4201
      %5289 = vmatprep.subr.mxu0 0.0
      %5290 = vmatpush1.msra.mxu0 %v4202
      %5291 = vmatprep.subr.mxu0 0.0
      %5292 = vmatpush1.msra.mxu0 %v4203
      %5293 = vmatprep.subr.mxu0 0.0
      %5294 = vmatpush1.msra.mxu0 %v4204
      %5295 = vmatprep.subr.mxu0 0.0
      %5296 = vmatpush1.msra.mxu0 %v4205
      %5297 = vmatprep.subr.mxu0 0.0
      %5298 = vmatpush1.msra.mxu0 %v4206
      %5299 = vmatprep.subr.mxu0 0.0
      %5300 = vmatpush1.msra.mxu0 %v4207
      %5301 = vmatprep.subr.mxu0 0.0
      %5302 = vmatpush1.msra.mxu0 %v4208
      %5303 = vmatprep.subr.mxu0 0.0
      %5304 = vmatpush1.msra.mxu0 %v4209
      %5305 = vmatprep.subr.mxu0 0.0
      %5306 = vmatpush1.msra.mxu0 %v4210
      %5307 = vmatprep.subr.mxu0 0.0
      %5308 = vmatpush1.msra.mxu0 %v4211
      %5309 = vmatprep.subr.mxu0 0.0
      %5310 = vmatpush1.msra.mxu0 %v4212
      %5311 = vmatprep.subr.mxu0 0.0
      %5312 = vmatpush1.msra.mxu0 %v4213
      %5313 = vmatprep.mubr.f32.mxu0 %v3487
      %5314 = vmatmul.mubr.f32.gmra.mrb[0].mxu0 %v3486
      %v5315 = vpop.f32.mrb[0].mxu0
      %v5316 = vadd.f32 %v5091, %v5315
      %v5317 = vpop.f32.mrb[0].mxu0
      %5318 = vmatprep.mubr.f32.mxu0 %v3505
      %5319 = vmatmul.mubr.f32.gmra.mrb[0].mxu0 %v3504
      %v5320 = vpop.f32.mrb[0].mxu0
      %v5321 = vadd.f32 %v5096, %v5320
      %v5322 = vpop.f32.mrb[0].mxu0
      %5323 = vmatprep.mubr.f32.mxu0 %v3523
      %5324 = vmatmul.mubr.f32.gmra.mrb[0].mxu0 %v3522
      %v5325 = vpop.f32.mrb[0].mxu0
      %v5326 = vadd.f32 %v5101, %v5325
      %v5327 = vpop.f32.mrb[0].mxu0
      %5328 = vmatprep.mubr.f32.mxu0 %v3541
      %5329 = vmatmul.mubr.f32.gmra.mrb[0].mxu0 %v3540
      %v5330 = vpop.f32.mrb[0].mxu0
      %v5331 = vadd.f32 %v5106, %v5330
      %v5332 = vpop.f32.mrb[0].mxu0
      %5333 = vmatprep.mubr.f32.mxu0 %v3559
      %5334 = vmatmul.mubr.f32.gmra.mrb[0].mxu0 %v3558
      %v5335 = vpop.f32.mrb[0].mxu0
      %v5336 = vadd.f32 %v5111, %v5335
      %v5337 = vpop.f32.mrb[0].mxu0
      %5338 = vmatprep.mubr.f32.mxu0 %v3577
      %5339 = vmatmul.mubr.f32.gmra.mrb[0].mxu0 %v3576
      %v5340 = vpop.f32.mrb[0].mxu0
      %v5341 = vadd.f32 %v5116, %v5340
      %v5342 = vpop.f32.mrb[0].mxu0
      %5343 = vmatprep.mubr.f32.mxu0 %v3595
      %5344 = vmatmul.mubr.f32.gmra.mrb[0].mxu0 %v3594
      %v5345 = vpop.f32.mrb[0].mxu0
      %v5346 = vadd.f32 %v5121, %v5345
      %v5347 = vpop.f32.mrb[0].mxu0
      %5348 = vmatprep.mubr.f32.mxu0 %v3613
      %5349 = vmatmul.mubr.f32.gmra.mrb[0].mxu0 %v3612
      %v5350 = vpop.f32.mrb[0].mxu0
      %v5351 = vadd.f32 %v5126, %v5350
      %v5352 = vpop.f32.mrb[0].mxu0
      %5353 = vmatprep.mubr.f32.mxu0 %v3631
      %5354 = vmatmul.mubr.f32.gmra.mrb[0].mxu0 %v3630
      %v5355 = vpop.f32.mrb[0].mxu0
      %v5356 = vadd.f32 %v5131, %v5355
      %v5357 = vpop.f32.mrb[0].mxu0
      %5358 = vmatprep.mubr.f32.mxu0 %v3649
      %5359 = vmatmul.mubr.f32.gmra.mrb[0].mxu0 %v3648
      %v5360 = vpop.f32.mrb[0].mxu0
      %v5361 = vadd.f32 %v5136, %v5360
      %v5362 = vpop.f32.mrb[0].mxu0
      %5363 = vmatprep.mubr.f32.mxu0 %v3667
      %5364 = vmatmul.mubr.f32.gmra.mrb[0].mxu0 %v3666
      %v5365 = vpop.f32.mrb[0].mxu0
      %v5366 = vadd.f32 %v5141, %v5365
      %v5367 = vpop.f32.mrb[0].mxu0
      %5368 = vmatprep.mubr.f32.mxu0 %v3685
      %5369 = vmatmul.mubr.f32.gmra.mrb[0].mxu0 %v3684
      %v5370 = vpop.f32.mrb[0].mxu0
      %v5371 = vadd.f32 %v5146, %v5370
      %v5372 = vpop.f32.mrb[0].mxu0
      %5373 = vmatprep.mubr.f32.mxu0 %v3703
      %5374 = vmatmul.mubr.f32.gmra.mrb[0].mxu0 %v3702
      %v5375 = vpop.f32.mrb[0].mxu0
      %v5376 = vadd.f32 %v5151, %v5375
      %v5377 = vpop.f32.mrb[0].mxu0
      %5378 = vmatprep.mubr.f32.mxu0 %v3721
      %5379 = vmatmul.mubr.f32.gmra.mrb[0].mxu0 %v3720
      %v5380 = vpop.f32.mrb[0].mxu0
      %v5381 = vadd.f32 %v5156, %v5380
      %v5382 = vpop.f32.mrb[0].mxu0
      %5383 = vmatprep.mubr.f32.mxu0 %v3739
      %5384 = vmatmul.mubr.f32.gmra.mrb[0].mxu0 %v3738
      %v5385 = vpop.f32.mrb[0].mxu0
      %v5386 = vadd.f32 %v5161, %v5385
      %v5387 = vpop.f32.mrb[0].mxu0
      %5388 = vmatprep.mubr.f32.mxu0 %v3757
      %5389 = vmatmul.mubr.f32.gmra.mrb[0].mxu0 %v3756
      %v5390 = vpop.f32.mrb[0].mxu0
      %v5391 = vadd.f32 %v5166, %v5390
      %v5392 = vpop.f32.mrb[0].mxu0
      %5393 = vmatprep.mubr.f32.mxu0 %v3775
      %5394 = vmatmul.mubr.f32.gmra.mrb[0].mxu0 %v3774
      %v5395 = vpop.f32.mrb[0].mxu0
      %v5396 = vadd.f32 %v5171, %v5395
      %v5397 = vpop.f32.mrb[0].mxu0
      %5398 = vmatprep.mubr.f32.mxu0 %v3793
      %5399 = vmatmul.mubr.f32.gmra.mrb[0].mxu0 %v3792
      %v5400 = vpop.f32.mrb[0].mxu0
      %v5401 = vadd.f32 %v5176, %v5400
      %v5402 = vpop.f32.mrb[0].mxu0
      %5403 = vmatprep.mubr.f32.mxu0 %v3811
      %5404 = vmatmul.mubr.f32.gmra.mrb[0].mxu0 %v3810
      %v5405 = vpop.f32.mrb[0].mxu0
      %v5406 = vadd.f32 %v5181, %v5405
      %v5407 = vpop.f32.mrb[0].mxu0
      %5408 = vmatprep.mubr.f32.mxu0 %v3829
      %5409 = vmatmul.mubr.f32.gmra.mrb[0].mxu0 %v3828
      %v5410 = vpop.f32.mrb[0].mxu0
      %v5411 = vadd.f32 %v5186, %v5410
      %v5412 = vpop.f32.mrb[0].mxu0
      %5413 = vmatprep.mubr.f32.mxu0 %v3847
      %5414 = vmatmul.mubr.f32.gmra.mrb[0].mxu0 %v3846
      %v5415 = vpop.f32.mrb[0].mxu0
      %v5416 = vadd.f32 %v5191, %v5415
      %v5417 = vpop.f32.mrb[0].mxu0
      %5418 = vmatprep.mubr.f32.mxu0 %v3865
      %5419 = vmatmul.mubr.f32.gmra.mrb[0].mxu0 %v3864
      %v5420 = vpop.f32.mrb[0].mxu0
      %v5421 = vadd.f32 %v5196, %v5420
      %v5422 = vpop.f32.mrb[0].mxu0
      %5423 = vmatprep.mubr.f32.mxu0 %v3883
      %5424 = vmatmul.mubr.f32.gmra.mrb[0].mxu0 %v3882
      %v5425 = vpop.f32.mrb[0].mxu0
      %v5426 = vadd.f32 %v5201, %v5425
      %v5427 = vpop.f32.mrb[0].mxu0
      %5428 = vmatprep.mubr.f32.mxu0 %v3901
      %5429 = vmatmul.mubr.f32.gmra.mrb[0].mxu0 %v3900
      %v5430 = vpop.f32.mrb[0].mxu0
      %v5431 = vadd.f32 %v5206, %v5430
      %v5432 = vpop.f32.mrb[0].mxu0
      %5433 = vmatprep.mubr.f32.mxu0 %v3919
      %5434 = vmatmul.mubr.f32.gmra.mrb[0].mxu0 %v3918
      %v5435 = vpop.f32.mrb[0].mxu0
      %v5436 = vadd.f32 %v5211, %v5435
      %v5437 = vpop.f32.mrb[0].mxu0
      %5438 = vmatprep.mubr.f32.mxu0 %v3937
      %5439 = vmatmul.mubr.f32.gmra.mrb[0].mxu0 %v3936
      %v5440 = vpop.f32.mrb[0].mxu0
      %v5441 = vadd.f32 %v5216, %v5440
      %v5442 = vpop.f32.mrb[0].mxu0
      %5443 = vmatprep.mubr.f32.mxu0 %v3955
      %5444 = vmatmul.mubr.f32.gmra.mrb[0].mxu0 %v3954
      %v5445 = vpop.f32.mrb[0].mxu0
      %v5446 = vadd.f32 %v5221, %v5445
      %v5447 = vpop.f32.mrb[0].mxu0
      %5448 = vmatprep.mubr.f32.mxu0 %v3973
      %5449 = vmatmul.mubr.f32.gmra.mrb[0].mxu0 %v3972
      %v5450 = vpop.f32.mrb[0].mxu0
      %v5451 = vadd.f32 %v5226, %v5450
      %v5452 = vpop.f32.mrb[0].mxu0
      %5453 = vmatprep.mubr.f32.mxu0 %v3991
      %5454 = vmatmul.mubr.f32.gmra.mrb[0].mxu0 %v3990
      %v5455 = vpop.f32.mrb[0].mxu0
      %v5456 = vadd.f32 %v5231, %v5455
      %v5457 = vpop.f32.mrb[0].mxu0
      %5458 = vmatprep.mubr.f32.mxu0 %v4009
      %5459 = vmatmul.mubr.f32.gmra.mrb[0].mxu0 %v4008
      %v5460 = vpop.f32.mrb[0].mxu0
      %v5461 = vadd.f32 %v5236, %v5460
      %v5462 = vpop.f32.mrb[0].mxu0
      %5463 = vmatprep.mubr.f32.mxu0 %v4027
      %5464 = vmatmul.mubr.f32.gmra.mrb[0].mxu0 %v4026
      %v5465 = vpop.f32.mrb[0].mxu0
      %v5466 = vadd.f32 %v5241, %v5465
      %v5467 = vpop.f32.mrb[0].mxu0
      %5468 = vmatprep.mubr.f32.mxu0 %v4045
      %5469 = vmatmul.mubr.f32.gmra.mrb[0].mxu0 %v4044
      %v5470 = vpop.f32.mrb[0].mxu0
      %v5471 = vadd.f32 %v5246, %v5470
      %v5472 = vpop.f32.mrb[0].mxu0
      %5473 = vdwg.mxu0
      %5474 = vmatprep.subr.mxu0 0.0
      %5475 = vmatpush1.msra.mxu0 %v4214
      %5476 = vmatprep.subr.mxu0 0.0
      %5477 = vmatpush1.msra.mxu0 %v4215
      %5478 = vmatprep.subr.mxu0 0.0
      %5479 = vmatpush1.msra.mxu0 %v4216
      %5480 = vmatprep.subr.mxu0 0.0
      %5481 = vmatpush1.msra.mxu0 %v4217
      %5482 = vmatprep.subr.mxu0 0.0
      %5483 = vmatpush1.msra.mxu0 %v4218
      %5484 = vmatprep.subr.mxu0 0.0
      %5485 = vmatpush1.msra.mxu0 %v4219
      %5486 = vmatprep.subr.mxu0 0.0
      %5487 = vmatpush1.msra.mxu0 %v4220
      %5488 = vmatprep.subr.mxu0 0.0
      %5489 = vmatpush1.msra.mxu0 %v4221
      %5490 = vmatprep.subr.mxu0 0.0
      %5491 = vmatpush1.msra.mxu0 %v4222
      %5492 = vmatprep.subr.mxu0 0.0
      %5493 = vmatpush1.msra.mxu0 %v4223
      %5494 = vmatprep.subr.mxu0 0.0
      %5495 = vmatpush1.msra.mxu0 %v4224
      %5496 = vmatprep.subr.mxu0 0.0
      %5497 = vmatpush1.msra.mxu0 %v4225
      %5498 = vmatprep.subr.mxu0 0.0
      %5499 = vmatpush1.msra.mxu0 %v4226
      %5500 = vmatprep.subr.mxu0 0.0
      %5501 = vmatpush1.msra.mxu0 %v4227
      %5502 = vmatprep.subr.mxu0 0.0
      %5503 = vmatpush1.msra.mxu0 %v4228
      %5504 = vmatprep.subr.mxu0 0.0
      %5505 = vmatpush1.msra.mxu0 %v4229
      %5506 = vmatprep.subr.mxu0 0.0
      %5507 = vmatpush1.msra.mxu0 %v4230
      %5508 = vmatprep.subr.mxu0 0.0
      %5509 = vmatpush1.msra.mxu0 %v4231
      %5510 = vmatprep.subr.mxu0 0.0
      %5511 = vmatpush1.msra.mxu0 %v4232
      %5512 = vmatprep.subr.mxu0 0.0
      %5513 = vmatpush1.msra.mxu0 %v4233
      %5514 = vmatprep.subr.mxu0 0.0
      %5515 = vmatpush1.msra.mxu0 %v4234
      %5516 = vmatprep.subr.mxu0 0.0
      %5517 = vmatpush1.msra.mxu0 %v4235
      %5518 = vmatprep.subr.mxu0 0.0
      %5519 = vmatpush1.msra.mxu0 %v4236
      %5520 = vmatprep.subr.mxu0 0.0
      %5521 = vmatpush1.msra.mxu0 %v4237
      %5522 = vmatprep.subr.mxu0 0.0
      %5523 = vmatpush1.msra.mxu0 %v4238
      %5524 = vmatprep.subr.mxu0 0.0
      %5525 = vmatpush1.msra.mxu0 %v4239
      %5526 = vmatprep.subr.mxu0 0.0
      %5527 = vmatpush1.msra.mxu0 %v4240
      %5528 = vmatprep.subr.mxu0 0.0
      %5529 = vmatpush1.msra.mxu0 %v4241
      %5530 = vmatprep.subr.mxu0 0.0
      %5531 = vmatpush1.msra.mxu0 %v4242
      %5532 = vmatprep.subr.mxu0 0.0
      %5533 = vmatpush1.msra.mxu0 %v4243
      %5534 = vmatprep.subr.mxu0 0.0
      %5535 = vmatpush1.msra.mxu0 %v4244
      %5536 = vmatprep.subr.mxu0 0.0
      %5537 = vmatpush1.msra.mxu0 %v4245
      %5538 = vmatprep.mubr.f32.mxu0 %v3489
      %5539 = vmatmul.mubr.f32.gmra.mrb[0].mxu0 %v3488
      %v5540 = vpop.f32.mrb[0].mxu0
      %v5541 = vadd.f32 %v5316, %v5540
      %v5542 = vpop.f32.mrb[0].mxu0
      %5543 = vmatprep.mubr.f32.mxu0 %v3507
      %5544 = vmatmul.mubr.f32.gmra.mrb[0].mxu0 %v3506
      %v5545 = vpop.f32.mrb[0].mxu0
      %v5546 = vadd.f32 %v5321, %v5545
      %v5547 = vpop.f32.mrb[0].mxu0
      %5548 = vmatprep.mubr.f32.mxu0 %v3525
      %5549 = vmatmul.mubr.f32.gmra.mrb[0].mxu0 %v3524
      %v5550 = vpop.f32.mrb[0].mxu0
      %v5551 = vadd.f32 %v5326, %v5550
      %v5552 = vpop.f32.mrb[0].mxu0
      %5553 = vmatprep.mubr.f32.mxu0 %v3543
      %5554 = vmatmul.mubr.f32.gmra.mrb[0].mxu0 %v3542
      %v5555 = vpop.f32.mrb[0].mxu0
      %v5556 = vadd.f32 %v5331, %v5555
      %v5557 = vpop.f32.mrb[0].mxu0
      %5558 = vmatprep.mubr.f32.mxu0 %v3561
      %5559 = vmatmul.mubr.f32.gmra.mrb[0].mxu0 %v3560
      %v5560 = vpop.f32.mrb[0].mxu0
      %v5561 = vadd.f32 %v5336, %v5560
      %v5562 = vpop.f32.mrb[0].mxu0
      %5563 = vmatprep.mubr.f32.mxu0 %v3579
      %5564 = vmatmul.mubr.f32.gmra.mrb[0].mxu0 %v3578
      %v5565 = vpop.f32.mrb[0].mxu0
      %v5566 = vadd.f32 %v5341, %v5565
      %v5567 = vpop.f32.mrb[0].mxu0
      %5568 = vmatprep.mubr.f32.mxu0 %v3597
      %5569 = vmatmul.mubr.f32.gmra.mrb[0].mxu0 %v3596
      %v5570 = vpop.f32.mrb[0].mxu0
      %v5571 = vadd.f32 %v5346, %v5570
      %v5572 = vpop.f32.mrb[0].mxu0
      %5573 = vmatprep.mubr.f32.mxu0 %v3615
      %5574 = vmatmul.mubr.f32.gmra.mrb[0].mxu0 %v3614
      %v5575 = vpop.f32.mrb[0].mxu0
      %v5576 = vadd.f32 %v5351, %v5575
      %v5577 = vpop.f32.mrb[0].mxu0
      %5578 = vmatprep.mubr.f32.mxu0 %v3633
      %5579 = vmatmul.mubr.f32.gmra.mrb[0].mxu0 %v3632
      %v5580 = vpop.f32.mrb[0].mxu0
      %v5581 = vadd.f32 %v5356, %v5580
      %v5582 = vpop.f32.mrb[0].mxu0
      %5583 = vmatprep.mubr.f32.mxu0 %v3651
      %5584 = vmatmul.mubr.f32.gmra.mrb[0].mxu0 %v3650
      %v5585 = vpop.f32.mrb[0].mxu0
      %v5586 = vadd.f32 %v5361, %v5585
      %v5587 = vpop.f32.mrb[0].mxu0
      %5588 = vmatprep.mubr.f32.mxu0 %v3669
      %5589 = vmatmul.mubr.f32.gmra.mrb[0].mxu0 %v3668
      %v5590 = vpop.f32.mrb[0].mxu0
      %v5591 = vadd.f32 %v5366, %v5590
      %v5592 = vpop.f32.mrb[0].mxu0
      %5593 = vmatprep.mubr.f32.mxu0 %v3687
      %5594 = vmatmul.mubr.f32.gmra.mrb[0].mxu0 %v3686
      %v5595 = vpop.f32.mrb[0].mxu0
      %v5596 = vadd.f32 %v5371, %v5595
      %v5597 = vpop.f32.mrb[0].mxu0
      %5598 = vmatprep.mubr.f32.mxu0 %v3705
      %5599 = vmatmul.mubr.f32.gmra.mrb[0].mxu0 %v3704
      %v5600 = vpop.f32.mrb[0].mxu0
      %v5601 = vadd.f32 %v5376, %v5600
      %v5602 = vpop.f32.mrb[0].mxu0
      %5603 = vmatprep.mubr.f32.mxu0 %v3723
      %5604 = vmatmul.mubr.f32.gmra.mrb[0].mxu0 %v3722
      %v5605 = vpop.f32.mrb[0].mxu0
      %v5606 = vadd.f32 %v5381, %v5605
      %v5607 = vpop.f32.mrb[0].mxu0
      %5608 = vmatprep.mubr.f32.mxu0 %v3741
      %5609 = vmatmul.mubr.f32.gmra.mrb[0].mxu0 %v3740
      %v5610 = vpop.f32.mrb[0].mxu0
      %v5611 = vadd.f32 %v5386, %v5610
      %v5612 = vpop.f32.mrb[0].mxu0
      %5613 = vmatprep.mubr.f32.mxu0 %v3759
      %5614 = vmatmul.mubr.f32.gmra.mrb[0].mxu0 %v3758
      %v5615 = vpop.f32.mrb[0].mxu0
      %v5616 = vadd.f32 %v5391, %v5615
      %v5617 = vpop.f32.mrb[0].mxu0
      %5618 = vmatprep.mubr.f32.mxu0 %v3777
      %5619 = vmatmul.mubr.f32.gmra.mrb[0].mxu0 %v3776
      %v5620 = vpop.f32.mrb[0].mxu0
      %v5621 = vadd.f32 %v5396, %v5620
      %v5622 = vpop.f32.mrb[0].mxu0
      %5623 = vmatprep.mubr.f32.mxu0 %v3795
      %5624 = vmatmul.mubr.f32.gmra.mrb[0].mxu0 %v3794
      %v5625 = vpop.f32.mrb[0].mxu0
      %v5626 = vadd.f32 %v5401, %v5625
      %v5627 = vpop.f32.mrb[0].mxu0
      %5628 = vmatprep.mubr.f32.mxu0 %v3813
      %5629 = vmatmul.mubr.f32.gmra.mrb[0].mxu0 %v3812
      %v5630 = vpop.f32.mrb[0].mxu0
      %v5631 = vadd.f32 %v5406, %v5630
      %v5632 = vpop.f32.mrb[0].mxu0
      %5633 = vmatprep.mubr.f32.mxu0 %v3831
      %5634 = vmatmul.mubr.f32.gmra.mrb[0].mxu0 %v3830
      %v5635 = vpop.f32.mrb[0].mxu0
      %v5636 = vadd.f32 %v5411, %v5635
      %v5637 = vpop.f32.mrb[0].mxu0
      %5638 = vmatprep.mubr.f32.mxu0 %v3849
      %5639 = vmatmul.mubr.f32.gmra.mrb[0].mxu0 %v3848
      %v5640 = vpop.f32.mrb[0].mxu0
      %v5641 = vadd.f32 %v5416, %v5640
      %v5642 = vpop.f32.mrb[0].mxu0
      %5643 = vmatprep.mubr.f32.mxu0 %v3867
      %5644 = vmatmul.mubr.f32.gmra.mrb[0].mxu0 %v3866
      %v5645 = vpop.f32.mrb[0].mxu0
      %v5646 = vadd.f32 %v5421, %v5645
      %v5647 = vpop.f32.mrb[0].mxu0
      %5648 = vmatprep.mubr.f32.mxu0 %v3885
      %5649 = vmatmul.mubr.f32.gmra.mrb[0].mxu0 %v3884
      %v5650 = vpop.f32.mrb[0].mxu0
      %v5651 = vadd.f32 %v5426, %v5650
      %v5652 = vpop.f32.mrb[0].mxu0
      %5653 = vmatprep.mubr.f32.mxu0 %v3903
      %5654 = vmatmul.mubr.f32.gmra.mrb[0].mxu0 %v3902
      %v5655 = vpop.f32.mrb[0].mxu0
      %v5656 = vadd.f32 %v5431, %v5655
      %v5657 = vpop.f32.mrb[0].mxu0
      %5658 = vmatprep.mubr.f32.mxu0 %v3921
      %5659 = vmatmul.mubr.f32.gmra.mrb[0].mxu0 %v3920
      %v5660 = vpop.f32.mrb[0].mxu0
      %v5661 = vadd.f32 %v5436, %v5660
      %v5662 = vpop.f32.mrb[0].mxu0
      %5663 = vmatprep.mubr.f32.mxu0 %v3939
      %5664 = vmatmul.mubr.f32.gmra.mrb[0].mxu0 %v3938
      %v5665 = vpop.f32.mrb[0].mxu0
      %v5666 = vadd.f32 %v5441, %v5665
      %v5667 = vpop.f32.mrb[0].mxu0
      %5668 = vmatprep.mubr.f32.mxu0 %v3957
      %5669 = vmatmul.mubr.f32.gmra.mrb[0].mxu0 %v3956
      %v5670 = vpop.f32.mrb[0].mxu0
      %v5671 = vadd.f32 %v5446, %v5670
      %v5672 = vpop.f32.mrb[0].mxu0
      %5673 = vmatprep.mubr.f32.mxu0 %v3975
      %5674 = vmatmul.mubr.f32.gmra.mrb[0].mxu0 %v3974
      %v5675 = vpop.f32.mrb[0].mxu0
      %v5676 = vadd.f32 %v5451, %v5675
      %v5677 = vpop.f32.mrb[0].mxu0
      %5678 = vmatprep.mubr.f32.mxu0 %v3993
      %5679 = vmatmul.mubr.f32.gmra.mrb[0].mxu0 %v3992
      %v5680 = vpop.f32.mrb[0].mxu0
      %v5681 = vadd.f32 %v5456, %v5680
      %v5682 = vpop.f32.mrb[0].mxu0
      %5683 = vmatprep.mubr.f32.mxu0 %v4011
      %5684 = vmatmul.mubr.f32.gmra.mrb[0].mxu0 %v4010
      %v5685 = vpop.f32.mrb[0].mxu0
      %v5686 = vadd.f32 %v5461, %v5685
      %v5687 = vpop.f32.mrb[0].mxu0
      %5688 = vmatprep.mubr.f32.mxu0 %v4029
      %5689 = vmatmul.mubr.f32.gmra.mrb[0].mxu0 %v4028
      %v5690 = vpop.f32.mrb[0].mxu0
      %v5691 = vadd.f32 %v5466, %v5690
      %v5692 = vpop.f32.mrb[0].mxu0
      %5693 = vmatprep.mubr.f32.mxu0 %v4047
      %5694 = vmatmul.mubr.f32.gmra.mrb[0].mxu0 %v4046
      %v5695 = vpop.f32.mrb[0].mxu0
      %v5696 = vadd.f32 %v5471, %v5695
      %v5697 = vpop.f32.mrb[0].mxu0
      %5698 = vdwg.mxu0
      %5699 = vmatprep.subr.mxu0 0.0
      %5700 = vmatpush1.msra.mxu0 %v4246
      %5701 = vmatprep.subr.mxu0 0.0
      %5702 = vmatpush1.msra.mxu0 %v4247
      %5703 = vmatprep.subr.mxu0 0.0
      %5704 = vmatpush1.msra.mxu0 %v4248
      %5705 = vmatprep.subr.mxu0 0.0
      %5706 = vmatpush1.msra.mxu0 %v4249
      %5707 = vmatprep.subr.mxu0 0.0
      %5708 = vmatpush1.msra.mxu0 %v4250
      %5709 = vmatprep.subr.mxu0 0.0
      %5710 = vmatpush1.msra.mxu0 %v4251
      %5711 = vmatprep.subr.mxu0 0.0
      %5712 = vmatpush1.msra.mxu0 %v4252
      %5713 = vmatprep.subr.mxu0 0.0
      %5714 = vmatpush1.msra.mxu0 %v4253
      %5715 = vmatprep.subr.mxu0 0.0
      %5716 = vmatpush1.msra.mxu0 %v4254
      %5717 = vmatprep.subr.mxu0 0.0
      %5718 = vmatpush1.msra.mxu0 %v4255
      %5719 = vmatprep.subr.mxu0 0.0
      %5720 = vmatpush1.msra.mxu0 %v4256
      %5721 = vmatprep.subr.mxu0 0.0
      %5722 = vmatpush1.msra.mxu0 %v4257
      %5723 = vmatprep.subr.mxu0 0.0
      %5724 = vmatpush1.msra.mxu0 %v4258
      %5725 = vmatprep.subr.mxu0 0.0
      %5726 = vmatpush1.msra.mxu0 %v4259
      %5727 = vmatprep.subr.mxu0 0.0
      %5728 = vmatpush1.msra.mxu0 %v4260
      %5729 = vmatprep.subr.mxu0 0.0
      %5730 = vmatpush1.msra.mxu0 %v4261
      %5731 = vmatprep.subr.mxu0 0.0
      %5732 = vmatpush1.msra.mxu0 %v4262
      %5733 = vmatprep.subr.mxu0 0.0
      %5734 = vmatpush1.msra.mxu0 %v4263
      %5735 = vmatprep.subr.mxu0 0.0
      %5736 = vmatpush1.msra.mxu0 %v4264
      %5737 = vmatprep.subr.mxu0 0.0
      %5738 = vmatpush1.msra.mxu0 %v4265
      %5739 = vmatprep.subr.mxu0 0.0
      %5740 = vmatpush1.msra.mxu0 %v4266
      %5741 = vmatprep.subr.mxu0 0.0
      %5742 = vmatpush1.msra.mxu0 %v4267
      %5743 = vmatprep.subr.mxu0 0.0
      %5744 = vmatpush1.msra.mxu0 %v4268
      %5745 = vmatprep.subr.mxu0 0.0
      %5746 = vmatpush1.msra.mxu0 %v4269
      %5747 = vmatprep.subr.mxu0 0.0
      %5748 = vmatpush1.msra.mxu0 %v4270
      %5749 = vmatprep.subr.mxu0 0.0
      %5750 = vmatpush1.msra.mxu0 %v4271
      %5751 = vmatprep.subr.mxu0 0.0
      %5752 = vmatpush1.msra.mxu0 %v4272
      %5753 = vmatprep.subr.mxu0 0.0
      %5754 = vmatpush1.msra.mxu0 %v4273
      %5755 = vmatprep.subr.mxu0 0.0
      %5756 = vmatpush1.msra.mxu0 %v4274
      %5757 = vmatprep.subr.mxu0 0.0
      %5758 = vmatpush1.msra.mxu0 %v4275
      %5759 = vmatprep.subr.mxu0 0.0
      %5760 = vmatpush1.msra.mxu0 %v4276
      %5761 = vmatprep.subr.mxu0 0.0
      %5762 = vmatpush1.msra.mxu0 %v4277
      %5763 = vmatprep.mubr.f32.mxu0 %v3491
      %5764 = vmatmul.mubr.f32.gmra.mrb[0].mxu0 %v3490
      %v5765 = vpop.f32.mrb[0].mxu0
      %v5766 = vadd.f32 %v5541, %v5765
      %v5767 = vpop.f32.mrb[0].mxu0
      %5768 = vmatprep.mubr.f32.mxu0 %v3509
      %5769 = vmatmul.mubr.f32.gmra.mrb[0].mxu0 %v3508
      %v5770 = vpop.f32.mrb[0].mxu0
      %v5771 = vadd.f32 %v5546, %v5770
      %v5772 = vpop.f32.mrb[0].mxu0
      %5773 = vmatprep.mubr.f32.mxu0 %v3527
      %5774 = vmatmul.mubr.f32.gmra.mrb[0].mxu0 %v3526
      %v5775 = vpop.f32.mrb[0].mxu0
      %v5776 = vadd.f32 %v5551, %v5775
      %v5777 = vpop.f32.mrb[0].mxu0
      %5778 = vmatprep.mubr.f32.mxu0 %v3545
      %5779 = vmatmul.mubr.f32.gmra.mrb[0].mxu0 %v3544
      %v5780 = vpop.f32.mrb[0].mxu0
      %v5781 = vadd.f32 %v5556, %v5780
      %v5782 = vpop.f32.mrb[0].mxu0
      %5783 = vmatprep.mubr.f32.mxu0 %v3563
      %5784 = vmatmul.mubr.f32.gmra.mrb[0].mxu0 %v3562
      %v5785 = vpop.f32.mrb[0].mxu0
      %v5786 = vadd.f32 %v5561, %v5785
      %v5787 = vpop.f32.mrb[0].mxu0
      %5788 = vmatprep.mubr.f32.mxu0 %v3581
      %5789 = vmatmul.mubr.f32.gmra.mrb[0].mxu0 %v3580
      %v5790 = vpop.f32.mrb[0].mxu0
      %v5791 = vadd.f32 %v5566, %v5790
      %v5792 = vpop.f32.mrb[0].mxu0
      %5793 = vmatprep.mubr.f32.mxu0 %v3599
      %5794 = vmatmul.mubr.f32.gmra.mrb[0].mxu0 %v3598
      %v5795 = vpop.f32.mrb[0].mxu0
      %v5796 = vadd.f32 %v5571, %v5795
      %v5797 = vpop.f32.mrb[0].mxu0
      %5798 = vmatprep.mubr.f32.mxu0 %v3617
      %5799 = vmatmul.mubr.f32.gmra.mrb[0].mxu0 %v3616
      %v5800 = vpop.f32.mrb[0].mxu0
      %v5801 = vadd.f32 %v5576, %v5800
      %v5802 = vpop.f32.mrb[0].mxu0
      %5803 = vmatprep.mubr.f32.mxu0 %v3635
      %5804 = vmatmul.mubr.f32.gmra.mrb[0].mxu0 %v3634
      %v5805 = vpop.f32.mrb[0].mxu0
      %v5806 = vadd.f32 %v5581, %v5805
      %v5807 = vpop.f32.mrb[0].mxu0
      %5808 = vmatprep.mubr.f32.mxu0 %v3653
      %5809 = vmatmul.mubr.f32.gmra.mrb[0].mxu0 %v3652
      %v5810 = vpop.f32.mrb[0].mxu0
      %v5811 = vadd.f32 %v5586, %v5810
      %v5812 = vpop.f32.mrb[0].mxu0
      %5813 = vmatprep.mubr.f32.mxu0 %v3671
      %5814 = vmatmul.mubr.f32.gmra.mrb[0].mxu0 %v3670
      %v5815 = vpop.f32.mrb[0].mxu0
      %v5816 = vadd.f32 %v5591, %v5815
      %v5817 = vpop.f32.mrb[0].mxu0
      %5818 = vmatprep.mubr.f32.mxu0 %v3689
      %5819 = vmatmul.mubr.f32.gmra.mrb[0].mxu0 %v3688
      %v5820 = vpop.f32.mrb[0].mxu0
      %v5821 = vadd.f32 %v5596, %v5820
      %v5822 = vpop.f32.mrb[0].mxu0
      %5823 = vmatprep.mubr.f32.mxu0 %v3707
      %5824 = vmatmul.mubr.f32.gmra.mrb[0].mxu0 %v3706
      %v5825 = vpop.f32.mrb[0].mxu0
      %v5826 = vadd.f32 %v5601, %v5825
      %v5827 = vpop.f32.mrb[0].mxu0
      %5828 = vmatprep.mubr.f32.mxu0 %v3725
      %5829 = vmatmul.mubr.f32.gmra.mrb[0].mxu0 %v3724
      %v5830 = vpop.f32.mrb[0].mxu0
      %v5831 = vadd.f32 %v5606, %v5830
      %v5832 = vpop.f32.mrb[0].mxu0
      %5833 = vmatprep.mubr.f32.mxu0 %v3743
      %5834 = vmatmul.mubr.f32.gmra.mrb[0].mxu0 %v3742
      %v5835 = vpop.f32.mrb[0].mxu0
      %v5836 = vadd.f32 %v5611, %v5835
      %v5837 = vpop.f32.mrb[0].mxu0
      %5838 = vmatprep.mubr.f32.mxu0 %v3761
      %5839 = vmatmul.mubr.f32.gmra.mrb[0].mxu0 %v3760
      %v5840 = vpop.f32.mrb[0].mxu0
      %v5841 = vadd.f32 %v5616, %v5840
      %v5842 = vpop.f32.mrb[0].mxu0
      %5843 = vmatprep.mubr.f32.mxu0 %v3779
      %5844 = vmatmul.mubr.f32.gmra.mrb[0].mxu0 %v3778
      %v5845 = vpop.f32.mrb[0].mxu0
      %v5846 = vadd.f32 %v5621, %v5845
      %v5847 = vpop.f32.mrb[0].mxu0
      %5848 = vmatprep.mubr.f32.mxu0 %v3797
      %5849 = vmatmul.mubr.f32.gmra.mrb[0].mxu0 %v3796
      %v5850 = vpop.f32.mrb[0].mxu0
      %v5851 = vadd.f32 %v5626, %v5850
      %v5852 = vpop.f32.mrb[0].mxu0
      %5853 = vmatprep.mubr.f32.mxu0 %v3815
      %5854 = vmatmul.mubr.f32.gmra.mrb[0].mxu0 %v3814
      %v5855 = vpop.f32.mrb[0].mxu0
      %v5856 = vadd.f32 %v5631, %v5855
      %v5857 = vpop.f32.mrb[0].mxu0
      %5858 = vmatprep.mubr.f32.mxu0 %v3833
      %5859 = vmatmul.mubr.f32.gmra.mrb[0].mxu0 %v3832
      %v5860 = vpop.f32.mrb[0].mxu0
      %v5861 = vadd.f32 %v5636, %v5860
      %v5862 = vpop.f32.mrb[0].mxu0
      %5863 = vmatprep.mubr.f32.mxu0 %v3851
      %5864 = vmatmul.mubr.f32.gmra.mrb[0].mxu0 %v3850
      %v5865 = vpop.f32.mrb[0].mxu0
      %v5866 = vadd.f32 %v5641, %v5865
      %v5867 = vpop.f32.mrb[0].mxu0
      %5868 = vmatprep.mubr.f32.mxu0 %v3869
      %5869 = vmatmul.mubr.f32.gmra.mrb[0].mxu0 %v3868
      %v5870 = vpop.f32.mrb[0].mxu0
      %v5871 = vadd.f32 %v5646, %v5870
      %v5872 = vpop.f32.mrb[0].mxu0
      %5873 = vmatprep.mubr.f32.mxu0 %v3887
      %5874 = vmatmul.mubr.f32.gmra.mrb[0].mxu0 %v3886
      %v5875 = vpop.f32.mrb[0].mxu0
      %v5876 = vadd.f32 %v5651, %v5875
      %v5877 = vpop.f32.mrb[0].mxu0
      %5878 = vmatprep.mubr.f32.mxu0 %v3905
      %5879 = vmatmul.mubr.f32.gmra.mrb[0].mxu0 %v3904
      %v5880 = vpop.f32.mrb[0].mxu0
      %v5881 = vadd.f32 %v5656, %v5880
      %v5882 = vpop.f32.mrb[0].mxu0
      %5883 = vmatprep.mubr.f32.mxu0 %v3923
      %5884 = vmatmul.mubr.f32.gmra.mrb[0].mxu0 %v3922
      %v5885 = vpop.f32.mrb[0].mxu0
      %v5886 = vadd.f32 %v5661, %v5885
      %v5887 = vpop.f32.mrb[0].mxu0
      %5888 = vmatprep.mubr.f32.mxu0 %v3941
      %5889 = vmatmul.mubr.f32.gmra.mrb[0].mxu0 %v3940
      %v5890 = vpop.f32.mrb[0].mxu0
      %v5891 = vadd.f32 %v5666, %v5890
      %v5892 = vpop.f32.mrb[0].mxu0
      %5893 = vmatprep.mubr.f32.mxu0 %v3959
      %5894 = vmatmul.mubr.f32.gmra.mrb[0].mxu0 %v3958
      %v5895 = vpop.f32.mrb[0].mxu0
      %v5896 = vadd.f32 %v5671, %v5895
      %v5897 = vpop.f32.mrb[0].mxu0
      %5898 = vmatprep.mubr.f32.mxu0 %v3977
      %5899 = vmatmul.mubr.f32.gmra.mrb[0].mxu0 %v3976
      %v5900 = vpop.f32.mrb[0].mxu0
      %v5901 = vadd.f32 %v5676, %v5900
      %v5902 = vpop.f32.mrb[0].mxu0
      %5903 = vmatprep.mubr.f32.mxu0 %v3995
      %5904 = vmatmul.mubr.f32.gmra.mrb[0].mxu0 %v3994
      %v5905 = vpop.f32.mrb[0].mxu0
      %v5906 = vadd.f32 %v5681, %v5905
      %v5907 = vpop.f32.mrb[0].mxu0
      %5908 = vmatprep.mubr.f32.mxu0 %v4013
      %5909 = vmatmul.mubr.f32.gmra.mrb[0].mxu0 %v4012
      %v5910 = vpop.f32.mrb[0].mxu0
      %v5911 = vadd.f32 %v5686, %v5910
      %v5912 = vpop.f32.mrb[0].mxu0
      %5913 = vmatprep.mubr.f32.mxu0 %v4031
      %5914 = vmatmul.mubr.f32.gmra.mrb[0].mxu0 %v4030
      %v5915 = vpop.f32.mrb[0].mxu0
      %v5916 = vadd.f32 %v5691, %v5915
      %v5917 = vpop.f32.mrb[0].mxu0
      %5918 = vmatprep.mubr.f32.mxu0 %v4049
      %5919 = vmatmul.mubr.f32.gmra.mrb[0].mxu0 %v4048
      %v5920 = vpop.f32.mrb[0].mxu0
      %v5921 = vadd.f32 %v5696, %v5920
      %v5922 = vpop.f32.mrb[0].mxu0
      %5923 = vdwg.mxu0
      %5924 = vmatprep.subr.mxu0 0.0
      %5925 = vmatpush1.msra.mxu0 %v4278
      %5926 = vmatprep.subr.mxu0 0.0
      %5927 = vmatpush1.msra.mxu0 %v4279
      %5928 = vmatprep.subr.mxu0 0.0
      %5929 = vmatpush1.msra.mxu0 %v4280
      %5930 = vmatprep.subr.mxu0 0.0
      %5931 = vmatpush1.msra.mxu0 %v4281
      %5932 = vmatprep.subr.mxu0 0.0
      %5933 = vmatpush1.msra.mxu0 %v4282
      %5934 = vmatprep.subr.mxu0 0.0
      %5935 = vmatpush1.msra.mxu0 %v4283
      %5936 = vmatprep.subr.mxu0 0.0
      %5937 = vmatpush1.msra.mxu0 %v4284
      %5938 = vmatprep.subr.mxu0 0.0
      %5939 = vmatpush1.msra.mxu0 %v4285
      %5940 = vmatprep.subr.mxu0 0.0
      %5941 = vmatpush1.msra.mxu0 %v4286
      %5942 = vmatprep.subr.mxu0 0.0
      %5943 = vmatpush1.msra.mxu0 %v4287
      %5944 = vmatprep.subr.mxu0 0.0
      %5945 = vmatpush1.msra.mxu0 %v4288
      %5946 = vmatprep.subr.mxu0 0.0
      %5947 = vmatpush1.msra.mxu0 %v4289
      %5948 = vmatprep.subr.mxu0 0.0
      %5949 = vmatpush1.msra.mxu0 %v4290
      %5950 = vmatprep.subr.mxu0 0.0
      %5951 = vmatpush1.msra.mxu0 %v4291
      %5952 = vmatprep.subr.mxu0 0.0
      %5953 = vmatpush1.msra.mxu0 %v4292
      %5954 = vmatprep.subr.mxu0 0.0
      %5955 = vmatpush1.msra.mxu0 %v4293
      %5956 = vmatprep.subr.mxu0 0.0
      %5957 = vmatpush1.msra.mxu0 %v4294
      %5958 = vmatprep.subr.mxu0 0.0
      %5959 = vmatpush1.msra.mxu0 %v4295
      %5960 = vmatprep.subr.mxu0 0.0
      %5961 = vmatpush1.msra.mxu0 %v4296
      %5962 = vmatprep.subr.mxu0 0.0
      %5963 = vmatpush1.msra.mxu0 %v4297
      %5964 = vmatprep.subr.mxu0 0.0
      %5965 = vmatpush1.msra.mxu0 %v4298
      %5966 = vmatprep.subr.mxu0 0.0
      %5967 = vmatpush1.msra.mxu0 %v4299
      %5968 = vmatprep.subr.mxu0 0.0
      %5969 = vmatpush1.msra.mxu0 %v4300
      %5970 = vmatprep.subr.mxu0 0.0
      %5971 = vmatpush1.msra.mxu0 %v4301
      %5972 = vmatprep.subr.mxu0 0.0
      %5973 = vmatpush1.msra.mxu0 %v4302
      %5974 = vmatprep.subr.mxu0 0.0
      %5975 = vmatpush1.msra.mxu0 %v4303
      %5976 = vmatprep.subr.mxu0 0.0
      %5977 = vmatpush1.msra.mxu0 %v4304
      %5978 = vmatprep.subr.mxu0 0.0
      %5979 = vmatpush1.msra.mxu0 %v4305
      %5980 = vmatprep.subr.mxu0 0.0
      %5981 = vmatpush1.msra.mxu0 %v4306
      %5982 = vmatprep.subr.mxu0 0.0
      %5983 = vmatpush1.msra.mxu0 %v4307
      %5984 = vmatprep.subr.mxu0 0.0
      %5985 = vmatpush1.msra.mxu0 %v4308
      %5986 = vmatprep.subr.mxu0 0.0
      %5987 = vmatpush1.msra.mxu0 %v4309
      %5988 = vmatprep.mubr.f32.mxu0 %v3493
      %5989 = vmatmul.mubr.f32.gmra.mrb[0].mxu0 %v3492
      %v5990 = vpop.f32.mrb[0].mxu0
      %v5991 = vadd.f32 %v5766, %v5990
      %v5992 = vpop.f32.mrb[0].mxu0
      %5993 = vmatprep.mubr.f32.mxu0 %v3511
      %5994 = vmatmul.mubr.f32.gmra.mrb[0].mxu0 %v3510
      %v5995 = vpop.f32.mrb[0].mxu0
      %v5996 = vadd.f32 %v5771, %v5995
      %v5997 = vpop.f32.mrb[0].mxu0
      %5998 = vmatprep.mubr.f32.mxu0 %v3529
      %5999 = vmatmul.mubr.f32.gmra.mrb[0].mxu0 %v3528
      %v6000 = vpop.f32.mrb[0].mxu0
      %v6001 = vadd.f32 %v5776, %v6000
      %v6002 = vpop.f32.mrb[0].mxu0
      %6003 = vmatprep.mubr.f32.mxu0 %v3547
      %6004 = vmatmul.mubr.f32.gmra.mrb[0].mxu0 %v3546
      %v6005 = vpop.f32.mrb[0].mxu0
      %v6006 = vadd.f32 %v5781, %v6005
      %v6007 = vpop.f32.mrb[0].mxu0
      %6008 = vmatprep.mubr.f32.mxu0 %v3565
      %6009 = vmatmul.mubr.f32.gmra.mrb[0].mxu0 %v3564
      %v6010 = vpop.f32.mrb[0].mxu0
      %v6011 = vadd.f32 %v5786, %v6010
      %v6012 = vpop.f32.mrb[0].mxu0
      %6013 = vmatprep.mubr.f32.mxu0 %v3583
      %6014 = vmatmul.mubr.f32.gmra.mrb[0].mxu0 %v3582
      %v6015 = vpop.f32.mrb[0].mxu0
      %v6016 = vadd.f32 %v5791, %v6015
      %v6017 = vpop.f32.mrb[0].mxu0
      %6018 = vmatprep.mubr.f32.mxu0 %v3601
      %6019 = vmatmul.mubr.f32.gmra.mrb[0].mxu0 %v3600
      %v6020 = vpop.f32.mrb[0].mxu0
      %v6021 = vadd.f32 %v5796, %v6020
      %v6022 = vpop.f32.mrb[0].mxu0
      %6023 = vmatprep.mubr.f32.mxu0 %v3619
      %6024 = vmatmul.mubr.f32.gmra.mrb[0].mxu0 %v3618
      %v6025 = vpop.f32.mrb[0].mxu0
      %v6026 = vadd.f32 %v5801, %v6025
      %v6027 = vpop.f32.mrb[0].mxu0
      %6028 = vmatprep.mubr.f32.mxu0 %v3637
      %6029 = vmatmul.mubr.f32.gmra.mrb[0].mxu0 %v3636
      %v6030 = vpop.f32.mrb[0].mxu0
      %v6031 = vadd.f32 %v5806, %v6030
      %v6032 = vpop.f32.mrb[0].mxu0
      %6033 = vmatprep.mubr.f32.mxu0 %v3655
      %6034 = vmatmul.mubr.f32.gmra.mrb[0].mxu0 %v3654
      %v6035 = vpop.f32.mrb[0].mxu0
      %v6036 = vadd.f32 %v5811, %v6035
      %v6037 = vpop.f32.mrb[0].mxu0
      %6038 = vmatprep.mubr.f32.mxu0 %v3673
      %6039 = vmatmul.mubr.f32.gmra.mrb[0].mxu0 %v3672
      %v6040 = vpop.f32.mrb[0].mxu0
      %v6041 = vadd.f32 %v5816, %v6040
      %v6042 = vpop.f32.mrb[0].mxu0
      %6043 = vmatprep.mubr.f32.mxu0 %v3691
      %6044 = vmatmul.mubr.f32.gmra.mrb[0].mxu0 %v3690
      %v6045 = vpop.f32.mrb[0].mxu0
      %v6046 = vadd.f32 %v5821, %v6045
      %v6047 = vpop.f32.mrb[0].mxu0
      %6048 = vmatprep.mubr.f32.mxu0 %v3709
      %6049 = vmatmul.mubr.f32.gmra.mrb[0].mxu0 %v3708
      %v6050 = vpop.f32.mrb[0].mxu0
      %v6051 = vadd.f32 %v5826, %v6050
      %v6052 = vpop.f32.mrb[0].mxu0
      %6053 = vmatprep.mubr.f32.mxu0 %v3727
      %6054 = vmatmul.mubr.f32.gmra.mrb[0].mxu0 %v3726
      %v6055 = vpop.f32.mrb[0].mxu0
      %v6056 = vadd.f32 %v5831, %v6055
      %v6057 = vpop.f32.mrb[0].mxu0
      %6058 = vmatprep.mubr.f32.mxu0 %v3745
      %6059 = vmatmul.mubr.f32.gmra.mrb[0].mxu0 %v3744
      %v6060 = vpop.f32.mrb[0].mxu0
      %v6061 = vadd.f32 %v5836, %v6060
      %v6062 = vpop.f32.mrb[0].mxu0
      %6063 = vmatprep.mubr.f32.mxu0 %v3763
      %6064 = vmatmul.mubr.f32.gmra.mrb[0].mxu0 %v3762
      %v6065 = vpop.f32.mrb[0].mxu0
      %v6066 = vadd.f32 %v5841, %v6065
      %v6067 = vpop.f32.mrb[0].mxu0
      %6068 = vmatprep.mubr.f32.mxu0 %v3781
      %6069 = vmatmul.mubr.f32.gmra.mrb[0].mxu0 %v3780
      %v6070 = vpop.f32.mrb[0].mxu0
      %v6071 = vadd.f32 %v5846, %v6070
      %v6072 = vpop.f32.mrb[0].mxu0
      %6073 = vmatprep.mubr.f32.mxu0 %v3799
      %6074 = vmatmul.mubr.f32.gmra.mrb[0].mxu0 %v3798
      %v6075 = vpop.f32.mrb[0].mxu0
      %v6076 = vadd.f32 %v5851, %v6075
      %v6077 = vpop.f32.mrb[0].mxu0
      %6078 = vmatprep.mubr.f32.mxu0 %v3817
      %6079 = vmatmul.mubr.f32.gmra.mrb[0].mxu0 %v3816
      %v6080 = vpop.f32.mrb[0].mxu0
      %v6081 = vadd.f32 %v5856, %v6080
      %v6082 = vpop.f32.mrb[0].mxu0
      %6083 = vmatprep.mubr.f32.mxu0 %v3835
      %6084 = vmatmul.mubr.f32.gmra.mrb[0].mxu0 %v3834
      %v6085 = vpop.f32.mrb[0].mxu0
      %v6086 = vadd.f32 %v5861, %v6085
      %v6087 = vpop.f32.mrb[0].mxu0
      %6088 = vmatprep.mubr.f32.mxu0 %v3853
      %6089 = vmatmul.mubr.f32.gmra.mrb[0].mxu0 %v3852
      %v6090 = vpop.f32.mrb[0].mxu0
      %v6091 = vadd.f32 %v5866, %v6090
      %v6092 = vpop.f32.mrb[0].mxu0
      %6093 = vmatprep.mubr.f32.mxu0 %v3871
      %6094 = vmatmul.mubr.f32.gmra.mrb[0].mxu0 %v3870
      %v6095 = vpop.f32.mrb[0].mxu0
      %v6096 = vadd.f32 %v5871, %v6095
      %v6097 = vpop.f32.mrb[0].mxu0
      %6098 = vmatprep.mubr.f32.mxu0 %v3889
      %6099 = vmatmul.mubr.f32.gmra.mrb[0].mxu0 %v3888
      %v6100 = vpop.f32.mrb[0].mxu0
      %v6101 = vadd.f32 %v5876, %v6100
      %v6102 = vpop.f32.mrb[0].mxu0
      %6103 = vmatprep.mubr.f32.mxu0 %v3907
      %6104 = vmatmul.mubr.f32.gmra.mrb[0].mxu0 %v3906
      %v6105 = vpop.f32.mrb[0].mxu0
      %v6106 = vadd.f32 %v5881, %v6105
      %v6107 = vpop.f32.mrb[0].mxu0
      %6108 = vmatprep.mubr.f32.mxu0 %v3925
      %6109 = vmatmul.mubr.f32.gmra.mrb[0].mxu0 %v3924
      %v6110 = vpop.f32.mrb[0].mxu0
      %v6111 = vadd.f32 %v5886, %v6110
      %v6112 = vpop.f32.mrb[0].mxu0
      %6113 = vmatprep.mubr.f32.mxu0 %v3943
      %6114 = vmatmul.mubr.f32.gmra.mrb[0].mxu0 %v3942
      %v6115 = vpop.f32.mrb[0].mxu0
      %v6116 = vadd.f32 %v5891, %v6115
      %v6117 = vpop.f32.mrb[0].mxu0
      %6118 = vmatprep.mubr.f32.mxu0 %v3961
      %6119 = vmatmul.mubr.f32.gmra.mrb[0].mxu0 %v3960
      %v6120 = vpop.f32.mrb[0].mxu0
      %v6121 = vadd.f32 %v5896, %v6120
      %v6122 = vpop.f32.mrb[0].mxu0
      %6123 = vmatprep.mubr.f32.mxu0 %v3979
      %6124 = vmatmul.mubr.f32.gmra.mrb[0].mxu0 %v3978
      %v6125 = vpop.f32.mrb[0].mxu0
      %v6126 = vadd.f32 %v5901, %v6125
      %v6127 = vpop.f32.mrb[0].mxu0
      %6128 = vmatprep.mubr.f32.mxu0 %v3997
      %6129 = vmatmul.mubr.f32.gmra.mrb[0].mxu0 %v3996
      %v6130 = vpop.f32.mrb[0].mxu0
      %v6131 = vadd.f32 %v5906, %v6130
      %v6132 = vpop.f32.mrb[0].mxu0
      %6133 = vmatprep.mubr.f32.mxu0 %v4015
      %6134 = vmatmul.mubr.f32.gmra.mrb[0].mxu0 %v4014
      %v6135 = vpop.f32.mrb[0].mxu0
      %v6136 = vadd.f32 %v5911, %v6135
      %v6137 = vpop.f32.mrb[0].mxu0
      %6138 = vmatprep.mubr.f32.mxu0 %v4033
      %6139 = vmatmul.mubr.f32.gmra.mrb[0].mxu0 %v4032
      %v6140 = vpop.f32.mrb[0].mxu0
      %v6141 = vadd.f32 %v5916, %v6140
      %v6142 = vpop.f32.mrb[0].mxu0
      %6143 = vmatprep.mubr.f32.mxu0 %v4051
      %6144 = vmatmul.mubr.f32.gmra.mrb[0].mxu0 %v4050
      %v6145 = vpop.f32.mrb[0].mxu0
      %v6146 = vadd.f32 %v5921, %v6145
      %v6147 = vpop.f32.mrb[0].mxu0
      %6148 = vdwg.mxu0
      %6149 = vmatprep.subr.mxu0 0.0
      %6150 = vmatpush1.msra.mxu0 %v4310
      %6151 = vmatprep.subr.mxu0 0.0
      %6152 = vmatpush1.msra.mxu0 %v4311
      %6153 = vmatprep.subr.mxu0 0.0
      %6154 = vmatpush1.msra.mxu0 %v4312
      %6155 = vmatprep.subr.mxu0 0.0
      %6156 = vmatpush1.msra.mxu0 %v4313
      %6157 = vmatprep.subr.mxu0 0.0
      %6158 = vmatpush1.msra.mxu0 %v4314
      %6159 = vmatprep.subr.mxu0 0.0
      %6160 = vmatpush1.msra.mxu0 %v4315
      %6161 = vmatprep.subr.mxu0 0.0
      %6162 = vmatpush1.msra.mxu0 %v4316
      %6163 = vmatprep.subr.mxu0 0.0
      %6164 = vmatpush1.msra.mxu0 %v4317
      %6165 = vmatprep.subr.mxu0 0.0
      %6166 = vmatpush1.msra.mxu0 %v4318
      %6167 = vmatprep.subr.mxu0 0.0
      %6168 = vmatpush1.msra.mxu0 %v4319
      %6169 = vmatprep.subr.mxu0 0.0
      %6170 = vmatpush1.msra.mxu0 %v4320
      %6171 = vmatprep.subr.mxu0 0.0
      %6172 = vmatpush1.msra.mxu0 %v4321
      %6173 = vmatprep.subr.mxu0 0.0
      %6174 = vmatpush1.msra.mxu0 %v4322
      %6175 = vmatprep.subr.mxu0 0.0
      %6176 = vmatpush1.msra.mxu0 %v4323
      %6177 = vmatprep.subr.mxu0 0.0
      %6178 = vmatpush1.msra.mxu0 %v4324
      %6179 = vmatprep.subr.mxu0 0.0
      %6180 = vmatpush1.msra.mxu0 %v4325
      %6181 = vmatprep.subr.mxu0 0.0
      %6182 = vmatpush1.msra.mxu0 %v4326
      %6183 = vmatprep.subr.mxu0 0.0
      %6184 = vmatpush1.msra.mxu0 %v4327
      %6185 = vmatprep.subr.mxu0 0.0
      %6186 = vmatpush1.msra.mxu0 %v4328
      %6187 = vmatprep.subr.mxu0 0.0
      %6188 = vmatpush1.msra.mxu0 %v4329
      %6189 = vmatprep.subr.mxu0 0.0
      %6190 = vmatpush1.msra.mxu0 %v4330
      %6191 = vmatprep.subr.mxu0 0.0
      %6192 = vmatpush1.msra.mxu0 %v4331
      %6193 = vmatprep.subr.mxu0 0.0
      %6194 = vmatpush1.msra.mxu0 %v4332
      %6195 = vmatprep.subr.mxu0 0.0
      %6196 = vmatpush1.msra.mxu0 %v4333
      %6197 = vmatprep.subr.mxu0 0.0
      %6198 = vmatpush1.msra.mxu0 %v4334
      %6199 = vmatprep.subr.mxu0 0.0
      %6200 = vmatpush1.msra.mxu0 %v4335
      %6201 = vmatprep.subr.mxu0 0.0
      %6202 = vmatpush1.msra.mxu0 %v4336
      %6203 = vmatprep.subr.mxu0 0.0
      %6204 = vmatpush1.msra.mxu0 %v4337
      %6205 = vmatprep.subr.mxu0 0.0
      %6206 = vmatpush1.msra.mxu0 %v4338
      %6207 = vmatprep.subr.mxu0 0.0
      %6208 = vmatpush1.msra.mxu0 %v4339
      %6209 = vmatprep.subr.mxu0 0.0
      %6210 = vmatpush1.msra.mxu0 %v4340
      %6211 = vmatprep.subr.mxu0 0.0
      %6212 = vmatpush1.msra.mxu0 %v4341
      %6213 = vmatprep.mubr.f32.mxu0 %v3495
      %6214 = vmatmul.mubr.f32.gmra.mrb[0].mxu0 %v3494
      %v6215 = vpop.f32.mrb[0].mxu0
      %v6216 = vadd.f32 %v5991, %v6215
      %v6217 = vpop.f32.mrb[0].mxu0
      %6218 = vmatprep.mubr.f32.mxu0 %v3513
      %6219 = vmatmul.mubr.f32.gmra.mrb[0].mxu0 %v3512
      %v6220 = vpop.f32.mrb[0].mxu0
      %v6221 = vadd.f32 %v5996, %v6220
      %v6222 = vpop.f32.mrb[0].mxu0
      %6223 = vmatprep.mubr.f32.mxu0 %v3531
      %6224 = vmatmul.mubr.f32.gmra.mrb[0].mxu0 %v3530
      %v6225 = vpop.f32.mrb[0].mxu0
      %v6226 = vadd.f32 %v6001, %v6225
      %v6227 = vpop.f32.mrb[0].mxu0
      %6228 = vmatprep.mubr.f32.mxu0 %v3549
      %6229 = vmatmul.mubr.f32.gmra.mrb[0].mxu0 %v3548
      %v6230 = vpop.f32.mrb[0].mxu0
      %v6231 = vadd.f32 %v6006, %v6230
      %v6232 = vpop.f32.mrb[0].mxu0
      %6233 = vmatprep.mubr.f32.mxu0 %v3567
      %6234 = vmatmul.mubr.f32.gmra.mrb[0].mxu0 %v3566
      %v6235 = vpop.f32.mrb[0].mxu0
      %v6236 = vadd.f32 %v6011, %v6235
      %v6237 = vpop.f32.mrb[0].mxu0
      %6238 = vmatprep.mubr.f32.mxu0 %v3585
      %6239 = vmatmul.mubr.f32.gmra.mrb[0].mxu0 %v3584
      %v6240 = vpop.f32.mrb[0].mxu0
      %v6241 = vadd.f32 %v6016, %v6240
      %v6242 = vpop.f32.mrb[0].mxu0
      %6243 = vmatprep.mubr.f32.mxu0 %v3603
      %6244 = vmatmul.mubr.f32.gmra.mrb[0].mxu0 %v3602
      %v6245 = vpop.f32.mrb[0].mxu0
      %v6246 = vadd.f32 %v6021, %v6245
      %v6247 = vpop.f32.mrb[0].mxu0
      %6248 = vmatprep.mubr.f32.mxu0 %v3621
      %6249 = vmatmul.mubr.f32.gmra.mrb[0].mxu0 %v3620
      %v6250 = vpop.f32.mrb[0].mxu0
      %v6251 = vadd.f32 %v6026, %v6250
      %v6252 = vpop.f32.mrb[0].mxu0
      %6253 = vmatprep.mubr.f32.mxu0 %v3639
      %6254 = vmatmul.mubr.f32.gmra.mrb[0].mxu0 %v3638
      %v6255 = vpop.f32.mrb[0].mxu0
      %v6256 = vadd.f32 %v6031, %v6255
      %v6257 = vpop.f32.mrb[0].mxu0
      %6258 = vmatprep.mubr.f32.mxu0 %v3657
      %6259 = vmatmul.mubr.f32.gmra.mrb[0].mxu0 %v3656
      %v6260 = vpop.f32.mrb[0].mxu0
      %v6261 = vadd.f32 %v6036, %v6260
      %v6262 = vpop.f32.mrb[0].mxu0
      %6263 = vmatprep.mubr.f32.mxu0 %v3675
      %6264 = vmatmul.mubr.f32.gmra.mrb[0].mxu0 %v3674
      %v6265 = vpop.f32.mrb[0].mxu0
      %v6266 = vadd.f32 %v6041, %v6265
      %v6267 = vpop.f32.mrb[0].mxu0
      %6268 = vmatprep.mubr.f32.mxu0 %v3693
      %6269 = vmatmul.mubr.f32.gmra.mrb[0].mxu0 %v3692
      %v6270 = vpop.f32.mrb[0].mxu0
      %v6271 = vadd.f32 %v6046, %v6270
      %v6272 = vpop.f32.mrb[0].mxu0
      %6273 = vmatprep.mubr.f32.mxu0 %v3711
      %6274 = vmatmul.mubr.f32.gmra.mrb[0].mxu0 %v3710
      %v6275 = vpop.f32.mrb[0].mxu0
      %v6276 = vadd.f32 %v6051, %v6275
      %v6277 = vpop.f32.mrb[0].mxu0
      %6278 = vmatprep.mubr.f32.mxu0 %v3729
      %6279 = vmatmul.mubr.f32.gmra.mrb[0].mxu0 %v3728
      %v6280 = vpop.f32.mrb[0].mxu0
      %v6281 = vadd.f32 %v6056, %v6280
      %v6282 = vpop.f32.mrb[0].mxu0
      %6283 = vmatprep.mubr.f32.mxu0 %v3747
      %6284 = vmatmul.mubr.f32.gmra.mrb[0].mxu0 %v3746
      %v6285 = vpop.f32.mrb[0].mxu0
      %v6286 = vadd.f32 %v6061, %v6285
      %v6287 = vpop.f32.mrb[0].mxu0
      %6288 = vmatprep.mubr.f32.mxu0 %v3765
      %6289 = vmatmul.mubr.f32.gmra.mrb[0].mxu0 %v3764
      %v6290 = vpop.f32.mrb[0].mxu0
      %v6291 = vadd.f32 %v6066, %v6290
      %v6292 = vpop.f32.mrb[0].mxu0
      %6293 = vmatprep.mubr.f32.mxu0 %v3783
      %6294 = vmatmul.mubr.f32.gmra.mrb[0].mxu0 %v3782
      %v6295 = vpop.f32.mrb[0].mxu0
      %v6296 = vadd.f32 %v6071, %v6295
      %v6297 = vpop.f32.mrb[0].mxu0
      %6298 = vmatprep.mubr.f32.mxu0 %v3801
      %6299 = vmatmul.mubr.f32.gmra.mrb[0].mxu0 %v3800
      %v6300 = vpop.f32.mrb[0].mxu0
      %v6301 = vadd.f32 %v6076, %v6300
      %v6302 = vpop.f32.mrb[0].mxu0
      %6303 = vmatprep.mubr.f32.mxu0 %v3819
      %6304 = vmatmul.mubr.f32.gmra.mrb[0].mxu0 %v3818
      %v6305 = vpop.f32.mrb[0].mxu0
      %v6306 = vadd.f32 %v6081, %v6305
      %v6307 = vpop.f32.mrb[0].mxu0
      %6308 = vmatprep.mubr.f32.mxu0 %v3837
      %6309 = vmatmul.mubr.f32.gmra.mrb[0].mxu0 %v3836
      %v6310 = vpop.f32.mrb[0].mxu0
      %v6311 = vadd.f32 %v6086, %v6310
      %v6312 = vpop.f32.mrb[0].mxu0
      %6313 = vmatprep.mubr.f32.mxu0 %v3855
      %6314 = vmatmul.mubr.f32.gmra.mrb[0].mxu0 %v3854
      %v6315 = vpop.f32.mrb[0].mxu0
      %v6316 = vadd.f32 %v6091, %v6315
      %v6317 = vpop.f32.mrb[0].mxu0
      %6318 = vmatprep.mubr.f32.mxu0 %v3873
      %6319 = vmatmul.mubr.f32.gmra.mrb[0].mxu0 %v3872
      %v6320 = vpop.f32.mrb[0].mxu0
      %v6321 = vadd.f32 %v6096, %v6320
      %v6322 = vpop.f32.mrb[0].mxu0
      %6323 = vmatprep.mubr.f32.mxu0 %v3891
      %6324 = vmatmul.mubr.f32.gmra.mrb[0].mxu0 %v3890
      %v6325 = vpop.f32.mrb[0].mxu0
      %v6326 = vadd.f32 %v6101, %v6325
      %v6327 = vpop.f32.mrb[0].mxu0
      %6328 = vmatprep.mubr.f32.mxu0 %v3909
      %6329 = vmatmul.mubr.f32.gmra.mrb[0].mxu0 %v3908
      %v6330 = vpop.f32.mrb[0].mxu0
      %v6331 = vadd.f32 %v6106, %v6330
      %v6332 = vpop.f32.mrb[0].mxu0
      %6333 = vmatprep.mubr.f32.mxu0 %v3927
      %6334 = vmatmul.mubr.f32.gmra.mrb[0].mxu0 %v3926
      %v6335 = vpop.f32.mrb[0].mxu0
      %v6336 = vadd.f32 %v6111, %v6335
      %v6337 = vpop.f32.mrb[0].mxu0
      %6338 = vmatprep.mubr.f32.mxu0 %v3945
      %6339 = vmatmul.mubr.f32.gmra.mrb[0].mxu0 %v3944
      %v6340 = vpop.f32.mrb[0].mxu0
      %v6341 = vadd.f32 %v6116, %v6340
      %v6342 = vpop.f32.mrb[0].mxu0
      %6343 = vmatprep.mubr.f32.mxu0 %v3963
      %6344 = vmatmul.mubr.f32.gmra.mrb[0].mxu0 %v3962
      %v6345 = vpop.f32.mrb[0].mxu0
      %v6346 = vadd.f32 %v6121, %v6345
      %v6347 = vpop.f32.mrb[0].mxu0
      %6348 = vmatprep.mubr.f32.mxu0 %v3981
      %6349 = vmatmul.mubr.f32.gmra.mrb[0].mxu0 %v3980
      %v6350 = vpop.f32.mrb[0].mxu0
      %v6351 = vadd.f32 %v6126, %v6350
      %v6352 = vpop.f32.mrb[0].mxu0
      %6353 = vmatprep.mubr.f32.mxu0 %v3999
      %6354 = vmatmul.mubr.f32.gmra.mrb[0].mxu0 %v3998
      %v6355 = vpop.f32.mrb[0].mxu0
      %v6356 = vadd.f32 %v6131, %v6355
      %v6357 = vpop.f32.mrb[0].mxu0
      %6358 = vmatprep.mubr.f32.mxu0 %v4017
      %6359 = vmatmul.mubr.f32.gmra.mrb[0].mxu0 %v4016
      %v6360 = vpop.f32.mrb[0].mxu0
      %v6361 = vadd.f32 %v6136, %v6360
      %v6362 = vpop.f32.mrb[0].mxu0
      %6363 = vmatprep.mubr.f32.mxu0 %v4035
      %6364 = vmatmul.mubr.f32.gmra.mrb[0].mxu0 %v4034
      %v6365 = vpop.f32.mrb[0].mxu0
      %v6366 = vadd.f32 %v6141, %v6365
      %v6367 = vpop.f32.mrb[0].mxu0
      %6368 = vmatprep.mubr.f32.mxu0 %v4053
      %6369 = vmatmul.mubr.f32.gmra.mrb[0].mxu0 %v4052
      %v6370 = vpop.f32.mrb[0].mxu0
      %v6371 = vadd.f32 %v6146, %v6370
      %v6372 = vpop.f32.mrb[0].mxu0
      %6373 = vdwg.mxu0
      %6374 = vst [vmem:[%s208] sm:$0xff] %v6216
      %6375 = vst [vmem:[%s208 + $0x8] sm:$0xff] %v6221
      %6376 = vst [vmem:[%s208 + $0x10] sm:$0xff] %v6226
      %6377 = vst [vmem:[%s208 + $0x18] sm:$0xff] %v6231
      %6378 = vst [vmem:[%s208 + $0x20] sm:$0xff] %v6236
      %6379 = vst [vmem:[%s208 + $0x28] sm:$0xff] %v6241
      %6380 = vst [vmem:[%s208 + $0x30] sm:$0xff] %v6246
      %6381 = vst [vmem:[%s208 + $0x38] sm:$0xff] %v6251
      %6382 = vst [vmem:[%s208 + $0x40] sm:$0xff] %v6256
      %6383 = vst [vmem:[%s208 + $0x48] sm:$0xff] %v6261
      %6384 = vst [vmem:[%s208 + $0x50] sm:$0xff] %v6266
      %6385 = vst [vmem:[%s208 + $0x58] sm:$0xff] %v6271
      %6386 = vst [vmem:[%s208 + $0x60] sm:$0xff] %v6276
      %6387 = vst [vmem:[%s208 + $0x68] sm:$0xff] %v6281
      %6388 = vst [vmem:[%s208 + $0x70] sm:$0xff] %v6286
      %6389 = vst [vmem:[%s208 + $0x78] sm:$0xff] %v6291
      %6390 = vst [vmem:[%s208 + $0x80] sm:$0xff] %v6296
      %6391 = vst [vmem:[%s208 + $0x88] sm:$0xff] %v6301
      %6392 = vst [vmem:[%s208 + $0x90] sm:$0xff] %v6306
      %6393 = vst [vmem:[%s208 + $0x98] sm:$0xff] %v6311
      %6394 = vst [vmem:[%s208 + $0xa0] sm:$0xff] %v6316
      %6395 = vst [vmem:[%s208 + $0xa8] sm:$0xff] %v6321
      %6396 = vst [vmem:[%s208 + $0xb0] sm:$0xff] %v6326
      %6397 = vst [vmem:[%s208 + $0xb8] sm:$0xff] %v6331
      %6398 = vst [vmem:[%s208 + $0xc0] sm:$0xff] %v6336
      %6399 = vst [vmem:[%s208 + $0xc8] sm:$0xff] %v6341
      %6400 = vst [vmem:[%s208 + $0xd0] sm:$0xff] %v6346
      %6401 = vst [vmem:[%s208 + $0xd8] sm:$0xff] %v6351
      %6402 = vst [vmem:[%s208 + $0xe0] sm:$0xff] %v6356
      %6403 = vst [vmem:[%s208 + $0xe8] sm:$0xff] %v6361
      %6404 = vst [vmem:[%s208 + $0xf0] sm:$0xff] %v6366
      %6405 = vst [vmem:[%s208 + $0xf8] sm:$0xff] %v6371
      %s6406 = smul.u32 16, %s19
      %p6407 = scmp.lt.s32.totalorder %s18, 1
      %s6408 = scalar_select %p6407, %s18, 1
      %p6409 = scmp.lt.s32.totalorder %s6406, 15
      %s6410 = scalar_select %p6409, %s6406, 15
      %s6411 = smul.addr %s6410, 2
      %s6412 = smul.addr %s6408, 32
      %s6413 = sadd.s32 %s6411, %s6412
      %s6414 = smul.addr %s6413, 8
      %s6415 = scalar_lea.vmem %s3, %s6414
      // Predicated region
      $region33: #{rrdb_forward.19} parent=31 // pred_check
        %p6416 = pneg %p116
      $region34: #{rrdb_forward.19} parent=31 // pred_check_branch
        %6418 = sbr.rel (%p6416) target = $region36
      $region35: #{rrdb_forward.19} parent=31 // pred_region
        %s6419 = smul.u32 16, %s19
      $region36: #{rrdb_forward.19} parent=31 // pred_fallthru
        _
    $region32: #{rrdb_forward.19} parent=5 // pred_fallthru
      _
    %p6420 = scmp.le.s32.totalorder 2, %s9
    // Predicated region
    $region37: #{rrdb_forward.19} parent=5 // pred_check
      %p6421 = pneg %p6420
    $region38: #{rrdb_forward.19} parent=5 // pred_check_branch
      %6423 = sbr.rel (%p6421) target = $region40
    $region39: #{rrdb_forward.19} parent=5 // pred_region
      %s6424 = ssub.s32 %s9, 2
      // Predicated region
      $region41: #{rrdb_forward.19} parent=39 // pred_check
        %p6425 = pneg %p122
      $region42: #{rrdb_forward.19} parent=39 // pred_check_branch
        %6427 = sbr.rel (%p6425) target = $region44
      $region43: #{rrdb_forward.19} parent=39 // pred_region
        %s6428 = smul.u32 16, %s21
        %p6429 = scmp.lt.s32.totalorder %s20, 1
        %s6430 = scalar_select %p6429, %s20, 1
        %p6431 = scmp.lt.s32.totalorder %s6428, 15
        %s6432 = scalar_select %p6431, %s6428, 15
        %s6433 = smul.addr %s6432, 2
        %s6434 = smul.addr %s6430, 32
        %s6435 = sadd.s32 %s6433, %s6434
        %s6436 = smul.addr %s6435, 8
        %s6437 = scalar_lea.vmem %s3, %s6436
      $region44: #{rrdb_forward.19} parent=39 // pred_fallthru
        _
    $region40: #{rrdb_forward.19} parent=5 // pred_fallthru
      _
  $region6: #{rrdb_forward.19} parent=0 // loop_footer
    %s13 = sadd.s32 1, %s9
  $region7: #{rrdb_forward.19} parent=0 // loop_footer_branch
    %8 = sbr.rel target = $region3
  $region8: #{rrdb_forward.19} parent=0 // loop_exit
    _

</llo_original>
